<compile_context>
chip_gen: v5e
topology: v5e:2x2
jax: 0.10.0
libtpu: 0.0.40
codegen_flags: <defaults>
</compile_context>

<pallas_src>
import jax
import jax.numpy as jnp
import numpy as np
from jax import lax
from jax.experimental import pallas as pl
from jax.experimental.pallas import tpu as pltpu


# ----------------------------------------------------------------------------
# Fused kernel: one row-block of one output frame.
# ----------------------------------------------------------------------------
def _fused_upsample_conv_kernel(x0_ref, x1_ref, x2_ref, w_ref, b_ref,
                                o_ref, col_ref, acc_ref):
    """
    x*_ref : (1, 1, 1, RB+2, W, Cin)  halo'd input row blocks at times
             clamp(t-2,0), clamp(t-1,0), t (rows 0 / RB+1 are the +-1 halo)
    w_ref  : (3, 9*Cin, Cout)         conv weight, kt major, (kh, kw, cin) -> K
    b_ref  : (1, Cout)                f32 bias
    o_ref  : (2, 1, 1, 2*RB, W, Cout) even/odd output-column phases of the block
    col_ref: (2, 2*RB, W, 9*Cin)      im2col scratch, phases stacked along M
    acc_ref: (2*2*RB*W, Cout)         f32 accumulator scratch
    """
    RBH, W, Cin = x0_ref.shape[3], x0_ref.shape[4], x0_ref.shape[5]
    RB = RBH - 2
    RB2 = 2 * RB
    Cout = o_ref.shape[5]

    h = pl.program_id(2)
    HB = pl.num_programs(2)
    not_top = (h > 0)
    not_bot = (h < HB - 1)

    # Hoisted out of the kt loop (JAX does not CSE broadcast_in_dim).
    zc = jnp.zeros((RB2 + 2, 1, Cin), dtype=jnp.float32)

    def upsample_phases(f_ref):
        """2x bilinear upsample of this row block plus the conv's zero-pad halo
        rows; even/odd output-column phases kept separate.
        Returns (col_e, col_o), each (RB2 + 2, W, Cin) f32."""
        xs = f_ref[0, 0, 0].astype(jnp.float32)       # (RB+2, W, Cin), blend in f32
        xp = xs[0:RB]                                  # rows R-1 .. R+RB-2 (clamped)
        xb = xs[1:RB + 1]                              # rows R   .. R+RB-1
        xn = xs[2:RB + 2]                              # rows R+1 .. R+RB   (clamped)

        # -- 2x along H (half-pixel centers; edge clamp via the replicated halo) --
        row_e = 0.25 * xp + 0.75 * xb                  # upsampled rows 2(R+i)
        row_o = 0.75 * xb + 0.25 * xn                  # upsampled rows 2(R+i)+1
        up = jnp.stack([row_e, row_o], axis=1).reshape(RB2, W, Cin)

        # -- conv zero-pad halo rows (upsampled rows 2R-1 and 2R+RB2) --
        top = 0.75 * xs[0:1] + 0.25 * xs[1:2]
        top = top * not_top.astype(top.dtype)          # zero pad above output row 0
        bot = 0.25 * xs[RB:RB + 1] + 0.75 * xs[RB + 1:RB + 2]
        bot = bot * not_bot.astype(bot.dtype)          # zero pad below output row 2H-1
        up = jnp.concatenate([top, up, bot], axis=0)   # (RB2 + 2, W, Cin)

        # -- 2x along W: even/odd column phases kept separate (no interleave) --
        # TODO(synk): pltpu.roll + boundary select would move these +-1 column
        #             shifts to the XLU; kept as layout-proven slice concats.
        wp = jnp.concatenate([up[:, :1], up[:, :-1]], axis=1)
        wn = jnp.concatenate([up[:, 1:], up[:, -1:]], axis=1)
        col_e = 0.25 * wp + 0.75 * up                  # upsampled cols 2u
        col_o = 0.75 * up + 0.25 * wn                  # upsampled cols 2u+1
        return col_e, col_o

    cdt = col_ref.dtype
    for kt, f_ref in enumerate((x0_ref, x1_ref, x2_ref)):
        col_e, col_o = upsample_phases(f_ref)
        # Conv taps along W per output-column phase (kw = 0, 1, 2):
        #   even output cols 2u   read upsampled cols 2u-1, 2u,   2u+1
        #   odd  output cols 2u+1 read upsampled cols 2u,   2u+1, 2u+2
        even_taps = (jnp.concatenate([zc, col_o[:, :-1]], axis=1), col_e, col_o)
        odd_taps = (col_e, col_o, jnp.concatenate([col_e[:, 1:], zc], axis=1))

        # im2col: both phases stacked along M, (kh, kw, cin) folded into K.
        # TODO(synk): if Cin is large but not a multiple of 128, pad the Cin
        #             chunks so each fill lands on a lane-tile boundary.
        for phase, taps in enumerate((even_taps, odd_taps)):
            for kh in range(3):
                for kw in range(3):
                    j = (kh * 3 + kw) * Cin
                    col_ref[phase, :, :, j:j + Cin] = (
                        taps[kw][kh:kh + RB2].astype(cdt))

        patches = col_ref[...].reshape(2 * RB2 * W, 9 * Cin)
        contrib = jnp.dot(patches, w_ref[kt], preferred_element_type=jnp.float32)
        if kt == 0:
            acc_ref[...] = contrib + b_ref[0, :]       # bias-initialized accumulator
        else:
            acc_ref[...] += contrib

    o_ref[:, 0, 0] = acc_ref[...].reshape(2, RB2, W, Cout).astype(o_ref.dtype)


# ----------------------------------------------------------------------------
# Wrapper: layout glue + VMEM-budget-aware tiling.
# ----------------------------------------------------------------------------
def _working_set_bytes(rb, W, Cin, Cout, compute_dtype, out_dtype):
    csz = jnp.dtype(compute_dtype).itemsize
    osz = jnp.dtype(out_dtype).itemsize
    rb2 = 2 * rb
    return (3 * 2 * (rb + 2) * W * Cin * csz      # halo'd input blocks (x3 taps, 2-buffered)
            + 2 * 3 * 9 * Cin * Cout * csz        # weights (double-buffered, constant index)
            + 2 * rb2 * W * 9 * Cin * csz         # im2col scratch (both phases)
            + 2 * rb2 * W * Cout * 4              # f32 accumulator
            + 2 * 2 * rb2 * W * Cout * osz)       # output blocks (double-buffered)


def _pick_row_block(H, W, Cin, Cout, compute_dtype, out_dtype,
                    budget_bytes=24 << 20):
    """Largest divisor of H whose per-step working set fits the budget
    (conservative enough for v7x's 64 MiB once doubled for headroom)."""
    best = 1
    for rb in range(1, H + 1):
        if H % rb == 0 and _working_set_bytes(
                rb, W, Cin, Cout, compute_dtype, out_dtype) <= budget_bytes:
            best = rb
    return best


def spatial_2x_3d_upsample(x_ncthw, conv_weight, conv_bias, *, row_block=None,
                           compute_dtype=jnp.bfloat16):
    """x: (N, Cin, T, H, W); weight: (Cout, Cin, 3, 3, 3); bias: (Cout,).
    Returns (N, Cout, T, 2H, 2W) in x.dtype.  compute_dtype controls the dtype
    of activations/weights fed to the MXU (accumulation is always f32)."""
    N, Cin, T, H, W = x_ncthw.shape
    Cout = conv_weight.shape[0]
    out_dtype = x_ncthw.dtype
    if row_block is None:
        row_block = _pick_row_block(H, W, Cin, Cout, compute_dtype, out_dtype)
    if H % row_block != 0:
        raise ValueError(f"row_block {row_block} must divide H={H}")
    RB = row_block
    HB = H // RB

    # NCTHW -> NTHWC (+ cast), edge-replicate pad H by 1 row each side, then
    # gather halo'd row blocks: (N, T, HB, RB+2, W, Cin).  This fuses with the
    # (already required) transpose copy; per-step input VMEM drops from 3 full
    # frames to 3 x (RB+2) rows.
    x = jnp.transpose(x_ncthw, (0, 2, 3, 4, 1)).astype(compute_dtype)
    xpad = jnp.concatenate([x[:, :, :1], x, x[:, :, -1:]], axis=2)
    ridx = jnp.arange(HB)[:, None] * RB + jnp.arange(RB + 2)[None, :]
    xblk = xpad[:, :, ridx]                             # (N, T, HB, RB+2, W, Cin)

    # (Cout, Cin, kt, kh, kw) -> (kt, kh, kw, Cin, Cout) -> (kt, 9*Cin, Cout)
    w = jnp.transpose(conv_weight, (2, 3, 4, 1, 0)).reshape(3, 9 * Cin, Cout)
    w = w.astype(compute_dtype)
    b = conv_bias.reshape(1, Cout).astype(jnp.float32)

    def frame_spec(dt):
        # Causal temporal pad folded into the index_map: conv tap kt reads the
        # original frame max(t + kt - 2, 0); here dt = 2 - kt.
        # TODO(synk): a t%3 VMEM ring (manual DMA) would cut the 3x HBM re-read.
        def imap(n, t, h):
            return (n, jnp.maximum(t - dt, 0), h, 0, 0, 0)
        return pl.BlockSpec((1, 1, 1, RB + 2, W, Cin), imap)

    vmem_limit = int(min(
        max(2 * _working_set_bytes(RB, W, Cin, Cout, compute_dtype, out_dtype),
            32 << 20),
        64 << 20))

    out = pl.pallas_call(
        _fused_upsample_conv_kernel,
        out_shape=jax.ShapeDtypeStruct((2, N, T, 2 * H, W, Cout), out_dtype),
        grid=(N, T, HB),
        in_specs=[
            frame_spec(2),                                      # kt = 0
            frame_spec(1),                                      # kt = 1
            frame_spec(0),                                      # kt = 2
            # TODO(synk): on v7x single-buffer this constant-index weight block
            #             (pipeline_mode=pl.Buffered(1)); consider K=27*Cin
            #             kt-folding on 128 MiB parts.
            pl.BlockSpec((3, 9 * Cin, Cout), lambda n, t, h: (0, 0, 0)),
            pl.BlockSpec((1, Cout), lambda n, t, h: (0, 0)),
        ],
        # TODO(synk): if production Cout % 128 != 0, fold W into the minor dim
        #             of the out block for lane-dense stores.
        out_specs=pl.BlockSpec(
            (2, 1, 1, 2 * RB, W, Cout),
            lambda n, t, h: (0, n, t, h, 0, 0)),
        scratch_shapes=[
            pltpu.VMEM((2, 2 * RB, W, 9 * Cin), compute_dtype),   # im2col
            pltpu.VMEM((2 * 2 * RB * W, Cout), jnp.float32),      # accumulator
        ],
        compiler_params=pltpu.CompilerParams(
            # h innermost + "arbitrary": a megacore split lands on n / t so the
            # two v7x TensorCores do not each re-fetch the same frame blocks.
            dimension_semantics=("parallel", "parallel", "arbitrary"),
            vmem_limit_bytes=vmem_limit),
    )(xblk, xblk, xblk, w, b)

    # (q, N, T, 2H, W, Cout) -> (N, Cout, T, 2H, W, q) -> (N, Cout, T, 2H, 2W).
    # The reshape merges the now-adjacent (W, 2) dims; the transpose is the
    # NTHWC->NCTHW layout conversion that was needed anyway.
    out = jnp.transpose(out, (1, 5, 2, 3, 4, 0))
    return out.reshape(N, Cout, T, 2 * H, 2 * W)


# ----------------------------------------------------------------------------
# Pure-JAX reference (same math via XLA ops) used as the correctness check.
# ----------------------------------------------------------------------------
def _ref_forward(x_ncthw, conv_weight, conv_bias):
    x = jnp.transpose(x_ncthw, (0, 2, 3, 4, 1))                     # NTHWC
    N, T, H, W, C = x.shape
    xp = jnp.concatenate([x[:, :, :1], x[:, :, :-1]], axis=2)
    xn = jnp.concatenate([x[:, :, 1:], x[:, :, -1:]], axis=2)
    re, ro = 0.25 * xp + 0.75 * x, 0.75 * x + 0.25 * xn
    hh = jnp.stack([re, ro], axis=3).reshape(N, T, 2 * H, W, C)
    hp = jnp.concatenate([hh[:, :, :, :1], hh[:, :, :, :-1]], axis=3)
    hn = jnp.concatenate([hh[:, :, :, 1:], hh[:, :, :, -1:]], axis=3)
    ce, co = 0.25 * hp + 0.75 * hh, 0.75 * hh + 0.25 * hn
    up = jnp.stack([ce, co], axis=4).reshape(N, T, 2 * H, 2 * W, C)
    up_nc = jnp.transpose(up, (0, 4, 1, 2, 3))                      # NCTHW
    pad_t = jnp.concatenate([up_nc[:, :, :1], up_nc[:, :, :1], up_nc], axis=2)
    out = lax.conv_general_dilated(
        pad_t, conv_weight, window_strides=(1, 1, 1),
        padding=((0, 0), (1, 1), (1, 1)),
        dimension_numbers=("NCDHW", "OIDHW", "NCDHW"))
    return out + conv_bias[None, :, None, None, None]


if __name__ == "__main__":
    key = jax.random.PRNGKey(0)
    kx, kw, kb = jax.random.split(key, 3)

    N, Cin, Cout, T, H, W = 2, 4, 8, 4, 8, 16
    x = jax.random.normal(kx, (N, Cin, T, H, W), dtype=jnp.float32)
    w = jax.random.normal(kw, (Cout, Cin, 3, 3, 3), dtype=jnp.float32) * 0.1
    b = jax.random.normal(kb, (Cout,), dtype=jnp.float32) * 0.1

    y_ref = np.asarray(_ref_forward(x, w, b))

    fwd = jax.jit(spatial_2x_3d_upsample,
                  static_argnames=("row_block", "compute_dtype"))

    # f32 compute path: exact-math check (2 row blocks -> boundary logic hit).
    y32 = jax.block_until_ready(fwd(x, w, b, row_block=4,
                                    compute_dtype=jnp.float32))
    assert y32.shape == (N, Cout, T, 2 * H, 2 * W)
    np.testing.assert_allclose(np.asarray(y32), y_ref, rtol=1e-4, atol=1e-4)

    # bf16 activations/weights with f32 accumulation (default production path).
    ybf = jax.block_until_ready(fwd(x, w, b, row_block=4,
                                    compute_dtype=jnp.bfloat16))
    np.testing.assert_allclose(np.asarray(ybf), y_ref, rtol=5e-2, atol=5e-2)

    print("KERNEL_OK")
</pallas_src>

<mosaic_0001>
module attributes {stable_mosaic.version = 11 : i64} {
  func.func @_fused_upsample_conv_kernel(%arg0: i32, %arg1: i32, %arg2: i32, %arg3: memref<1x1x1x6x16x4xf32, #tpu.memory_space<vmem>>, %arg4: memref<1x1x1x6x16x4xf32, #tpu.memory_space<vmem>>, %arg5: memref<1x1x1x6x16x4xf32, #tpu.memory_space<vmem>>, %arg6: memref<3x36x8xf32, #tpu.memory_space<vmem>>, %arg7: memref<1x8xf32, #tpu.memory_space<vmem>>, %arg8: memref<2x1x1x8x16x8xf32, #tpu.memory_space<vmem>>, %arg9: memref<2x8x16x36xf32, #tpu.memory_space<vmem>>, %arg10: memref<256x8xf32, #tpu.memory_space<vmem>>) attributes {dimension_semantics = [#tpu.dimension_semantics<parallel>, #tpu.dimension_semantics<parallel>, #tpu.dimension_semantics<arbitrary>], iteration_bounds = array<i64: 2, 4, 2>, scalar_prefetch = 0 : i64, scratch_operands = 2 : i64, tpu.core_type = #tpu.core_type<tc>, window_params = [{transform_indices = @transform_0, window_bounds = array<i64: 1, 1, 1, 6, 16, 4>}, {transform_indices = @transform_1, window_bounds = array<i64: 1, 1, 1, 6, 16, 4>}, {transform_indices = @transform_2, window_bounds = array<i64: 1, 1, 1, 6, 16, 4>}, {pipeline_mode = #tpu.pipeline_mode<synchronous>, transform_indices = @transform_3, window_bounds = array<i64: 3, 36, 8>}, {pipeline_mode = #tpu.pipeline_mode<synchronous>, transform_indices = @transform_4, window_bounds = array<i64: 1, 8>}, {transform_indices = @transform_5, window_bounds = array<i64: 2, 1, 1, 8, 16, 8>}]} {
    %c0_i32 = arith.constant 0 : i32
    %0 = arith.cmpi sgt, %arg2, %c0_i32 : i32
    %c1_i32 = arith.constant 1 : i32
    %1 = arith.cmpi slt, %arg2, %c1_i32 : i32
    %cst = arith.constant 0.000000e+00 : f32
    %2 = vector.broadcast %cst : f32 to vector<10x1x4xf32>
    %c0 = arith.constant 0 : index
    %c0_0 = arith.constant 0 : index
    %c0_1 = arith.constant 0 : index
    %c0_2 = arith.constant 0 : index
    %c0_3 = arith.constant 0 : index
    %c0_4 = arith.constant 0 : index
    %3 = vector.load %arg3[%c0, %c0_0, %c0_1, %c0_2, %c0_3, %c0_4] : memref<1x1x1x6x16x4xf32, #tpu.memory_space<vmem>>, vector<1x1x1x6x16x4xf32>
    %4 = vector.shape_cast %3 : vector<1x1x1x6x16x4xf32> to vector<6x16x4xf32>
    %5 = vector.extract_strided_slice %4 {offsets = [0, 0, 0], sizes = [4, 16, 4], strides = [1, 1, 1]} : vector<6x16x4xf32> to vector<4x16x4xf32>
    %6 = vector.extract_strided_slice %4 {offsets = [1, 0, 0], sizes = [4, 16, 4], strides = [1, 1, 1]} : vector<6x16x4xf32> to vector<4x16x4xf32>
    %7 = vector.extract_strided_slice %4 {offsets = [2, 0, 0], sizes = [4, 16, 4], strides = [1, 1, 1]} : vector<6x16x4xf32> to vector<4x16x4xf32>
    %cst_5 = arith.constant 2.500000e-01 : f32
    %8 = vector.broadcast %cst_5 : f32 to vector<4x16x4xf32>
    %9 = arith.mulf %8, %5 : vector<4x16x4xf32>
    %cst_6 = arith.constant 7.500000e-01 : f32
    %10 = vector.broadcast %cst_6 : f32 to vector<4x16x4xf32>
    %11 = arith.mulf %10, %6 : vector<4x16x4xf32>
    %12 = arith.addf %9, %11 : vector<4x16x4xf32>
    %cst_7 = arith.constant 7.500000e-01 : f32
    %13 = vector.broadcast %cst_7 : f32 to vector<4x16x4xf32>
    %14 = arith.mulf %13, %6 : vector<4x16x4xf32>
    %cst_8 = arith.constant 2.500000e-01 : f32
    %15 = vector.broadcast %cst_8 : f32 to vector<4x16x4xf32>
    %16 = arith.mulf %15, %7 : vector<4x16x4xf32>
    %17 = arith.addf %14, %16 : vector<4x16x4xf32>
    %18 = vector.shape_cast %12 : vector<4x16x4xf32> to vector<4x1x16x4xf32>
    %19 = vector.shape_cast %17 : vector<4x16x4xf32> to vector<4x1x16x4xf32>
    %20 = tpu.concatenate %18, %19 in 1 : vector<4x1x16x4xf32>, vector<4x1x16x4xf32> -> vector<4x2x16x4xf32>
    %21 = vector.shape_cast %20 : vector<4x2x16x4xf32> to vector<8x16x4xf32>
    %22 = vector.extract_strided_slice %4 {offsets = [0, 0, 0], sizes = [1, 16, 4], strides = [1, 1, 1]} : vector<6x16x4xf32> to vector<1x16x4xf32>
    %cst_9 = arith.constant 7.500000e-01 : f32
    %23 = vector.broadcast %cst_9 : f32 to vector<1x16x4xf32>
    %24 = arith.mulf %23, %22 : vector<1x16x4xf32>
    %25 = vector.extract_strided_slice %4 {offsets = [1, 0, 0], sizes = [1, 16, 4], strides = [1, 1, 1]} : vector<6x16x4xf32> to vector<1x16x4xf32>
    %cst_10 = arith.constant 2.500000e-01 : f32
    %26 = vector.broadcast %cst_10 : f32 to vector<1x16x4xf32>
    %27 = arith.mulf %26, %25 : vector<1x16x4xf32>
    %28 = arith.addf %24, %27 : vector<1x16x4xf32>
    %29 = arith.extui %0 : i1 to i32
    %30 = arith.sitofp %29 : i32 to f32
    %31 = vector.broadcast %30 : f32 to vector<1x16x4xf32>
    %32 = arith.mulf %28, %31 : vector<1x16x4xf32>
    %33 = vector.extract_strided_slice %4 {offsets = [4, 0, 0], sizes = [1, 16, 4], strides = [1, 1, 1]} : vector<6x16x4xf32> to vector<1x16x4xf32>
    %cst_11 = arith.constant 2.500000e-01 : f32
    %34 = vector.broadcast %cst_11 : f32 to vector<1x16x4xf32>
    %35 = arith.mulf %34, %33 : vector<1x16x4xf32>
    %36 = vector.extract_strided_slice %4 {offsets = [5, 0, 0], sizes = [1, 16, 4], strides = [1, 1, 1]} : vector<6x16x4xf32> to vector<1x16x4xf32>
    %cst_12 = arith.constant 7.500000e-01 : f32
    %37 = vector.broadcast %cst_12 : f32 to vector<1x16x4xf32>
    %38 = arith.mulf %37, %36 : vector<1x16x4xf32>
    %39 = arith.addf %35, %38 : vector<1x16x4xf32>
    %40 = arith.extui %1 : i1 to i32
    %41 = arith.sitofp %40 : i32 to f32
    %42 = vector.broadcast %41 : f32 to vector<1x16x4xf32>
    %43 = arith.mulf %39, %42 : vector<1x16x4xf32>
    %44 = tpu.concatenate %32, %21, %43 in 0 : vector<1x16x4xf32>, vector<8x16x4xf32>, vector<1x16x4xf32> -> vector<10x16x4xf32>
    %45 = vector.extract_strided_slice %44 {offsets = [0, 0, 0], sizes = [10, 1, 4], strides = [1, 1, 1]} : vector<10x16x4xf32> to vector<10x1x4xf32>
    %46 = vector.extract_strided_slice %44 {offsets = [0, 0, 0], sizes = [10, 15, 4], strides = [1, 1, 1]} : vector<10x16x4xf32> to vector<10x15x4xf32>
    %47 = tpu.concatenate %45, %46 in 1 : vector<10x1x4xf32>, vector<10x15x4xf32> -> vector<10x16x4xf32>
    %48 = vector.extract_strided_slice %44 {offsets = [0, 1, 0], sizes = [10, 15, 4], strides = [1, 1, 1]} : vector<10x16x4xf32> to vector<10x15x4xf32>
    %49 = vector.extract_strided_slice %44 {offsets = [0, 15, 0], sizes = [10, 1, 4], strides = [1, 1, 1]} : vector<10x16x4xf32> to vector<10x1x4xf32>
    %50 = tpu.concatenate %48, %49 in 1 : vector<10x15x4xf32>, vector<10x1x4xf32> -> vector<10x16x4xf32>
    %cst_13 = arith.constant 2.500000e-01 : f32
    %51 = vector.broadcast %cst_13 : f32 to vector<10x16x4xf32>
    %52 = arith.mulf %51, %47 : vector<10x16x4xf32>
    %cst_14 = arith.constant 7.500000e-01 : f32
    %53 = vector.broadcast %cst_14 : f32 to vector<10x16x4xf32>
    %54 = arith.mulf %53, %44 : vector<10x16x4xf32>
    %55 = arith.addf %52, %54 : vector<10x16x4xf32>
    %cst_15 = arith.constant 7.500000e-01 : f32
    %56 = vector.broadcast %cst_15 : f32 to vector<10x16x4xf32>
    %57 = arith.mulf %56, %44 : vector<10x16x4xf32>
    %cst_16 = arith.constant 2.500000e-01 : f32
    %58 = vector.broadcast %cst_16 : f32 to vector<10x16x4xf32>
    %59 = arith.mulf %58, %50 : vector<10x16x4xf32>
    %60 = arith.addf %57, %59 : vector<10x16x4xf32>
    %61 = vector.extract_strided_slice %60 {offsets = [0, 0, 0], sizes = [10, 15, 4], strides = [1, 1, 1]} : vector<10x16x4xf32> to vector<10x15x4xf32>
    %62 = tpu.concatenate %2, %61 in 1 : vector<10x1x4xf32>, vector<10x15x4xf32> -> vector<10x16x4xf32>
    %63 = vector.extract_strided_slice %55 {offsets = [0, 1, 0], sizes = [10, 15, 4], strides = [1, 1, 1]} : vector<10x16x4xf32> to vector<10x15x4xf32>
    %64 = tpu.concatenate %63, %2 in 1 : vector<10x15x4xf32>, vector<10x1x4xf32> -> vector<10x16x4xf32>
    %65 = vector.extract_strided_slice %62 {offsets = [0, 0, 0], sizes = [8, 16, 4], strides = [1, 1, 1]} : vector<10x16x4xf32> to vector<8x16x4xf32>
    %c0_17 = arith.constant 0 : index
    %c0_18 = arith.constant 0 : index
    %c0_19 = arith.constant 0 : index
    %c0_20 = arith.constant 0 : index
    %66 = vector.load %arg9[%c0_17, %c0_18, %c0_19, %c0_20] : memref<2x8x16x36xf32, #tpu.memory_space<vmem>>, vector<1x8x16x4xf32>
    %67 = vector.shape_cast %66 : vector<1x8x16x4xf32> to vector<8x16x4xf32>
    %68 = vector.shape_cast %65 : vector<8x16x4xf32> to vector<1x8x16x4xf32>
    tpu.vector_store %arg9[%c0_17, %c0_18, %c0_19, %c0_20], %68 {strides = array<i32>} : memref<2x8x16x36xf32, #tpu.memory_space<vmem>>, vector<1x8x16x4xf32>,
    %69 = vector.extract_strided_slice %55 {offsets = [0, 0, 0], sizes = [8, 16, 4], strides = [1, 1, 1]} : vector<10x16x4xf32> to vector<8x16x4xf32>
    %c0_21 = arith.constant 0 : index
    %c0_22 = arith.constant 0 : index
    %c0_23 = arith.constant 0 : index
    %c4 = arith.constant 4 : index
    %70 = vector.load %arg9[%c0_21, %c0_22, %c0_23, %c4] : memref<2x8x16x36xf32, #tpu.memory_space<vmem>>, vector<1x8x16x4xf32>
    %71 = vector.shape_cast %70 : vector<1x8x16x4xf32> to vector<8x16x4xf32>
    %72 = vector.shape_cast %69 : vector<8x16x4xf32> to vector<1x8x16x4xf32>
    tpu.vector_store %arg9[%c0_21, %c0_22, %c0_23, %c4], %72 {strides = array<i32>} : memref<2x8x16x36xf32, #tpu.memory_space<vmem>>, vector<1x8x16x4xf32>,
    %73 = vector.extract_strided_slice %60 {offsets = [0, 0, 0], sizes = [8, 16, 4], strides = [1, 1, 1]} : vector<10x16x4xf32> to vector<8x16x4xf32>
    %c0_24 = arith.constant 0 : index
    %c0_25 = arith.constant 0 : index
    %c0_26 = arith.constant 0 : index
    %c8 = arith.constant 8 : index
    %74 = vector.load %arg9[%c0_24, %c0_25, %c0_26, %c8] : memref<2x8x16x36xf32, #tpu.memory_space<vmem>>, vector<1x8x16x4xf32>
    %75 = vector.shape_cast %74 : vector<1x8x16x4xf32> to vector<8x16x4xf32>
    %76 = vector.shape_cast %73 : vector<8x16x4xf32> to vector<1x8x16x4xf32>
    tpu.vector_store %arg9[%c0_24, %c0_25, %c0_26, %c8], %76 {strides = array<i32>} : memref<2x8x16x36xf32, #tpu.memory_space<vmem>>, vector<1x8x16x4xf32>,
    %77 = vector.extract_strided_slice %62 {offsets = [1, 0, 0], sizes = [8, 16, 4], strides = [1, 1, 1]} : vector<10x16x4xf32> to vector<8x16x4xf32>
    %c0_27 = arith.constant 0 : index
    %c0_28 = arith.constant 0 : index
    %c0_29 = arith.constant 0 : index
    %c12 = arith.constant 12 : index
    %78 = vector.load %arg9[%c0_27, %c0_28, %c0_29, %c12] : memref<2x8x16x36xf32, #tpu.memory_space<vmem>>, vector<1x8x16x4xf32>
    %79 = vector.shape_cast %78 : vector<1x8x16x4xf32> to vector<8x16x4xf32>
    %80 = vector.shape_cast %77 : vector<8x16x4xf32> to vector<1x8x16x4xf32>
    tpu.vector_store %arg9[%c0_27, %c0_28, %c0_29, %c12], %80 {strides = array<i32>} : memref<2x8x16x36xf32, #tpu.memory_space<vmem>>, vector<1x8x16x4xf32>,
    %81 = vector.extract_strided_slice %55 {offsets = [1, 0, 0], sizes = [8, 16, 4], strides = [1, 1, 1]} : vector<10x16x4xf32> to vector<8x16x4xf32>
    %c0_30 = arith.constant 0 : index
    %c0_31 = arith.constant 0 : index
    %c0_32 = arith.constant 0 : index
    %c16 = arith.constant 16 : index
    %82 = vector.load %arg9[%c0_30, %c0_31, %c0_32, %c16] : memref<2x8x16x36xf32, #tpu.memory_space<vmem>>, vector<1x8x16x4xf32>
    %83 = vector.shape_cast %82 : vector<1x8x16x4xf32> to vector<8x16x4xf32>
    %84 = vector.shape_cast %81 : vector<8x16x4xf32> to vector<1x8x16x4xf32>
    tpu.vector_store %arg9[%c0_30, %c0_31, %c0_32, %c16], %84 {strides = array<i32>} : memref<2x8x16x36xf32, #tpu.memory_space<vmem>>, vector<1x8x16x4xf32>,
    %85 = vector.extract_strided_slice %60 {offsets = [1, 0, 0], sizes = [8, 16, 4], strides = [1, 1, 1]} : vector<10x16x4xf32> to vector<8x16x4xf32>
    %c0_33 = arith.constant 0 : index
    %c0_34 = arith.constant 0 : index
    %c0_35 = arith.constant 0 : index
    %c20 = arith.constant 20 : index
    %86 = vector.load %arg9[%c0_33, %c0_34, %c0_35, %c20] : memref<2x8x16x36xf32, #tpu.memory_space<vmem>>, vector<1x8x16x4xf32>
    %87 = vector.shape_cast %86 : vector<1x8x16x4xf32> to vector<8x16x4xf32>
    %88 = vector.shape_cast %85 : vector<8x16x4xf32> to vector<1x8x16x4xf32>
    tpu.vector_store %arg9[%c0_33, %c0_34, %c0_35, %c20], %88 {strides = array<i32>} : memref<2x8x16x36xf32, #tpu.memory_space<vmem>>, vector<1x8x16x4xf32>,
    %89 = vector.extract_strided_slice %62 {offsets = [2, 0, 0], sizes = [8, 16, 4], strides = [1, 1, 1]} : vector<10x16x4xf32> to vector<8x16x4xf32>
    %c0_36 = arith.constant 0 : index
    %c0_37 = arith.constant 0 : index
    %c0_38 = arith.constant 0 : index
    %c24 = arith.constant 24 : index
    %90 = vector.load %arg9[%c0_36, %c0_37, %c0_38, %c24] : memref<2x8x16x36xf32, #tpu.memory_space<vmem>>, vector<1x8x16x4xf32>
    %91 = vector.shape_cast %90 : vector<1x8x16x4xf32> to vector<8x16x4xf32>
    %92 = vector.shape_cast %89 : vector<8x16x4xf32> to vector<1x8x16x4xf32>
    tpu.vector_store %arg9[%c0_36, %c0_37, %c0_38, %c24], %92 {strides = array<i32>} : memref<2x8x16x36xf32, #tpu.memory_space<vmem>>, vector<1x8x16x4xf32>,
    %93 = vector.extract_strided_slice %55 {offsets = [2, 0, 0], sizes = [8, 16, 4], strides = [1, 1, 1]} : vector<10x16x4xf32> to vector<8x16x4xf32>
    %c0_39 = arith.constant 0 : index
    %c0_40 = arith.constant 0 : index
    %c0_41 = arith.constant 0 : index
    %c28 = arith.constant 28 : index
    %94 = vector.load %arg9[%c0_39, %c0_40, %c0_41, %c28] : memref<2x8x16x36xf32, #tpu.memory_space<vmem>>, vector<1x8x16x4xf32>
    %95 = vector.shape_cast %94 : vector<1x8x16x4xf32> to vector<8x16x4xf32>
    %96 = vector.shape_cast %93 : vector<8x16x4xf32> to vector<1x8x16x4xf32>
    tpu.vector_store %arg9[%c0_39, %c0_40, %c0_41, %c28], %96 {strides = array<i32>} : memref<2x8x16x36xf32, #tpu.memory_space<vmem>>, vector<1x8x16x4xf32>,
    %97 = vector.extract_strided_slice %60 {offsets = [2, 0, 0], sizes = [8, 16, 4], strides = [1, 1, 1]} : vector<10x16x4xf32> to vector<8x16x4xf32>
    %c0_42 = arith.constant 0 : index
    %c0_43 = arith.constant 0 : index
    %c0_44 = arith.constant 0 : index
    %c32 = arith.constant 32 : index
    %98 = vector.load %arg9[%c0_42, %c0_43, %c0_44, %c32] : memref<2x8x16x36xf32, #tpu.memory_space<vmem>>, vector<1x8x16x4xf32>
    %99 = vector.shape_cast %98 : vector<1x8x16x4xf32> to vector<8x16x4xf32>
    %100 = vector.shape_cast %97 : vector<8x16x4xf32> to vector<1x8x16x4xf32>
    tpu.vector_store %arg9[%c0_42, %c0_43, %c0_44, %c32], %100 {strides = array<i32>} : memref<2x8x16x36xf32, #tpu.memory_space<vmem>>, vector<1x8x16x4xf32>,
    %101 = vector.extract_strided_slice %55 {offsets = [0, 0, 0], sizes = [8, 16, 4], strides = [1, 1, 1]} : vector<10x16x4xf32> to vector<8x16x4xf32>
    %c1 = arith.constant 1 : index
    %c0_45 = arith.constant 0 : index
    %c0_46 = arith.constant 0 : index
    %c0_47 = arith.constant 0 : index
    %102 = vector.load %arg9[%c1, %c0_45, %c0_46, %c0_47] : memref<2x8x16x36xf32, #tpu.memory_space<vmem>>, vector<1x8x16x4xf32>
    %103 = vector.shape_cast %102 : vector<1x8x16x4xf32> to vector<8x16x4xf32>
    %104 = vector.shape_cast %101 : vector<8x16x4xf32> to vector<1x8x16x4xf32>
    tpu.vector_store %arg9[%c1, %c0_45, %c0_46, %c0_47], %104 {strides = array<i32>} : memref<2x8x16x36xf32, #tpu.memory_space<vmem>>, vector<1x8x16x4xf32>,
    %105 = vector.extract_strided_slice %60 {offsets = [0, 0, 0], sizes = [8, 16, 4], strides = [1, 1, 1]} : vector<10x16x4xf32> to vector<8x16x4xf32>
    %c1_48 = arith.constant 1 : index
    %c0_49 = arith.constant 0 : index
    %c0_50 = arith.constant 0 : index
    %c4_51 = arith.constant 4 : index
    %106 = vector.load %arg9[%c1_48, %c0_49, %c0_50, %c4_51] : memref<2x8x16x36xf32, #tpu.memory_space<vmem>>, vector<1x8x16x4xf32>
    %107 = vector.shape_cast %106 : vector<1x8x16x4xf32> to vector<8x16x4xf32>
    %108 = vector.shape_cast %105 : vector<8x16x4xf32> to vector<1x8x16x4xf32>
    tpu.vector_store %arg9[%c1_48, %c0_49, %c0_50, %c4_51], %108 {strides = array<i32>} : memref<2x8x16x36xf32, #tpu.memory_space<vmem>>, vector<1x8x16x4xf32>,
    %109 = vector.extract_strided_slice %64 {offsets = [0, 0, 0], sizes = [8, 16, 4], strides = [1, 1, 1]} : vector<10x16x4xf32> to vector<8x16x4xf32>
    %c1_52 = arith.constant 1 : index
    %c0_53 = arith.constant 0 : index
    %c0_54 = arith.constant 0 : index
    %c8_55 = arith.constant 8 : index
    %110 = vector.load %arg9[%c1_52, %c0_53, %c0_54, %c8_55] : memref<2x8x16x36xf32, #tpu.memory_space<vmem>>, vector<1x8x16x4xf32>
    %111 = vector.shape_cast %110 : vector<1x8x16x4xf32> to vector<8x16x4xf32>
    %112 = vector.shape_cast %109 : vector<8x16x4xf32> to vector<1x8x16x4xf32>
    tpu.vector_store %arg9[%c1_52, %c0_53, %c0_54, %c8_55], %112 {strides = array<i32>} : memref<2x8x16x36xf32, #tpu.memory_space<vmem>>, vector<1x8x16x4xf32>,
    %113 = vector.extract_strided_slice %55 {offsets = [1, 0, 0], sizes = [8, 16, 4], strides = [1, 1, 1]} : vector<10x16x4xf32> to vector<8x16x4xf32>
    %c1_56 = arith.constant 1 : index
    %c0_57 = arith.constant 0 : index
    %c0_58 = arith.constant 0 : index
    %c12_59 = arith.constant 12 : index
    %114 = vector.load %arg9[%c1_56, %c0_57, %c0_58, %c12_59] : memref<2x8x16x36xf32, #tpu.memory_space<vmem>>, vector<1x8x16x4xf32>
    %115 = vector.shape_cast %114 : vector<1x8x16x4xf32> to vector<8x16x4xf32>
    %116 = vector.shape_cast %113 : vector<8x16x4xf32> to vector<1x8x16x4xf32>
    tpu.vector_store %arg9[%c1_56, %c0_57, %c0_58, %c12_59], %116 {strides = array<i32>} : memref<2x8x16x36xf32, #tpu.memory_space<vmem>>, vector<1x8x16x4xf32>,
    %117 = vector.extract_strided_slice %60 {offsets = [1, 0, 0], sizes = [8, 16, 4], strides = [1, 1, 1]} : vector<10x16x4xf32> to vector<8x16x4xf32>
    %c1_60 = arith.constant 1 : index
    %c0_61 = arith.constant 0 : index
    %c0_62 = arith.constant 0 : index
    %c16_63 = arith.constant 16 : index
    %118 = vector.load %arg9[%c1_60, %c0_61, %c0_62, %c16_63] : memref<2x8x16x36xf32, #tpu.memory_space<vmem>>, vector<1x8x16x4xf32>
    %119 = vector.shape_cast %118 : vector<1x8x16x4xf32> to vector<8x16x4xf32>
    %120 = vector.shape_cast %117 : vector<8x16x4xf32> to vector<1x8x16x4xf32>
    tpu.vector_store %arg9[%c1_60, %c0_61, %c0_62, %c16_63], %120 {strides = array<i32>} : memref<2x8x16x36xf32, #tpu.memory_space<vmem>>, vector<1x8x16x4xf32>,
    %121 = vector.extract_strided_slice %64 {offsets = [1, 0, 0], sizes = [8, 16, 4], strides = [1, 1, 1]} : vector<10x16x4xf32> to vector<8x16x4xf32>
    %c1_64 = arith.constant 1 : index
    %c0_65 = arith.constant 0 : index
    %c0_66 = arith.constant 0 : index
    %c20_67 = arith.constant 20 : index
    %122 = vector.load %arg9[%c1_64, %c0_65, %c0_66, %c20_67] : memref<2x8x16x36xf32, #tpu.memory_space<vmem>>, vector<1x8x16x4xf32>
    %123 = vector.shape_cast %122 : vector<1x8x16x4xf32> to vector<8x16x4xf32>
    %124 = vector.shape_cast %121 : vector<8x16x4xf32> to vector<1x8x16x4xf32>
    tpu.vector_store %arg9[%c1_64, %c0_65, %c0_66, %c20_67], %124 {strides = array<i32>} : memref<2x8x16x36xf32, #tpu.memory_space<vmem>>, vector<1x8x16x4xf32>,
    %125 = vector.extract_strided_slice %55 {offsets = [2, 0, 0], sizes = [8, 16, 4], strides = [1, 1, 1]} : vector<10x16x4xf32> to vector<8x16x4xf32>
    %c1_68 = arith.constant 1 : index
    %c0_69 = arith.constant 0 : index
    %c0_70 = arith.constant 0 : index
    %c24_71 = arith.constant 24 : index
    %126 = vector.load %arg9[%c1_68, %c0_69, %c0_70, %c24_71] : memref<2x8x16x36xf32, #tpu.memory_space<vmem>>, vector<1x8x16x4xf32>
    %127 = vector.shape_cast %126 : vector<1x8x16x4xf32> to vector<8x16x4xf32>
    %128 = vector.shape_cast %125 : vector<8x16x4xf32> to vector<1x8x16x4xf32>
    tpu.vector_store %arg9[%c1_68, %c0_69, %c0_70, %c24_71], %128 {strides = array<i32>} : memref<2x8x16x36xf32, #tpu.memory_space<vmem>>, vector<1x8x16x4xf32>,
    %129 = vector.extract_strided_slice %60 {offsets = [2, 0, 0], sizes = [8, 16, 4], strides = [1, 1, 1]} : vector<10x16x4xf32> to vector<8x16x4xf32>
    %c1_72 = arith.constant 1 : index
    %c0_73 = arith.constant 0 : index
    %c0_74 = arith.constant 0 : index
    %c28_75 = arith.constant 28 : index
    %130 = vector.load %arg9[%c1_72, %c0_73, %c0_74, %c28_75] : memref<2x8x16x36xf32, #tpu.memory_space<vmem>>, vector<1x8x16x4xf32>
    %131 = vector.shape_cast %130 : vector<1x8x16x4xf32> to vector<8x16x4xf32>
    %132 = vector.shape_cast %129 : vector<8x16x4xf32> to vector<1x8x16x4xf32>
    tpu.vector_store %arg9[%c1_72, %c0_73, %c0_74, %c28_75], %132 {strides = array<i32>} : memref<2x8x16x36xf32, #tpu.memory_space<vmem>>, vector<1x8x16x4xf32>,
    %133 = vector.extract_strided_slice %64 {offsets = [2, 0, 0], sizes = [8, 16, 4], strides = [1, 1, 1]} : vector<10x16x4xf32> to vector<8x16x4xf32>
    %c1_76 = arith.constant 1 : index
    %c0_77 = arith.constant 0 : index
    %c0_78 = arith.constant 0 : index
    %c32_79 = arith.constant 32 : index
    %134 = vector.load %arg9[%c1_76, %c0_77, %c0_78, %c32_79] : memref<2x8x16x36xf32, #tpu.memory_space<vmem>>, vector<1x8x16x4xf32>
    %135 = vector.shape_cast %134 : vector<1x8x16x4xf32> to vector<8x16x4xf32>
    %136 = vector.shape_cast %133 : vector<8x16x4xf32> to vector<1x8x16x4xf32>
    tpu.vector_store %arg9[%c1_76, %c0_77, %c0_78, %c32_79], %136 {strides = array<i32>} : memref<2x8x16x36xf32, #tpu.memory_space<vmem>>, vector<1x8x16x4xf32>,
    %c0_80 = arith.constant 0 : index
    %c0_81 = arith.constant 0 : index
    %c0_82 = arith.constant 0 : index
    %c0_83 = arith.constant 0 : index
    %137 = vector.load %arg9[%c0_80, %c0_81, %c0_82, %c0_83] : memref<2x8x16x36xf32, #tpu.memory_space<vmem>>, vector<2x8x16x36xf32>
    %138 = vector.shape_cast %137 : vector<2x8x16x36xf32> to vector<256x36xf32>
    %c0_84 = arith.constant 0 : index
    %c0_85 = arith.constant 0 : index
    %c0_86 = arith.constant 0 : index
    %139 = vector.load %arg6[%c0_84, %c0_85, %c0_86] : memref<3x36x8xf32, #tpu.memory_space<vmem>>, vector<1x36x8xf32>
    %140 = vector.shape_cast %139 : vector<1x36x8xf32> to vector<36x8xf32>
    %cst_87 = arith.constant dense<0.000000e+00> : vector<256x8xf32>
    %141 = tpu.matmul %138, %140, %cst_87 {dimension_numbers = #tpu.dot_dimension_numbers<[1], [0], [0], [1], [0, 0, 1, 1], [], []>} : vector<256x36xf32>, vector<36x8xf32>, vector<256x8xf32> -> vector<256x8xf32>
    %c0_88 = arith.constant 0 : index
    %c0_89 = arith.constant 0 : index
    %142 = vector.load %arg7[%c0_88, %c0_89] : memref<1x8xf32, #tpu.memory_space<vmem>>, vector<1x8xf32>
    %143 = vector.shape_cast %142 : vector<1x8xf32> to vector<8xf32>
    %144 = vector.shape_cast %143 : vector<8xf32> to vector<1x8xf32>
    %145 = vector.broadcast %144 : vector<1x8xf32> to vector<256x8xf32>
    %146 = arith.addf %141, %145 : vector<256x8xf32>
    %c0_90 = arith.constant 0 : index
    %c0_91 = arith.constant 0 : index
    %147 = vector.load %arg10[%c0_90, %c0_91] : memref<256x8xf32, #tpu.memory_space<vmem>>, vector<256x8xf32>
    tpu.vector_store %arg10[%c0_90, %c0_91], %146 {strides = array<i32>} : memref<256x8xf32, #tpu.memory_space<vmem>>, vector<256x8xf32>,
    %c0_92 = arith.constant 0 : index
    %c0_93 = arith.constant 0 : index
    %c0_94 = arith.constant 0 : index
    %c0_95 = arith.constant 0 : index
    %c0_96 = arith.constant 0 : index
    %c0_97 = arith.constant 0 : index
    %148 = vector.load %arg4[%c0_92, %c0_93, %c0_94, %c0_95, %c0_96, %c0_97] : memref<1x1x1x6x16x4xf32, #tpu.memory_space<vmem>>, vector<1x1x1x6x16x4xf32>
    %149 = vector.shape_cast %148 : vector<1x1x1x6x16x4xf32> to vector<6x16x4xf32>
    %150 = vector.extract_strided_slice %149 {offsets = [0, 0, 0], sizes = [4, 16, 4], strides = [1, 1, 1]} : vector<6x16x4xf32> to vector<4x16x4xf32>
    %151 = vector.extract_strided_slice %149 {offsets = [1, 0, 0], sizes = [4, 16, 4], strides = [1, 1, 1]} : vector<6x16x4xf32> to vector<4x16x4xf32>
    %152 = vector.extract_strided_slice %149 {offsets = [2, 0, 0], sizes = [4, 16, 4], strides = [1, 1, 1]} : vector<6x16x4xf32> to vector<4x16x4xf32>
    %cst_98 = arith.constant 2.500000e-01 : f32
    %153 = vector.broadcast %cst_98 : f32 to vector<4x16x4xf32>
    %154 = arith.mulf %153, %150 : vector<4x16x4xf32>
    %cst_99 = arith.constant 7.500000e-01 : f32
    %155 = vector.broadcast %cst_99 : f32 to vector<4x16x4xf32>
    %156 = arith.mulf %155, %151 : vector<4x16x4xf32>
    %157 = arith.addf %154, %156 : vector<4x16x4xf32>
    %cst_100 = arith.constant 7.500000e-01 : f32
    %158 = vector.broadcast %cst_100 : f32 to vector<4x16x4xf32>
    %159 = arith.mulf %158, %151 : vector<4x16x4xf32>
    %cst_101 = arith.constant 2.500000e-01 : f32
    %160 = vector.broadcast %cst_101 : f32 to vector<4x16x4xf32>
    %161 = arith.mulf %160, %152 : vector<4x16x4xf32>
    %162 = arith.addf %159, %161 : vector<4x16x4xf32>
    %163 = vector.shape_cast %157 : vector<4x16x4xf32> to vector<4x1x16x4xf32>
    %164 = vector.shape_cast %162 : vector<4x16x4xf32> to vector<4x1x16x4xf32>
    %165 = tpu.concatenate %163, %164 in 1 : vector<4x1x16x4xf32>, vector<4x1x16x4xf32> -> vector<4x2x16x4xf32>
    %166 = vector.shape_cast %165 : vector<4x2x16x4xf32> to vector<8x16x4xf32>
    %167 = vector.extract_strided_slice %149 {offsets = [0, 0, 0], sizes = [1, 16, 4], strides = [1, 1, 1]} : vector<6x16x4xf32> to vector<1x16x4xf32>
    %cst_102 = arith.constant 7.500000e-01 : f32
    %168 = vector.broadcast %cst_102 : f32 to vector<1x16x4xf32>
    %169 = arith.mulf %168, %167 : vector<1x16x4xf32>
    %170 = vector.extract_strided_slice %149 {offsets = [1, 0, 0], sizes = [1, 16, 4], strides = [1, 1, 1]} : vector<6x16x4xf32> to vector<1x16x4xf32>
    %cst_103 = arith.constant 2.500000e-01 : f32
    %171 = vector.broadcast %cst_103 : f32 to vector<1x16x4xf32>
    %172 = arith.mulf %171, %170 : vector<1x16x4xf32>
    %173 = arith.addf %169, %172 : vector<1x16x4xf32>
    %174 = arith.extui %0 : i1 to i32
    %175 = arith.sitofp %174 : i32 to f32
    %176 = vector.broadcast %175 : f32 to vector<1x16x4xf32>
    %177 = arith.mulf %173, %176 : vector<1x16x4xf32>
    %178 = vector.extract_strided_slice %149 {offsets = [4, 0, 0], sizes = [1, 16, 4], strides = [1, 1, 1]} : vector<6x16x4xf32> to vector<1x16x4xf32>
    %cst_104 = arith.constant 2.500000e-01 : f32
    %179 = vector.broadcast %cst_104 : f32 to vector<1x16x4xf32>
    %180 = arith.mulf %179, %178 : vector<1x16x4xf32>
    %181 = vector.extract_strided_slice %149 {offsets = [5, 0, 0], sizes = [1, 16, 4], strides = [1, 1, 1]} : vector<6x16x4xf32> to vector<1x16x4xf32>
    %cst_105 = arith.constant 7.500000e-01 : f32
    %182 = vector.broadcast %cst_105 : f32 to vector<1x16x4xf32>
    %183 = arith.mulf %182, %181 : vector<1x16x4xf32>
    %184 = arith.addf %180, %183 : vector<1x16x4xf32>
    %185 = arith.extui %1 : i1 to i32
    %186 = arith.sitofp %185 : i32 to f32
    %187 = vector.broadcast %186 : f32 to vector<1x16x4xf32>
    %188 = arith.mulf %184, %187 : vector<1x16x4xf32>
    %189 = tpu.concatenate %177, %166, %188 in 0 : vector<1x16x4xf32>, vector<8x16x4xf32>, vector<1x16x4xf32> -> vector<10x16x4xf32>
    %190 = vector.extract_strided_slice %189 {offsets = [0, 0, 0], sizes = [10, 1, 4], strides = [1, 1, 1]} : vector<10x16x4xf32> to vector<10x1x4xf32>
    %191 = vector.extract_strided_slice %189 {offsets = [0, 0, 0], sizes = [10, 15, 4], strides = [1, 1, 1]} : vector<10x16x4xf32> to vector<10x15x4xf32>
    %192 = tpu.concatenate %190, %191 in 1 : vector<10x1x4xf32>, vector<10x15x4xf32> -> vector<10x16x4xf32>
    %193 = vector.extract_strided_slice %189 {offsets = [0, 1, 0], sizes = [10, 15, 4], strides = [1, 1, 1]} : vector<10x16x4xf32> to vector<10x15x4xf32>
    %194 = vector.extract_strided_slice %189 {offsets = [0, 15, 0], sizes = [10, 1, 4], strides = [1, 1, 1]} : vector<10x16x4xf32> to vector<10x1x4xf32>
    %195 = tpu.concatenate %193, %194 in 1 : vector<10x15x4xf32>, vector<10x1x4xf32> -> vector<10x16x4xf32>
    %cst_106 = arith.constant 2.500000e-01 : f32
    %196 = vector.broadcast %cst_106 : f32 to vector<10x16x4xf32>
    %197 = arith.mulf %196, %192 : vector<10x16x4xf32>
    %cst_107 = arith.constant 7.500000e-01 : f32
    %198 = vector.broadcast %cst_107 : f32 to vector<10x16x4xf32>
    %199 = arith.mulf %198, %189 : vector<10x16x4xf32>
    %200 = arith.addf %197, %199 : vector<10x16x4xf32>
    %cst_108 = arith.constant 7.500000e-01 : f32
    %201 = vector.broadcast %cst_108 : f32 to vector<10x16x4xf32>
    %202 = arith.mulf %201, %189 : vector<10x16x4xf32>
    %cst_109 = arith.constant 2.500000e-01 : f32
    %203 = vector.broadcast %cst_109 : f32 to vector<10x16x4xf32>
    %204 = arith.mulf %203, %195 : vector<10x16x4xf32>
    %205 = arith.addf %202, %204 : vector<10x16x4xf32>
    %206 = vector.extract_strided_slice %205 {offsets = [0, 0, 0], sizes = [10, 15, 4], strides = [1, 1, 1]} : vector<10x16x4xf32> to vector<10x15x4xf32>
    %207 = tpu.concatenate %2, %206 in 1 : vector<10x1x4xf32>, vector<10x15x4xf32> -> vector<10x16x4xf32>
    %208 = vector.extract_strided_slice %200 {offsets = [0, 1, 0], sizes = [10, 15, 4], strides = [1, 1, 1]} : vector<10x16x4xf32> to vector<10x15x4xf32>
    %209 = tpu.concatenate %208, %2 in 1 : vector<10x15x4xf32>, vector<10x1x4xf32> -> vector<10x16x4xf32>
    %210 = vector.extract_strided_slice %207 {offsets = [0, 0, 0], sizes = [8, 16, 4], strides = [1, 1, 1]} : vector<10x16x4xf32> to vector<8x16x4xf32>
    %c0_110 = arith.constant 0 : index
    %c0_111 = arith.constant 0 : index
    %c0_112 = arith.constant 0 : index
    %c0_113 = arith.constant 0 : index
    %211 = vector.load %arg9[%c0_110, %c0_111, %c0_112, %c0_113] : memref<2x8x16x36xf32, #tpu.memory_space<vmem>>, vector<1x8x16x4xf32>
    %212 = vector.shape_cast %211 : vector<1x8x16x4xf32> to vector<8x16x4xf32>
    %213 = vector.shape_cast %210 : vector<8x16x4xf32> to vector<1x8x16x4xf32>
    tpu.vector_store %arg9[%c0_110, %c0_111, %c0_112, %c0_113], %213 {strides = array<i32>} : memref<2x8x16x36xf32, #tpu.memory_space<vmem>>, vector<1x8x16x4xf32>,
    %214 = vector.extract_strided_slice %200 {offsets = [0, 0, 0], sizes = [8, 16, 4], strides = [1, 1, 1]} : vector<10x16x4xf32> to vector<8x16x4xf32>
    %c0_114 = arith.constant 0 : index
    %c0_115 = arith.constant 0 : index
    %c0_116 = arith.constant 0 : index
    %c4_117 = arith.constant 4 : index
    %215 = vector.load %arg9[%c0_114, %c0_115, %c0_116, %c4_117] : memref<2x8x16x36xf32, #tpu.memory_space<vmem>>, vector<1x8x16x4xf32>
    %216 = vector.shape_cast %215 : vector<1x8x16x4xf32> to vector<8x16x4xf32>
    %217 = vector.shape_cast %214 : vector<8x16x4xf32> to vector<1x8x16x4xf32>
    tpu.vector_store %arg9[%c0_114, %c0_115, %c0_116, %c4_117], %217 {strides = array<i32>} : memref<2x8x16x36xf32, #tpu.memory_space<vmem>>, vector<1x8x16x4xf32>,
    %218 = vector.extract_strided_slice %205 {offsets = [0, 0, 0], sizes = [8, 16, 4], strides = [1, 1, 1]} : vector<10x16x4xf32> to vector<8x16x4xf32>
    %c0_118 = arith.constant 0 : index
    %c0_119 = arith.constant 0 : index
    %c0_120 = arith.constant 0 : index
    %c8_121 = arith.constant 8 : index
    %219 = vector.load %arg9[%c0_118, %c0_119, %c0_120, %c8_121] : memref<2x8x16x36xf32, #tpu.memory_space<vmem>>, vector<1x8x16x4xf32>
    %220 = vector.shape_cast %219 : vector<1x8x16x4xf32> to vector<8x16x4xf32>
    %221 = vector.shape_cast %218 : vector<8x16x4xf32> to vector<1x8x16x4xf32>
    tpu.vector_store %arg9[%c0_118, %c0_119, %c0_120, %c8_121], %221 {strides = array<i32>} : memref<2x8x16x36xf32, #tpu.memory_space<vmem>>, vector<1x8x16x4xf32>,
    %222 = vector.extract_strided_slice %207 {offsets = [1, 0, 0], sizes = [8, 16, 4], strides = [1, 1, 1]} : vector<10x16x4xf32> to vector<8x16x4xf32>
    %c0_122 = arith.constant 0 : index
    %c0_123 = arith.constant 0 : index
    %c0_124 = arith.constant 0 : index
    %c12_125 = arith.constant 12 : index
    %223 = vector.load %arg9[%c0_122, %c0_123, %c0_124, %c12_125] : memref<2x8x16x36xf32, #tpu.memory_space<vmem>>, vector<1x8x16x4xf32>
    %224 = vector.shape_cast %223 : vector<1x8x16x4xf32> to vector<8x16x4xf32>
    %225 = vector.shape_cast %222 : vector<8x16x4xf32> to vector<1x8x16x4xf32>
    tpu.vector_store %arg9[%c0_122, %c0_123, %c0_124, %c12_125], %225 {strides = array<i32>} : memref<2x8x16x36xf32, #tpu.memory_space<vmem>>, vector<1x8x16x4xf32>,
    %226 = vector.extract_strided_slice %200 {offsets = [1, 0, 0], sizes = [8, 16, 4], strides = [1, 1, 1]} : vector<10x16x4xf32> to vector<8x16x4xf32>
    %c0_126 = arith.constant 0 : index
    %c0_127 = arith.constant 0 : index
    %c0_128 = arith.constant 0 : index
    %c16_129 = arith.constant 16 : index
    %227 = vector.load %arg9[%c0_126, %c0_127, %c0_128, %c16_129] : memref<2x8x16x36xf32, #tpu.memory_space<vmem>>, vector<1x8x16x4xf32>
    %228 = vector.shape_cast %227 : vector<1x8x16x4xf32> to vector<8x16x4xf32>
    %229 = vector.shape_cast %226 : vector<8x16x4xf32> to vector<1x8x16x4xf32>
    tpu.vector_store %arg9[%c0_126, %c0_127, %c0_128, %c16_129], %229 {strides = array<i32>} : memref<2x8x16x36xf32, #tpu.memory_space<vmem>>, vector<1x8x16x4xf32>,
    %230 = vector.extract_strided_slice %205 {offsets = [1, 0, 0], sizes = [8, 16, 4], strides = [1, 1, 1]} : vector<10x16x4xf32> to vector<8x16x4xf32>
    %c0_130 = arith.constant 0 : index
    %c0_131 = arith.constant 0 : index
    %c0_132 = arith.constant 0 : index
    %c20_133 = arith.constant 20 : index
    %231 = vector.load %arg9[%c0_130, %c0_131, %c0_132, %c20_133] : memref<2x8x16x36xf32, #tpu.memory_space<vmem>>, vector<1x8x16x4xf32>
    %232 = vector.shape_cast %231 : vector<1x8x16x4xf32> to vector<8x16x4xf32>
    %233 = vector.shape_cast %230 : vector<8x16x4xf32> to vector<1x8x16x4xf32>
    tpu.vector_store %arg9[%c0_130, %c0_131, %c0_132, %c20_133], %233 {strides = array<i32>} : memref<2x8x16x36xf32, #tpu.memory_space<vmem>>, vector<1x8x16x4xf32>,
    %234 = vector.extract_strided_slice %207 {offsets = [2, 0, 0], sizes = [8, 16, 4], strides = [1, 1, 1]} : vector<10x16x4xf32> to vector<8x16x4xf32>
    %c0_134 = arith.constant 0 : index
    %c0_135 = arith.constant 0 : index
    %c0_136 = arith.constant 0 : index
    %c24_137 = arith.constant 24 : index
    %235 = vector.load %arg9[%c0_134, %c0_135, %c0_136, %c24_137] : memref<2x8x16x36xf32, #tpu.memory_space<vmem>>, vector<1x8x16x4xf32>
    %236 = vector.shape_cast %235 : vector<1x8x16x4xf32> to vector<8x16x4xf32>
    %237 = vector.shape_cast %234 : vector<8x16x4xf32> to vector<1x8x16x4xf32>
    tpu.vector_store %arg9[%c0_134, %c0_135, %c0_136, %c24_137], %237 {strides = array<i32>} : memref<2x8x16x36xf32, #tpu.memory_space<vmem>>, vector<1x8x16x4xf32>,
    %238 = vector.extract_strided_slice %200 {offsets = [2, 0, 0], sizes = [8, 16, 4], strides = [1, 1, 1]} : vector<10x16x4xf32> to vector<8x16x4xf32>
    %c0_138 = arith.constant 0 : index
    %c0_139 = arith.constant 0 : index
    %c0_140 = arith.constant 0 : index
    %c28_141 = arith.constant 28 : index
    %239 = vector.load %arg9[%c0_138, %c0_139, %c0_140, %c28_141] : memref<2x8x16x36xf32, #tpu.memory_space<vmem>>, vector<1x8x16x4xf32>
    %240 = vector.shape_cast %239 : vector<1x8x16x4xf32> to vector<8x16x4xf32>
    %241 = vector.shape_cast %238 : vector<8x16x4xf32> to vector<1x8x16x4xf32>
    tpu.vector_store %arg9[%c0_138, %c0_139, %c0_140, %c28_141], %241 {strides = array<i32>} : memref<2x8x16x36xf32, #tpu.memory_space<vmem>>, vector<1x8x16x4xf32>,
    %242 = vector.extract_strided_slice %205 {offsets = [2, 0, 0], sizes = [8, 16, 4], strides = [1, 1, 1]} : vector<10x16x4xf32> to vector<8x16x4xf32>
    %c0_142 = arith.constant 0 : index
    %c0_143 = arith.constant 0 : index
    %c0_144 = arith.constant 0 : index
    %c32_145 = arith.constant 32 : index
    %243 = vector.load %arg9[%c0_142, %c0_143, %c0_144, %c32_145] : memref<2x8x16x36xf32, #tpu.memory_space<vmem>>, vector<1x8x16x4xf32>
    %244 = vector.shape_cast %243 : vector<1x8x16x4xf32> to vector<8x16x4xf32>
    %245 = vector.shape_cast %242 : vector<8x16x4xf32> to vector<1x8x16x4xf32>
    tpu.vector_store %arg9[%c0_142, %c0_143, %c0_144, %c32_145], %245 {strides = array<i32>} : memref<2x8x16x36xf32, #tpu.memory_space<vmem>>, vector<1x8x16x4xf32>,
    %246 = vector.extract_strided_slice %200 {offsets = [0, 0, 0], sizes = [8, 16, 4], strides = [1, 1, 1]} : vector<10x16x4xf32> to vector<8x16x4xf32>
    %c1_146 = arith.constant 1 : index
    %c0_147 = arith.constant 0 : index
    %c0_148 = arith.constant 0 : index
    %c0_149 = arith.constant 0 : index
    %247 = vector.load %arg9[%c1_146, %c0_147, %c0_148, %c0_149] : memref<2x8x16x36xf32, #tpu.memory_space<vmem>>, vector<1x8x16x4xf32>
    %248 = vector.shape_cast %247 : vector<1x8x16x4xf32> to vector<8x16x4xf32>
    %249 = vector.shape_cast %246 : vector<8x16x4xf32> to vector<1x8x16x4xf32>
    tpu.vector_store %arg9[%c1_146, %c0_147, %c0_148, %c0_149], %249 {strides = array<i32>} : memref<2x8x16x36xf32, #tpu.memory_space<vmem>>, vector<1x8x16x4xf32>,
    %250 = vector.extract_strided_slice %205 {offsets = [0, 0, 0], sizes = [8, 16, 4], strides = [1, 1, 1]} : vector<10x16x4xf32> to vector<8x16x4xf32>
    %c1_150 = arith.constant 1 : index
    %c0_151 = arith.constant 0 : index
    %c0_152 = arith.constant 0 : index
    %c4_153 = arith.constant 4 : index
    %251 = vector.load %arg9[%c1_150, %c0_151, %c0_152, %c4_153] : memref<2x8x16x36xf32, #tpu.memory_space<vmem>>, vector<1x8x16x4xf32>
    %252 = vector.shape_cast %251 : vector<1x8x16x4xf32> to vector<8x16x4xf32>
    %253 = vector.shape_cast %250 : vector<8x16x4xf32> to vector<1x8x16x4xf32>
    tpu.vector_store %arg9[%c1_150, %c0_151, %c0_152, %c4_153], %253 {strides = array<i32>} : memref<2x8x16x36xf32, #tpu.memory_space<vmem>>, vector<1x8x16x4xf32>,
    %254 = vector.extract_strided_slice %209 {offsets = [0, 0, 0], sizes = [8, 16, 4], strides = [1, 1, 1]} : vector<10x16x4xf32> to vector<8x16x4xf32>
    %c1_154 = arith.constant 1 : index
    %c0_155 = arith.constant 0 : index
    %c0_156 = arith.constant 0 : index
    %c8_157 = arith.constant 8 : index
    %255 = vector.load %arg9[%c1_154, %c0_155, %c0_156, %c8_157] : memref<2x8x16x36xf32, #tpu.memory_space<vmem>>, vector<1x8x16x4xf32>
    %256 = vector.shape_cast %255 : vector<1x8x16x4xf32> to vector<8x16x4xf32>
    %257 = vector.shape_cast %254 : vector<8x16x4xf32> to vector<1x8x16x4xf32>
    tpu.vector_store %arg9[%c1_154, %c0_155, %c0_156, %c8_157], %257 {strides = array<i32>} : memref<2x8x16x36xf32, #tpu.memory_space<vmem>>, vector<1x8x16x4xf32>,
    %258 = vector.extract_strided_slice %200 {offsets = [1, 0, 0], sizes = [8, 16, 4], strides = [1, 1, 1]} : vector<10x16x4xf32> to vector<8x16x4xf32>
    %c1_158 = arith.constant 1 : index
    %c0_159 = arith.constant 0 : index
    %c0_160 = arith.constant 0 : index
    %c12_161 = arith.constant 12 : index
    %259 = vector.load %arg9[%c1_158, %c0_159, %c0_160, %c12_161] : memref<2x8x16x36xf32, #tpu.memory_space<vmem>>, vector<1x8x16x4xf32>
    %260 = vector.shape_cast %259 : vector<1x8x16x4xf32> to vector<8x16x4xf32>
    %261 = vector.shape_cast %258 : vector<8x16x4xf32> to vector<1x8x16x4xf32>
    tpu.vector_store %arg9[%c1_158, %c0_159, %c0_160, %c12_161], %261 {strides = array<i32>} : memref<2x8x16x36xf32, #tpu.memory_space<vmem>>, vector<1x8x16x4xf32>,
    %262 = vector.extract_strided_slice %205 {offsets = [1, 0, 0], sizes = [8, 16, 4], strides = [1, 1, 1]} : vector<10x16x4xf32> to vector<8x16x4xf32>
    %c1_162 = arith.constant 1 : index
    %c0_163 = arith.constant 0 : index
    %c0_164 = arith.constant 0 : index
    %c16_165 = arith.constant 16 : index
    %263 = vector.load %arg9[%c1_162, %c0_163, %c0_164, %c16_165] : memref<2x8x16x36xf32, #tpu.memory_space<vmem>>, vector<1x8x16x4xf32>
    %264 = vector.shape_cast %263 : vector<1x8x16x4xf32> to vector<8x16x4xf32>
    %265 = vector.shape_cast %262 : vector<8x16x4xf32> to vector<1x8x16x4xf32>
    tpu.vector_store %arg9[%c1_162, %c0_163, %c0_164, %c16_165], %265 {strides = array<i32>} : memref<2x8x16x36xf32, #tpu.memory_space<vmem>>, vector<1x8x16x4xf32>,
    %266 = vector.extract_strided_slice %209 {offsets = [1, 0, 0], sizes = [8, 16, 4], strides = [1, 1, 1]} : vector<10x16x4xf32> to vector<8x16x4xf32>
    %c1_166 = arith.constant 1 : index
    %c0_167 = arith.constant 0 : index
    %c0_168 = arith.constant 0 : index
    %c20_169 = arith.constant 20 : index
    %267 = vector.load %arg9[%c1_166, %c0_167, %c0_168, %c20_169] : memref<2x8x16x36xf32, #tpu.memory_space<vmem>>, vector<1x8x16x4xf32>
    %268 = vector.shape_cast %267 : vector<1x8x16x4xf32> to vector<8x16x4xf32>
    %269 = vector.shape_cast %266 : vector<8x16x4xf32> to vector<1x8x16x4xf32>
    tpu.vector_store %arg9[%c1_166, %c0_167, %c0_168, %c20_169], %269 {strides = array<i32>} : memref<2x8x16x36xf32, #tpu.memory_space<vmem>>, vector<1x8x16x4xf32>,
    %270 = vector.extract_strided_slice %200 {offsets = [2, 0, 0], sizes = [8, 16, 4], strides = [1, 1, 1]} : vector<10x16x4xf32> to vector<8x16x4xf32>
    %c1_170 = arith.constant 1 : index
    %c0_171 = arith.constant 0 : index
    %c0_172 = arith.constant 0 : index
    %c24_173 = arith.constant 24 : index
    %271 = vector.load %arg9[%c1_170, %c0_171, %c0_172, %c24_173] : memref<2x8x16x36xf32, #tpu.memory_space<vmem>>, vector<1x8x16x4xf32>
    %272 = vector.shape_cast %271 : vector<1x8x16x4xf32> to vector<8x16x4xf32>
    %273 = vector.shape_cast %270 : vector<8x16x4xf32> to vector<1x8x16x4xf32>
    tpu.vector_store %arg9[%c1_170, %c0_171, %c0_172, %c24_173], %273 {strides = array<i32>} : memref<2x8x16x36xf32, #tpu.memory_space<vmem>>, vector<1x8x16x4xf32>,
    %274 = vector.extract_strided_slice %205 {offsets = [2, 0, 0], sizes = [8, 16, 4], strides = [1, 1, 1]} : vector<10x16x4xf32> to vector<8x16x4xf32>
    %c1_174 = arith.constant 1 : index
    %c0_175 = arith.constant 0 : index
    %c0_176 = arith.constant 0 : index
    %c28_177 = arith.constant 28 : index
    %275 = vector.load %arg9[%c1_174, %c0_175, %c0_176, %c28_177] : memref<2x8x16x36xf32, #tpu.memory_space<vmem>>, vector<1x8x16x4xf32>
    %276 = vector.shape_cast %275 : vector<1x8x16x4xf32> to vector<8x16x4xf32>
    %277 = vector.shape_cast %274 : vector<8x16x4xf32> to vector<1x8x16x4xf32>
    tpu.vector_store %arg9[%c1_174, %c0_175, %c0_176, %c28_177], %277 {strides = array<i32>} : memref<2x8x16x36xf32, #tpu.memory_space<vmem>>, vector<1x8x16x4xf32>,
    %278 = vector.extract_strided_slice %209 {offsets = [2, 0, 0], sizes = [8, 16, 4], strides = [1, 1, 1]} : vector<10x16x4xf32> to vector<8x16x4xf32>
    %c1_178 = arith.constant 1 : index
    %c0_179 = arith.constant 0 : index
    %c0_180 = arith.constant 0 : index
    %c32_181 = arith.constant 32 : index
    %279 = vector.load %arg9[%c1_178, %c0_179, %c0_180, %c32_181] : memref<2x8x16x36xf32, #tpu.memory_space<vmem>>, vector<1x8x16x4xf32>
    %280 = vector.shape_cast %279 : vector<1x8x16x4xf32> to vector<8x16x4xf32>
    %281 = vector.shape_cast %278 : vector<8x16x4xf32> to vector<1x8x16x4xf32>
    tpu.vector_store %arg9[%c1_178, %c0_179, %c0_180, %c32_181], %281 {strides = array<i32>} : memref<2x8x16x36xf32, #tpu.memory_space<vmem>>, vector<1x8x16x4xf32>,
    %c0_182 = arith.constant 0 : index
    %c0_183 = arith.constant 0 : index
    %c0_184 = arith.constant 0 : index
    %c0_185 = arith.constant 0 : index
    %282 = vector.load %arg9[%c0_182, %c0_183, %c0_184, %c0_185] : memref<2x8x16x36xf32, #tpu.memory_space<vmem>>, vector<2x8x16x36xf32>
    %283 = vector.shape_cast %282 : vector<2x8x16x36xf32> to vector<256x36xf32>
    %c1_186 = arith.constant 1 : index
    %c0_187 = arith.constant 0 : index
    %c0_188 = arith.constant 0 : index
    %284 = vector.load %arg6[%c1_186, %c0_187, %c0_188] : memref<3x36x8xf32, #tpu.memory_space<vmem>>, vector<1x36x8xf32>
    %285 = vector.shape_cast %284 : vector<1x36x8xf32> to vector<36x8xf32>
    %cst_189 = arith.constant dense<0.000000e+00> : vector<256x8xf32>
    %286 = tpu.matmul %283, %285, %cst_189 {dimension_numbers = #tpu.dot_dimension_numbers<[1], [0], [0], [1], [0, 0, 1, 1], [], []>} : vector<256x36xf32>, vector<36x8xf32>, vector<256x8xf32> -> vector<256x8xf32>
    %c0_190 = arith.constant 0 : index
    %c0_191 = arith.constant 0 : index
    %287 = vector.load %arg10[%c0_190, %c0_191] : memref<256x8xf32, #tpu.memory_space<vmem>>, vector<256x8xf32>
    %288 = arith.addf %287, %286 : vector<256x8xf32>
    %c0_192 = arith.constant 0 : index
    %c0_193 = arith.constant 0 : index
    %289 = vector.load %arg10[%c0_192, %c0_193] : memref<256x8xf32, #tpu.memory_space<vmem>>, vector<256x8xf32>
    tpu.vector_store %arg10[%c0_192, %c0_193], %288 {strides = array<i32>} : memref<256x8xf32, #tpu.memory_space<vmem>>, vector<256x8xf32>,
    %c0_194 = arith.constant 0 : index
    %c0_195 = arith.constant 0 : index
    %c0_196 = arith.constant 0 : index
    %c0_197 = arith.constant 0 : index
    %c0_198 = arith.constant 0 : index
    %c0_199 = arith.constant 0 : index
    %290 = vector.load %arg5[%c0_194, %c0_195, %c0_196, %c0_197, %c0_198, %c0_199] : memref<1x1x1x6x16x4xf32, #tpu.memory_space<vmem>>, vector<1x1x1x6x16x4xf32>
    %291 = vector.shape_cast %290 : vector<1x1x1x6x16x4xf32> to vector<6x16x4xf32>
    %292 = vector.extract_strided_slice %291 {offsets = [0, 0, 0], sizes = [4, 16, 4], strides = [1, 1, 1]} : vector<6x16x4xf32> to vector<4x16x4xf32>
    %293 = vector.extract_strided_slice %291 {offsets = [1, 0, 0], sizes = [4, 16, 4], strides = [1, 1, 1]} : vector<6x16x4xf32> to vector<4x16x4xf32>
    %294 = vector.extract_strided_slice %291 {offsets = [2, 0, 0], sizes = [4, 16, 4], strides = [1, 1, 1]} : vector<6x16x4xf32> to vector<4x16x4xf32>
    %cst_200 = arith.constant 2.500000e-01 : f32
    %295 = vector.broadcast %cst_200 : f32 to vector<4x16x4xf32>
    %296 = arith.mulf %295, %292 : vector<4x16x4xf32>
    %cst_201 = arith.constant 7.500000e-01 : f32
    %297 = vector.broadcast %cst_201 : f32 to vector<4x16x4xf32>
    %298 = arith.mulf %297, %293 : vector<4x16x4xf32>
    %299 = arith.addf %296, %298 : vector<4x16x4xf32>
    %cst_202 = arith.constant 7.500000e-01 : f32
    %300 = vector.broadcast %cst_202 : f32 to vector<4x16x4xf32>
    %301 = arith.mulf %300, %293 : vector<4x16x4xf32>
    %cst_203 = arith.constant 2.500000e-01 : f32
    %302 = vector.broadcast %cst_203 : f32 to vector<4x16x4xf32>
    %303 = arith.mulf %302, %294 : vector<4x16x4xf32>
    %304 = arith.addf %301, %303 : vector<4x16x4xf32>
    %305 = vector.shape_cast %299 : vector<4x16x4xf32> to vector<4x1x16x4xf32>
    %306 = vector.shape_cast %304 : vector<4x16x4xf32> to vector<4x1x16x4xf32>
    %307 = tpu.concatenate %305, %306 in 1 : vector<4x1x16x4xf32>, vector<4x1x16x4xf32> -> vector<4x2x16x4xf32>
    %308 = vector.shape_cast %307 : vector<4x2x16x4xf32> to vector<8x16x4xf32>
    %309 = vector.extract_strided_slice %291 {offsets = [0, 0, 0], sizes = [1, 16, 4], strides = [1, 1, 1]} : vector<6x16x4xf32> to vector<1x16x4xf32>
    %cst_204 = arith.constant 7.500000e-01 : f32
    %310 = vector.broadcast %cst_204 : f32 to vector<1x16x4xf32>
    %311 = arith.mulf %310, %309 : vector<1x16x4xf32>
    %312 = vector.extract_strided_slice %291 {offsets = [1, 0, 0], sizes = [1, 16, 4], strides = [1, 1, 1]} : vector<6x16x4xf32> to vector<1x16x4xf32>
    %cst_205 = arith.constant 2.500000e-01 : f32
    %313 = vector.broadcast %cst_205 : f32 to vector<1x16x4xf32>
    %314 = arith.mulf %313, %312 : vector<1x16x4xf32>
    %315 = arith.addf %311, %314 : vector<1x16x4xf32>
    %316 = arith.extui %0 : i1 to i32
    %317 = arith.sitofp %316 : i32 to f32
    %318 = vector.broadcast %317 : f32 to vector<1x16x4xf32>
    %319 = arith.mulf %315, %318 : vector<1x16x4xf32>
    %320 = vector.extract_strided_slice %291 {offsets = [4, 0, 0], sizes = [1, 16, 4], strides = [1, 1, 1]} : vector<6x16x4xf32> to vector<1x16x4xf32>
    %cst_206 = arith.constant 2.500000e-01 : f32
    %321 = vector.broadcast %cst_206 : f32 to vector<1x16x4xf32>
    %322 = arith.mulf %321, %320 : vector<1x16x4xf32>
    %323 = vector.extract_strided_slice %291 {offsets = [5, 0, 0], sizes = [1, 16, 4], strides = [1, 1, 1]} : vector<6x16x4xf32> to vector<1x16x4xf32>
    %cst_207 = arith.constant 7.500000e-01 : f32
    %324 = vector.broadcast %cst_207 : f32 to vector<1x16x4xf32>
    %325 = arith.mulf %324, %323 : vector<1x16x4xf32>
    %326 = arith.addf %322, %325 : vector<1x16x4xf32>
    %327 = arith.extui %1 : i1 to i32
    %328 = arith.sitofp %327 : i32 to f32
    %329 = vector.broadcast %328 : f32 to vector<1x16x4xf32>
    %330 = arith.mulf %326, %329 : vector<1x16x4xf32>
    %331 = tpu.concatenate %319, %308, %330 in 0 : vector<1x16x4xf32>, vector<8x16x4xf32>, vector<1x16x4xf32> -> vector<10x16x4xf32>
    %332 = vector.extract_strided_slice %331 {offsets = [0, 0, 0], sizes = [10, 1, 4], strides = [1, 1, 1]} : vector<10x16x4xf32> to vector<10x1x4xf32>
    %333 = vector.extract_strided_slice %331 {offsets = [0, 0, 0], sizes = [10, 15, 4], strides = [1, 1, 1]} : vector<10x16x4xf32> to vector<10x15x4xf32>
    %334 = tpu.concatenate %332, %333 in 1 : vector<10x1x4xf32>, vector<10x15x4xf32> -> vector<10x16x4xf32>
    %335 = vector.extract_strided_slice %331 {offsets = [0, 1, 0], sizes = [10, 15, 4], strides = [1, 1, 1]} : vector<10x16x4xf32> to vector<10x15x4xf32>
    %336 = vector.extract_strided_slice %331 {offsets = [0, 15, 0], sizes = [10, 1, 4], strides = [1, 1, 1]} : vector<10x16x4xf32> to vector<10x1x4xf32>
    %337 = tpu.concatenate %335, %336 in 1 : vector<10x15x4xf32>, vector<10x1x4xf32> -> vector<10x16x4xf32>
    %cst_208 = arith.constant 2.500000e-01 : f32
    %338 = vector.broadcast %cst_208 : f32 to vector<10x16x4xf32>
    %339 = arith.mulf %338, %334 : vector<10x16x4xf32>
    %cst_209 = arith.constant 7.500000e-01 : f32
    %340 = vector.broadcast %cst_209 : f32 to vector<10x16x4xf32>
    %341 = arith.mulf %340, %331 : vector<10x16x4xf32>
    %342 = arith.addf %339, %341 : vector<10x16x4xf32>
    %cst_210 = arith.constant 7.500000e-01 : f32
    %343 = vector.broadcast %cst_210 : f32 to vector<10x16x4xf32>
    %344 = arith.mulf %343, %331 : vector<10x16x4xf32>
    %cst_211 = arith.constant 2.500000e-01 : f32
    %345 = vector.broadcast %cst_211 : f32 to vector<10x16x4xf32>
    %346 = arith.mulf %345, %337 : vector<10x16x4xf32>
    %347 = arith.addf %344, %346 : vector<10x16x4xf32>
    %348 = vector.extract_strided_slice %347 {offsets = [0, 0, 0], sizes = [10, 15, 4], strides = [1, 1, 1]} : vector<10x16x4xf32> to vector<10x15x4xf32>
    %349 = tpu.concatenate %2, %348 in 1 : vector<10x1x4xf32>, vector<10x15x4xf32> -> vector<10x16x4xf32>
    %350 = vector.extract_strided_slice %342 {offsets = [0, 1, 0], sizes = [10, 15, 4], strides = [1, 1, 1]} : vector<10x16x4xf32> to vector<10x15x4xf32>
    %351 = tpu.concatenate %350, %2 in 1 : vector<10x15x4xf32>, vector<10x1x4xf32> -> vector<10x16x4xf32>
    %352 = vector.extract_strided_slice %349 {offsets = [0, 0, 0], sizes = [8, 16, 4], strides = [1, 1, 1]} : vector<10x16x4xf32> to vector<8x16x4xf32>
    %c0_212 = arith.constant 0 : index
    %c0_213 = arith.constant 0 : index
    %c0_214 = arith.constant 0 : index
    %c0_215 = arith.constant 0 : index
    %353 = vector.load %arg9[%c0_212, %c0_213, %c0_214, %c0_215] : memref<2x8x16x36xf32, #tpu.memory_space<vmem>>, vector<1x8x16x4xf32>
    %354 = vector.shape_cast %353 : vector<1x8x16x4xf32> to vector<8x16x4xf32>
    %355 = vector.shape_cast %352 : vector<8x16x4xf32> to vector<1x8x16x4xf32>
    tpu.vector_store %arg9[%c0_212, %c0_213, %c0_214, %c0_215], %355 {strides = array<i32>} : memref<2x8x16x36xf32, #tpu.memory_space<vmem>>, vector<1x8x16x4xf32>,
    %356 = vector.extract_strided_slice %342 {offsets = [0, 0, 0], sizes = [8, 16, 4], strides = [1, 1, 1]} : vector<10x16x4xf32> to vector<8x16x4xf32>
    %c0_216 = arith.constant 0 : index
    %c0_217 = arith.constant 0 : index
    %c0_218 = arith.constant 0 : index
    %c4_219 = arith.constant 4 : index
    %357 = vector.load %arg9[%c0_216, %c0_217, %c0_218, %c4_219] : memref<2x8x16x36xf32, #tpu.memory_space<vmem>>, vector<1x8x16x4xf32>
    %358 = vector.shape_cast %357 : vector<1x8x16x4xf32> to vector<8x16x4xf32>
    %359 = vector.shape_cast %356 : vector<8x16x4xf32> to vector<1x8x16x4xf32>
    tpu.vector_store %arg9[%c0_216, %c0_217, %c0_218, %c4_219], %359 {strides = array<i32>} : memref<2x8x16x36xf32, #tpu.memory_space<vmem>>, vector<1x8x16x4xf32>,
    %360 = vector.extract_strided_slice %347 {offsets = [0, 0, 0], sizes = [8, 16, 4], strides = [1, 1, 1]} : vector<10x16x4xf32> to vector<8x16x4xf32>
    %c0_220 = arith.constant 0 : index
    %c0_221 = arith.constant 0 : index
    %c0_222 = arith.constant 0 : index
    %c8_223 = arith.constant 8 : index
    %361 = vector.load %arg9[%c0_220, %c0_221, %c0_222, %c8_223] : memref<2x8x16x36xf32, #tpu.memory_space<vmem>>, vector<1x8x16x4xf32>
    %362 = vector.shape_cast %361 : vector<1x8x16x4xf32> to vector<8x16x4xf32>
    %363 = vector.shape_cast %360 : vector<8x16x4xf32> to vector<1x8x16x4xf32>
    tpu.vector_store %arg9[%c0_220, %c0_221, %c0_222, %c8_223], %363 {strides = array<i32>} : memref<2x8x16x36xf32, #tpu.memory_space<vmem>>, vector<1x8x16x4xf32>,
    %364 = vector.extract_strided_slice %349 {offsets = [1, 0, 0], sizes = [8, 16, 4], strides = [1, 1, 1]} : vector<10x16x4xf32> to vector<8x16x4xf32>
    %c0_224 = arith.constant 0 : index
    %c0_225 = arith.constant 0 : index
    %c0_226 = arith.constant 0 : index
    %c12_227 = arith.constant 12 : index
    %365 = vector.load %arg9[%c0_224, %c0_225, %c0_226, %c12_227] : memref<2x8x16x36xf32, #tpu.memory_space<vmem>>, vector<1x8x16x4xf32>
    %366 = vector.shape_cast %365 : vector<1x8x16x4xf32> to vector<8x16x4xf32>
    %367 = vector.shape_cast %364 : vector<8x16x4xf32> to vector<1x8x16x4xf32>
    tpu.vector_store %arg9[%c0_224, %c0_225, %c0_226, %c12_227], %367 {strides = array<i32>} : memref<2x8x16x36xf32, #tpu.memory_space<vmem>>, vector<1x8x16x4xf32>,
    %368 = vector.extract_strided_slice %342 {offsets = [1, 0, 0], sizes = [8, 16, 4], strides = [1, 1, 1]} : vector<10x16x4xf32> to vector<8x16x4xf32>
    %c0_228 = arith.constant 0 : index
    %c0_229 = arith.constant 0 : index
    %c0_230 = arith.constant 0 : index
    %c16_231 = arith.constant 16 : index
    %369 = vector.load %arg9[%c0_228, %c0_229, %c0_230, %c16_231] : memref<2x8x16x36xf32, #tpu.memory_space<vmem>>, vector<1x8x16x4xf32>
    %370 = vector.shape_cast %369 : vector<1x8x16x4xf32> to vector<8x16x4xf32>
    %371 = vector.shape_cast %368 : vector<8x16x4xf32> to vector<1x8x16x4xf32>
    tpu.vector_store %arg9[%c0_228, %c0_229, %c0_230, %c16_231], %371 {strides = array<i32>} : memref<2x8x16x36xf32, #tpu.memory_space<vmem>>, vector<1x8x16x4xf32>,
    %372 = vector.extract_strided_slice %347 {offsets = [1, 0, 0], sizes = [8, 16, 4], strides = [1, 1, 1]} : vector<10x16x4xf32> to vector<8x16x4xf32>
    %c0_232 = arith.constant 0 : index
    %c0_233 = arith.constant 0 : index
    %c0_234 = arith.constant 0 : index
    %c20_235 = arith.constant 20 : index
    %373 = vector.load %arg9[%c0_232, %c0_233, %c0_234, %c20_235] : memref<2x8x16x36xf32, #tpu.memory_space<vmem>>, vector<1x8x16x4xf32>
    %374 = vector.shape_cast %373 : vector<1x8x16x4xf32> to vector<8x16x4xf32>
    %375 = vector.shape_cast %372 : vector<8x16x4xf32> to vector<1x8x16x4xf32>
    tpu.vector_store %arg9[%c0_232, %c0_233, %c0_234, %c20_235], %375 {strides = array<i32>} : memref<2x8x16x36xf32, #tpu.memory_space<vmem>>, vector<1x8x16x4xf32>,
    %376 = vector.extract_strided_slice %349 {offsets = [2, 0, 0], sizes = [8, 16, 4], strides = [1, 1, 1]} : vector<10x16x4xf32> to vector<8x16x4xf32>
    %c0_236 = arith.constant 0 : index
    %c0_237 = arith.constant 0 : index
    %c0_238 = arith.constant 0 : index
    %c24_239 = arith.constant 24 : index
    %377 = vector.load %arg9[%c0_236, %c0_237, %c0_238, %c24_239] : memref<2x8x16x36xf32, #tpu.memory_space<vmem>>, vector<1x8x16x4xf32>
    %378 = vector.shape_cast %377 : vector<1x8x16x4xf32> to vector<8x16x4xf32>
    %379 = vector.shape_cast %376 : vector<8x16x4xf32> to vector<1x8x16x4xf32>
    tpu.vector_store %arg9[%c0_236, %c0_237, %c0_238, %c24_239], %379 {strides = array<i32>} : memref<2x8x16x36xf32, #tpu.memory_space<vmem>>, vector<1x8x16x4xf32>,
    %380 = vector.extract_strided_slice %342 {offsets = [2, 0, 0], sizes = [8, 16, 4], strides = [1, 1, 1]} : vector<10x16x4xf32> to vector<8x16x4xf32>
    %c0_240 = arith.constant 0 : index
    %c0_241 = arith.constant 0 : index
    %c0_242 = arith.constant 0 : index
    %c28_243 = arith.constant 28 : index
    %381 = vector.load %arg9[%c0_240, %c0_241, %c0_242, %c28_243] : memref<2x8x16x36xf32, #tpu.memory_space<vmem>>, vector<1x8x16x4xf32>
    %382 = vector.shape_cast %381 : vector<1x8x16x4xf32> to vector<8x16x4xf32>
    %383 = vector.shape_cast %380 : vector<8x16x4xf32> to vector<1x8x16x4xf32>
    tpu.vector_store %arg9[%c0_240, %c0_241, %c0_242, %c28_243], %383 {strides = array<i32>} : memref<2x8x16x36xf32, #tpu.memory_space<vmem>>, vector<1x8x16x4xf32>,
    %384 = vector.extract_strided_slice %347 {offsets = [2, 0, 0], sizes = [8, 16, 4], strides = [1, 1, 1]} : vector<10x16x4xf32> to vector<8x16x4xf32>
    %c0_244 = arith.constant 0 : index
    %c0_245 = arith.constant 0 : index
    %c0_246 = arith.constant 0 : index
    %c32_247 = arith.constant 32 : index
    %385 = vector.load %arg9[%c0_244, %c0_245, %c0_246, %c32_247] : memref<2x8x16x36xf32, #tpu.memory_space<vmem>>, vector<1x8x16x4xf32>
    %386 = vector.shape_cast %385 : vector<1x8x16x4xf32> to vector<8x16x4xf32>
    %387 = vector.shape_cast %384 : vector<8x16x4xf32> to vector<1x8x16x4xf32>
    tpu.vector_store %arg9[%c0_244, %c0_245, %c0_246, %c32_247], %387 {strides = array<i32>} : memref<2x8x16x36xf32, #tpu.memory_space<vmem>>, vector<1x8x16x4xf32>,
    %388 = vector.extract_strided_slice %342 {offsets = [0, 0, 0], sizes = [8, 16, 4], strides = [1, 1, 1]} : vector<10x16x4xf32> to vector<8x16x4xf32>
    %c1_248 = arith.constant 1 : index
    %c0_249 = arith.constant 0 : index
    %c0_250 = arith.constant 0 : index
    %c0_251 = arith.constant 0 : index
    %389 = vector.load %arg9[%c1_248, %c0_249, %c0_250, %c0_251] : memref<2x8x16x36xf32, #tpu.memory_space<vmem>>, vector<1x8x16x4xf32>
    %390 = vector.shape_cast %389 : vector<1x8x16x4xf32> to vector<8x16x4xf32>
    %391 = vector.shape_cast %388 : vector<8x16x4xf32> to vector<1x8x16x4xf32>
    tpu.vector_store %arg9[%c1_248, %c0_249, %c0_250, %c0_251], %391 {strides = array<i32>} : memref<2x8x16x36xf32, #tpu.memory_space<vmem>>, vector<1x8x16x4xf32>,
    %392 = vector.extract_strided_slice %347 {offsets = [0, 0, 0], sizes = [8, 16, 4], strides = [1, 1, 1]} : vector<10x16x4xf32> to vector<8x16x4xf32>
    %c1_252 = arith.constant 1 : index
    %c0_253 = arith.constant 0 : index
    %c0_254 = arith.constant 0 : index
    %c4_255 = arith.constant 4 : index
    %393 = vector.load %arg9[%c1_252, %c0_253, %c0_254, %c4_255] : memref<2x8x16x36xf32, #tpu.memory_space<vmem>>, vector<1x8x16x4xf32>
    %394 = vector.shape_cast %393 : vector<1x8x16x4xf32> to vector<8x16x4xf32>
    %395 = vector.shape_cast %392 : vector<8x16x4xf32> to vector<1x8x16x4xf32>
    tpu.vector_store %arg9[%c1_252, %c0_253, %c0_254, %c4_255], %395 {strides = array<i32>} : memref<2x8x16x36xf32, #tpu.memory_space<vmem>>, vector<1x8x16x4xf32>,
    %396 = vector.extract_strided_slice %351 {offsets = [0, 0, 0], sizes = [8, 16, 4], strides = [1, 1, 1]} : vector<10x16x4xf32> to vector<8x16x4xf32>
    %c1_256 = arith.constant 1 : index
    %c0_257 = arith.constant 0 : index
    %c0_258 = arith.constant 0 : index
    %c8_259 = arith.constant 8 : index
    %397 = vector.load %arg9[%c1_256, %c0_257, %c0_258, %c8_259] : memref<2x8x16x36xf32, #tpu.memory_space<vmem>>, vector<1x8x16x4xf32>
    %398 = vector.shape_cast %397 : vector<1x8x16x4xf32> to vector<8x16x4xf32>
    %399 = vector.shape_cast %396 : vector<8x16x4xf32> to vector<1x8x16x4xf32>
    tpu.vector_store %arg9[%c1_256, %c0_257, %c0_258, %c8_259], %399 {strides = array<i32>} : memref<2x8x16x36xf32, #tpu.memory_space<vmem>>, vector<1x8x16x4xf32>,
    %400 = vector.extract_strided_slice %342 {offsets = [1, 0, 0], sizes = [8, 16, 4], strides = [1, 1, 1]} : vector<10x16x4xf32> to vector<8x16x4xf32>
    %c1_260 = arith.constant 1 : index
    %c0_261 = arith.constant 0 : index
    %c0_262 = arith.constant 0 : index
    %c12_263 = arith.constant 12 : index
    %401 = vector.load %arg9[%c1_260, %c0_261, %c0_262, %c12_263] : memref<2x8x16x36xf32, #tpu.memory_space<vmem>>, vector<1x8x16x4xf32>
    %402 = vector.shape_cast %401 : vector<1x8x16x4xf32> to vector<8x16x4xf32>
    %403 = vector.shape_cast %400 : vector<8x16x4xf32> to vector<1x8x16x4xf32>
    tpu.vector_store %arg9[%c1_260, %c0_261, %c0_262, %c12_263], %403 {strides = array<i32>} : memref<2x8x16x36xf32, #tpu.memory_space<vmem>>, vector<1x8x16x4xf32>,
    %404 = vector.extract_strided_slice %347 {offsets = [1, 0, 0], sizes = [8, 16, 4], strides = [1, 1, 1]} : vector<10x16x4xf32> to vector<8x16x4xf32>
    %c1_264 = arith.constant 1 : index
    %c0_265 = arith.constant 0 : index
    %c0_266 = arith.constant 0 : index
    %c16_267 = arith.constant 16 : index
    %405 = vector.load %arg9[%c1_264, %c0_265, %c0_266, %c16_267] : memref<2x8x16x36xf32, #tpu.memory_space<vmem>>, vector<1x8x16x4xf32>
    %406 = vector.shape_cast %405 : vector<1x8x16x4xf32> to vector<8x16x4xf32>
    %407 = vector.shape_cast %404 : vector<8x16x4xf32> to vector<1x8x16x4xf32>
    tpu.vector_store %arg9[%c1_264, %c0_265, %c0_266, %c16_267], %407 {strides = array<i32>} : memref<2x8x16x36xf32, #tpu.memory_space<vmem>>, vector<1x8x16x4xf32>,
    %408 = vector.extract_strided_slice %351 {offsets = [1, 0, 0], sizes = [8, 16, 4], strides = [1, 1, 1]} : vector<10x16x4xf32> to vector<8x16x4xf32>
    %c1_268 = arith.constant 1 : index
    %c0_269 = arith.constant 0 : index
    %c0_270 = arith.constant 0 : index
    %c20_271 = arith.constant 20 : index
    %409 = vector.load %arg9[%c1_268, %c0_269, %c0_270, %c20_271] : memref<2x8x16x36xf32, #tpu.memory_space<vmem>>, vector<1x8x16x4xf32>
    %410 = vector.shape_cast %409 : vector<1x8x16x4xf32> to vector<8x16x4xf32>
    %411 = vector.shape_cast %408 : vector<8x16x4xf32> to vector<1x8x16x4xf32>
    tpu.vector_store %arg9[%c1_268, %c0_269, %c0_270, %c20_271], %411 {strides = array<i32>} : memref<2x8x16x36xf32, #tpu.memory_space<vmem>>, vector<1x8x16x4xf32>,
    %412 = vector.extract_strided_slice %342 {offsets = [2, 0, 0], sizes = [8, 16, 4], strides = [1, 1, 1]} : vector<10x16x4xf32> to vector<8x16x4xf32>
    %c1_272 = arith.constant 1 : index
    %c0_273 = arith.constant 0 : index
    %c0_274 = arith.constant 0 : index
    %c24_275 = arith.constant 24 : index
    %413 = vector.load %arg9[%c1_272, %c0_273, %c0_274, %c24_275] : memref<2x8x16x36xf32, #tpu.memory_space<vmem>>, vector<1x8x16x4xf32>
    %414 = vector.shape_cast %413 : vector<1x8x16x4xf32> to vector<8x16x4xf32>
    %415 = vector.shape_cast %412 : vector<8x16x4xf32> to vector<1x8x16x4xf32>
    tpu.vector_store %arg9[%c1_272, %c0_273, %c0_274, %c24_275], %415 {strides = array<i32>} : memref<2x8x16x36xf32, #tpu.memory_space<vmem>>, vector<1x8x16x4xf32>,
    %416 = vector.extract_strided_slice %347 {offsets = [2, 0, 0], sizes = [8, 16, 4], strides = [1, 1, 1]} : vector<10x16x4xf32> to vector<8x16x4xf32>
    %c1_276 = arith.constant 1 : index
    %c0_277 = arith.constant 0 : index
    %c0_278 = arith.constant 0 : index
    %c28_279 = arith.constant 28 : index
    %417 = vector.load %arg9[%c1_276, %c0_277, %c0_278, %c28_279] : memref<2x8x16x36xf32, #tpu.memory_space<vmem>>, vector<1x8x16x4xf32>
    %418 = vector.shape_cast %417 : vector<1x8x16x4xf32> to vector<8x16x4xf32>
    %419 = vector.shape_cast %416 : vector<8x16x4xf32> to vector<1x8x16x4xf32>
    tpu.vector_store %arg9[%c1_276, %c0_277, %c0_278, %c28_279], %419 {strides = array<i32>} : memref<2x8x16x36xf32, #tpu.memory_space<vmem>>, vector<1x8x16x4xf32>,
    %420 = vector.extract_strided_slice %351 {offsets = [2, 0, 0], sizes = [8, 16, 4], strides = [1, 1, 1]} : vector<10x16x4xf32> to vector<8x16x4xf32>
    %c1_280 = arith.constant 1 : index
    %c0_281 = arith.constant 0 : index
    %c0_282 = arith.constant 0 : index
    %c32_283 = arith.constant 32 : index
    %421 = vector.load %arg9[%c1_280, %c0_281, %c0_282, %c32_283] : memref<2x8x16x36xf32, #tpu.memory_space<vmem>>, vector<1x8x16x4xf32>
    %422 = vector.shape_cast %421 : vector<1x8x16x4xf32> to vector<8x16x4xf32>
    %423 = vector.shape_cast %420 : vector<8x16x4xf32> to vector<1x8x16x4xf32>
    tpu.vector_store %arg9[%c1_280, %c0_281, %c0_282, %c32_283], %423 {strides = array<i32>} : memref<2x8x16x36xf32, #tpu.memory_space<vmem>>, vector<1x8x16x4xf32>,
    %c0_284 = arith.constant 0 : index
    %c0_285 = arith.constant 0 : index
    %c0_286 = arith.constant 0 : index
    %c0_287 = arith.constant 0 : index
    %424 = vector.load %arg9[%c0_284, %c0_285, %c0_286, %c0_287] : memref<2x8x16x36xf32, #tpu.memory_space<vmem>>, vector<2x8x16x36xf32>
    %425 = vector.shape_cast %424 : vector<2x8x16x36xf32> to vector<256x36xf32>
    %c2 = arith.constant 2 : index
    %c0_288 = arith.constant 0 : index
    %c0_289 = arith.constant 0 : index
    %426 = vector.load %arg6[%c2, %c0_288, %c0_289] : memref<3x36x8xf32, #tpu.memory_space<vmem>>, vector<1x36x8xf32>
    %427 = vector.shape_cast %426 : vector<1x36x8xf32> to vector<36x8xf32>
    %cst_290 = arith.constant dense<0.000000e+00> : vector<256x8xf32>
    %428 = tpu.matmul %425, %427, %cst_290 {dimension_numbers = #tpu.dot_dimension_numbers<[1], [0], [0], [1], [0, 0, 1, 1], [], []>} : vector<256x36xf32>, vector<36x8xf32>, vector<256x8xf32> -> vector<256x8xf32>
    %c0_291 = arith.constant 0 : index
    %c0_292 = arith.constant 0 : index
    %429 = vector.load %arg10[%c0_291, %c0_292] : memref<256x8xf32, #tpu.memory_space<vmem>>, vector<256x8xf32>
    %430 = arith.addf %429, %428 : vector<256x8xf32>
    %c0_293 = arith.constant 0 : index
    %c0_294 = arith.constant 0 : index
    %431 = vector.load %arg10[%c0_293, %c0_294] : memref<256x8xf32, #tpu.memory_space<vmem>>, vector<256x8xf32>
    tpu.vector_store %arg10[%c0_293, %c0_294], %430 {strides = array<i32>} : memref<256x8xf32, #tpu.memory_space<vmem>>, vector<256x8xf32>,
    %c0_295 = arith.constant 0 : index
    %c0_296 = arith.constant 0 : index
    %432 = vector.load %arg10[%c0_295, %c0_296] : memref<256x8xf32, #tpu.memory_space<vmem>>, vector<256x8xf32>
    %433 = vector.shape_cast %432 : vector<256x8xf32> to vector<2x8x16x8xf32>
    %c0_297 = arith.constant 0 : index
    %c0_298 = arith.constant 0 : index
    %c0_299 = arith.constant 0 : index
    %c0_300 = arith.constant 0 : index
    %c0_301 = arith.constant 0 : index
    %c0_302 = arith.constant 0 : index
    %434 = vector.load %arg8[%c0_297, %c0_298, %c0_299, %c0_300, %c0_301, %c0_302] : memref<2x1x1x8x16x8xf32, #tpu.memory_space<vmem>>, vector<2x1x1x8x16x8xf32>
    %435 = vector.shape_cast %434 : vector<2x1x1x8x16x8xf32> to vector<2x8x16x8xf32>
    %436 = vector.shape_cast %433 : vector<2x8x16x8xf32> to vector<2x1x1x8x16x8xf32>
    tpu.vector_store %arg8[%c0_297, %c0_298, %c0_299, %c0_300, %c0_301, %c0_302], %436 {strides = array<i32>} : memref<2x1x1x8x16x8xf32, #tpu.memory_space<vmem>>, vector<2x1x1x8x16x8xf32>,
    return
  }
  func.func @transform_0(%arg0: i32, %arg1: i32, %arg2: i32) -> (i32, i32, i32, i32, i32, i32) {
    %c2_i32 = arith.constant 2 : i32
    %0 = arith.subi %arg1, %c2_i32 : i32
    %c0_i32 = arith.constant 0 : i32
    %1 = arith.maxsi %0, %c0_i32 : i32
    %c0_i32_0 = arith.constant 0 : i32
    %c0_i32_1 = arith.constant 0 : i32
    %c0_i32_2 = arith.constant 0 : i32
    %c0_i32_3 = arith.constant 0 : i32
    return %arg0, %1, %arg2, %c0_i32_0, %c0_i32_1, %c0_i32_2 : i32, i32, i32, i32, i32, i32
  }
  func.func @transform_1(%arg0: i32, %arg1: i32, %arg2: i32) -> (i32, i32, i32, i32, i32, i32) {
    %c1_i32 = arith.constant 1 : i32
    %0 = arith.subi %arg1, %c1_i32 : i32
    %c0_i32 = arith.constant 0 : i32
    %1 = arith.maxsi %0, %c0_i32 : i32
    %c0_i32_0 = arith.constant 0 : i32
    %c0_i32_1 = arith.constant 0 : i32
    %c0_i32_2 = arith.constant 0 : i32
    %c0_i32_3 = arith.constant 0 : i32
    return %arg0, %1, %arg2, %c0_i32_0, %c0_i32_1, %c0_i32_2 : i32, i32, i32, i32, i32, i32
  }
  func.func @transform_2(%arg0: i32, %arg1: i32, %arg2: i32) -> (i32, i32, i32, i32, i32, i32) {
    %c0_i32 = arith.constant 0 : i32
    %0 = arith.subi %arg1, %c0_i32 : i32
    %c0_i32_0 = arith.constant 0 : i32
    %1 = arith.maxsi %0, %c0_i32_0 : i32
    %c0_i32_1 = arith.constant 0 : i32
    %c0_i32_2 = arith.constant 0 : i32
    %c0_i32_3 = arith.constant 0 : i32
    %c0_i32_4 = arith.constant 0 : i32
    return %arg0, %1, %arg2, %c0_i32_1, %c0_i32_2, %c0_i32_3 : i32, i32, i32, i32, i32, i32
  }
  func.func @transform_3(%arg0: i32, %arg1: i32, %arg2: i32) -> (i32, i32, i32) {
    %c0_i32 = arith.constant 0 : i32
    %c0_i32_0 = arith.constant 0 : i32
    %c0_i32_1 = arith.constant 0 : i32
    %c0_i32_2 = arith.constant 0 : i32
    return %c0_i32, %c0_i32_0, %c0_i32_1 : i32, i32, i32
  }
  func.func @transform_4(%arg0: i32, %arg1: i32, %arg2: i32) -> (i32, i32) {
    %c0_i32 = arith.constant 0 : i32
    %c0_i32_0 = arith.constant 0 : i32
    %c0_i32_1 = arith.constant 0 : i32
    return %c0_i32, %c0_i32_0 : i32, i32
  }
  func.func @transform_5(%arg0: i32, %arg1: i32, %arg2: i32) -> (i32, i32, i32, i32, i32, i32) {
    %c0_i32 = arith.constant 0 : i32
    %c0_i32_0 = arith.constant 0 : i32
    %c0_i32_1 = arith.constant 0 : i32
    %c0_i32_2 = arith.constant 0 : i32
    return %c0_i32, %arg0, %arg1, %arg2, %c0_i32_0, %c0_i32_1 : i32, i32, i32, i32, i32, i32
  }
}

</mosaic_0001>

<llo_original>
// kernel: spatial_2x_3d_upsample.1
$region0: #{spatial_2x_3d_upsample.1}
  #allocation0 [shape = 'u32[]', space=smem, size = 0x4, offset = 0x4, fixed_abs, tag = 'smem constant byte address 0x4 - core index']
  #allocation1 [shape = 'u32[72,128]{1,0:T(1,128)}', space=vmem, size = 0x9000, scoped, tag = 'internal scratch']
  #allocation2 [shape = 'f32[2,8,16,36]{3,2,1,0:T(8,128)}', space=vmem, size = 0x20000, scoped, tag = 'scratch operand']
  #allocation3 [shape = 'f32[256,8]{1,0:T(8,128)}', space=vmem, size = 0x20000, scoped, tag = 'scratch operand']
  %s0 = inlined_call_operand.vmem [shape: f32[2,4,2,6,16,4], index: 0, kind: input, shape index: {}, may-alias: {0,1,2}]
  %s1 = inlined_call_operand.vmem [shape: f32[2,4,2,6,16,4], index: 1, kind: input, shape index: {}, may-alias: {0,1,2}]
  %s2 = inlined_call_operand.vmem [shape: f32[2,4,2,6,16,4], index: 2, kind: input, shape index: {}, may-alias: {0,1,2}]
  %s3 = inlined_call_operand.vmem [shape: f32[3,36,8], index: 3, kind: input, shape index: {}]
  %s4 = inlined_call_operand.vmem [shape: f32[1,8], index: 4, kind: input, shape index: {}]
  %s5 = inlined_call_operand.vmem [shape: f32[2,2,4,16,16,8], index: 5, kind: output, shape index: {}]
  %s6 = sld [smem:[#allocation0]]
  $region87: #{spatial_2x_3d_upsample.1} parent=0
    _
  %s8 = ssub.s32 1, %s6
  %s9 = scalar_select 0, %s8, %s6
  $region1: #{spatial_2x_3d_upsample.1} parent=0
    #allocation4 [shape = 'u8[262144]{0}', space=vmem, size = 0x40000, scoped, tag = 'output window, operand 0']
    loop: start=0, step=1, limit=18
    $region2: #{spatial_2x_3d_upsample.1} parent=1 // loop_pre_header
      _
    $region3: #{spatial_2x_3d_upsample.1} parent=1 // loop_header
      %s11 = sphi 0, %s15
      %p12 = scmp.ge.s32.totalorder %s11, 18
      %s18 = sphi 0, %s37
      %s19 = sphi 0, %s33
      %s20 = sphi 0, %s29
      %s21 = sphi 0, %s18
      %s22 = sphi 0, %s19
      %s23 = sphi 0, %s20
      %s24 = sphi 0, %s21
      %s25 = sphi 0, %s22
      %s26 = sphi 0, %s23
      %s50 = sphi 0, %s52
      %s53 = sphi 0, %s50
      %s54 = sphi 0, %s53
      %s70 = sphi 0, %s54
      %s86 = sphi 0, %s88
      %s89 = sphi 0, %s86
      %s90 = sphi 0, %s89
      %s106 = sphi 0, %s90
      %s120 = sphi 0, %s122
      %s123 = sphi 0, %s120
      %s124 = sphi 0, %s123
      %s140 = sphi 0, %s124
      %s144 = sphi 0, %s144
      %s146 = sphi 0, %s144
      %s147 = sphi 0, %s146
      %s161 = sphi 0, %s147
      %s165 = sphi 0, %s165
      %s167 = sphi 0, %s165
      %s168 = sphi 0, %s167
      %s182 = sphi 0, %s168
      %s192 = sphi 0, %s194
      %s195 = sphi 0, %s192
      %s196 = sphi 0, %s195
      %s212 = sphi 0, %s196
    $region4: #{spatial_2x_3d_upsample.1} parent=1 // loop_header_branch
      %14 = sbr.rel (%p12) target = $region8
    $region5: #{spatial_2x_3d_upsample.1} parent=1 // loop_body
      %s16 = ssub.s32 %s11, 1
      %s17 = ssub.s32 %s11, 2
      %s27 = sadd.s32 1, %s20
      %p28 = scmp.ge.s32.totalorder %s27, 2
      %s29 = scalar_select %p28, 0, %s27
      %s30 = sadd.s32 1, %s19
      %s31 = scalar_select %p28, %s30, %s19
      %p32 = scmp.ge.s32.totalorder %s31, 4
      %s33 = scalar_select %p32, 0, %s31
      %s34 = sadd.s32 1, %s18
      %s35 = scalar_select %p32, %s34, %s18
      %p36 = scmp.ge.s32.totalorder %s35, 2
      %s37 = scalar_select %p36, 0, %s35
      %s38 = ssub.s32 %s19, 2
      %p39 = scmp.gt.s32.totalorder %s38, 0
      %s40 = scalar_select %p39, %s38, 0
      %s41 = ssub.s32 %s33, 2
      %p42 = scmp.gt.s32.totalorder %s41, 0
      %s43 = scalar_select %p42, %s41, 0
      %s44 = ssub.s32 %s18, %s37
      %s45 = ssub.s32 %s40, %s43
      %s46 = sor.u32 %s44, %s45
      %s47 = ssub.s32 %s20, %s29
      %s48 = sor.u32 %s46, %s47
      %p49 = scmp.eq.s32.totalorder %s48, 0
      %s51 = sadd.s32 %s50, 1
      %s52 = scalar_select %p49, %s50, %s51
      %p55 = pneg %p49
      %p56 = scmp.eq.s32.totalorder %s11, 15
      %p57 = por %p55, %p56
      %p58 = scmp.ne.s32.totalorder %s50, %s53
      %p59 = scmp.eq.s32.totalorder %s11, 0
      %p60 = por %p58, %p59
      %p61 = scmp.ne.s32.totalorder %s50, %s53
      %p62 = scmp.eq.s32.totalorder %s16, 15
      %p63 = por %p61, %p62
      %p64 = scmp.ne.s32.totalorder %s53, %s54
      %p65 = scmp.eq.s32.totalorder %s16, 0
      %p66 = por %p64, %p65
      %p67 = scmp.ne.s32.totalorder %s53, %s54
      %p68 = scmp.eq.s32.totalorder %s17, 15
      %p69 = por %p67, %p68
      %p71 = scmp.ne.s32.totalorder %s54, %s70
      %p72 = scmp.eq.s32.totalorder %s17, 0
      %p73 = por %p71, %p72
      %s74 = ssub.s32 %s19, 1
      %p75 = scmp.gt.s32.totalorder %s74, 0
      %s76 = scalar_select %p75, %s74, 0
      %s77 = ssub.s32 %s33, 1
      %p78 = scmp.gt.s32.totalorder %s77, 0
      %s79 = scalar_select %p78, %s77, 0
      %s80 = ssub.s32 %s18, %s37
      %s81 = ssub.s32 %s76, %s79
      %s82 = sor.u32 %s80, %s81
      %s83 = ssub.s32 %s20, %s29
      %s84 = sor.u32 %s82, %s83
      %p85 = scmp.eq.s32.totalorder %s84, 0
      %s87 = sadd.s32 %s86, 1
      %s88 = scalar_select %p85, %s86, %s87
      %p91 = pneg %p85
      %p92 = scmp.eq.s32.totalorder %s11, 15
      %p93 = por %p91, %p92
      %p94 = scmp.ne.s32.totalorder %s86, %s89
      %p95 = scmp.eq.s32.totalorder %s11, 0
      %p96 = por %p94, %p95
      %p97 = scmp.ne.s32.totalorder %s86, %s89
      %p98 = scmp.eq.s32.totalorder %s16, 15
      %p99 = por %p97, %p98
      %p100 = scmp.ne.s32.totalorder %s89, %s90
      %p101 = scmp.eq.s32.totalorder %s16, 0
      %p102 = por %p100, %p101
      %p103 = scmp.ne.s32.totalorder %s89, %s90
      %p104 = scmp.eq.s32.totalorder %s17, 15
      %p105 = por %p103, %p104
      %p107 = scmp.ne.s32.totalorder %s90, %s106
      %p108 = scmp.eq.s32.totalorder %s17, 0
      %p109 = por %p107, %p108
      %p110 = scmp.gt.s32.totalorder %s19, 0
      %s111 = scalar_select %p110, %s19, 0
      %p112 = scmp.gt.s32.totalorder %s33, 0
      %s113 = scalar_select %p112, %s33, 0
      %s114 = ssub.s32 %s18, %s37
      %s115 = ssub.s32 %s111, %s113
      %s116 = sor.u32 %s114, %s115
      %s117 = ssub.s32 %s20, %s29
      %s118 = sor.u32 %s116, %s117
      %p119 = scmp.eq.s32.totalorder %s118, 0
      %s121 = sadd.s32 %s120, 1
      %s122 = scalar_select %p119, %s120, %s121
      %p125 = pneg %p119
      %p126 = scmp.eq.s32.totalorder %s11, 15
      %p127 = por %p125, %p126
      %p128 = scmp.ne.s32.totalorder %s120, %s123
      %p129 = scmp.eq.s32.totalorder %s11, 0
      %p130 = por %p128, %p129
      %p131 = scmp.ne.s32.totalorder %s120, %s123
      %p132 = scmp.eq.s32.totalorder %s16, 15
      %p133 = por %p131, %p132
      %p134 = scmp.ne.s32.totalorder %s123, %s124
      %p135 = scmp.eq.s32.totalorder %s16, 0
      %p136 = por %p134, %p135
      %p137 = scmp.ne.s32.totalorder %s123, %s124
      %p138 = scmp.eq.s32.totalorder %s17, 15
      %p139 = por %p137, %p138
      %p141 = scmp.ne.s32.totalorder %s124, %s140
      %p142 = scmp.eq.s32.totalorder %s17, 0
      %p143 = por %p141, %p142
      %s145 = sadd.s32 %s144, 1
      %p148 = scmp.eq.s32.totalorder %s11, 15
      %p149 = scmp.ne.s32.totalorder %s144, %s146
      %p150 = scmp.eq.s32.totalorder %s11, 0
      %p151 = por %p149, %p150
      %p152 = scmp.ne.s32.totalorder %s144, %s146
      %p153 = scmp.eq.s32.totalorder %s16, 15
      %p154 = por %p152, %p153
      %p155 = scmp.ne.s32.totalorder %s146, %s147
      %p156 = scmp.eq.s32.totalorder %s16, 0
      %p157 = por %p155, %p156
      %p158 = scmp.ne.s32.totalorder %s146, %s147
      %p159 = scmp.eq.s32.totalorder %s17, 15
      %p160 = por %p158, %p159
      %p162 = scmp.ne.s32.totalorder %s147, %s161
      %p163 = scmp.eq.s32.totalorder %s17, 0
      %p164 = por %p162, %p163
      %s166 = sadd.s32 %s165, 1
      %p169 = scmp.eq.s32.totalorder %s11, 15
      %p170 = scmp.ne.s32.totalorder %s165, %s167
      %p171 = scmp.eq.s32.totalorder %s11, 0
      %p172 = por %p170, %p171
      %p173 = scmp.ne.s32.totalorder %s165, %s167
      %p174 = scmp.eq.s32.totalorder %s16, 15
      %p175 = por %p173, %p174
      %p176 = scmp.ne.s32.totalorder %s167, %s168
      %p177 = scmp.eq.s32.totalorder %s16, 0
      %p178 = por %p176, %p177
      %p179 = scmp.ne.s32.totalorder %s167, %s168
      %p180 = scmp.eq.s32.totalorder %s17, 15
      %p181 = por %p179, %p180
      %p183 = scmp.ne.s32.totalorder %s168, %s182
      %p184 = scmp.eq.s32.totalorder %s17, 0
      %p185 = por %p183, %p184
      %s186 = ssub.s32 %s18, %s37
      %s187 = ssub.s32 %s19, %s33
      %s188 = sor.u32 %s186, %s187
      %s189 = ssub.s32 %s20, %s29
      %s190 = sor.u32 %s188, %s189
      %p191 = scmp.eq.s32.totalorder %s190, 0
      %s193 = sadd.s32 %s192, 1
      %s194 = scalar_select %p191, %s192, %s193
      %p197 = pneg %p191
      %p198 = scmp.eq.s32.totalorder %s11, 15
      %p199 = por %p197, %p198
      %p200 = scmp.ne.s32.totalorder %s192, %s195
      %p201 = scmp.eq.s32.totalorder %s11, 0
      %p202 = por %p200, %p201
      %p203 = scmp.ne.s32.totalorder %s192, %s195
      %p204 = scmp.eq.s32.totalorder %s16, 15
      %p205 = por %p203, %p204
      %p206 = scmp.ne.s32.totalorder %s195, %s196
      %p207 = scmp.eq.s32.totalorder %s16, 0
      %p208 = por %p206, %p207
      %p209 = scmp.ne.s32.totalorder %s195, %s196
      %p210 = scmp.eq.s32.totalorder %s17, 15
      %p211 = por %p209, %p210
      %p213 = scmp.ne.s32.totalorder %s196, %s212
      %p214 = scmp.eq.s32.totalorder %s17, 0
      %p215 = por %p213, %p214
      %p216 = scmp.le.s32.totalorder 1, %s11
      %p217 = scmp.lt.s32.totalorder %s11, 17
      %p218 = pnand %p216, %p217
      %p219 = pneg %p218
      // Predicated region
      $region9: #{spatial_2x_3d_upsample.1} parent=5 // pred_check
        _
      $region10: #{spatial_2x_3d_upsample.1} parent=5 // pred_check_branch
        %221 = sbr.rel (%p218) target = $region12
      $region11: #{spatial_2x_3d_upsample.1} parent=5 // pred_region
        %s222 = ssub.s32 %s11, 1
        // Predicated region
        $region13: #{spatial_2x_3d_upsample.1} parent=11 // pred_check
          %p223 = pneg %p157
        $region14: #{spatial_2x_3d_upsample.1} parent=11 // pred_check_branch
          %225 = sbr.rel (%p223) target = $region16
        $region15: #{spatial_2x_3d_upsample.1} parent=11 // pred_region
          _
        $region16: #{spatial_2x_3d_upsample.1} parent=11 // pred_fallthru
          _
        // Predicated region
        $region17: #{spatial_2x_3d_upsample.1} parent=11 // pred_check
          %p226 = pneg %p178
        $region18: #{spatial_2x_3d_upsample.1} parent=11 // pred_check_branch
          %228 = sbr.rel (%p226) target = $region20
        $region19: #{spatial_2x_3d_upsample.1} parent=11 // pred_region
          _
        $region20: #{spatial_2x_3d_upsample.1} parent=11 // pred_fallthru
          _
      $region12: #{spatial_2x_3d_upsample.1} parent=5 // pred_fallthru
        _
      %p229 = scmp.lt.s32.totalorder %s11, 16
      // Predicated region
      $region21: #{spatial_2x_3d_upsample.1} parent=5 // pred_check
        %p230 = pneg %p229
      $region22: #{spatial_2x_3d_upsample.1} parent=5 // pred_check_branch
        %232 = sbr.rel (%p230) target = $region24
      $region23: #{spatial_2x_3d_upsample.1} parent=5 // pred_region
        // Predicated region
        $region25: #{spatial_2x_3d_upsample.1} parent=23 // pred_check
          %p233 = pneg %p60
        $region26: #{spatial_2x_3d_upsample.1} parent=23 // pred_check_branch
          %235 = sbr.rel (%p233) target = $region28
        $region27: #{spatial_2x_3d_upsample.1} parent=23 // pred_region
          %s236 = ssub.s32 %s19, 2
          %p237 = scmp.gt.s32.totalorder %s236, 0
          %s238 = scalar_select %p237, %s236, 0
          %p239 = scmp.lt.s32.totalorder %s18, 1
          %s240 = scalar_select %p239, %s18, 1
          %p241 = scmp.lt.s32.totalorder %s238, 3
          %s242 = scalar_select %p241, %s238, 3
          %p243 = scmp.lt.s32.totalorder %s20, 1
          %s244 = scalar_select %p243, %s20, 1
          %s245 = smul.addr %s244, 12
          %s246 = smul.addr %s242, 24
          %s247 = sadd.s32 %s245, %s246
          %s248 = smul.addr %s240, 96
          %s249 = sadd.s32 %s247, %s248
          %s250 = smul.addr %s249, 8
          %s251 = scalar_lea.vmem %s0, %s250
          %s252 = ssub.s32 %s19, 2
          %p253 = scmp.gt.s32.totalorder %s252, 0
          %s254 = scalar_select %p253, %s252, 0
        $region28: #{spatial_2x_3d_upsample.1} parent=23 // pred_fallthru
          _
        // Predicated region
        $region29: #{spatial_2x_3d_upsample.1} parent=23 // pred_check
          %p255 = pneg %p96
        $region30: #{spatial_2x_3d_upsample.1} parent=23 // pred_check_branch
          %257 = sbr.rel (%p255) target = $region32
        $region31: #{spatial_2x_3d_upsample.1} parent=23 // pred_region
          %s258 = ssub.s32 %s19, 1
          %p259 = scmp.gt.s32.totalorder %s258, 0
          %s260 = scalar_select %p259, %s258, 0
          %p261 = scmp.lt.s32.totalorder %s18, 1
          %s262 = scalar_select %p261, %s18, 1
          %p263 = scmp.lt.s32.totalorder %s260, 3
          %s264 = scalar_select %p263, %s260, 3
          %p265 = scmp.lt.s32.totalorder %s20, 1
          %s266 = scalar_select %p265, %s20, 1
          %s267 = smul.addr %s266, 12
          %s268 = smul.addr %s264, 24
          %s269 = sadd.s32 %s267, %s268
          %s270 = smul.addr %s262, 96
          %s271 = sadd.s32 %s269, %s270
          %s272 = smul.addr %s271, 8
          %s273 = scalar_lea.vmem %s1, %s272
          %s274 = ssub.s32 %s19, 1
          %p275 = scmp.gt.s32.totalorder %s274, 0
          %s276 = scalar_select %p275, %s274, 0
        $region32: #{spatial_2x_3d_upsample.1} parent=23 // pred_fallthru
          _
        // Predicated region
        $region33: #{spatial_2x_3d_upsample.1} parent=23 // pred_check
          %p277 = pneg %p130
        $region34: #{spatial_2x_3d_upsample.1} parent=23 // pred_check_branch
          %279 = sbr.rel (%p277) target = $region36
        $region35: #{spatial_2x_3d_upsample.1} parent=23 // pred_region
          %p280 = scmp.gt.s32.totalorder %s19, 0
          %s281 = scalar_select %p280, %s19, 0
          %p282 = scmp.lt.s32.totalorder %s18, 1
          %s283 = scalar_select %p282, %s18, 1
          %p284 = scmp.lt.s32.totalorder %s281, 3
          %s285 = scalar_select %p284, %s281, 3
          %p286 = scmp.lt.s32.totalorder %s20, 1
          %s287 = scalar_select %p286, %s20, 1
          %s288 = smul.addr %s287, 12
          %s289 = smul.addr %s285, 24
          %s290 = sadd.s32 %s288, %s289
          %s291 = smul.addr %s283, 96
          %s292 = sadd.s32 %s290, %s291
          %s293 = smul.addr %s292, 8
          %s294 = scalar_lea.vmem %s2, %s293
          %p295 = scmp.gt.s32.totalorder %s19, 0
          %s296 = scalar_select %p295, %s19, 0
        $region36: #{spatial_2x_3d_upsample.1} parent=23 // pred_fallthru
          _
      $region24: #{spatial_2x_3d_upsample.1} parent=5 // pred_fallthru
        _
      %p297 = scmp.le.s32.totalorder 1, %s11
      %p298 = scmp.lt.s32.totalorder %s11, 17
      %p299 = pnand %p297, %p298
      %p300 = pneg %p299
      // Predicated region
      $region37: #{spatial_2x_3d_upsample.1} parent=5 // pred_check
        _
      $region38: #{spatial_2x_3d_upsample.1} parent=5 // pred_check_branch
        %302 = sbr.rel (%p299) target = $region40
      $region39: #{spatial_2x_3d_upsample.1} parent=5 // pred_region
        %s303 = ssub.s32 %s11, 1
        %s304 = ssub.s32 %s22, 2
        %p305 = scmp.gt.s32.totalorder %s304, 0
        %s306 = scalar_select %p305, %s304, 0
        %p307 = scmp.lt.s32.totalorder %s21, 1
        %s308 = scalar_select %p307, %s21, 1
        %p309 = scmp.lt.s32.totalorder %s306, 3
        %s310 = scalar_select %p309, %s306, 3
        %p311 = scmp.lt.s32.totalorder %s23, 1
        %s312 = scalar_select %p311, %s23, 1
        %s313 = smul.addr %s312, 12
        %s314 = smul.addr %s310, 24
        %s315 = sadd.s32 %s313, %s314
        %s316 = smul.addr %s308, 96
        %s317 = sadd.s32 %s315, %s316
        %s318 = smul.addr %s317, 8
        %s319 = scalar_lea.vmem %s0, %s318
        %p320 = pneg %p66
        %p321 = pneg %p63
        %s322 = ssub.s32 %s22, 1
        %p323 = scmp.gt.s32.totalorder %s322, 0
        %s324 = scalar_select %p323, %s322, 0
        %p325 = scmp.lt.s32.totalorder %s21, 1
        %s326 = scalar_select %p325, %s21, 1
        %p327 = scmp.lt.s32.totalorder %s324, 3
        %s328 = scalar_select %p327, %s324, 3
        %p329 = scmp.lt.s32.totalorder %s23, 1
        %s330 = scalar_select %p329, %s23, 1
        %s331 = smul.addr %s330, 12
        %s332 = smul.addr %s328, 24
        %s333 = sadd.s32 %s331, %s332
        %s334 = smul.addr %s326, 96
        %s335 = sadd.s32 %s333, %s334
        %s336 = smul.addr %s335, 8
        %s337 = scalar_lea.vmem %s1, %s336
        %p338 = pneg %p102
        %p339 = pneg %p99
        %p340 = scmp.gt.s32.totalorder %s22, 0
        %s341 = scalar_select %p340, %s22, 0
        %p342 = scmp.lt.s32.totalorder %s21, 1
        %s343 = scalar_select %p342, %s21, 1
        %p344 = scmp.lt.s32.totalorder %s341, 3
        %s345 = scalar_select %p344, %s341, 3
        %p346 = scmp.lt.s32.totalorder %s23, 1
        %s347 = scalar_select %p346, %s23, 1
        %s348 = smul.addr %s347, 12
        %s349 = smul.addr %s345, 24
        %s350 = sadd.s32 %s348, %s349
        %s351 = smul.addr %s343, 96
        %s352 = sadd.s32 %s350, %s351
        %s353 = smul.addr %s352, 8
        %s354 = scalar_lea.vmem %s2, %s353
        %p355 = pneg %p136
        %p356 = pneg %p133
        %p357 = pneg %p157
        %p358 = pneg %p154
        %p359 = pneg %p178
        %p360 = pneg %p175
        %p361 = pneg %p208
        %p362 = pneg %p205
        %s363 = sand.u32 %s195, 1
        %s364 = sand.u32 %s195, 1
        %s365 = smul.addr %s364, 256
        %s366 = scalar_lea.vmem [#allocation4], %s365
        %s367 = ssub.s32 %s22, 2
        %p368 = scmp.gt.s32.totalorder %s367, 0
        %s369 = scalar_select %p368, %s367, 0
        %p370 = scmp.lt.s32.totalorder %s21, 1
        %s371 = scalar_select %p370, %s21, 1
        %p372 = scmp.lt.s32.totalorder %s369, 3
        %s373 = scalar_select %p372, %s369, 3
        %p374 = scmp.lt.s32.totalorder %s23, 1
        %s375 = scalar_select %p374, %s23, 1
        %s376 = smul.addr %s375, 12
        %s377 = smul.addr %s373, 24
        %s378 = sadd.s32 %s376, %s377
        %s379 = smul.addr %s371, 96
        %s380 = sadd.s32 %s378, %s379
        %s381 = smul.addr %s380, 8
        %s382 = scalar_lea.vmem %s0, %s381
        %s383 = ssub.s32 %s22, 2
        %p384 = scmp.gt.s32.totalorder %s383, 0
        %s385 = scalar_select %p384, %s383, 0
        %s386 = ssub.s32 %s22, 1
        %p387 = scmp.gt.s32.totalorder %s386, 0
        %s388 = scalar_select %p387, %s386, 0
        %p389 = scmp.lt.s32.totalorder %s21, 1
        %s390 = scalar_select %p389, %s21, 1
        %p391 = scmp.lt.s32.totalorder %s388, 3
        %s392 = scalar_select %p391, %s388, 3
        %p393 = scmp.lt.s32.totalorder %s23, 1
        %s394 = scalar_select %p393, %s23, 1
        %s395 = smul.addr %s394, 12
        %s396 = smul.addr %s392, 24
        %s397 = sadd.s32 %s395, %s396
        %s398 = smul.addr %s390, 96
        %s399 = sadd.s32 %s397, %s398
        %s400 = smul.addr %s399, 8
        %s401 = scalar_lea.vmem %s1, %s400
        %s402 = ssub.s32 %s22, 1
        %p403 = scmp.gt.s32.totalorder %s402, 0
        %s404 = scalar_select %p403, %s402, 0
        %p405 = scmp.gt.s32.totalorder %s22, 0
        %s406 = scalar_select %p405, %s22, 0
        %p407 = scmp.lt.s32.totalorder %s21, 1
        %s408 = scalar_select %p407, %s21, 1
        %p409 = scmp.lt.s32.totalorder %s406, 3
        %s410 = scalar_select %p409, %s406, 3
        %p411 = scmp.lt.s32.totalorder %s23, 1
        %s412 = scalar_select %p411, %s23, 1
        %s413 = smul.addr %s412, 12
        %s414 = smul.addr %s410, 24
        %s415 = sadd.s32 %s413, %s414
        %s416 = smul.addr %s408, 96
        %s417 = sadd.s32 %s415, %s416
        %s418 = smul.addr %s417, 8
        %s419 = scalar_lea.vmem %s2, %s418
        %p420 = scmp.gt.s32.totalorder %s22, 0
        %s421 = scalar_select %p420, %s22, 0
        %s422 = smul.u32 8, %s23
        %p423 = scmp.gt.s32.totalorder %s23, 0
        %p424 = scmp.lt.s32.totalorder %s23, 1
        %v425 = vld [vmem:[%s382] sm:$0xff]
        %v426 = vld [vmem:[%s382 + $0x8] sm:$0xff]
        %v427 = vld [vmem:[%s382 + $0x10] sm:$0xff]
        %v428 = vld [vmem:[%s382 + $0x18] sm:$0xff]
        %v429 = vld [vmem:[%s382 + $0x20] sm:$0xff]
        %v430 = vld [vmem:[%s382 + $0x28] sm:$0xff]
        %v431 = vld [vmem:[%s382 + $0x30] sm:$0xff]
        %v432 = vld [vmem:[%s382 + $0x38] sm:$0xff]
        %v433 = vld [vmem:[%s382 + $0x40] sm:$0xff]
        %v434 = vld [vmem:[%s382 + $0x48] sm:$0xff]
        %v435 = vld [vmem:[%s382 + $0x50] sm:$0xff]
        %v436 = vld [vmem:[%s382 + $0x58] sm:$0xff]
        %v437 = vmul.f32 %v425, 0.25
        %v438 = vmul.f32 %v426, 0.25
        %v439 = vmul.f32 %v427, 0.25
        %v440 = vmul.f32 %v428, 0.25
        %v441 = vmul.f32 %v429, 0.25
        %v442 = vmul.f32 %v430, 0.25
        %v443 = vmul.f32 %v431, 0.25
        %v444 = vmul.f32 %v432, 0.25
        %v445 = vmul.f32 %v427, 0.75
        %v446 = vmul.f32 %v428, 0.75
        %v447 = vmul.f32 %v429, 0.75
        %v448 = vmul.f32 %v430, 0.75
        %v449 = vmul.f32 %v431, 0.75
        %v450 = vmul.f32 %v432, 0.75
        %v451 = vmul.f32 %v433, 0.75
        %v452 = vmul.f32 %v434, 0.75
        %v453 = vadd.f32 %v437, %v445
        %v454 = vadd.f32 %v438, %v446
        %v455 = vadd.f32 %v439, %v447
        %v456 = vadd.f32 %v440, %v448
        %v457 = vadd.f32 %v441, %v449
        %v458 = vadd.f32 %v442, %v450
        %v459 = vadd.f32 %v443, %v451
        %v460 = vadd.f32 %v444, %v452
        %v461 = vmul.f32 %v433, 0.25
        %v462 = vmul.f32 %v434, 0.25
        %v463 = vmul.f32 %v435, 0.25
        %v464 = vmul.f32 %v436, 0.25
        %v465 = vadd.f32 %v445, %v441
        %v466 = vadd.f32 %v446, %v442
        %v467 = vadd.f32 %v447, %v443
        %v468 = vadd.f32 %v448, %v444
        %v469 = vadd.f32 %v449, %v461
        %v470 = vadd.f32 %v450, %v462
        %v471 = vadd.f32 %v451, %v463
        %v472 = vadd.f32 %v452, %v464
        %v473 = vmul.f32 %v425, 0.75
        %v474 = vmul.f32 %v426, 0.75
        %v475 = vadd.f32 %v473, %v439
        %v476 = vadd.f32 %v474, %v440
        %s477 = scalar_select %p423, 1, 0
        %s478 = scvt.s32.f32 %s477
        %v479 = vstv %s478
        %v480 = vmul.f32 %v475, %v479
        %v481 = vmul.f32 %v476, %v479
        %v482 = vmul.f32 %v435, 0.75
        %v483 = vmul.f32 %v436, 0.75
        %v484 = vadd.f32 %v461, %v482
        %v485 = vadd.f32 %v462, %v483
        %s486 = scalar_select %p424, 1, 0
        %s487 = scvt.s32.f32 %s486
        %v488 = vstv %s487
        %v489 = vmul.f32 %v484, %v488
        %v490 = vmul.f32 %v485, %v488
        %vm511 = vcmask 1040384
        %v512 = vrot.slane %v480, 7
        %v513 = vrot.slane %v481, 7
        %v514 = vsel %vm511, %v512, %v513
        %v515 = vrot.slane %v453, 7
        %v516 = vrot.slane %v454, 7
        %v517 = vsel %vm511, %v515, %v516
        %v518 = vrot.slane %v465, 7
        %v519 = vrot.slane %v466, 7
        %v520 = vsel %vm511, %v518, %v519
        %v521 = vrot.slane %v455, 7
        %v522 = vrot.slane %v456, 7
        %v523 = vsel %vm511, %v521, %v522
        %v524 = vrot.slane %v467, 7
        %v525 = vrot.slane %v468, 7
        %v526 = vsel %vm511, %v524, %v525
        %v527 = vrot.slane %v457, 7
        %v528 = vrot.slane %v458, 7
        %v529 = vsel %vm511, %v527, %v528
        %v530 = vrot.slane %v469, 7
        %v531 = vrot.slane %v470, 7
        %v532 = vsel %vm511, %v530, %v531
        %v533 = vrot.slane %v459, 7
        %v534 = vrot.slane %v460, 7
        %v535 = vsel %vm511, %v533, %v534
        %v536 = vrot.slane %v471, 7
        %v537 = vrot.slane %v472, 7
        %v538 = vsel %vm511, %v536, %v537
        %v539 = vrot.slane %v489, 7
        %v540 = vrot.slane %v490, 7
        %v541 = vsel %vm511, %v539, %v540
        %v562 = vsel %vm511, %v480, %v512
        %v563 = vsel %vm511, %v453, %v515
        %v564 = vsel %vm511, %v465, %v518
        %v565 = vsel %vm511, %v455, %v521
        %v566 = vsel %vm511, %v467, %v524
        %v567 = vsel %vm511, %v457, %v527
        %v568 = vsel %vm511, %v469, %v530
        %v569 = vsel %vm511, %v459, %v533
        %v570 = vsel %vm511, %v471, %v536
        %v571 = vsel %vm511, %v489, %v539
        %vm572 = vcmask 1046528
        %v573 = vrot.slane %v480, 1
        %v574 = vrot.slane %v481, 1
        %v575 = vsel %vm572, %v573, %v574
        %v576 = vrot.slane %v453, 1
        %v577 = vrot.slane %v454, 1
        %v578 = vsel %vm572, %v576, %v577
        %v579 = vrot.slane %v465, 1
        %v580 = vrot.slane %v466, 1
        %v581 = vsel %vm572, %v579, %v580
        %v582 = vrot.slane %v455, 1
        %v583 = vrot.slane %v456, 1
        %v584 = vsel %vm572, %v582, %v583
        %v585 = vrot.slane %v467, 1
        %v586 = vrot.slane %v468, 1
        %v587 = vsel %vm572, %v585, %v586
        %v588 = vrot.slane %v457, 1
        %v589 = vrot.slane %v458, 1
        %v590 = vsel %vm572, %v588, %v589
        %v591 = vrot.slane %v469, 1
        %v592 = vrot.slane %v470, 1
        %v593 = vsel %vm572, %v591, %v592
        %v594 = vrot.slane %v459, 1
        %v595 = vrot.slane %v460, 1
        %v596 = vsel %vm572, %v594, %v595
        %v597 = vrot.slane %v471, 1
        %v598 = vrot.slane %v472, 1
        %v599 = vsel %vm572, %v597, %v598
        %v600 = vrot.slane %v489, 1
        %v601 = vrot.slane %v490, 1
        %v602 = vsel %vm572, %v600, %v601
        %v623 = vsel %vm572, %v574, %v481
        %v624 = vsel %vm572, %v577, %v454
        %v625 = vsel %vm572, %v580, %v466
        %v626 = vsel %vm572, %v583, %v456
        %v627 = vsel %vm572, %v586, %v468
        %v628 = vsel %vm572, %v589, %v458
        %v629 = vsel %vm572, %v592, %v470
        %v630 = vsel %vm572, %v595, %v460
        %v631 = vsel %vm572, %v598, %v472
        %v632 = vsel %vm572, %v601, %v490
        %v633 = vmul.f32 %v562, 0.25
        %v634 = vmul.f32 %v514, 0.25
        %v635 = vmul.f32 %v563, 0.25
        %v636 = vmul.f32 %v517, 0.25
        %v637 = vmul.f32 %v564, 0.25
        %v638 = vmul.f32 %v520, 0.25
        %v639 = vmul.f32 %v565, 0.25
        %v640 = vmul.f32 %v523, 0.25
        %v641 = vmul.f32 %v566, 0.25
        %v642 = vmul.f32 %v526, 0.25
        %v643 = vmul.f32 %v567, 0.25
        %v644 = vmul.f32 %v529, 0.25
        %v645 = vmul.f32 %v568, 0.25
        %v646 = vmul.f32 %v532, 0.25
        %v647 = vmul.f32 %v569, 0.25
        %v648 = vmul.f32 %v535, 0.25
        %v649 = vmul.f32 %v570, 0.25
        %v650 = vmul.f32 %v538, 0.25
        %v651 = vmul.f32 %v571, 0.25
        %v652 = vmul.f32 %v541, 0.25
        %v653 = vmul.f32 %v480, 0.75
        %v654 = vmul.f32 %v481, 0.75
        %v655 = vmul.f32 %v453, 0.75
        %v656 = vmul.f32 %v454, 0.75
        %v657 = vmul.f32 %v465, 0.75
        %v658 = vmul.f32 %v466, 0.75
        %v659 = vmul.f32 %v455, 0.75
        %v660 = vmul.f32 %v456, 0.75
        %v661 = vmul.f32 %v467, 0.75
        %v662 = vmul.f32 %v468, 0.75
        %v663 = vmul.f32 %v457, 0.75
        %v664 = vmul.f32 %v458, 0.75
        %v665 = vmul.f32 %v469, 0.75
        %v666 = vmul.f32 %v470, 0.75
        %v667 = vmul.f32 %v459, 0.75
        %v668 = vmul.f32 %v460, 0.75
        %v669 = vmul.f32 %v471, 0.75
        %v670 = vmul.f32 %v472, 0.75
        %v671 = vmul.f32 %v489, 0.75
        %v672 = vmul.f32 %v490, 0.75
        %v673 = vadd.f32 %v633, %v653
        %v674 = vadd.f32 %v634, %v654
        %v675 = vadd.f32 %v635, %v655
        %v676 = vadd.f32 %v636, %v656
        %v677 = vadd.f32 %v637, %v657
        %v678 = vadd.f32 %v638, %v658
        %v679 = vadd.f32 %v639, %v659
        %v680 = vadd.f32 %v640, %v660
        %v681 = vadd.f32 %v641, %v661
        %v682 = vadd.f32 %v642, %v662
        %v683 = vadd.f32 %v643, %v663
        %v684 = vadd.f32 %v644, %v664
        %v685 = vadd.f32 %v645, %v665
        %v686 = vadd.f32 %v646, %v666
        %v687 = vadd.f32 %v647, %v667
        %v688 = vadd.f32 %v648, %v668
        %v689 = vadd.f32 %v649, %v669
        %v690 = vadd.f32 %v650, %v670
        %v691 = vadd.f32 %v651, %v671
        %v692 = vadd.f32 %v652, %v672
        %v693 = vmul.f32 %v575, 0.25
        %v694 = vmul.f32 %v623, 0.25
        %v695 = vmul.f32 %v578, 0.25
        %v696 = vmul.f32 %v624, 0.25
        %v697 = vmul.f32 %v581, 0.25
        %v698 = vmul.f32 %v625, 0.25
        %v699 = vmul.f32 %v584, 0.25
        %v700 = vmul.f32 %v626, 0.25
        %v701 = vmul.f32 %v587, 0.25
        %v702 = vmul.f32 %v627, 0.25
        %v703 = vmul.f32 %v590, 0.25
        %v704 = vmul.f32 %v628, 0.25
        %v705 = vmul.f32 %v593, 0.25
        %v706 = vmul.f32 %v629, 0.25
        %v707 = vmul.f32 %v596, 0.25
        %v708 = vmul.f32 %v630, 0.25
        %v709 = vmul.f32 %v599, 0.25
        %v710 = vmul.f32 %v631, 0.25
        %v711 = vmul.f32 %v602, 0.25
        %v712 = vmul.f32 %v632, 0.25
        %v713 = vadd.f32 %v653, %v693
        %v714 = vadd.f32 %v654, %v694
        %v715 = vadd.f32 %v655, %v695
        %v716 = vadd.f32 %v656, %v696
        %v717 = vadd.f32 %v657, %v697
        %v718 = vadd.f32 %v658, %v698
        %v719 = vadd.f32 %v659, %v699
        %v720 = vadd.f32 %v660, %v700
        %v721 = vadd.f32 %v661, %v701
        %v722 = vadd.f32 %v662, %v702
        %v723 = vadd.f32 %v663, %v703
        %v724 = vadd.f32 %v664, %v704
        %v725 = vadd.f32 %v665, %v705
        %v726 = vadd.f32 %v666, %v706
        %v727 = vadd.f32 %v667, %v707
        %v728 = vadd.f32 %v668, %v708
        %v729 = vadd.f32 %v669, %v709
        %v730 = vadd.f32 %v670, %v710
        %v731 = vadd.f32 %v671, %v711
        %v732 = vadd.f32 %v672, %v712
        %v753 = vrot.slane %v713, 7
        %v754 = vrot.slane %v714, 7
        %v755 = vsel %vm511, %v753, %v754
        %v756 = vrot.slane %v715, 7
        %v757 = vrot.slane %v716, 7
        %v758 = vsel %vm511, %v756, %v757
        %v759 = vrot.slane %v717, 7
        %v760 = vrot.slane %v718, 7
        %v761 = vsel %vm511, %v759, %v760
        %v762 = vrot.slane %v719, 7
        %v763 = vrot.slane %v720, 7
        %v764 = vsel %vm511, %v762, %v763
        %v765 = vrot.slane %v721, 7
        %v766 = vrot.slane %v722, 7
        %v767 = vsel %vm511, %v765, %v766
        %v768 = vrot.slane %v723, 7
        %v769 = vrot.slane %v724, 7
        %v770 = vsel %vm511, %v768, %v769
        %v771 = vrot.slane %v725, 7
        %v772 = vrot.slane %v726, 7
        %v773 = vsel %vm511, %v771, %v772
        %v774 = vrot.slane %v727, 7
        %v775 = vrot.slane %v728, 7
        %v776 = vsel %vm511, %v774, %v775
        %v777 = vrot.slane %v729, 7
        %v778 = vrot.slane %v730, 7
        %v779 = vsel %vm511, %v777, %v778
        %v780 = vrot.slane %v731, 7
        %v781 = vrot.slane %v732, 7
        %v782 = vsel %vm511, %v780, %v781
        %v801 = vsel %vm511, 0.0, %v753
        %v802 = vsel %vm511, 0.0, %v756
        %v803 = vsel %vm511, 0.0, %v759
        %v804 = vsel %vm511, 0.0, %v762
        %v805 = vsel %vm511, 0.0, %v765
        %v806 = vsel %vm511, 0.0, %v768
        %v807 = vsel %vm511, 0.0, %v771
        %v808 = vsel %vm511, 0.0, %v774
        %v809 = vsel %vm511, 0.0, %v777
        %v810 = vsel %vm511, 0.0, %v780
        %v831 = vrot.slane %v673, 1
        %v832 = vrot.slane %v674, 1
        %v833 = vsel %vm572, %v831, %v832
        %v834 = vrot.slane %v675, 1
        %v835 = vrot.slane %v676, 1
        %v836 = vsel %vm572, %v834, %v835
        %v837 = vrot.slane %v677, 1
        %v838 = vrot.slane %v678, 1
        %v839 = vsel %vm572, %v837, %v838
        %v840 = vrot.slane %v679, 1
        %v841 = vrot.slane %v680, 1
        %v842 = vsel %vm572, %v840, %v841
        %v843 = vrot.slane %v681, 1
        %v844 = vrot.slane %v682, 1
        %v845 = vsel %vm572, %v843, %v844
        %v846 = vrot.slane %v683, 1
        %v847 = vrot.slane %v684, 1
        %v848 = vsel %vm572, %v846, %v847
        %v849 = vrot.slane %v685, 1
        %v850 = vrot.slane %v686, 1
        %v851 = vsel %vm572, %v849, %v850
        %v852 = vrot.slane %v687, 1
        %v853 = vrot.slane %v688, 1
        %v854 = vsel %vm572, %v852, %v853
        %v855 = vrot.slane %v689, 1
        %v856 = vrot.slane %v690, 1
        %v857 = vsel %vm572, %v855, %v856
        %v858 = vrot.slane %v691, 1
        %v859 = vrot.slane %v692, 1
        %v860 = vsel %vm572, %v858, %v859
        %v871 = vsel %vm572, %v832, 0.0
        %v872 = vsel %vm572, %v835, 0.0
        %v873 = vsel %vm572, %v838, 0.0
        %v874 = vsel %vm572, %v841, 0.0
        %v875 = vsel %vm572, %v844, 0.0
        %v876 = vsel %vm572, %v847, 0.0
        %v877 = vsel %vm572, %v850, 0.0
        %v878 = vsel %vm572, %v853, 0.0
        %v879 = vsel %vm572, %v856, 0.0
        %v880 = vsel %vm572, %v859, 0.0
        %vm881 = vcmask 31744
        %882 = vst.msk [vmem:[#allocation2] sm:$0xff] %vm881, %v801
        %883 = vst.msk [vmem:[#allocation2 + $0x8] sm:$0xff] %vm881, %v755
        %884 = vst.msk [vmem:[#allocation2 + $0x10] sm:$0xff] %vm881, %v802
        %885 = vst.msk [vmem:[#allocation2 + $0x18] sm:$0xff] %vm881, %v758
        %886 = vst.msk [vmem:[#allocation2 + $0x20] sm:$0xff] %vm881, %v803
        %887 = vst.msk [vmem:[#allocation2 + $0x28] sm:$0xff] %vm881, %v761
        %888 = vst.msk [vmem:[#allocation2 + $0x30] sm:$0xff] %vm881, %v804
        %889 = vst.msk [vmem:[#allocation2 + $0x38] sm:$0xff] %vm881, %v764
        %890 = vst.msk [vmem:[#allocation2 + $0x40] sm:$0xff] %vm881, %v805
        %891 = vst.msk [vmem:[#allocation2 + $0x48] sm:$0xff] %vm881, %v767
        %892 = vst.msk [vmem:[#allocation2 + $0x50] sm:$0xff] %vm881, %v806
        %893 = vst.msk [vmem:[#allocation2 + $0x58] sm:$0xff] %vm881, %v770
        %894 = vst.msk [vmem:[#allocation2 + $0x60] sm:$0xff] %vm881, %v807
        %895 = vst.msk [vmem:[#allocation2 + $0x68] sm:$0xff] %vm881, %v773
        %896 = vst.msk [vmem:[#allocation2 + $0x70] sm:$0xff] %vm881, %v808
        %897 = vst.msk [vmem:[#allocation2 + $0x78] sm:$0xff] %vm881, %v776
        %898 = vrot.lane.b32.xlu0 %v673, 4
        %v899 = vpop.permute.xlu0 %898
        %900 = vrot.lane.b32.xlu0 %v674, 4
        %v901 = vpop.permute.xlu0 %900
        %902 = vrot.lane.b32.xlu0 %v675, 4
        %v903 = vpop.permute.xlu0 %902
        %904 = vrot.lane.b32.xlu0 %v676, 4
        %v905 = vpop.permute.xlu0 %904
        %906 = vrot.lane.b32.xlu0 %v677, 4
        %v907 = vpop.permute.xlu0 %906
        %908 = vrot.lane.b32.xlu0 %v678, 4
        %v909 = vpop.permute.xlu0 %908
        %910 = vrot.lane.b32.xlu0 %v679, 4
        %v911 = vpop.permute.xlu0 %910
        %912 = vrot.lane.b32.xlu0 %v680, 4
        %v913 = vpop.permute.xlu0 %912
        %914 = vrot.lane.b32.xlu0 %v681, 4
        %v915 = vpop.permute.xlu0 %914
        %916 = vrot.lane.b32.xlu0 %v682, 4
        %v917 = vpop.permute.xlu0 %916
        %918 = vrot.lane.b32.xlu0 %v683, 4
        %v919 = vpop.permute.xlu0 %918
        %920 = vrot.lane.b32.xlu0 %v684, 4
        %v921 = vpop.permute.xlu0 %920
        %922 = vrot.lane.b32.xlu0 %v685, 4
        %v923 = vpop.permute.xlu0 %922
        %924 = vrot.lane.b32.xlu0 %v686, 4
        %v925 = vpop.permute.xlu0 %924
        %926 = vrot.lane.b32.xlu0 %v687, 4
        %v927 = vpop.permute.xlu0 %926
        %928 = vrot.lane.b32.xlu0 %v688, 4
        %v929 = vpop.permute.xlu0 %928
        %vm946 = vcmask 64544
        %947 = vst.msk [vmem:[#allocation2] sm:$0xff] %vm946, %v899
        %948 = vst.msk [vmem:[#allocation2 + $0x8] sm:$0xff] %vm946, %v901
        %949 = vst.msk [vmem:[#allocation2 + $0x10] sm:$0xff] %vm946, %v903
        %950 = vst.msk [vmem:[#allocation2 + $0x18] sm:$0xff] %vm946, %v905
        %951 = vst.msk [vmem:[#allocation2 + $0x20] sm:$0xff] %vm946, %v907
        %952 = vst.msk [vmem:[#allocation2 + $0x28] sm:$0xff] %vm946, %v909
        %953 = vst.msk [vmem:[#allocation2 + $0x30] sm:$0xff] %vm946, %v911
        %954 = vst.msk [vmem:[#allocation2 + $0x38] sm:$0xff] %vm946, %v913
        %955 = vst.msk [vmem:[#allocation2 + $0x40] sm:$0xff] %vm946, %v915
        %956 = vst.msk [vmem:[#allocation2 + $0x48] sm:$0xff] %vm946, %v917
        %957 = vst.msk [vmem:[#allocation2 + $0x50] sm:$0xff] %vm946, %v919
        %958 = vst.msk [vmem:[#allocation2 + $0x58] sm:$0xff] %vm946, %v921
        %959 = vst.msk [vmem:[#allocation2 + $0x60] sm:$0xff] %vm946, %v923
        %960 = vst.msk [vmem:[#allocation2 + $0x68] sm:$0xff] %vm946, %v925
        %961 = vst.msk [vmem:[#allocation2 + $0x70] sm:$0xff] %vm946, %v927
        %962 = vst.msk [vmem:[#allocation2 + $0x78] sm:$0xff] %vm946, %v929
        %963 = vrot.lane.b32.xlu0 %v713, 8
        %v964 = vpop.permute.xlu0 %963
        %965 = vrot.lane.b32.xlu0 %v714, 8
        %v966 = vpop.permute.xlu0 %965
        %967 = vrot.lane.b32.xlu0 %v715, 8
        %v968 = vpop.permute.xlu0 %967
        %969 = vrot.lane.b32.xlu0 %v716, 8
        %v970 = vpop.permute.xlu0 %969
        %971 = vrot.lane.b32.xlu0 %v717, 8
        %v972 = vpop.permute.xlu0 %971
        %973 = vrot.lane.b32.xlu0 %v718, 8
        %v974 = vpop.permute.xlu0 %973
        %975 = vrot.lane.b32.xlu0 %v719, 8
        %v976 = vpop.permute.xlu0 %975
        %977 = vrot.lane.b32.xlu0 %v720, 8
        %v978 = vpop.permute.xlu0 %977
        %979 = vrot.lane.b32.xlu0 %v721, 8
        %v980 = vpop.permute.xlu0 %979
        %981 = vrot.lane.b32.xlu0 %v722, 8
        %v982 = vpop.permute.xlu0 %981
        %983 = vrot.lane.b32.xlu0 %v723, 8
        %v984 = vpop.permute.xlu0 %983
        %985 = vrot.lane.b32.xlu0 %v724, 8
        %v986 = vpop.permute.xlu0 %985
        %987 = vrot.lane.b32.xlu0 %v725, 8
        %v988 = vpop.permute.xlu0 %987
        %989 = vrot.lane.b32.xlu0 %v726, 8
        %v990 = vpop.permute.xlu0 %989
        %991 = vrot.lane.b32.xlu0 %v727, 8
        %v992 = vpop.permute.xlu0 %991
        %993 = vrot.lane.b32.xlu0 %v728, 8
        %v994 = vpop.permute.xlu0 %993
        %vm1011 = vcmask 97344
        %1012 = vst.msk [vmem:[#allocation2] sm:$0xff] %vm1011, %v964
        %1013 = vst.msk [vmem:[#allocation2 + $0x8] sm:$0xff] %vm1011, %v966
        %1014 = vst.msk [vmem:[#allocation2 + $0x10] sm:$0xff] %vm1011, %v968
        %1015 = vst.msk [vmem:[#allocation2 + $0x18] sm:$0xff] %vm1011, %v970
        %1016 = vst.msk [vmem:[#allocation2 + $0x20] sm:$0xff] %vm1011, %v972
        %1017 = vst.msk [vmem:[#allocation2 + $0x28] sm:$0xff] %vm1011, %v974
        %1018 = vst.msk [vmem:[#allocation2 + $0x30] sm:$0xff] %vm1011, %v976
        %1019 = vst.msk [vmem:[#allocation2 + $0x38] sm:$0xff] %vm1011, %v978
        %1020 = vst.msk [vmem:[#allocation2 + $0x40] sm:$0xff] %vm1011, %v980
        %1021 = vst.msk [vmem:[#allocation2 + $0x48] sm:$0xff] %vm1011, %v982
        %1022 = vst.msk [vmem:[#allocation2 + $0x50] sm:$0xff] %vm1011, %v984
        %1023 = vst.msk [vmem:[#allocation2 + $0x58] sm:$0xff] %vm1011, %v986
        %1024 = vst.msk [vmem:[#allocation2 + $0x60] sm:$0xff] %vm1011, %v988
        %1025 = vst.msk [vmem:[#allocation2 + $0x68] sm:$0xff] %vm1011, %v990
        %1026 = vst.msk [vmem:[#allocation2 + $0x70] sm:$0xff] %vm1011, %v992
        %1027 = vst.msk [vmem:[#allocation2 + $0x78] sm:$0xff] %vm1011, %v994
        %1036 = vrot.lane.b32.xlu0 %v802, 12
        %v1037 = vpop.permute.xlu0 %1036
        %1038 = vrot.lane.b32.xlu0 %v758, 12
        %v1039 = vpop.permute.xlu0 %1038
        %1040 = vrot.lane.b32.xlu0 %v803, 12
        %v1041 = vpop.permute.xlu0 %1040
        %1042 = vrot.lane.b32.xlu0 %v761, 12
        %v1043 = vpop.permute.xlu0 %1042
        %1044 = vrot.lane.b32.xlu0 %v804, 12
        %v1045 = vpop.permute.xlu0 %1044
        %1046 = vrot.lane.b32.xlu0 %v764, 12
        %v1047 = vpop.permute.xlu0 %1046
        %1048 = vrot.lane.b32.xlu0 %v805, 12
        %v1049 = vpop.permute.xlu0 %1048
        %1050 = vrot.lane.b32.xlu0 %v767, 12
        %v1051 = vpop.permute.xlu0 %1050
        %1052 = vrot.lane.b32.xlu0 %v806, 12
        %v1053 = vpop.permute.xlu0 %1052
        %1054 = vrot.lane.b32.xlu0 %v770, 12
        %v1055 = vpop.permute.xlu0 %1054
        %1056 = vrot.lane.b32.xlu0 %v807, 12
        %v1057 = vpop.permute.xlu0 %1056
        %1058 = vrot.lane.b32.xlu0 %v773, 12
        %v1059 = vpop.permute.xlu0 %1058
        %1060 = vrot.lane.b32.xlu0 %v808, 12
        %v1061 = vpop.permute.xlu0 %1060
        %1062 = vrot.lane.b32.xlu0 %v776, 12
        %v1063 = vpop.permute.xlu0 %1062
        %1064 = vrot.lane.b32.xlu0 %v809, 12
        %v1065 = vpop.permute.xlu0 %1064
        %1066 = vrot.lane.b32.xlu0 %v779, 12
        %v1067 = vpop.permute.xlu0 %1066
        %vm1084 = vcmask 130144
        %1085 = vst.msk [vmem:[#allocation2] sm:$0xff] %vm1084, %v1037
        %1086 = vst.msk [vmem:[#allocation2 + $0x8] sm:$0xff] %vm1084, %v1039
        %1087 = vst.msk [vmem:[#allocation2 + $0x10] sm:$0xff] %vm1084, %v1041
        %1088 = vst.msk [vmem:[#allocation2 + $0x18] sm:$0xff] %vm1084, %v1043
        %1089 = vst.msk [vmem:[#allocation2 + $0x20] sm:$0xff] %vm1084, %v1045
        %1090 = vst.msk [vmem:[#allocation2 + $0x28] sm:$0xff] %vm1084, %v1047
        %1091 = vst.msk [vmem:[#allocation2 + $0x30] sm:$0xff] %vm1084, %v1049
        %1092 = vst.msk [vmem:[#allocation2 + $0x38] sm:$0xff] %vm1084, %v1051
        %1093 = vst.msk [vmem:[#allocation2 + $0x40] sm:$0xff] %vm1084, %v1053
        %1094 = vst.msk [vmem:[#allocation2 + $0x48] sm:$0xff] %vm1084, %v1055
        %1095 = vst.msk [vmem:[#allocation2 + $0x50] sm:$0xff] %vm1084, %v1057
        %1096 = vst.msk [vmem:[#allocation2 + $0x58] sm:$0xff] %vm1084, %v1059
        %1097 = vst.msk [vmem:[#allocation2 + $0x60] sm:$0xff] %vm1084, %v1061
        %1098 = vst.msk [vmem:[#allocation2 + $0x68] sm:$0xff] %vm1084, %v1063
        %1099 = vst.msk [vmem:[#allocation2 + $0x70] sm:$0xff] %vm1084, %v1065
        %1100 = vst.msk [vmem:[#allocation2 + $0x78] sm:$0xff] %vm1084, %v1067
        %1101 = vrot.lane.b32.xlu0 %v675, 16
        %v1102 = vpop.permute.xlu0 %1101
        %1103 = vrot.lane.b32.xlu0 %v676, 16
        %v1104 = vpop.permute.xlu0 %1103
        %1105 = vrot.lane.b32.xlu0 %v677, 16
        %v1106 = vpop.permute.xlu0 %1105
        %1107 = vrot.lane.b32.xlu0 %v678, 16
        %v1108 = vpop.permute.xlu0 %1107
        %1109 = vrot.lane.b32.xlu0 %v679, 16
        %v1110 = vpop.permute.xlu0 %1109
        %1111 = vrot.lane.b32.xlu0 %v680, 16
        %v1112 = vpop.permute.xlu0 %1111
        %1113 = vrot.lane.b32.xlu0 %v681, 16
        %v1114 = vpop.permute.xlu0 %1113
        %1115 = vrot.lane.b32.xlu0 %v682, 16
        %v1116 = vpop.permute.xlu0 %1115
        %1117 = vrot.lane.b32.xlu0 %v683, 16
        %v1118 = vpop.permute.xlu0 %1117
        %1119 = vrot.lane.b32.xlu0 %v684, 16
        %v1120 = vpop.permute.xlu0 %1119
        %1121 = vrot.lane.b32.xlu0 %v685, 16
        %v1122 = vpop.permute.xlu0 %1121
        %1123 = vrot.lane.b32.xlu0 %v686, 16
        %v1124 = vpop.permute.xlu0 %1123
        %1125 = vrot.lane.b32.xlu0 %v687, 16
        %v1126 = vpop.permute.xlu0 %1125
        %1127 = vrot.lane.b32.xlu0 %v688, 16
        %v1128 = vpop.permute.xlu0 %1127
        %1129 = vrot.lane.b32.xlu0 %v689, 16
        %v1130 = vpop.permute.xlu0 %1129
        %1131 = vrot.lane.b32.xlu0 %v690, 16
        %v1132 = vpop.permute.xlu0 %1131
        %vm1149 = vcmask 162944
        %1150 = vst.msk [vmem:[#allocation2] sm:$0xff] %vm1149, %v1102
        %1151 = vst.msk [vmem:[#allocation2 + $0x8] sm:$0xff] %vm1149, %v1104
        %1152 = vst.msk [vmem:[#allocation2 + $0x10] sm:$0xff] %vm1149, %v1106
        %1153 = vst.msk [vmem:[#allocation2 + $0x18] sm:$0xff] %vm1149, %v1108
        %1154 = vst.msk [vmem:[#allocation2 + $0x20] sm:$0xff] %vm1149, %v1110
        %1155 = vst.msk [vmem:[#allocation2 + $0x28] sm:$0xff] %vm1149, %v1112
        %1156 = vst.msk [vmem:[#allocation2 + $0x30] sm:$0xff] %vm1149, %v1114
        %1157 = vst.msk [vmem:[#allocation2 + $0x38] sm:$0xff] %vm1149, %v1116
        %1158 = vst.msk [vmem:[#allocation2 + $0x40] sm:$0xff] %vm1149, %v1118
        %1159 = vst.msk [vmem:[#allocation2 + $0x48] sm:$0xff] %vm1149, %v1120
        %1160 = vst.msk [vmem:[#allocation2 + $0x50] sm:$0xff] %vm1149, %v1122
        %1161 = vst.msk [vmem:[#allocation2 + $0x58] sm:$0xff] %vm1149, %v1124
        %1162 = vst.msk [vmem:[#allocation2 + $0x60] sm:$0xff] %vm1149, %v1126
        %1163 = vst.msk [vmem:[#allocation2 + $0x68] sm:$0xff] %vm1149, %v1128
        %1164 = vst.msk [vmem:[#allocation2 + $0x70] sm:$0xff] %vm1149, %v1130
        %1165 = vst.msk [vmem:[#allocation2 + $0x78] sm:$0xff] %vm1149, %v1132
        %1166 = vrot.lane.b32.xlu0 %v715, 20
        %v1167 = vpop.permute.xlu0 %1166
        %1168 = vrot.lane.b32.xlu0 %v716, 20
        %v1169 = vpop.permute.xlu0 %1168
        %1170 = vrot.lane.b32.xlu0 %v717, 20
        %v1171 = vpop.permute.xlu0 %1170
        %1172 = vrot.lane.b32.xlu0 %v718, 20
        %v1173 = vpop.permute.xlu0 %1172
        %1174 = vrot.lane.b32.xlu0 %v719, 20
        %v1175 = vpop.permute.xlu0 %1174
        %1176 = vrot.lane.b32.xlu0 %v720, 20
        %v1177 = vpop.permute.xlu0 %1176
        %1178 = vrot.lane.b32.xlu0 %v721, 20
        %v1179 = vpop.permute.xlu0 %1178
        %1180 = vrot.lane.b32.xlu0 %v722, 20
        %v1181 = vpop.permute.xlu0 %1180
        %1182 = vrot.lane.b32.xlu0 %v723, 20
        %v1183 = vpop.permute.xlu0 %1182
        %1184 = vrot.lane.b32.xlu0 %v724, 20
        %v1185 = vpop.permute.xlu0 %1184
        %1186 = vrot.lane.b32.xlu0 %v725, 20
        %v1187 = vpop.permute.xlu0 %1186
        %1188 = vrot.lane.b32.xlu0 %v726, 20
        %v1189 = vpop.permute.xlu0 %1188
        %1190 = vrot.lane.b32.xlu0 %v727, 20
        %v1191 = vpop.permute.xlu0 %1190
        %1192 = vrot.lane.b32.xlu0 %v728, 20
        %v1193 = vpop.permute.xlu0 %1192
        %1194 = vrot.lane.b32.xlu0 %v729, 20
        %v1195 = vpop.permute.xlu0 %1194
        %1196 = vrot.lane.b32.xlu0 %v730, 20
        %v1197 = vpop.permute.xlu0 %1196
        %vm1214 = vcmask 195744
        %1215 = vst.msk [vmem:[#allocation2] sm:$0xff] %vm1214, %v1167
        %1216 = vst.msk [vmem:[#allocation2 + $0x8] sm:$0xff] %vm1214, %v1169
        %1217 = vst.msk [vmem:[#allocation2 + $0x10] sm:$0xff] %vm1214, %v1171
        %1218 = vst.msk [vmem:[#allocation2 + $0x18] sm:$0xff] %vm1214, %v1173
        %1219 = vst.msk [vmem:[#allocation2 + $0x20] sm:$0xff] %vm1214, %v1175
        %1220 = vst.msk [vmem:[#allocation2 + $0x28] sm:$0xff] %vm1214, %v1177
        %1221 = vst.msk [vmem:[#allocation2 + $0x30] sm:$0xff] %vm1214, %v1179
        %1222 = vst.msk [vmem:[#allocation2 + $0x38] sm:$0xff] %vm1214, %v1181
        %1223 = vst.msk [vmem:[#allocation2 + $0x40] sm:$0xff] %vm1214, %v1183
        %1224 = vst.msk [vmem:[#allocation2 + $0x48] sm:$0xff] %vm1214, %v1185
        %1225 = vst.msk [vmem:[#allocation2 + $0x50] sm:$0xff] %vm1214, %v1187
        %1226 = vst.msk [vmem:[#allocation2 + $0x58] sm:$0xff] %vm1214, %v1189
        %1227 = vst.msk [vmem:[#allocation2 + $0x60] sm:$0xff] %vm1214, %v1191
        %1228 = vst.msk [vmem:[#allocation2 + $0x68] sm:$0xff] %vm1214, %v1193
        %1229 = vst.msk [vmem:[#allocation2 + $0x70] sm:$0xff] %vm1214, %v1195
        %1230 = vst.msk [vmem:[#allocation2 + $0x78] sm:$0xff] %vm1214, %v1197
        %1232 = vrot.lane.b32.xlu0 %v803, 24
        %v1233 = vpop.permute.xlu0 %1232
        %1234 = vrot.lane.b32.xlu0 %v761, 24
        %v1235 = vpop.permute.xlu0 %1234
        %1236 = vrot.lane.b32.xlu0 %v804, 24
        %v1237 = vpop.permute.xlu0 %1236
        %1238 = vrot.lane.b32.xlu0 %v764, 24
        %v1239 = vpop.permute.xlu0 %1238
        %1240 = vrot.lane.b32.xlu0 %v805, 24
        %v1241 = vpop.permute.xlu0 %1240
        %1242 = vrot.lane.b32.xlu0 %v767, 24
        %v1243 = vpop.permute.xlu0 %1242
        %1244 = vrot.lane.b32.xlu0 %v806, 24
        %v1245 = vpop.permute.xlu0 %1244
        %1246 = vrot.lane.b32.xlu0 %v770, 24
        %v1247 = vpop.permute.xlu0 %1246
        %1248 = vrot.lane.b32.xlu0 %v807, 24
        %v1249 = vpop.permute.xlu0 %1248
        %1250 = vrot.lane.b32.xlu0 %v773, 24
        %v1251 = vpop.permute.xlu0 %1250
        %1252 = vrot.lane.b32.xlu0 %v808, 24
        %v1253 = vpop.permute.xlu0 %1252
        %1254 = vrot.lane.b32.xlu0 %v776, 24
        %v1255 = vpop.permute.xlu0 %1254
        %1256 = vrot.lane.b32.xlu0 %v809, 24
        %v1257 = vpop.permute.xlu0 %1256
        %1258 = vrot.lane.b32.xlu0 %v779, 24
        %v1259 = vpop.permute.xlu0 %1258
        %1260 = vrot.lane.b32.xlu0 %v810, 24
        %v1261 = vpop.permute.xlu0 %1260
        %1262 = vrot.lane.b32.xlu0 %v782, 24
        %v1263 = vpop.permute.xlu0 %1262
        %vm1280 = vcmask 228544
        %1281 = vst.msk [vmem:[#allocation2] sm:$0xff] %vm1280, %v1233
        %1282 = vst.msk [vmem:[#allocation2 + $0x8] sm:$0xff] %vm1280, %v1235
        %1283 = vst.msk [vmem:[#allocation2 + $0x10] sm:$0xff] %vm1280, %v1237
        %1284 = vst.msk [vmem:[#allocation2 + $0x18] sm:$0xff] %vm1280, %v1239
        %1285 = vst.msk [vmem:[#allocation2 + $0x20] sm:$0xff] %vm1280, %v1241
        %1286 = vst.msk [vmem:[#allocation2 + $0x28] sm:$0xff] %vm1280, %v1243
        %1287 = vst.msk [vmem:[#allocation2 + $0x30] sm:$0xff] %vm1280, %v1245
        %1288 = vst.msk [vmem:[#allocation2 + $0x38] sm:$0xff] %vm1280, %v1247
        %1289 = vst.msk [vmem:[#allocation2 + $0x40] sm:$0xff] %vm1280, %v1249
        %1290 = vst.msk [vmem:[#allocation2 + $0x48] sm:$0xff] %vm1280, %v1251
        %1291 = vst.msk [vmem:[#allocation2 + $0x50] sm:$0xff] %vm1280, %v1253
        %1292 = vst.msk [vmem:[#allocation2 + $0x58] sm:$0xff] %vm1280, %v1255
        %1293 = vst.msk [vmem:[#allocation2 + $0x60] sm:$0xff] %vm1280, %v1257
        %1294 = vst.msk [vmem:[#allocation2 + $0x68] sm:$0xff] %vm1280, %v1259
        %1295 = vst.msk [vmem:[#allocation2 + $0x70] sm:$0xff] %vm1280, %v1261
        %1296 = vst.msk [vmem:[#allocation2 + $0x78] sm:$0xff] %vm1280, %v1263
        %1297 = vrot.lane.b32.xlu0 %v677, 28
        %v1298 = vpop.permute.xlu0 %1297
        %1299 = vrot.lane.b32.xlu0 %v678, 28
        %v1300 = vpop.permute.xlu0 %1299
        %1301 = vrot.lane.b32.xlu0 %v679, 28
        %v1302 = vpop.permute.xlu0 %1301
        %1303 = vrot.lane.b32.xlu0 %v680, 28
        %v1304 = vpop.permute.xlu0 %1303
        %1305 = vrot.lane.b32.xlu0 %v681, 28
        %v1306 = vpop.permute.xlu0 %1305
        %1307 = vrot.lane.b32.xlu0 %v682, 28
        %v1308 = vpop.permute.xlu0 %1307
        %1309 = vrot.lane.b32.xlu0 %v683, 28
        %v1310 = vpop.permute.xlu0 %1309
        %1311 = vrot.lane.b32.xlu0 %v684, 28
        %v1312 = vpop.permute.xlu0 %1311
        %1313 = vrot.lane.b32.xlu0 %v685, 28
        %v1314 = vpop.permute.xlu0 %1313
        %1315 = vrot.lane.b32.xlu0 %v686, 28
        %v1316 = vpop.permute.xlu0 %1315
        %1317 = vrot.lane.b32.xlu0 %v687, 28
        %v1318 = vpop.permute.xlu0 %1317
        %1319 = vrot.lane.b32.xlu0 %v688, 28
        %v1320 = vpop.permute.xlu0 %1319
        %1321 = vrot.lane.b32.xlu0 %v689, 28
        %v1322 = vpop.permute.xlu0 %1321
        %1323 = vrot.lane.b32.xlu0 %v690, 28
        %v1324 = vpop.permute.xlu0 %1323
        %1325 = vrot.lane.b32.xlu0 %v691, 28
        %v1326 = vpop.permute.xlu0 %1325
        %1327 = vrot.lane.b32.xlu0 %v692, 28
        %v1328 = vpop.permute.xlu0 %1327
        %vm1345 = vcmask 261344
        %1346 = vst.msk [vmem:[#allocation2] sm:$0xff] %vm1345, %v1298
        %1347 = vst.msk [vmem:[#allocation2 + $0x8] sm:$0xff] %vm1345, %v1300
        %1348 = vst.msk [vmem:[#allocation2 + $0x10] sm:$0xff] %vm1345, %v1302
        %1349 = vst.msk [vmem:[#allocation2 + $0x18] sm:$0xff] %vm1345, %v1304
        %1350 = vst.msk [vmem:[#allocation2 + $0x20] sm:$0xff] %vm1345, %v1306
        %1351 = vst.msk [vmem:[#allocation2 + $0x28] sm:$0xff] %vm1345, %v1308
        %1352 = vst.msk [vmem:[#allocation2 + $0x30] sm:$0xff] %vm1345, %v1310
        %1353 = vst.msk [vmem:[#allocation2 + $0x38] sm:$0xff] %vm1345, %v1312
        %1354 = vst.msk [vmem:[#allocation2 + $0x40] sm:$0xff] %vm1345, %v1314
        %1355 = vst.msk [vmem:[#allocation2 + $0x48] sm:$0xff] %vm1345, %v1316
        %1356 = vst.msk [vmem:[#allocation2 + $0x50] sm:$0xff] %vm1345, %v1318
        %1357 = vst.msk [vmem:[#allocation2 + $0x58] sm:$0xff] %vm1345, %v1320
        %1358 = vst.msk [vmem:[#allocation2 + $0x60] sm:$0xff] %vm1345, %v1322
        %1359 = vst.msk [vmem:[#allocation2 + $0x68] sm:$0xff] %vm1345, %v1324
        %1360 = vst.msk [vmem:[#allocation2 + $0x70] sm:$0xff] %vm1345, %v1326
        %1361 = vst.msk [vmem:[#allocation2 + $0x78] sm:$0xff] %vm1345, %v1328
        %1362 = vrot.lane.b32.xlu0 %v717, 32
        %v1363 = vpop.permute.xlu0 %1362
        %1364 = vrot.lane.b32.xlu0 %v718, 32
        %v1365 = vpop.permute.xlu0 %1364
        %1366 = vrot.lane.b32.xlu0 %v719, 32
        %v1367 = vpop.permute.xlu0 %1366
        %1368 = vrot.lane.b32.xlu0 %v720, 32
        %v1369 = vpop.permute.xlu0 %1368
        %1370 = vrot.lane.b32.xlu0 %v721, 32
        %v1371 = vpop.permute.xlu0 %1370
        %1372 = vrot.lane.b32.xlu0 %v722, 32
        %v1373 = vpop.permute.xlu0 %1372
        %1374 = vrot.lane.b32.xlu0 %v723, 32
        %v1375 = vpop.permute.xlu0 %1374
        %1376 = vrot.lane.b32.xlu0 %v724, 32
        %v1377 = vpop.permute.xlu0 %1376
        %1378 = vrot.lane.b32.xlu0 %v725, 32
        %v1379 = vpop.permute.xlu0 %1378
        %1380 = vrot.lane.b32.xlu0 %v726, 32
        %v1381 = vpop.permute.xlu0 %1380
        %1382 = vrot.lane.b32.xlu0 %v727, 32
        %v1383 = vpop.permute.xlu0 %1382
        %1384 = vrot.lane.b32.xlu0 %v728, 32
        %v1385 = vpop.permute.xlu0 %1384
        %1386 = vrot.lane.b32.xlu0 %v729, 32
        %v1387 = vpop.permute.xlu0 %1386
        %1388 = vrot.lane.b32.xlu0 %v730, 32
        %v1389 = vpop.permute.xlu0 %1388
        %1390 = vrot.lane.b32.xlu0 %v731, 32
        %v1391 = vpop.permute.xlu0 %1390
        %1392 = vrot.lane.b32.xlu0 %v732, 32
        %v1393 = vpop.permute.xlu0 %1392
        %vm1410 = vcmask 294144
        %1411 = vst.msk [vmem:[#allocation2] sm:$0xff] %vm1410, %v1363
        %1412 = vst.msk [vmem:[#allocation2 + $0x8] sm:$0xff] %vm1410, %v1365
        %1413 = vst.msk [vmem:[#allocation2 + $0x10] sm:$0xff] %vm1410, %v1367
        %1414 = vst.msk [vmem:[#allocation2 + $0x18] sm:$0xff] %vm1410, %v1369
        %1415 = vst.msk [vmem:[#allocation2 + $0x20] sm:$0xff] %vm1410, %v1371
        %1416 = vst.msk [vmem:[#allocation2 + $0x28] sm:$0xff] %vm1410, %v1373
        %1417 = vst.msk [vmem:[#allocation2 + $0x30] sm:$0xff] %vm1410, %v1375
        %1418 = vst.msk [vmem:[#allocation2 + $0x38] sm:$0xff] %vm1410, %v1377
        %1419 = vst.msk [vmem:[#allocation2 + $0x40] sm:$0xff] %vm1410, %v1379
        %1420 = vst.msk [vmem:[#allocation2 + $0x48] sm:$0xff] %vm1410, %v1381
        %1421 = vst.msk [vmem:[#allocation2 + $0x50] sm:$0xff] %vm1410, %v1383
        %1422 = vst.msk [vmem:[#allocation2 + $0x58] sm:$0xff] %vm1410, %v1385
        %1423 = vst.msk [vmem:[#allocation2 + $0x60] sm:$0xff] %vm1410, %v1387
        %1424 = vst.msk [vmem:[#allocation2 + $0x68] sm:$0xff] %vm1410, %v1389
        %1425 = vst.msk [vmem:[#allocation2 + $0x70] sm:$0xff] %vm1410, %v1391
        %1426 = vst.msk [vmem:[#allocation2 + $0x78] sm:$0xff] %vm1410, %v1393
        %s1427 = scalar_lea.vmem [#allocation2], 128
        %1428 = vst.msk [vmem:[%s1427] sm:$0xff] %vm881, %v673
        %1429 = vst.msk [vmem:[%s1427 + $0x8] sm:$0xff] %vm881, %v674
        %1430 = vst.msk [vmem:[%s1427 + $0x10] sm:$0xff] %vm881, %v675
        %1431 = vst.msk [vmem:[%s1427 + $0x18] sm:$0xff] %vm881, %v676
        %1432 = vst.msk [vmem:[%s1427 + $0x20] sm:$0xff] %vm881, %v677
        %1433 = vst.msk [vmem:[%s1427 + $0x28] sm:$0xff] %vm881, %v678
        %1434 = vst.msk [vmem:[%s1427 + $0x30] sm:$0xff] %vm881, %v679
        %1435 = vst.msk [vmem:[%s1427 + $0x38] sm:$0xff] %vm881, %v680
        %1436 = vst.msk [vmem:[%s1427 + $0x40] sm:$0xff] %vm881, %v681
        %1437 = vst.msk [vmem:[%s1427 + $0x48] sm:$0xff] %vm881, %v682
        %1438 = vst.msk [vmem:[%s1427 + $0x50] sm:$0xff] %vm881, %v683
        %1439 = vst.msk [vmem:[%s1427 + $0x58] sm:$0xff] %vm881, %v684
        %1440 = vst.msk [vmem:[%s1427 + $0x60] sm:$0xff] %vm881, %v685
        %1441 = vst.msk [vmem:[%s1427 + $0x68] sm:$0xff] %vm881, %v686
        %1442 = vst.msk [vmem:[%s1427 + $0x70] sm:$0xff] %vm881, %v687
        %1443 = vst.msk [vmem:[%s1427 + $0x78] sm:$0xff] %vm881, %v688
        %1444 = vrot.lane.b32.xlu0 %v713, 4
        %v1445 = vpop.permute.xlu0 %1444
        %1446 = vrot.lane.b32.xlu0 %v714, 4
        %v1447 = vpop.permute.xlu0 %1446
        %1448 = vrot.lane.b32.xlu0 %v715, 4
        %v1449 = vpop.permute.xlu0 %1448
        %1450 = vrot.lane.b32.xlu0 %v716, 4
        %v1451 = vpop.permute.xlu0 %1450
        %1452 = vrot.lane.b32.xlu0 %v717, 4
        %v1453 = vpop.permute.xlu0 %1452
        %1454 = vrot.lane.b32.xlu0 %v718, 4
        %v1455 = vpop.permute.xlu0 %1454
        %1456 = vrot.lane.b32.xlu0 %v719, 4
        %v1457 = vpop.permute.xlu0 %1456
        %1458 = vrot.lane.b32.xlu0 %v720, 4
        %v1459 = vpop.permute.xlu0 %1458
        %1460 = vrot.lane.b32.xlu0 %v721, 4
        %v1461 = vpop.permute.xlu0 %1460
        %1462 = vrot.lane.b32.xlu0 %v722, 4
        %v1463 = vpop.permute.xlu0 %1462
        %1464 = vrot.lane.b32.xlu0 %v723, 4
        %v1465 = vpop.permute.xlu0 %1464
        %1466 = vrot.lane.b32.xlu0 %v724, 4
        %v1467 = vpop.permute.xlu0 %1466
        %1468 = vrot.lane.b32.xlu0 %v725, 4
        %v1469 = vpop.permute.xlu0 %1468
        %1470 = vrot.lane.b32.xlu0 %v726, 4
        %v1471 = vpop.permute.xlu0 %1470
        %1472 = vrot.lane.b32.xlu0 %v727, 4
        %v1473 = vpop.permute.xlu0 %1472
        %1474 = vrot.lane.b32.xlu0 %v728, 4
        %v1475 = vpop.permute.xlu0 %1474
        %1492 = vst.msk [vmem:[%s1427] sm:$0xff] %vm946, %v1445
        %1493 = vst.msk [vmem:[%s1427 + $0x8] sm:$0xff] %vm946, %v1447
        %1494 = vst.msk [vmem:[%s1427 + $0x10] sm:$0xff] %vm946, %v1449
        %1495 = vst.msk [vmem:[%s1427 + $0x18] sm:$0xff] %vm946, %v1451
        %1496 = vst.msk [vmem:[%s1427 + $0x20] sm:$0xff] %vm946, %v1453
        %1497 = vst.msk [vmem:[%s1427 + $0x28] sm:$0xff] %vm946, %v1455
        %1498 = vst.msk [vmem:[%s1427 + $0x30] sm:$0xff] %vm946, %v1457
        %1499 = vst.msk [vmem:[%s1427 + $0x38] sm:$0xff] %vm946, %v1459
        %1500 = vst.msk [vmem:[%s1427 + $0x40] sm:$0xff] %vm946, %v1461
        %1501 = vst.msk [vmem:[%s1427 + $0x48] sm:$0xff] %vm946, %v1463
        %1502 = vst.msk [vmem:[%s1427 + $0x50] sm:$0xff] %vm946, %v1465
        %1503 = vst.msk [vmem:[%s1427 + $0x58] sm:$0xff] %vm946, %v1467
        %1504 = vst.msk [vmem:[%s1427 + $0x60] sm:$0xff] %vm946, %v1469
        %1505 = vst.msk [vmem:[%s1427 + $0x68] sm:$0xff] %vm946, %v1471
        %1506 = vst.msk [vmem:[%s1427 + $0x70] sm:$0xff] %vm946, %v1473
        %1507 = vst.msk [vmem:[%s1427 + $0x78] sm:$0xff] %vm946, %v1475
        %1516 = vrot.lane.b32.xlu0 %v833, 8
        %v1517 = vpop.permute.xlu0 %1516
        %1518 = vrot.lane.b32.xlu0 %v871, 8
        %v1519 = vpop.permute.xlu0 %1518
        %1520 = vrot.lane.b32.xlu0 %v836, 8
        %v1521 = vpop.permute.xlu0 %1520
        %1522 = vrot.lane.b32.xlu0 %v872, 8
        %v1523 = vpop.permute.xlu0 %1522
        %1524 = vrot.lane.b32.xlu0 %v839, 8
        %v1525 = vpop.permute.xlu0 %1524
        %1526 = vrot.lane.b32.xlu0 %v873, 8
        %v1527 = vpop.permute.xlu0 %1526
        %1528 = vrot.lane.b32.xlu0 %v842, 8
        %v1529 = vpop.permute.xlu0 %1528
        %1530 = vrot.lane.b32.xlu0 %v874, 8
        %v1531 = vpop.permute.xlu0 %1530
        %1532 = vrot.lane.b32.xlu0 %v845, 8
        %v1533 = vpop.permute.xlu0 %1532
        %1534 = vrot.lane.b32.xlu0 %v875, 8
        %v1535 = vpop.permute.xlu0 %1534
        %1536 = vrot.lane.b32.xlu0 %v848, 8
        %v1537 = vpop.permute.xlu0 %1536
        %1538 = vrot.lane.b32.xlu0 %v876, 8
        %v1539 = vpop.permute.xlu0 %1538
        %1540 = vrot.lane.b32.xlu0 %v851, 8
        %v1541 = vpop.permute.xlu0 %1540
        %1542 = vrot.lane.b32.xlu0 %v877, 8
        %v1543 = vpop.permute.xlu0 %1542
        %1544 = vrot.lane.b32.xlu0 %v854, 8
        %v1545 = vpop.permute.xlu0 %1544
        %1546 = vrot.lane.b32.xlu0 %v878, 8
        %v1547 = vpop.permute.xlu0 %1546
        %1564 = vst.msk [vmem:[%s1427] sm:$0xff] %vm1011, %v1517
        %1565 = vst.msk [vmem:[%s1427 + $0x8] sm:$0xff] %vm1011, %v1519
        %1566 = vst.msk [vmem:[%s1427 + $0x10] sm:$0xff] %vm1011, %v1521
        %1567 = vst.msk [vmem:[%s1427 + $0x18] sm:$0xff] %vm1011, %v1523
        %1568 = vst.msk [vmem:[%s1427 + $0x20] sm:$0xff] %vm1011, %v1525
        %1569 = vst.msk [vmem:[%s1427 + $0x28] sm:$0xff] %vm1011, %v1527
        %1570 = vst.msk [vmem:[%s1427 + $0x30] sm:$0xff] %vm1011, %v1529
        %1571 = vst.msk [vmem:[%s1427 + $0x38] sm:$0xff] %vm1011, %v1531
        %1572 = vst.msk [vmem:[%s1427 + $0x40] sm:$0xff] %vm1011, %v1533
        %1573 = vst.msk [vmem:[%s1427 + $0x48] sm:$0xff] %vm1011, %v1535
        %1574 = vst.msk [vmem:[%s1427 + $0x50] sm:$0xff] %vm1011, %v1537
        %1575 = vst.msk [vmem:[%s1427 + $0x58] sm:$0xff] %vm1011, %v1539
        %1576 = vst.msk [vmem:[%s1427 + $0x60] sm:$0xff] %vm1011, %v1541
        %1577 = vst.msk [vmem:[%s1427 + $0x68] sm:$0xff] %vm1011, %v1543
        %1578 = vst.msk [vmem:[%s1427 + $0x70] sm:$0xff] %vm1011, %v1545
        %1579 = vst.msk [vmem:[%s1427 + $0x78] sm:$0xff] %vm1011, %v1547
        %1580 = vrot.lane.b32.xlu0 %v675, 12
        %v1581 = vpop.permute.xlu0 %1580
        %1582 = vrot.lane.b32.xlu0 %v676, 12
        %v1583 = vpop.permute.xlu0 %1582
        %1584 = vrot.lane.b32.xlu0 %v677, 12
        %v1585 = vpop.permute.xlu0 %1584
        %1586 = vrot.lane.b32.xlu0 %v678, 12
        %v1587 = vpop.permute.xlu0 %1586
        %1588 = vrot.lane.b32.xlu0 %v679, 12
        %v1589 = vpop.permute.xlu0 %1588
        %1590 = vrot.lane.b32.xlu0 %v680, 12
        %v1591 = vpop.permute.xlu0 %1590
        %1592 = vrot.lane.b32.xlu0 %v681, 12
        %v1593 = vpop.permute.xlu0 %1592
        %1594 = vrot.lane.b32.xlu0 %v682, 12
        %v1595 = vpop.permute.xlu0 %1594
        %1596 = vrot.lane.b32.xlu0 %v683, 12
        %v1597 = vpop.permute.xlu0 %1596
        %1598 = vrot.lane.b32.xlu0 %v684, 12
        %v1599 = vpop.permute.xlu0 %1598
        %1600 = vrot.lane.b32.xlu0 %v685, 12
        %v1601 = vpop.permute.xlu0 %1600
        %1602 = vrot.lane.b32.xlu0 %v686, 12
        %v1603 = vpop.permute.xlu0 %1602
        %1604 = vrot.lane.b32.xlu0 %v687, 12
        %v1605 = vpop.permute.xlu0 %1604
        %1606 = vrot.lane.b32.xlu0 %v688, 12
        %v1607 = vpop.permute.xlu0 %1606
        %1608 = vrot.lane.b32.xlu0 %v689, 12
        %v1609 = vpop.permute.xlu0 %1608
        %1610 = vrot.lane.b32.xlu0 %v690, 12
        %v1611 = vpop.permute.xlu0 %1610
        %1628 = vst.msk [vmem:[%s1427] sm:$0xff] %vm1084, %v1581
        %1629 = vst.msk [vmem:[%s1427 + $0x8] sm:$0xff] %vm1084, %v1583
        %1630 = vst.msk [vmem:[%s1427 + $0x10] sm:$0xff] %vm1084, %v1585
        %1631 = vst.msk [vmem:[%s1427 + $0x18] sm:$0xff] %vm1084, %v1587
        %1632 = vst.msk [vmem:[%s1427 + $0x20] sm:$0xff] %vm1084, %v1589
        %1633 = vst.msk [vmem:[%s1427 + $0x28] sm:$0xff] %vm1084, %v1591
        %1634 = vst.msk [vmem:[%s1427 + $0x30] sm:$0xff] %vm1084, %v1593
        %1635 = vst.msk [vmem:[%s1427 + $0x38] sm:$0xff] %vm1084, %v1595
        %1636 = vst.msk [vmem:[%s1427 + $0x40] sm:$0xff] %vm1084, %v1597
        %1637 = vst.msk [vmem:[%s1427 + $0x48] sm:$0xff] %vm1084, %v1599
        %1638 = vst.msk [vmem:[%s1427 + $0x50] sm:$0xff] %vm1084, %v1601
        %1639 = vst.msk [vmem:[%s1427 + $0x58] sm:$0xff] %vm1084, %v1603
        %1640 = vst.msk [vmem:[%s1427 + $0x60] sm:$0xff] %vm1084, %v1605
        %1641 = vst.msk [vmem:[%s1427 + $0x68] sm:$0xff] %vm1084, %v1607
        %1642 = vst.msk [vmem:[%s1427 + $0x70] sm:$0xff] %vm1084, %v1609
        %1643 = vst.msk [vmem:[%s1427 + $0x78] sm:$0xff] %vm1084, %v1611
        %1644 = vrot.lane.b32.xlu0 %v715, 16
        %v1645 = vpop.permute.xlu0 %1644
        %1646 = vrot.lane.b32.xlu0 %v716, 16
        %v1647 = vpop.permute.xlu0 %1646
        %1648 = vrot.lane.b32.xlu0 %v717, 16
        %v1649 = vpop.permute.xlu0 %1648
        %1650 = vrot.lane.b32.xlu0 %v718, 16
        %v1651 = vpop.permute.xlu0 %1650
        %1652 = vrot.lane.b32.xlu0 %v719, 16
        %v1653 = vpop.permute.xlu0 %1652
        %1654 = vrot.lane.b32.xlu0 %v720, 16
        %v1655 = vpop.permute.xlu0 %1654
        %1656 = vrot.lane.b32.xlu0 %v721, 16
        %v1657 = vpop.permute.xlu0 %1656
        %1658 = vrot.lane.b32.xlu0 %v722, 16
        %v1659 = vpop.permute.xlu0 %1658
        %1660 = vrot.lane.b32.xlu0 %v723, 16
        %v1661 = vpop.permute.xlu0 %1660
        %1662 = vrot.lane.b32.xlu0 %v724, 16
        %v1663 = vpop.permute.xlu0 %1662
        %1664 = vrot.lane.b32.xlu0 %v725, 16
        %v1665 = vpop.permute.xlu0 %1664
        %1666 = vrot.lane.b32.xlu0 %v726, 16
        %v1667 = vpop.permute.xlu0 %1666
        %1668 = vrot.lane.b32.xlu0 %v727, 16
        %v1669 = vpop.permute.xlu0 %1668
        %1670 = vrot.lane.b32.xlu0 %v728, 16
        %v1671 = vpop.permute.xlu0 %1670
        %1672 = vrot.lane.b32.xlu0 %v729, 16
        %v1673 = vpop.permute.xlu0 %1672
        %1674 = vrot.lane.b32.xlu0 %v730, 16
        %v1675 = vpop.permute.xlu0 %1674
        %1692 = vst.msk [vmem:[%s1427] sm:$0xff] %vm1149, %v1645
        %1693 = vst.msk [vmem:[%s1427 + $0x8] sm:$0xff] %vm1149, %v1647
        %1694 = vst.msk [vmem:[%s1427 + $0x10] sm:$0xff] %vm1149, %v1649
        %1695 = vst.msk [vmem:[%s1427 + $0x18] sm:$0xff] %vm1149, %v1651
        %1696 = vst.msk [vmem:[%s1427 + $0x20] sm:$0xff] %vm1149, %v1653
        %1697 = vst.msk [vmem:[%s1427 + $0x28] sm:$0xff] %vm1149, %v1655
        %1698 = vst.msk [vmem:[%s1427 + $0x30] sm:$0xff] %vm1149, %v1657
        %1699 = vst.msk [vmem:[%s1427 + $0x38] sm:$0xff] %vm1149, %v1659
        %1700 = vst.msk [vmem:[%s1427 + $0x40] sm:$0xff] %vm1149, %v1661
        %1701 = vst.msk [vmem:[%s1427 + $0x48] sm:$0xff] %vm1149, %v1663
        %1702 = vst.msk [vmem:[%s1427 + $0x50] sm:$0xff] %vm1149, %v1665
        %1703 = vst.msk [vmem:[%s1427 + $0x58] sm:$0xff] %vm1149, %v1667
        %1704 = vst.msk [vmem:[%s1427 + $0x60] sm:$0xff] %vm1149, %v1669
        %1705 = vst.msk [vmem:[%s1427 + $0x68] sm:$0xff] %vm1149, %v1671
        %1706 = vst.msk [vmem:[%s1427 + $0x70] sm:$0xff] %vm1149, %v1673
        %1707 = vst.msk [vmem:[%s1427 + $0x78] sm:$0xff] %vm1149, %v1675
        %1709 = vrot.lane.b32.xlu0 %v836, 20
        %v1710 = vpop.permute.xlu0 %1709
        %1711 = vrot.lane.b32.xlu0 %v872, 20
        %v1712 = vpop.permute.xlu0 %1711
        %1713 = vrot.lane.b32.xlu0 %v839, 20
        %v1714 = vpop.permute.xlu0 %1713
        %1715 = vrot.lane.b32.xlu0 %v873, 20
        %v1716 = vpop.permute.xlu0 %1715
        %1717 = vrot.lane.b32.xlu0 %v842, 20
        %v1718 = vpop.permute.xlu0 %1717
        %1719 = vrot.lane.b32.xlu0 %v874, 20
        %v1720 = vpop.permute.xlu0 %1719
        %1721 = vrot.lane.b32.xlu0 %v845, 20
        %v1722 = vpop.permute.xlu0 %1721
        %1723 = vrot.lane.b32.xlu0 %v875, 20
        %v1724 = vpop.permute.xlu0 %1723
        %1725 = vrot.lane.b32.xlu0 %v848, 20
        %v1726 = vpop.permute.xlu0 %1725
        %1727 = vrot.lane.b32.xlu0 %v876, 20
        %v1728 = vpop.permute.xlu0 %1727
        %1729 = vrot.lane.b32.xlu0 %v851, 20
        %v1730 = vpop.permute.xlu0 %1729
        %1731 = vrot.lane.b32.xlu0 %v877, 20
        %v1732 = vpop.permute.xlu0 %1731
        %1733 = vrot.lane.b32.xlu0 %v854, 20
        %v1734 = vpop.permute.xlu0 %1733
        %1735 = vrot.lane.b32.xlu0 %v878, 20
        %v1736 = vpop.permute.xlu0 %1735
        %1737 = vrot.lane.b32.xlu0 %v857, 20
        %v1738 = vpop.permute.xlu0 %1737
        %1739 = vrot.lane.b32.xlu0 %v879, 20
        %v1740 = vpop.permute.xlu0 %1739
        %1757 = vst.msk [vmem:[%s1427] sm:$0xff] %vm1214, %v1710
        %1758 = vst.msk [vmem:[%s1427 + $0x8] sm:$0xff] %vm1214, %v1712
        %1759 = vst.msk [vmem:[%s1427 + $0x10] sm:$0xff] %vm1214, %v1714
        %1760 = vst.msk [vmem:[%s1427 + $0x18] sm:$0xff] %vm1214, %v1716
        %1761 = vst.msk [vmem:[%s1427 + $0x20] sm:$0xff] %vm1214, %v1718
        %1762 = vst.msk [vmem:[%s1427 + $0x28] sm:$0xff] %vm1214, %v1720
        %1763 = vst.msk [vmem:[%s1427 + $0x30] sm:$0xff] %vm1214, %v1722
        %1764 = vst.msk [vmem:[%s1427 + $0x38] sm:$0xff] %vm1214, %v1724
        %1765 = vst.msk [vmem:[%s1427 + $0x40] sm:$0xff] %vm1214, %v1726
        %1766 = vst.msk [vmem:[%s1427 + $0x48] sm:$0xff] %vm1214, %v1728
        %1767 = vst.msk [vmem:[%s1427 + $0x50] sm:$0xff] %vm1214, %v1730
        %1768 = vst.msk [vmem:[%s1427 + $0x58] sm:$0xff] %vm1214, %v1732
        %1769 = vst.msk [vmem:[%s1427 + $0x60] sm:$0xff] %vm1214, %v1734
        %1770 = vst.msk [vmem:[%s1427 + $0x68] sm:$0xff] %vm1214, %v1736
        %1771 = vst.msk [vmem:[%s1427 + $0x70] sm:$0xff] %vm1214, %v1738
        %1772 = vst.msk [vmem:[%s1427 + $0x78] sm:$0xff] %vm1214, %v1740
        %1773 = vrot.lane.b32.xlu0 %v677, 24
        %v1774 = vpop.permute.xlu0 %1773
        %1775 = vrot.lane.b32.xlu0 %v678, 24
        %v1776 = vpop.permute.xlu0 %1775
        %1777 = vrot.lane.b32.xlu0 %v679, 24
        %v1778 = vpop.permute.xlu0 %1777
        %1779 = vrot.lane.b32.xlu0 %v680, 24
        %v1780 = vpop.permute.xlu0 %1779
        %1781 = vrot.lane.b32.xlu0 %v681, 24
        %v1782 = vpop.permute.xlu0 %1781
        %1783 = vrot.lane.b32.xlu0 %v682, 24
        %v1784 = vpop.permute.xlu0 %1783
        %1785 = vrot.lane.b32.xlu0 %v683, 24
        %v1786 = vpop.permute.xlu0 %1785
        %1787 = vrot.lane.b32.xlu0 %v684, 24
        %v1788 = vpop.permute.xlu0 %1787
        %1789 = vrot.lane.b32.xlu0 %v685, 24
        %v1790 = vpop.permute.xlu0 %1789
        %1791 = vrot.lane.b32.xlu0 %v686, 24
        %v1792 = vpop.permute.xlu0 %1791
        %1793 = vrot.lane.b32.xlu0 %v687, 24
        %v1794 = vpop.permute.xlu0 %1793
        %1795 = vrot.lane.b32.xlu0 %v688, 24
        %v1796 = vpop.permute.xlu0 %1795
        %1797 = vrot.lane.b32.xlu0 %v689, 24
        %v1798 = vpop.permute.xlu0 %1797
        %1799 = vrot.lane.b32.xlu0 %v690, 24
        %v1800 = vpop.permute.xlu0 %1799
        %1801 = vrot.lane.b32.xlu0 %v691, 24
        %v1802 = vpop.permute.xlu0 %1801
        %1803 = vrot.lane.b32.xlu0 %v692, 24
        %v1804 = vpop.permute.xlu0 %1803
        %1821 = vst.msk [vmem:[%s1427] sm:$0xff] %vm1280, %v1774
        %1822 = vst.msk [vmem:[%s1427 + $0x8] sm:$0xff] %vm1280, %v1776
        %1823 = vst.msk [vmem:[%s1427 + $0x10] sm:$0xff] %vm1280, %v1778
        %1824 = vst.msk [vmem:[%s1427 + $0x18] sm:$0xff] %vm1280, %v1780
        %1825 = vst.msk [vmem:[%s1427 + $0x20] sm:$0xff] %vm1280, %v1782
        %1826 = vst.msk [vmem:[%s1427 + $0x28] sm:$0xff] %vm1280, %v1784
        %1827 = vst.msk [vmem:[%s1427 + $0x30] sm:$0xff] %vm1280, %v1786
        %1828 = vst.msk [vmem:[%s1427 + $0x38] sm:$0xff] %vm1280, %v1788
        %1829 = vst.msk [vmem:[%s1427 + $0x40] sm:$0xff] %vm1280, %v1790
        %1830 = vst.msk [vmem:[%s1427 + $0x48] sm:$0xff] %vm1280, %v1792
        %1831 = vst.msk [vmem:[%s1427 + $0x50] sm:$0xff] %vm1280, %v1794
        %1832 = vst.msk [vmem:[%s1427 + $0x58] sm:$0xff] %vm1280, %v1796
        %1833 = vst.msk [vmem:[%s1427 + $0x60] sm:$0xff] %vm1280, %v1798
        %1834 = vst.msk [vmem:[%s1427 + $0x68] sm:$0xff] %vm1280, %v1800
        %1835 = vst.msk [vmem:[%s1427 + $0x70] sm:$0xff] %vm1280, %v1802
        %1836 = vst.msk [vmem:[%s1427 + $0x78] sm:$0xff] %vm1280, %v1804
        %1837 = vrot.lane.b32.xlu0 %v717, 28
        %v1838 = vpop.permute.xlu0 %1837
        %1839 = vrot.lane.b32.xlu0 %v718, 28
        %v1840 = vpop.permute.xlu0 %1839
        %1841 = vrot.lane.b32.xlu0 %v719, 28
        %v1842 = vpop.permute.xlu0 %1841
        %1843 = vrot.lane.b32.xlu0 %v720, 28
        %v1844 = vpop.permute.xlu0 %1843
        %1845 = vrot.lane.b32.xlu0 %v721, 28
        %v1846 = vpop.permute.xlu0 %1845
        %1847 = vrot.lane.b32.xlu0 %v722, 28
        %v1848 = vpop.permute.xlu0 %1847
        %1849 = vrot.lane.b32.xlu0 %v723, 28
        %v1850 = vpop.permute.xlu0 %1849
        %1851 = vrot.lane.b32.xlu0 %v724, 28
        %v1852 = vpop.permute.xlu0 %1851
        %1853 = vrot.lane.b32.xlu0 %v725, 28
        %v1854 = vpop.permute.xlu0 %1853
        %1855 = vrot.lane.b32.xlu0 %v726, 28
        %v1856 = vpop.permute.xlu0 %1855
        %1857 = vrot.lane.b32.xlu0 %v727, 28
        %v1858 = vpop.permute.xlu0 %1857
        %1859 = vrot.lane.b32.xlu0 %v728, 28
        %v1860 = vpop.permute.xlu0 %1859
        %1861 = vrot.lane.b32.xlu0 %v729, 28
        %v1862 = vpop.permute.xlu0 %1861
        %1863 = vrot.lane.b32.xlu0 %v730, 28
        %v1864 = vpop.permute.xlu0 %1863
        %1865 = vrot.lane.b32.xlu0 %v731, 28
        %v1866 = vpop.permute.xlu0 %1865
        %1867 = vrot.lane.b32.xlu0 %v732, 28
        %v1868 = vpop.permute.xlu0 %1867
        %1885 = vst.msk [vmem:[%s1427] sm:$0xff] %vm1345, %v1838
        %1886 = vst.msk [vmem:[%s1427 + $0x8] sm:$0xff] %vm1345, %v1840
        %1887 = vst.msk [vmem:[%s1427 + $0x10] sm:$0xff] %vm1345, %v1842
        %1888 = vst.msk [vmem:[%s1427 + $0x18] sm:$0xff] %vm1345, %v1844
        %1889 = vst.msk [vmem:[%s1427 + $0x20] sm:$0xff] %vm1345, %v1846
        %1890 = vst.msk [vmem:[%s1427 + $0x28] sm:$0xff] %vm1345, %v1848
        %1891 = vst.msk [vmem:[%s1427 + $0x30] sm:$0xff] %vm1345, %v1850
        %1892 = vst.msk [vmem:[%s1427 + $0x38] sm:$0xff] %vm1345, %v1852
        %1893 = vst.msk [vmem:[%s1427 + $0x40] sm:$0xff] %vm1345, %v1854
        %1894 = vst.msk [vmem:[%s1427 + $0x48] sm:$0xff] %vm1345, %v1856
        %1895 = vst.msk [vmem:[%s1427 + $0x50] sm:$0xff] %vm1345, %v1858
        %1896 = vst.msk [vmem:[%s1427 + $0x58] sm:$0xff] %vm1345, %v1860
        %1897 = vst.msk [vmem:[%s1427 + $0x60] sm:$0xff] %vm1345, %v1862
        %1898 = vst.msk [vmem:[%s1427 + $0x68] sm:$0xff] %vm1345, %v1864
        %1899 = vst.msk [vmem:[%s1427 + $0x70] sm:$0xff] %vm1345, %v1866
        %1900 = vst.msk [vmem:[%s1427 + $0x78] sm:$0xff] %vm1345, %v1868
        %1902 = vrot.lane.b32.xlu0 %v839, 32
        %v1903 = vpop.permute.xlu0 %1902
        %1904 = vrot.lane.b32.xlu0 %v873, 32
        %v1905 = vpop.permute.xlu0 %1904
        %1906 = vrot.lane.b32.xlu0 %v842, 32
        %v1907 = vpop.permute.xlu0 %1906
        %1908 = vrot.lane.b32.xlu0 %v874, 32
        %v1909 = vpop.permute.xlu0 %1908
        %1910 = vrot.lane.b32.xlu0 %v845, 32
        %v1911 = vpop.permute.xlu0 %1910
        %1912 = vrot.lane.b32.xlu0 %v875, 32
        %v1913 = vpop.permute.xlu0 %1912
        %1914 = vrot.lane.b32.xlu0 %v848, 32
        %v1915 = vpop.permute.xlu0 %1914
        %1916 = vrot.lane.b32.xlu0 %v876, 32
        %v1917 = vpop.permute.xlu0 %1916
        %1918 = vrot.lane.b32.xlu0 %v851, 32
        %v1919 = vpop.permute.xlu0 %1918
        %1920 = vrot.lane.b32.xlu0 %v877, 32
        %v1921 = vpop.permute.xlu0 %1920
        %1922 = vrot.lane.b32.xlu0 %v854, 32
        %v1923 = vpop.permute.xlu0 %1922
        %1924 = vrot.lane.b32.xlu0 %v878, 32
        %v1925 = vpop.permute.xlu0 %1924
        %1926 = vrot.lane.b32.xlu0 %v857, 32
        %v1927 = vpop.permute.xlu0 %1926
        %1928 = vrot.lane.b32.xlu0 %v879, 32
        %v1929 = vpop.permute.xlu0 %1928
        %1930 = vrot.lane.b32.xlu0 %v860, 32
        %v1931 = vpop.permute.xlu0 %1930
        %1932 = vrot.lane.b32.xlu0 %v880, 32
        %v1933 = vpop.permute.xlu0 %1932
        %1950 = vst.msk [vmem:[%s1427] sm:$0xff] %vm1410, %v1903
        %1951 = vst.msk [vmem:[%s1427 + $0x8] sm:$0xff] %vm1410, %v1905
        %1952 = vst.msk [vmem:[%s1427 + $0x10] sm:$0xff] %vm1410, %v1907
        %1953 = vst.msk [vmem:[%s1427 + $0x18] sm:$0xff] %vm1410, %v1909
        %1954 = vst.msk [vmem:[%s1427 + $0x20] sm:$0xff] %vm1410, %v1911
        %1955 = vst.msk [vmem:[%s1427 + $0x28] sm:$0xff] %vm1410, %v1913
        %1956 = vst.msk [vmem:[%s1427 + $0x30] sm:$0xff] %vm1410, %v1915
        %1957 = vst.msk [vmem:[%s1427 + $0x38] sm:$0xff] %vm1410, %v1917
        %1958 = vst.msk [vmem:[%s1427 + $0x40] sm:$0xff] %vm1410, %v1919
        %1959 = vst.msk [vmem:[%s1427 + $0x48] sm:$0xff] %vm1410, %v1921
        %1960 = vst.msk [vmem:[%s1427 + $0x50] sm:$0xff] %vm1410, %v1923
        %1961 = vst.msk [vmem:[%s1427 + $0x58] sm:$0xff] %vm1410, %v1925
        %1962 = vst.msk [vmem:[%s1427 + $0x60] sm:$0xff] %vm1410, %v1927
        %1963 = vst.msk [vmem:[%s1427 + $0x68] sm:$0xff] %vm1410, %v1929
        %1964 = vst.msk [vmem:[%s1427 + $0x70] sm:$0xff] %vm1410, %v1931
        %1965 = vst.msk [vmem:[%s1427 + $0x78] sm:$0xff] %vm1410, %v1933
        %v1966 = vld [vmem:[#allocation2] sm:$0xff]
        %v1967 = vld [vmem:[#allocation2 + $0x8] sm:$0xff]
        %v1968 = vld [vmem:[#allocation2 + $0x10] sm:$0xff]
        %v1969 = vld [vmem:[#allocation2 + $0x18] sm:$0xff]
        %v1970 = vld [vmem:[#allocation2 + $0x20] sm:$0xff]
        %v1971 = vld [vmem:[#allocation2 + $0x28] sm:$0xff]
        %v1972 = vld [vmem:[#allocation2 + $0x30] sm:$0xff]
        %v1973 = vld [vmem:[#allocation2 + $0x38] sm:$0xff]
        %v1974 = vld [vmem:[#allocation2 + $0x40] sm:$0xff]
        %v1975 = vld [vmem:[#allocation2 + $0x48] sm:$0xff]
        %v1976 = vld [vmem:[#allocation2 + $0x50] sm:$0xff]
        %v1977 = vld [vmem:[#allocation2 + $0x58] sm:$0xff]
        %v1978 = vld [vmem:[#allocation2 + $0x60] sm:$0xff]
        %v1979 = vld [vmem:[#allocation2 + $0x68] sm:$0xff]
        %v1980 = vld [vmem:[#allocation2 + $0x70] sm:$0xff]
        %v1981 = vld [vmem:[#allocation2 + $0x78] sm:$0xff]
        %v1982 = vld [vmem:[#allocation2 + $0x80] sm:$0xff]
        %v1983 = vld [vmem:[#allocation2 + $0x88] sm:$0xff]
        %v1984 = vld [vmem:[#allocation2 + $0x90] sm:$0xff]
        %v1985 = vld [vmem:[#allocation2 + $0x98] sm:$0xff]
        %v1986 = vld [vmem:[#allocation2 + $0xa0] sm:$0xff]
        %v1987 = vld [vmem:[#allocation2 + $0xa8] sm:$0xff]
        %v1988 = vld [vmem:[#allocation2 + $0xb0] sm:$0xff]
        %v1989 = vld [vmem:[#allocation2 + $0xb8] sm:$0xff]
        %v1990 = vld [vmem:[#allocation2 + $0xc0] sm:$0xff]
        %v1991 = vld [vmem:[#allocation2 + $0xc8] sm:$0xff]
        %v1992 = vld [vmem:[#allocation2 + $0xd0] sm:$0xff]
        %v1993 = vld [vmem:[#allocation2 + $0xd8] sm:$0xff]
        %v1994 = vld [vmem:[#allocation2 + $0xe0] sm:$0xff]
        %v1995 = vld [vmem:[#allocation2 + $0xe8] sm:$0xff]
        %v1996 = vld [vmem:[#allocation2 + $0xf0] sm:$0xff]
        %v1997 = vld [vmem:[#allocation2 + $0xf8] sm:$0xff]
        %v1998 = vld [vmem:[%s3] sm:$0xff]
        %v1999 = vld [vmem:[%s3 + $0x8] sm:$0xff]
        %v2000 = vld [vmem:[%s3 + $0x10] sm:$0xff]
        %v2001 = vld [vmem:[%s3 + $0x18] sm:$0xff]
        %v2002 = vld [vmem:[%s3 + $0x20] sm:$0xf]
        %v2003 = vld [vmem:[%s4] sm:$0x1]
        %v2005 = vperm.slane %v2003, 0
        %vm2007 = vcmask 293888
        %v2009 = vsel %vm2007, %v1966, 0
        %v2012 = vsel %vm2007, %v1967, 0
        %v2015 = vsel %vm2007, %v1968, 0
        %v2018 = vsel %vm2007, %v1969, 0
        %v2021 = vsel %vm2007, %v1970, 0
        %v2024 = vsel %vm2007, %v1971, 0
        %v2027 = vsel %vm2007, %v1972, 0
        %v2030 = vsel %vm2007, %v1973, 0
        %v2033 = vsel %vm2007, %v1974, 0
        %v2036 = vsel %vm2007, %v1975, 0
        %v2039 = vsel %vm2007, %v1976, 0
        %v2042 = vsel %vm2007, %v1977, 0
        %v2045 = vsel %vm2007, %v1978, 0
        %v2048 = vsel %vm2007, %v1979, 0
        %v2051 = vsel %vm2007, %v1980, 0
        %v2054 = vsel %vm2007, %v1981, 0
        %v2057 = vsel %vm2007, %v1982, 0
        %v2060 = vsel %vm2007, %v1983, 0
        %v2063 = vsel %vm2007, %v1984, 0
        %v2066 = vsel %vm2007, %v1985, 0
        %v2069 = vsel %vm2007, %v1986, 0
        %v2072 = vsel %vm2007, %v1987, 0
        %v2075 = vsel %vm2007, %v1988, 0
        %v2078 = vsel %vm2007, %v1989, 0
        %v2081 = vsel %vm2007, %v1990, 0
        %v2084 = vsel %vm2007, %v1991, 0
        %v2087 = vsel %vm2007, %v1992, 0
        %v2090 = vsel %vm2007, %v1993, 0
        %v2093 = vsel %vm2007, %v1994, 0
        %v2096 = vsel %vm2007, %v1995, 0
        %v2099 = vsel %vm2007, %v1996, 0
        %v2102 = vsel %vm2007, %v1997, 0
        %vm2104 = vcmask 1043456
        %v2106 = vsel %vm2104, %v2002, 0
        %2108 = vmatpush.msra.mxu0 0.0
        %2109 = vmatpush.msra.mxu0 0.0
        %2110 = vmatpush.msra.mxu0 0.0
        %2111 = vmatpush.msra.mxu0 0.0
        %2112 = vmatpush.msra.mxu0 0.0
        %2113 = vmatpush.msra.mxu0 0.0
        %2114 = vmatpush.msra.mxu0 0.0
        %2115 = vmatpush.msra.mxu0 0.0
        %2116 = vmatpush.msra.mxu0 0.0
        %2117 = vmatpush.msra.mxu0 0.0
        %2118 = vmatpush.msra.mxu0 0.0
        %2119 = vmatpush.msra.mxu0 %v2106
        %2120 = vmatpush.msra.mxu0 %v2001
        %2121 = vmatpush.msra.mxu0 %v2000
        %2122 = vmatpush.msra.mxu0 %v1999
        %2123 = vmatpush.msra.mxu0 %v1998
        %2124 = vmatmul.f32.gmra.mxu0 %v2009
        %v2125 = vpop.f32.mrf.mxu0
        %v2126 = vadd.f32 %v2005, %v2125
        %2127 = vmatmul.f32.gmra.mxu0 %v2012
        %v2128 = vpop.f32.mrf.mxu0
        %v2129 = vadd.f32 %v2005, %v2128
        %2130 = vmatmul.f32.gmra.mxu0 %v2015
        %v2131 = vpop.f32.mrf.mxu0
        %v2132 = vadd.f32 %v2005, %v2131
        %2133 = vmatmul.f32.gmra.mxu0 %v2018
        %v2134 = vpop.f32.mrf.mxu0
        %v2135 = vadd.f32 %v2005, %v2134
        %2136 = vmatmul.f32.gmra.mxu0 %v2021
        %v2137 = vpop.f32.mrf.mxu0
        %v2138 = vadd.f32 %v2005, %v2137
        %2139 = vmatmul.f32.gmra.mxu0 %v2024
        %v2140 = vpop.f32.mrf.mxu0
        %v2141 = vadd.f32 %v2005, %v2140
        %2142 = vmatmul.f32.gmra.mxu0 %v2027
        %v2143 = vpop.f32.mrf.mxu0
        %v2144 = vadd.f32 %v2005, %v2143
        %2145 = vmatmul.f32.gmra.mxu0 %v2030
        %v2146 = vpop.f32.mrf.mxu0
        %v2147 = vadd.f32 %v2005, %v2146
        %2148 = vmatmul.f32.gmra.mxu0 %v2033
        %v2149 = vpop.f32.mrf.mxu0
        %v2150 = vadd.f32 %v2005, %v2149
        %2151 = vmatmul.f32.gmra.mxu0 %v2036
        %v2152 = vpop.f32.mrf.mxu0
        %v2153 = vadd.f32 %v2005, %v2152
        %2154 = vmatmul.f32.gmra.mxu0 %v2039
        %v2155 = vpop.f32.mrf.mxu0
        %v2156 = vadd.f32 %v2005, %v2155
        %2157 = vmatmul.f32.gmra.mxu0 %v2042
        %v2158 = vpop.f32.mrf.mxu0
        %v2159 = vadd.f32 %v2005, %v2158
        %2160 = vmatmul.f32.gmra.mxu0 %v2045
        %v2161 = vpop.f32.mrf.mxu0
        %v2162 = vadd.f32 %v2005, %v2161
        %2163 = vmatmul.f32.gmra.mxu0 %v2048
        %v2164 = vpop.f32.mrf.mxu0
        %v2165 = vadd.f32 %v2005, %v2164
        %2166 = vmatmul.f32.gmra.mxu0 %v2051
        %v2167 = vpop.f32.mrf.mxu0
        %v2168 = vadd.f32 %v2005, %v2167
        %2169 = vmatmul.f32.gmra.mxu0 %v2054
        %v2170 = vpop.f32.mrf.mxu0
        %v2171 = vadd.f32 %v2005, %v2170
        %2172 = vmatmul.f32.gmra.mxu0 %v2057
        %v2173 = vpop.f32.mrf.mxu0
        %v2174 = vadd.f32 %v2005, %v2173
        %2175 = vmatmul.f32.gmra.mxu0 %v2060
        %v2176 = vpop.f32.mrf.mxu0
        %v2177 = vadd.f32 %v2005, %v2176
        %2178 = vmatmul.f32.gmra.mxu0 %v2063
        %v2179 = vpop.f32.mrf.mxu0
        %v2180 = vadd.f32 %v2005, %v2179
        %2181 = vmatmul.f32.gmra.mxu0 %v2066
        %v2182 = vpop.f32.mrf.mxu0
        %v2183 = vadd.f32 %v2005, %v2182
        %2184 = vmatmul.f32.gmra.mxu0 %v2069
        %v2185 = vpop.f32.mrf.mxu0
        %v2186 = vadd.f32 %v2005, %v2185
        %2187 = vmatmul.f32.gmra.mxu0 %v2072
        %v2188 = vpop.f32.mrf.mxu0
        %v2189 = vadd.f32 %v2005, %v2188
        %2190 = vmatmul.f32.gmra.mxu0 %v2075
        %v2191 = vpop.f32.mrf.mxu0
        %v2192 = vadd.f32 %v2005, %v2191
        %2193 = vmatmul.f32.gmra.mxu0 %v2078
        %v2194 = vpop.f32.mrf.mxu0
        %v2195 = vadd.f32 %v2005, %v2194
        %2196 = vmatmul.f32.gmra.mxu0 %v2081
        %v2197 = vpop.f32.mrf.mxu0
        %v2198 = vadd.f32 %v2005, %v2197
        %2199 = vmatmul.f32.gmra.mxu0 %v2084
        %v2200 = vpop.f32.mrf.mxu0
        %v2201 = vadd.f32 %v2005, %v2200
        %2202 = vmatmul.f32.gmra.mxu0 %v2087
        %v2203 = vpop.f32.mrf.mxu0
        %v2204 = vadd.f32 %v2005, %v2203
        %2205 = vmatmul.f32.gmra.mxu0 %v2090
        %v2206 = vpop.f32.mrf.mxu0
        %v2207 = vadd.f32 %v2005, %v2206
        %2208 = vmatmul.f32.gmra.mxu0 %v2093
        %v2209 = vpop.f32.mrf.mxu0
        %v2210 = vadd.f32 %v2005, %v2209
        %2211 = vmatmul.f32.gmra.mxu0 %v2096
        %v2212 = vpop.f32.mrf.mxu0
        %v2213 = vadd.f32 %v2005, %v2212
        %2214 = vmatmul.f32.gmra.mxu0 %v2099
        %v2215 = vpop.f32.mrf.mxu0
        %v2216 = vadd.f32 %v2005, %v2215
        %2217 = vmatmul.f32.gmra.mxu0 %v2102
        %v2218 = vpop.f32.mrf.mxu0
        %v2219 = vadd.f32 %v2005, %v2218
        %2220 = vdwg.mxu0
        %vm2221 = vcmask 64512
        %2222 = vst.msk [vmem:[#allocation3] sm:$0xff] %vm2221, %v2126
        %2223 = vst.msk [vmem:[#allocation3 + $0x8] sm:$0xff] %vm2221, %v2129
        %2224 = vst.msk [vmem:[#allocation3 + $0x10] sm:$0xff] %vm2221, %v2132
        %2225 = vst.msk [vmem:[#allocation3 + $0x18] sm:$0xff] %vm2221, %v2135
        %2226 = vst.msk [vmem:[#allocation3 + $0x20] sm:$0xff] %vm2221, %v2138
        %2227 = vst.msk [vmem:[#allocation3 + $0x28] sm:$0xff] %vm2221, %v2141
        %2228 = vst.msk [vmem:[#allocation3 + $0x30] sm:$0xff] %vm2221, %v2144
        %2229 = vst.msk [vmem:[#allocation3 + $0x38] sm:$0xff] %vm2221, %v2147
        %2230 = vst.msk [vmem:[#allocation3 + $0x40] sm:$0xff] %vm2221, %v2150
        %2231 = vst.msk [vmem:[#allocation3 + $0x48] sm:$0xff] %vm2221, %v2153
        %2232 = vst.msk [vmem:[#allocation3 + $0x50] sm:$0xff] %vm2221, %v2156
        %2233 = vst.msk [vmem:[#allocation3 + $0x58] sm:$0xff] %vm2221, %v2159
        %2234 = vst.msk [vmem:[#allocation3 + $0x60] sm:$0xff] %vm2221, %v2162
        %2235 = vst.msk [vmem:[#allocation3 + $0x68] sm:$0xff] %vm2221, %v2165
        %2236 = vst.msk [vmem:[#allocation3 + $0x70] sm:$0xff] %vm2221, %v2168
        %2237 = vst.msk [vmem:[#allocation3 + $0x78] sm:$0xff] %vm2221, %v2171
        %2238 = vst.msk [vmem:[#allocation3 + $0x80] sm:$0xff] %vm2221, %v2174
        %2239 = vst.msk [vmem:[#allocation3 + $0x88] sm:$0xff] %vm2221, %v2177
        %2240 = vst.msk [vmem:[#allocation3 + $0x90] sm:$0xff] %vm2221, %v2180
        %2241 = vst.msk [vmem:[#allocation3 + $0x98] sm:$0xff] %vm2221, %v2183
        %2242 = vst.msk [vmem:[#allocation3 + $0xa0] sm:$0xff] %vm2221, %v2186
        %2243 = vst.msk [vmem:[#allocation3 + $0xa8] sm:$0xff] %vm2221, %v2189
        %2244 = vst.msk [vmem:[#allocation3 + $0xb0] sm:$0xff] %vm2221, %v2192
        %2245 = vst.msk [vmem:[#allocation3 + $0xb8] sm:$0xff] %vm2221, %v2195
        %2246 = vst.msk [vmem:[#allocation3 + $0xc0] sm:$0xff] %vm2221, %v2198
        %2247 = vst.msk [vmem:[#allocation3 + $0xc8] sm:$0xff] %vm2221, %v2201
        %2248 = vst.msk [vmem:[#allocation3 + $0xd0] sm:$0xff] %vm2221, %v2204
        %2249 = vst.msk [vmem:[#allocation3 + $0xd8] sm:$0xff] %vm2221, %v2207
        %2250 = vst.msk [vmem:[#allocation3 + $0xe0] sm:$0xff] %vm2221, %v2210
        %2251 = vst.msk [vmem:[#allocation3 + $0xe8] sm:$0xff] %vm2221, %v2213
        %2252 = vst.msk [vmem:[#allocation3 + $0xf0] sm:$0xff] %vm2221, %v2216
        %2253 = vst.msk [vmem:[#allocation3 + $0xf8] sm:$0xff] %vm2221, %v2219
        %v2254 = vld [vmem:[%s401] sm:$0xff]
        %v2255 = vld [vmem:[%s401 + $0x8] sm:$0xff]
        %v2256 = vld [vmem:[%s401 + $0x10] sm:$0xff]
        %v2257 = vld [vmem:[%s401 + $0x18] sm:$0xff]
        %v2258 = vld [vmem:[%s401 + $0x20] sm:$0xff]
        %v2259 = vld [vmem:[%s401 + $0x28] sm:$0xff]
        %v2260 = vld [vmem:[%s401 + $0x30] sm:$0xff]
        %v2261 = vld [vmem:[%s401 + $0x38] sm:$0xff]
        %v2262 = vld [vmem:[%s401 + $0x40] sm:$0xff]
        %v2263 = vld [vmem:[%s401 + $0x48] sm:$0xff]
        %v2264 = vld [vmem:[%s401 + $0x50] sm:$0xff]
        %v2265 = vld [vmem:[%s401 + $0x58] sm:$0xff]
        %v2266 = vmul.f32 %v2254, 0.25
        %v2267 = vmul.f32 %v2255, 0.25
        %v2268 = vmul.f32 %v2256, 0.25
        %v2269 = vmul.f32 %v2257, 0.25
        %v2270 = vmul.f32 %v2258, 0.25
        %v2271 = vmul.f32 %v2259, 0.25
        %v2272 = vmul.f32 %v2260, 0.25
        %v2273 = vmul.f32 %v2261, 0.25
        %v2274 = vmul.f32 %v2256, 0.75
        %v2275 = vmul.f32 %v2257, 0.75
        %v2276 = vmul.f32 %v2258, 0.75
        %v2277 = vmul.f32 %v2259, 0.75
        %v2278 = vmul.f32 %v2260, 0.75
        %v2279 = vmul.f32 %v2261, 0.75
        %v2280 = vmul.f32 %v2262, 0.75
        %v2281 = vmul.f32 %v2263, 0.75
        %v2282 = vadd.f32 %v2266, %v2274
        %v2283 = vadd.f32 %v2267, %v2275
        %v2284 = vadd.f32 %v2268, %v2276
        %v2285 = vadd.f32 %v2269, %v2277
        %v2286 = vadd.f32 %v2270, %v2278
        %v2287 = vadd.f32 %v2271, %v2279
        %v2288 = vadd.f32 %v2272, %v2280
        %v2289 = vadd.f32 %v2273, %v2281
        %v2290 = vmul.f32 %v2262, 0.25
        %v2291 = vmul.f32 %v2263, 0.25
        %v2292 = vmul.f32 %v2264, 0.25
        %v2293 = vmul.f32 %v2265, 0.25
        %v2294 = vadd.f32 %v2274, %v2270
        %v2295 = vadd.f32 %v2275, %v2271
        %v2296 = vadd.f32 %v2276, %v2272
        %v2297 = vadd.f32 %v2277, %v2273
        %v2298 = vadd.f32 %v2278, %v2290
        %v2299 = vadd.f32 %v2279, %v2291
        %v2300 = vadd.f32 %v2280, %v2292
        %v2301 = vadd.f32 %v2281, %v2293
        %v2302 = vmul.f32 %v2254, 0.75
        %v2303 = vmul.f32 %v2255, 0.75
        %v2304 = vadd.f32 %v2302, %v2268
        %v2305 = vadd.f32 %v2303, %v2269
        %v2306 = vmul.f32 %v2304, %v479
        %v2307 = vmul.f32 %v2305, %v479
        %v2308 = vmul.f32 %v2264, 0.75
        %v2309 = vmul.f32 %v2265, 0.75
        %v2310 = vadd.f32 %v2290, %v2308
        %v2311 = vadd.f32 %v2291, %v2309
        %v2312 = vmul.f32 %v2310, %v488
        %v2313 = vmul.f32 %v2311, %v488
        %v2334 = vrot.slane %v2306, 7
        %v2335 = vrot.slane %v2307, 7
        %v2336 = vsel %vm511, %v2334, %v2335
        %v2337 = vrot.slane %v2282, 7
        %v2338 = vrot.slane %v2283, 7
        %v2339 = vsel %vm511, %v2337, %v2338
        %v2340 = vrot.slane %v2294, 7
        %v2341 = vrot.slane %v2295, 7
        %v2342 = vsel %vm511, %v2340, %v2341
        %v2343 = vrot.slane %v2284, 7
        %v2344 = vrot.slane %v2285, 7
        %v2345 = vsel %vm511, %v2343, %v2344
        %v2346 = vrot.slane %v2296, 7
        %v2347 = vrot.slane %v2297, 7
        %v2348 = vsel %vm511, %v2346, %v2347
        %v2349 = vrot.slane %v2286, 7
        %v2350 = vrot.slane %v2287, 7
        %v2351 = vsel %vm511, %v2349, %v2350
        %v2352 = vrot.slane %v2298, 7
        %v2353 = vrot.slane %v2299, 7
        %v2354 = vsel %vm511, %v2352, %v2353
        %v2355 = vrot.slane %v2288, 7
        %v2356 = vrot.slane %v2289, 7
        %v2357 = vsel %vm511, %v2355, %v2356
        %v2358 = vrot.slane %v2300, 7
        %v2359 = vrot.slane %v2301, 7
        %v2360 = vsel %vm511, %v2358, %v2359
        %v2361 = vrot.slane %v2312, 7
        %v2362 = vrot.slane %v2313, 7
        %v2363 = vsel %vm511, %v2361, %v2362
        %v2384 = vsel %vm511, %v2306, %v2334
        %v2385 = vsel %vm511, %v2282, %v2337
        %v2386 = vsel %vm511, %v2294, %v2340
        %v2387 = vsel %vm511, %v2284, %v2343
        %v2388 = vsel %vm511, %v2296, %v2346
        %v2389 = vsel %vm511, %v2286, %v2349
        %v2390 = vsel %vm511, %v2298, %v2352
        %v2391 = vsel %vm511, %v2288, %v2355
        %v2392 = vsel %vm511, %v2300, %v2358
        %v2393 = vsel %vm511, %v2312, %v2361
        %v2394 = vrot.slane %v2306, 1
        %v2395 = vrot.slane %v2307, 1
        %v2396 = vsel %vm572, %v2394, %v2395
        %v2397 = vrot.slane %v2282, 1
        %v2398 = vrot.slane %v2283, 1
        %v2399 = vsel %vm572, %v2397, %v2398
        %v2400 = vrot.slane %v2294, 1
        %v2401 = vrot.slane %v2295, 1
        %v2402 = vsel %vm572, %v2400, %v2401
        %v2403 = vrot.slane %v2284, 1
        %v2404 = vrot.slane %v2285, 1
        %v2405 = vsel %vm572, %v2403, %v2404
        %v2406 = vrot.slane %v2296, 1
        %v2407 = vrot.slane %v2297, 1
        %v2408 = vsel %vm572, %v2406, %v2407
        %v2409 = vrot.slane %v2286, 1
        %v2410 = vrot.slane %v2287, 1
        %v2411 = vsel %vm572, %v2409, %v2410
        %v2412 = vrot.slane %v2298, 1
        %v2413 = vrot.slane %v2299, 1
        %v2414 = vsel %vm572, %v2412, %v2413
        %v2415 = vrot.slane %v2288, 1
        %v2416 = vrot.slane %v2289, 1
        %v2417 = vsel %vm572, %v2415, %v2416
        %v2418 = vrot.slane %v2300, 1
        %v2419 = vrot.slane %v2301, 1
        %v2420 = vsel %vm572, %v2418, %v2419
        %v2421 = vrot.slane %v2312, 1
        %v2422 = vrot.slane %v2313, 1
        %v2423 = vsel %vm572, %v2421, %v2422
        %v2444 = vsel %vm572, %v2395, %v2307
        %v2445 = vsel %vm572, %v2398, %v2283
        %v2446 = vsel %vm572, %v2401, %v2295
        %v2447 = vsel %vm572, %v2404, %v2285
        %v2448 = vsel %vm572, %v2407, %v2297
        %v2449 = vsel %vm572, %v2410, %v2287
        %v2450 = vsel %vm572, %v2413, %v2299
        %v2451 = vsel %vm572, %v2416, %v2289
        %v2452 = vsel %vm572, %v2419, %v2301
        %v2453 = vsel %vm572, %v2422, %v2313
        %v2454 = vmul.f32 %v2384, 0.25
        %v2455 = vmul.f32 %v2336, 0.25
        %v2456 = vmul.f32 %v2385, 0.25
        %v2457 = vmul.f32 %v2339, 0.25
        %v2458 = vmul.f32 %v2386, 0.25
        %v2459 = vmul.f32 %v2342, 0.25
        %v2460 = vmul.f32 %v2387, 0.25
        %v2461 = vmul.f32 %v2345, 0.25
        %v2462 = vmul.f32 %v2388, 0.25
        %v2463 = vmul.f32 %v2348, 0.25
        %v2464 = vmul.f32 %v2389, 0.25
        %v2465 = vmul.f32 %v2351, 0.25
        %v2466 = vmul.f32 %v2390, 0.25
        %v2467 = vmul.f32 %v2354, 0.25
        %v2468 = vmul.f32 %v2391, 0.25
        %v2469 = vmul.f32 %v2357, 0.25
        %v2470 = vmul.f32 %v2392, 0.25
        %v2471 = vmul.f32 %v2360, 0.25
        %v2472 = vmul.f32 %v2393, 0.25
        %v2473 = vmul.f32 %v2363, 0.25
        %v2474 = vmul.f32 %v2306, 0.75
        %v2475 = vmul.f32 %v2307, 0.75
        %v2476 = vmul.f32 %v2282, 0.75
        %v2477 = vmul.f32 %v2283, 0.75
        %v2478 = vmul.f32 %v2294, 0.75
        %v2479 = vmul.f32 %v2295, 0.75
        %v2480 = vmul.f32 %v2284, 0.75
        %v2481 = vmul.f32 %v2285, 0.75
        %v2482 = vmul.f32 %v2296, 0.75
        %v2483 = vmul.f32 %v2297, 0.75
        %v2484 = vmul.f32 %v2286, 0.75
        %v2485 = vmul.f32 %v2287, 0.75
        %v2486 = vmul.f32 %v2298, 0.75
        %v2487 = vmul.f32 %v2299, 0.75
        %v2488 = vmul.f32 %v2288, 0.75
        %v2489 = vmul.f32 %v2289, 0.75
        %v2490 = vmul.f32 %v2300, 0.75
        %v2491 = vmul.f32 %v2301, 0.75
        %v2492 = vmul.f32 %v2312, 0.75
        %v2493 = vmul.f32 %v2313, 0.75
        %v2494 = vadd.f32 %v2454, %v2474
        %v2495 = vadd.f32 %v2455, %v2475
        %v2496 = vadd.f32 %v2456, %v2476
        %v2497 = vadd.f32 %v2457, %v2477
        %v2498 = vadd.f32 %v2458, %v2478
        %v2499 = vadd.f32 %v2459, %v2479
        %v2500 = vadd.f32 %v2460, %v2480
        %v2501 = vadd.f32 %v2461, %v2481
        %v2502 = vadd.f32 %v2462, %v2482
        %v2503 = vadd.f32 %v2463, %v2483
        %v2504 = vadd.f32 %v2464, %v2484
        %v2505 = vadd.f32 %v2465, %v2485
        %v2506 = vadd.f32 %v2466, %v2486
        %v2507 = vadd.f32 %v2467, %v2487
        %v2508 = vadd.f32 %v2468, %v2488
        %v2509 = vadd.f32 %v2469, %v2489
        %v2510 = vadd.f32 %v2470, %v2490
        %v2511 = vadd.f32 %v2471, %v2491
        %v2512 = vadd.f32 %v2472, %v2492
        %v2513 = vadd.f32 %v2473, %v2493
        %v2514 = vmul.f32 %v2396, 0.25
        %v2515 = vmul.f32 %v2444, 0.25
        %v2516 = vmul.f32 %v2399, 0.25
        %v2517 = vmul.f32 %v2445, 0.25
        %v2518 = vmul.f32 %v2402, 0.25
        %v2519 = vmul.f32 %v2446, 0.25
        %v2520 = vmul.f32 %v2405, 0.25
        %v2521 = vmul.f32 %v2447, 0.25
        %v2522 = vmul.f32 %v2408, 0.25
        %v2523 = vmul.f32 %v2448, 0.25
        %v2524 = vmul.f32 %v2411, 0.25
        %v2525 = vmul.f32 %v2449, 0.25
        %v2526 = vmul.f32 %v2414, 0.25
        %v2527 = vmul.f32 %v2450, 0.25
        %v2528 = vmul.f32 %v2417, 0.25
        %v2529 = vmul.f32 %v2451, 0.25
        %v2530 = vmul.f32 %v2420, 0.25
        %v2531 = vmul.f32 %v2452, 0.25
        %v2532 = vmul.f32 %v2423, 0.25
        %v2533 = vmul.f32 %v2453, 0.25
        %v2534 = vadd.f32 %v2474, %v2514
        %v2535 = vadd.f32 %v2475, %v2515
        %v2536 = vadd.f32 %v2476, %v2516
        %v2537 = vadd.f32 %v2477, %v2517
        %v2538 = vadd.f32 %v2478, %v2518
        %v2539 = vadd.f32 %v2479, %v2519
        %v2540 = vadd.f32 %v2480, %v2520
        %v2541 = vadd.f32 %v2481, %v2521
        %v2542 = vadd.f32 %v2482, %v2522
        %v2543 = vadd.f32 %v2483, %v2523
        %v2544 = vadd.f32 %v2484, %v2524
        %v2545 = vadd.f32 %v2485, %v2525
        %v2546 = vadd.f32 %v2486, %v2526
        %v2547 = vadd.f32 %v2487, %v2527
        %v2548 = vadd.f32 %v2488, %v2528
        %v2549 = vadd.f32 %v2489, %v2529
        %v2550 = vadd.f32 %v2490, %v2530
        %v2551 = vadd.f32 %v2491, %v2531
        %v2552 = vadd.f32 %v2492, %v2532
        %v2553 = vadd.f32 %v2493, %v2533
        %v2574 = vrot.slane %v2534, 7
        %v2575 = vrot.slane %v2535, 7
        %v2576 = vsel %vm511, %v2574, %v2575
        %v2577 = vrot.slane %v2536, 7
        %v2578 = vrot.slane %v2537, 7
        %v2579 = vsel %vm511, %v2577, %v2578
        %v2580 = vrot.slane %v2538, 7
        %v2581 = vrot.slane %v2539, 7
        %v2582 = vsel %vm511, %v2580, %v2581
        %v2583 = vrot.slane %v2540, 7
        %v2584 = vrot.slane %v2541, 7
        %v2585 = vsel %vm511, %v2583, %v2584
        %v2586 = vrot.slane %v2542, 7
        %v2587 = vrot.slane %v2543, 7
        %v2588 = vsel %vm511, %v2586, %v2587
        %v2589 = vrot.slane %v2544, 7
        %v2590 = vrot.slane %v2545, 7
        %v2591 = vsel %vm511, %v2589, %v2590
        %v2592 = vrot.slane %v2546, 7
        %v2593 = vrot.slane %v2547, 7
        %v2594 = vsel %vm511, %v2592, %v2593
        %v2595 = vrot.slane %v2548, 7
        %v2596 = vrot.slane %v2549, 7
        %v2597 = vsel %vm511, %v2595, %v2596
        %v2598 = vrot.slane %v2550, 7
        %v2599 = vrot.slane %v2551, 7
        %v2600 = vsel %vm511, %v2598, %v2599
        %v2601 = vrot.slane %v2552, 7
        %v2602 = vrot.slane %v2553, 7
        %v2603 = vsel %vm511, %v2601, %v2602
        %v2622 = vsel %vm511, 0.0, %v2574
        %v2623 = vsel %vm511, 0.0, %v2577
        %v2624 = vsel %vm511, 0.0, %v2580
        %v2625 = vsel %vm511, 0.0, %v2583
        %v2626 = vsel %vm511, 0.0, %v2586
        %v2627 = vsel %vm511, 0.0, %v2589
        %v2628 = vsel %vm511, 0.0, %v2592
        %v2629 = vsel %vm511, 0.0, %v2595
        %v2630 = vsel %vm511, 0.0, %v2598
        %v2631 = vsel %vm511, 0.0, %v2601
        %v2652 = vrot.slane %v2494, 1
        %v2653 = vrot.slane %v2495, 1
        %v2654 = vsel %vm572, %v2652, %v2653
        %v2655 = vrot.slane %v2496, 1
        %v2656 = vrot.slane %v2497, 1
        %v2657 = vsel %vm572, %v2655, %v2656
        %v2658 = vrot.slane %v2498, 1
        %v2659 = vrot.slane %v2499, 1
        %v2660 = vsel %vm572, %v2658, %v2659
        %v2661 = vrot.slane %v2500, 1
        %v2662 = vrot.slane %v2501, 1
        %v2663 = vsel %vm572, %v2661, %v2662
        %v2664 = vrot.slane %v2502, 1
        %v2665 = vrot.slane %v2503, 1
        %v2666 = vsel %vm572, %v2664, %v2665
        %v2667 = vrot.slane %v2504, 1
        %v2668 = vrot.slane %v2505, 1
        %v2669 = vsel %vm572, %v2667, %v2668
        %v2670 = vrot.slane %v2506, 1
        %v2671 = vrot.slane %v2507, 1
        %v2672 = vsel %vm572, %v2670, %v2671
        %v2673 = vrot.slane %v2508, 1
        %v2674 = vrot.slane %v2509, 1
        %v2675 = vsel %vm572, %v2673, %v2674
        %v2676 = vrot.slane %v2510, 1
        %v2677 = vrot.slane %v2511, 1
        %v2678 = vsel %vm572, %v2676, %v2677
        %v2679 = vrot.slane %v2512, 1
        %v2680 = vrot.slane %v2513, 1
        %v2681 = vsel %vm572, %v2679, %v2680
        %v2692 = vsel %vm572, %v2653, 0.0
        %v2693 = vsel %vm572, %v2656, 0.0
        %v2694 = vsel %vm572, %v2659, 0.0
        %v2695 = vsel %vm572, %v2662, 0.0
        %v2696 = vsel %vm572, %v2665, 0.0
        %v2697 = vsel %vm572, %v2668, 0.0
        %v2698 = vsel %vm572, %v2671, 0.0
        %v2699 = vsel %vm572, %v2674, 0.0
        %v2700 = vsel %vm572, %v2677, 0.0
        %v2701 = vsel %vm572, %v2680, 0.0
        %2702 = vst.msk [vmem:[#allocation2] sm:$0xff] %vm881, %v2622
        %2703 = vst.msk [vmem:[#allocation2 + $0x8] sm:$0xff] %vm881, %v2576
        %2704 = vst.msk [vmem:[#allocation2 + $0x10] sm:$0xff] %vm881, %v2623
        %2705 = vst.msk [vmem:[#allocation2 + $0x18] sm:$0xff] %vm881, %v2579
        %2706 = vst.msk [vmem:[#allocation2 + $0x20] sm:$0xff] %vm881, %v2624
        %2707 = vst.msk [vmem:[#allocation2 + $0x28] sm:$0xff] %vm881, %v2582
        %2708 = vst.msk [vmem:[#allocation2 + $0x30] sm:$0xff] %vm881, %v2625
        %2709 = vst.msk [vmem:[#allocation2 + $0x38] sm:$0xff] %vm881, %v2585
        %2710 = vst.msk [vmem:[#allocation2 + $0x40] sm:$0xff] %vm881, %v2626
        %2711 = vst.msk [vmem:[#allocation2 + $0x48] sm:$0xff] %vm881, %v2588
        %2712 = vst.msk [vmem:[#allocation2 + $0x50] sm:$0xff] %vm881, %v2627
        %2713 = vst.msk [vmem:[#allocation2 + $0x58] sm:$0xff] %vm881, %v2591
        %2714 = vst.msk [vmem:[#allocation2 + $0x60] sm:$0xff] %vm881, %v2628
        %2715 = vst.msk [vmem:[#allocation2 + $0x68] sm:$0xff] %vm881, %v2594
        %2716 = vst.msk [vmem:[#allocation2 + $0x70] sm:$0xff] %vm881, %v2629
        %2717 = vst.msk [vmem:[#allocation2 + $0x78] sm:$0xff] %vm881, %v2597
        %2718 = vrot.lane.b32.xlu0 %v2494, 4
        %v2719 = vpop.permute.xlu0 %2718
        %2720 = vrot.lane.b32.xlu0 %v2495, 4
        %v2721 = vpop.permute.xlu0 %2720
        %2722 = vrot.lane.b32.xlu0 %v2496, 4
        %v2723 = vpop.permute.xlu0 %2722
        %2724 = vrot.lane.b32.xlu0 %v2497, 4
        %v2725 = vpop.permute.xlu0 %2724
        %2726 = vrot.lane.b32.xlu0 %v2498, 4
        %v2727 = vpop.permute.xlu0 %2726
        %2728 = vrot.lane.b32.xlu0 %v2499, 4
        %v2729 = vpop.permute.xlu0 %2728
        %2730 = vrot.lane.b32.xlu0 %v2500, 4
        %v2731 = vpop.permute.xlu0 %2730
        %2732 = vrot.lane.b32.xlu0 %v2501, 4
        %v2733 = vpop.permute.xlu0 %2732
        %2734 = vrot.lane.b32.xlu0 %v2502, 4
        %v2735 = vpop.permute.xlu0 %2734
        %2736 = vrot.lane.b32.xlu0 %v2503, 4
        %v2737 = vpop.permute.xlu0 %2736
        %2738 = vrot.lane.b32.xlu0 %v2504, 4
        %v2739 = vpop.permute.xlu0 %2738
        %2740 = vrot.lane.b32.xlu0 %v2505, 4
        %v2741 = vpop.permute.xlu0 %2740
        %2742 = vrot.lane.b32.xlu0 %v2506, 4
        %v2743 = vpop.permute.xlu0 %2742
        %2744 = vrot.lane.b32.xlu0 %v2507, 4
        %v2745 = vpop.permute.xlu0 %2744
        %2746 = vrot.lane.b32.xlu0 %v2508, 4
        %v2747 = vpop.permute.xlu0 %2746
        %2748 = vrot.lane.b32.xlu0 %v2509, 4
        %v2749 = vpop.permute.xlu0 %2748
        %2766 = vst.msk [vmem:[#allocation2] sm:$0xff] %vm946, %v2719
        %2767 = vst.msk [vmem:[#allocation2 + $0x8] sm:$0xff] %vm946, %v2721
        %2768 = vst.msk [vmem:[#allocation2 + $0x10] sm:$0xff] %vm946, %v2723
        %2769 = vst.msk [vmem:[#allocation2 + $0x18] sm:$0xff] %vm946, %v2725
        %2770 = vst.msk [vmem:[#allocation2 + $0x20] sm:$0xff] %vm946, %v2727
        %2771 = vst.msk [vmem:[#allocation2 + $0x28] sm:$0xff] %vm946, %v2729
        %2772 = vst.msk [vmem:[#allocation2 + $0x30] sm:$0xff] %vm946, %v2731
        %2773 = vst.msk [vmem:[#allocation2 + $0x38] sm:$0xff] %vm946, %v2733
        %2774 = vst.msk [vmem:[#allocation2 + $0x40] sm:$0xff] %vm946, %v2735
        %2775 = vst.msk [vmem:[#allocation2 + $0x48] sm:$0xff] %vm946, %v2737
        %2776 = vst.msk [vmem:[#allocation2 + $0x50] sm:$0xff] %vm946, %v2739
        %2777 = vst.msk [vmem:[#allocation2 + $0x58] sm:$0xff] %vm946, %v2741
        %2778 = vst.msk [vmem:[#allocation2 + $0x60] sm:$0xff] %vm946, %v2743
        %2779 = vst.msk [vmem:[#allocation2 + $0x68] sm:$0xff] %vm946, %v2745
        %2780 = vst.msk [vmem:[#allocation2 + $0x70] sm:$0xff] %vm946, %v2747
        %2781 = vst.msk [vmem:[#allocation2 + $0x78] sm:$0xff] %vm946, %v2749
        %2782 = vrot.lane.b32.xlu0 %v2534, 8
        %v2783 = vpop.permute.xlu0 %2782
        %2784 = vrot.lane.b32.xlu0 %v2535, 8
        %v2785 = vpop.permute.xlu0 %2784
        %2786 = vrot.lane.b32.xlu0 %v2536, 8
        %v2787 = vpop.permute.xlu0 %2786
        %2788 = vrot.lane.b32.xlu0 %v2537, 8
        %v2789 = vpop.permute.xlu0 %2788
        %2790 = vrot.lane.b32.xlu0 %v2538, 8
        %v2791 = vpop.permute.xlu0 %2790
        %2792 = vrot.lane.b32.xlu0 %v2539, 8
        %v2793 = vpop.permute.xlu0 %2792
        %2794 = vrot.lane.b32.xlu0 %v2540, 8
        %v2795 = vpop.permute.xlu0 %2794
        %2796 = vrot.lane.b32.xlu0 %v2541, 8
        %v2797 = vpop.permute.xlu0 %2796
        %2798 = vrot.lane.b32.xlu0 %v2542, 8
        %v2799 = vpop.permute.xlu0 %2798
        %2800 = vrot.lane.b32.xlu0 %v2543, 8
        %v2801 = vpop.permute.xlu0 %2800
        %2802 = vrot.lane.b32.xlu0 %v2544, 8
        %v2803 = vpop.permute.xlu0 %2802
        %2804 = vrot.lane.b32.xlu0 %v2545, 8
        %v2805 = vpop.permute.xlu0 %2804
        %2806 = vrot.lane.b32.xlu0 %v2546, 8
        %v2807 = vpop.permute.xlu0 %2806
        %2808 = vrot.lane.b32.xlu0 %v2547, 8
        %v2809 = vpop.permute.xlu0 %2808
        %2810 = vrot.lane.b32.xlu0 %v2548, 8
        %v2811 = vpop.permute.xlu0 %2810
        %2812 = vrot.lane.b32.xlu0 %v2549, 8
        %v2813 = vpop.permute.xlu0 %2812
        %2830 = vst.msk [vmem:[#allocation2] sm:$0xff] %vm1011, %v2783
        %2831 = vst.msk [vmem:[#allocation2 + $0x8] sm:$0xff] %vm1011, %v2785
        %2832 = vst.msk [vmem:[#allocation2 + $0x10] sm:$0xff] %vm1011, %v2787
        %2833 = vst.msk [vmem:[#allocation2 + $0x18] sm:$0xff] %vm1011, %v2789
        %2834 = vst.msk [vmem:[#allocation2 + $0x20] sm:$0xff] %vm1011, %v2791
        %2835 = vst.msk [vmem:[#allocation2 + $0x28] sm:$0xff] %vm1011, %v2793
        %2836 = vst.msk [vmem:[#allocation2 + $0x30] sm:$0xff] %vm1011, %v2795
        %2837 = vst.msk [vmem:[#allocation2 + $0x38] sm:$0xff] %vm1011, %v2797
        %2838 = vst.msk [vmem:[#allocation2 + $0x40] sm:$0xff] %vm1011, %v2799
        %2839 = vst.msk [vmem:[#allocation2 + $0x48] sm:$0xff] %vm1011, %v2801
        %2840 = vst.msk [vmem:[#allocation2 + $0x50] sm:$0xff] %vm1011, %v2803
        %2841 = vst.msk [vmem:[#allocation2 + $0x58] sm:$0xff] %vm1011, %v2805
        %2842 = vst.msk [vmem:[#allocation2 + $0x60] sm:$0xff] %vm1011, %v2807
        %2843 = vst.msk [vmem:[#allocation2 + $0x68] sm:$0xff] %vm1011, %v2809
        %2844 = vst.msk [vmem:[#allocation2 + $0x70] sm:$0xff] %vm1011, %v2811
        %2845 = vst.msk [vmem:[#allocation2 + $0x78] sm:$0xff] %vm1011, %v2813
        %2854 = vrot.lane.b32.xlu0 %v2623, 12
        %v2855 = vpop.permute.xlu0 %2854
        %2856 = vrot.lane.b32.xlu0 %v2579, 12
        %v2857 = vpop.permute.xlu0 %2856
        %2858 = vrot.lane.b32.xlu0 %v2624, 12
        %v2859 = vpop.permute.xlu0 %2858
        %2860 = vrot.lane.b32.xlu0 %v2582, 12
        %v2861 = vpop.permute.xlu0 %2860
        %2862 = vrot.lane.b32.xlu0 %v2625, 12
        %v2863 = vpop.permute.xlu0 %2862
        %2864 = vrot.lane.b32.xlu0 %v2585, 12
        %v2865 = vpop.permute.xlu0 %2864
        %2866 = vrot.lane.b32.xlu0 %v2626, 12
        %v2867 = vpop.permute.xlu0 %2866
        %2868 = vrot.lane.b32.xlu0 %v2588, 12
        %v2869 = vpop.permute.xlu0 %2868
        %2870 = vrot.lane.b32.xlu0 %v2627, 12
        %v2871 = vpop.permute.xlu0 %2870
        %2872 = vrot.lane.b32.xlu0 %v2591, 12
        %v2873 = vpop.permute.xlu0 %2872
        %2874 = vrot.lane.b32.xlu0 %v2628, 12
        %v2875 = vpop.permute.xlu0 %2874
        %2876 = vrot.lane.b32.xlu0 %v2594, 12
        %v2877 = vpop.permute.xlu0 %2876
        %2878 = vrot.lane.b32.xlu0 %v2629, 12
        %v2879 = vpop.permute.xlu0 %2878
        %2880 = vrot.lane.b32.xlu0 %v2597, 12
        %v2881 = vpop.permute.xlu0 %2880
        %2882 = vrot.lane.b32.xlu0 %v2630, 12
        %v2883 = vpop.permute.xlu0 %2882
        %2884 = vrot.lane.b32.xlu0 %v2600, 12
        %v2885 = vpop.permute.xlu0 %2884
        %2902 = vst.msk [vmem:[#allocation2] sm:$0xff] %vm1084, %v2855
        %2903 = vst.msk [vmem:[#allocation2 + $0x8] sm:$0xff] %vm1084, %v2857
        %2904 = vst.msk [vmem:[#allocation2 + $0x10] sm:$0xff] %vm1084, %v2859
        %2905 = vst.msk [vmem:[#allocation2 + $0x18] sm:$0xff] %vm1084, %v2861
        %2906 = vst.msk [vmem:[#allocation2 + $0x20] sm:$0xff] %vm1084, %v2863
        %2907 = vst.msk [vmem:[#allocation2 + $0x28] sm:$0xff] %vm1084, %v2865
        %2908 = vst.msk [vmem:[#allocation2 + $0x30] sm:$0xff] %vm1084, %v2867
        %2909 = vst.msk [vmem:[#allocation2 + $0x38] sm:$0xff] %vm1084, %v2869
        %2910 = vst.msk [vmem:[#allocation2 + $0x40] sm:$0xff] %vm1084, %v2871
        %2911 = vst.msk [vmem:[#allocation2 + $0x48] sm:$0xff] %vm1084, %v2873
        %2912 = vst.msk [vmem:[#allocation2 + $0x50] sm:$0xff] %vm1084, %v2875
        %2913 = vst.msk [vmem:[#allocation2 + $0x58] sm:$0xff] %vm1084, %v2877
        %2914 = vst.msk [vmem:[#allocation2 + $0x60] sm:$0xff] %vm1084, %v2879
        %2915 = vst.msk [vmem:[#allocation2 + $0x68] sm:$0xff] %vm1084, %v2881
        %2916 = vst.msk [vmem:[#allocation2 + $0x70] sm:$0xff] %vm1084, %v2883
        %2917 = vst.msk [vmem:[#allocation2 + $0x78] sm:$0xff] %vm1084, %v2885
        %2918 = vrot.lane.b32.xlu0 %v2496, 16
        %v2919 = vpop.permute.xlu0 %2918
        %2920 = vrot.lane.b32.xlu0 %v2497, 16
        %v2921 = vpop.permute.xlu0 %2920
        %2922 = vrot.lane.b32.xlu0 %v2498, 16
        %v2923 = vpop.permute.xlu0 %2922
        %2924 = vrot.lane.b32.xlu0 %v2499, 16
        %v2925 = vpop.permute.xlu0 %2924
        %2926 = vrot.lane.b32.xlu0 %v2500, 16
        %v2927 = vpop.permute.xlu0 %2926
        %2928 = vrot.lane.b32.xlu0 %v2501, 16
        %v2929 = vpop.permute.xlu0 %2928
        %2930 = vrot.lane.b32.xlu0 %v2502, 16
        %v2931 = vpop.permute.xlu0 %2930
        %2932 = vrot.lane.b32.xlu0 %v2503, 16
        %v2933 = vpop.permute.xlu0 %2932
        %2934 = vrot.lane.b32.xlu0 %v2504, 16
        %v2935 = vpop.permute.xlu0 %2934
        %2936 = vrot.lane.b32.xlu0 %v2505, 16
        %v2937 = vpop.permute.xlu0 %2936
        %2938 = vrot.lane.b32.xlu0 %v2506, 16
        %v2939 = vpop.permute.xlu0 %2938
        %2940 = vrot.lane.b32.xlu0 %v2507, 16
        %v2941 = vpop.permute.xlu0 %2940
        %2942 = vrot.lane.b32.xlu0 %v2508, 16
        %v2943 = vpop.permute.xlu0 %2942
        %2944 = vrot.lane.b32.xlu0 %v2509, 16
        %v2945 = vpop.permute.xlu0 %2944
        %2946 = vrot.lane.b32.xlu0 %v2510, 16
        %v2947 = vpop.permute.xlu0 %2946
        %2948 = vrot.lane.b32.xlu0 %v2511, 16
        %v2949 = vpop.permute.xlu0 %2948
        %2966 = vst.msk [vmem:[#allocation2] sm:$0xff] %vm1149, %v2919
        %2967 = vst.msk [vmem:[#allocation2 + $0x8] sm:$0xff] %vm1149, %v2921
        %2968 = vst.msk [vmem:[#allocation2 + $0x10] sm:$0xff] %vm1149, %v2923
        %2969 = vst.msk [vmem:[#allocation2 + $0x18] sm:$0xff] %vm1149, %v2925
        %2970 = vst.msk [vmem:[#allocation2 + $0x20] sm:$0xff] %vm1149, %v2927
        %2971 = vst.msk [vmem:[#allocation2 + $0x28] sm:$0xff] %vm1149, %v2929
        %2972 = vst.msk [vmem:[#allocation2 + $0x30] sm:$0xff] %vm1149, %v2931
        %2973 = vst.msk [vmem:[#allocation2 + $0x38] sm:$0xff] %vm1149, %v2933
        %2974 = vst.msk [vmem:[#allocation2 + $0x40] sm:$0xff] %vm1149, %v2935
        %2975 = vst.msk [vmem:[#allocation2 + $0x48] sm:$0xff] %vm1149, %v2937
        %2976 = vst.msk [vmem:[#allocation2 + $0x50] sm:$0xff] %vm1149, %v2939
        %2977 = vst.msk [vmem:[#allocation2 + $0x58] sm:$0xff] %vm1149, %v2941
        %2978 = vst.msk [vmem:[#allocation2 + $0x60] sm:$0xff] %vm1149, %v2943
        %2979 = vst.msk [vmem:[#allocation2 + $0x68] sm:$0xff] %vm1149, %v2945
        %2980 = vst.msk [vmem:[#allocation2 + $0x70] sm:$0xff] %vm1149, %v2947
        %2981 = vst.msk [vmem:[#allocation2 + $0x78] sm:$0xff] %vm1149, %v2949
        %2982 = vrot.lane.b32.xlu0 %v2536, 20
        %v2983 = vpop.permute.xlu0 %2982
        %2984 = vrot.lane.b32.xlu0 %v2537, 20
        %v2985 = vpop.permute.xlu0 %2984
        %2986 = vrot.lane.b32.xlu0 %v2538, 20
        %v2987 = vpop.permute.xlu0 %2986
        %2988 = vrot.lane.b32.xlu0 %v2539, 20
        %v2989 = vpop.permute.xlu0 %2988
        %2990 = vrot.lane.b32.xlu0 %v2540, 20
        %v2991 = vpop.permute.xlu0 %2990
        %2992 = vrot.lane.b32.xlu0 %v2541, 20
        %v2993 = vpop.permute.xlu0 %2992
        %2994 = vrot.lane.b32.xlu0 %v2542, 20
        %v2995 = vpop.permute.xlu0 %2994
        %2996 = vrot.lane.b32.xlu0 %v2543, 20
        %v2997 = vpop.permute.xlu0 %2996
        %2998 = vrot.lane.b32.xlu0 %v2544, 20
        %v2999 = vpop.permute.xlu0 %2998
        %3000 = vrot.lane.b32.xlu0 %v2545, 20
        %v3001 = vpop.permute.xlu0 %3000
        %3002 = vrot.lane.b32.xlu0 %v2546, 20
        %v3003 = vpop.permute.xlu0 %3002
        %3004 = vrot.lane.b32.xlu0 %v2547, 20
        %v3005 = vpop.permute.xlu0 %3004
        %3006 = vrot.lane.b32.xlu0 %v2548, 20
        %v3007 = vpop.permute.xlu0 %3006
        %3008 = vrot.lane.b32.xlu0 %v2549, 20
        %v3009 = vpop.permute.xlu0 %3008
        %3010 = vrot.lane.b32.xlu0 %v2550, 20
        %v3011 = vpop.permute.xlu0 %3010
        %3012 = vrot.lane.b32.xlu0 %v2551, 20
        %v3013 = vpop.permute.xlu0 %3012
        %3030 = vst.msk [vmem:[#allocation2] sm:$0xff] %vm1214, %v2983
        %3031 = vst.msk [vmem:[#allocation2 + $0x8] sm:$0xff] %vm1214, %v2985
        %3032 = vst.msk [vmem:[#allocation2 + $0x10] sm:$0xff] %vm1214, %v2987
        %3033 = vst.msk [vmem:[#allocation2 + $0x18] sm:$0xff] %vm1214, %v2989
        %3034 = vst.msk [vmem:[#allocation2 + $0x20] sm:$0xff] %vm1214, %v2991
        %3035 = vst.msk [vmem:[#allocation2 + $0x28] sm:$0xff] %vm1214, %v2993
        %3036 = vst.msk [vmem:[#allocation2 + $0x30] sm:$0xff] %vm1214, %v2995
        %3037 = vst.msk [vmem:[#allocation2 + $0x38] sm:$0xff] %vm1214, %v2997
        %3038 = vst.msk [vmem:[#allocation2 + $0x40] sm:$0xff] %vm1214, %v2999
        %3039 = vst.msk [vmem:[#allocation2 + $0x48] sm:$0xff] %vm1214, %v3001
        %3040 = vst.msk [vmem:[#allocation2 + $0x50] sm:$0xff] %vm1214, %v3003
        %3041 = vst.msk [vmem:[#allocation2 + $0x58] sm:$0xff] %vm1214, %v3005
        %3042 = vst.msk [vmem:[#allocation2 + $0x60] sm:$0xff] %vm1214, %v3007
        %3043 = vst.msk [vmem:[#allocation2 + $0x68] sm:$0xff] %vm1214, %v3009
        %3044 = vst.msk [vmem:[#allocation2 + $0x70] sm:$0xff] %vm1214, %v3011
        %3045 = vst.msk [vmem:[#allocation2 + $0x78] sm:$0xff] %vm1214, %v3013
        %3047 = vrot.lane.b32.xlu0 %v2624, 24
        %v3048 = vpop.permute.xlu0 %3047
        %3049 = vrot.lane.b32.xlu0 %v2582, 24
        %v3050 = vpop.permute.xlu0 %3049
        %3051 = vrot.lane.b32.xlu0 %v2625, 24
        %v3052 = vpop.permute.xlu0 %3051
        %3053 = vrot.lane.b32.xlu0 %v2585, 24
        %v3054 = vpop.permute.xlu0 %3053
        %3055 = vrot.lane.b32.xlu0 %v2626, 24
        %v3056 = vpop.permute.xlu0 %3055
        %3057 = vrot.lane.b32.xlu0 %v2588, 24
        %v3058 = vpop.permute.xlu0 %3057
        %3059 = vrot.lane.b32.xlu0 %v2627, 24
        %v3060 = vpop.permute.xlu0 %3059
        %3061 = vrot.lane.b32.xlu0 %v2591, 24
        %v3062 = vpop.permute.xlu0 %3061
        %3063 = vrot.lane.b32.xlu0 %v2628, 24
        %v3064 = vpop.permute.xlu0 %3063
        %3065 = vrot.lane.b32.xlu0 %v2594, 24
        %v3066 = vpop.permute.xlu0 %3065
        %3067 = vrot.lane.b32.xlu0 %v2629, 24
        %v3068 = vpop.permute.xlu0 %3067
        %3069 = vrot.lane.b32.xlu0 %v2597, 24
        %v3070 = vpop.permute.xlu0 %3069
        %3071 = vrot.lane.b32.xlu0 %v2630, 24
        %v3072 = vpop.permute.xlu0 %3071
        %3073 = vrot.lane.b32.xlu0 %v2600, 24
        %v3074 = vpop.permute.xlu0 %3073
        %3075 = vrot.lane.b32.xlu0 %v2631, 24
        %v3076 = vpop.permute.xlu0 %3075
        %3077 = vrot.lane.b32.xlu0 %v2603, 24
        %v3078 = vpop.permute.xlu0 %3077
        %3095 = vst.msk [vmem:[#allocation2] sm:$0xff] %vm1280, %v3048
        %3096 = vst.msk [vmem:[#allocation2 + $0x8] sm:$0xff] %vm1280, %v3050
        %3097 = vst.msk [vmem:[#allocation2 + $0x10] sm:$0xff] %vm1280, %v3052
        %3098 = vst.msk [vmem:[#allocation2 + $0x18] sm:$0xff] %vm1280, %v3054
        %3099 = vst.msk [vmem:[#allocation2 + $0x20] sm:$0xff] %vm1280, %v3056
        %3100 = vst.msk [vmem:[#allocation2 + $0x28] sm:$0xff] %vm1280, %v3058
        %3101 = vst.msk [vmem:[#allocation2 + $0x30] sm:$0xff] %vm1280, %v3060
        %3102 = vst.msk [vmem:[#allocation2 + $0x38] sm:$0xff] %vm1280, %v3062
        %3103 = vst.msk [vmem:[#allocation2 + $0x40] sm:$0xff] %vm1280, %v3064
        %3104 = vst.msk [vmem:[#allocation2 + $0x48] sm:$0xff] %vm1280, %v3066
        %3105 = vst.msk [vmem:[#allocation2 + $0x50] sm:$0xff] %vm1280, %v3068
        %3106 = vst.msk [vmem:[#allocation2 + $0x58] sm:$0xff] %vm1280, %v3070
        %3107 = vst.msk [vmem:[#allocation2 + $0x60] sm:$0xff] %vm1280, %v3072
        %3108 = vst.msk [vmem:[#allocation2 + $0x68] sm:$0xff] %vm1280, %v3074
        %3109 = vst.msk [vmem:[#allocation2 + $0x70] sm:$0xff] %vm1280, %v3076
        %3110 = vst.msk [vmem:[#allocation2 + $0x78] sm:$0xff] %vm1280, %v3078
        %3111 = vrot.lane.b32.xlu0 %v2498, 28
        %v3112 = vpop.permute.xlu0 %3111
        %3113 = vrot.lane.b32.xlu0 %v2499, 28
        %v3114 = vpop.permute.xlu0 %3113
        %3115 = vrot.lane.b32.xlu0 %v2500, 28
        %v3116 = vpop.permute.xlu0 %3115
        %3117 = vrot.lane.b32.xlu0 %v2501, 28
        %v3118 = vpop.permute.xlu0 %3117
        %3119 = vrot.lane.b32.xlu0 %v2502, 28
        %v3120 = vpop.permute.xlu0 %3119
        %3121 = vrot.lane.b32.xlu0 %v2503, 28
        %v3122 = vpop.permute.xlu0 %3121
        %3123 = vrot.lane.b32.xlu0 %v2504, 28
        %v3124 = vpop.permute.xlu0 %3123
        %3125 = vrot.lane.b32.xlu0 %v2505, 28
        %v3126 = vpop.permute.xlu0 %3125
        %3127 = vrot.lane.b32.xlu0 %v2506, 28
        %v3128 = vpop.permute.xlu0 %3127
        %3129 = vrot.lane.b32.xlu0 %v2507, 28
        %v3130 = vpop.permute.xlu0 %3129
        %3131 = vrot.lane.b32.xlu0 %v2508, 28
        %v3132 = vpop.permute.xlu0 %3131
        %3133 = vrot.lane.b32.xlu0 %v2509, 28
        %v3134 = vpop.permute.xlu0 %3133
        %3135 = vrot.lane.b32.xlu0 %v2510, 28
        %v3136 = vpop.permute.xlu0 %3135
        %3137 = vrot.lane.b32.xlu0 %v2511, 28
        %v3138 = vpop.permute.xlu0 %3137
        %3139 = vrot.lane.b32.xlu0 %v2512, 28
        %v3140 = vpop.permute.xlu0 %3139
        %3141 = vrot.lane.b32.xlu0 %v2513, 28
        %v3142 = vpop.permute.xlu0 %3141
        %3159 = vst.msk [vmem:[#allocation2] sm:$0xff] %vm1345, %v3112
        %3160 = vst.msk [vmem:[#allocation2 + $0x8] sm:$0xff] %vm1345, %v3114
        %3161 = vst.msk [vmem:[#allocation2 + $0x10] sm:$0xff] %vm1345, %v3116
        %3162 = vst.msk [vmem:[#allocation2 + $0x18] sm:$0xff] %vm1345, %v3118
        %3163 = vst.msk [vmem:[#allocation2 + $0x20] sm:$0xff] %vm1345, %v3120
        %3164 = vst.msk [vmem:[#allocation2 + $0x28] sm:$0xff] %vm1345, %v3122
        %3165 = vst.msk [vmem:[#allocation2 + $0x30] sm:$0xff] %vm1345, %v3124
        %3166 = vst.msk [vmem:[#allocation2 + $0x38] sm:$0xff] %vm1345, %v3126
        %3167 = vst.msk [vmem:[#allocation2 + $0x40] sm:$0xff] %vm1345, %v3128
        %3168 = vst.msk [vmem:[#allocation2 + $0x48] sm:$0xff] %vm1345, %v3130
        %3169 = vst.msk [vmem:[#allocation2 + $0x50] sm:$0xff] %vm1345, %v3132
        %3170 = vst.msk [vmem:[#allocation2 + $0x58] sm:$0xff] %vm1345, %v3134
        %3171 = vst.msk [vmem:[#allocation2 + $0x60] sm:$0xff] %vm1345, %v3136
        %3172 = vst.msk [vmem:[#allocation2 + $0x68] sm:$0xff] %vm1345, %v3138
        %3173 = vst.msk [vmem:[#allocation2 + $0x70] sm:$0xff] %vm1345, %v3140
        %3174 = vst.msk [vmem:[#allocation2 + $0x78] sm:$0xff] %vm1345, %v3142
        %3175 = vrot.lane.b32.xlu0 %v2538, 32
        %v3176 = vpop.permute.xlu0 %3175
        %3177 = vrot.lane.b32.xlu0 %v2539, 32
        %v3178 = vpop.permute.xlu0 %3177
        %3179 = vrot.lane.b32.xlu0 %v2540, 32
        %v3180 = vpop.permute.xlu0 %3179
        %3181 = vrot.lane.b32.xlu0 %v2541, 32
        %v3182 = vpop.permute.xlu0 %3181
        %3183 = vrot.lane.b32.xlu0 %v2542, 32
        %v3184 = vpop.permute.xlu0 %3183
        %3185 = vrot.lane.b32.xlu0 %v2543, 32
        %v3186 = vpop.permute.xlu0 %3185
        %3187 = vrot.lane.b32.xlu0 %v2544, 32
        %v3188 = vpop.permute.xlu0 %3187
        %3189 = vrot.lane.b32.xlu0 %v2545, 32
        %v3190 = vpop.permute.xlu0 %3189
        %3191 = vrot.lane.b32.xlu0 %v2546, 32
        %v3192 = vpop.permute.xlu0 %3191
        %3193 = vrot.lane.b32.xlu0 %v2547, 32
        %v3194 = vpop.permute.xlu0 %3193
        %3195 = vrot.lane.b32.xlu0 %v2548, 32
        %v3196 = vpop.permute.xlu0 %3195
        %3197 = vrot.lane.b32.xlu0 %v2549, 32
        %v3198 = vpop.permute.xlu0 %3197
        %3199 = vrot.lane.b32.xlu0 %v2550, 32
        %v3200 = vpop.permute.xlu0 %3199
        %3201 = vrot.lane.b32.xlu0 %v2551, 32
        %v3202 = vpop.permute.xlu0 %3201
        %3203 = vrot.lane.b32.xlu0 %v2552, 32
        %v3204 = vpop.permute.xlu0 %3203
        %3205 = vrot.lane.b32.xlu0 %v2553, 32
        %v3206 = vpop.permute.xlu0 %3205
        %3223 = vst.msk [vmem:[#allocation2] sm:$0xff] %vm1410, %v3176
        %3224 = vst.msk [vmem:[#allocation2 + $0x8] sm:$0xff] %vm1410, %v3178
        %3225 = vst.msk [vmem:[#allocation2 + $0x10] sm:$0xff] %vm1410, %v3180
        %3226 = vst.msk [vmem:[#allocation2 + $0x18] sm:$0xff] %vm1410, %v3182
        %3227 = vst.msk [vmem:[#allocation2 + $0x20] sm:$0xff] %vm1410, %v3184
        %3228 = vst.msk [vmem:[#allocation2 + $0x28] sm:$0xff] %vm1410, %v3186
        %3229 = vst.msk [vmem:[#allocation2 + $0x30] sm:$0xff] %vm1410, %v3188
        %3230 = vst.msk [vmem:[#allocation2 + $0x38] sm:$0xff] %vm1410, %v3190
        %3231 = vst.msk [vmem:[#allocation2 + $0x40] sm:$0xff] %vm1410, %v3192
        %3232 = vst.msk [vmem:[#allocation2 + $0x48] sm:$0xff] %vm1410, %v3194
        %3233 = vst.msk [vmem:[#allocation2 + $0x50] sm:$0xff] %vm1410, %v3196
        %3234 = vst.msk [vmem:[#allocation2 + $0x58] sm:$0xff] %vm1410, %v3198
        %3235 = vst.msk [vmem:[#allocation2 + $0x60] sm:$0xff] %vm1410, %v3200
        %3236 = vst.msk [vmem:[#allocation2 + $0x68] sm:$0xff] %vm1410, %v3202
        %3237 = vst.msk [vmem:[#allocation2 + $0x70] sm:$0xff] %vm1410, %v3204
        %3238 = vst.msk [vmem:[#allocation2 + $0x78] sm:$0xff] %vm1410, %v3206
        %3239 = vst.msk [vmem:[%s1427] sm:$0xff] %vm881, %v2494
        %3240 = vst.msk [vmem:[%s1427 + $0x8] sm:$0xff] %vm881, %v2495
        %3241 = vst.msk [vmem:[%s1427 + $0x10] sm:$0xff] %vm881, %v2496
        %3242 = vst.msk [vmem:[%s1427 + $0x18] sm:$0xff] %vm881, %v2497
        %3243 = vst.msk [vmem:[%s1427 + $0x20] sm:$0xff] %vm881, %v2498
        %3244 = vst.msk [vmem:[%s1427 + $0x28] sm:$0xff] %vm881, %v2499
        %3245 = vst.msk [vmem:[%s1427 + $0x30] sm:$0xff] %vm881, %v2500
        %3246 = vst.msk [vmem:[%s1427 + $0x38] sm:$0xff] %vm881, %v2501
        %3247 = vst.msk [vmem:[%s1427 + $0x40] sm:$0xff] %vm881, %v2502
        %3248 = vst.msk [vmem:[%s1427 + $0x48] sm:$0xff] %vm881, %v2503
        %3249 = vst.msk [vmem:[%s1427 + $0x50] sm:$0xff] %vm881, %v2504
        %3250 = vst.msk [vmem:[%s1427 + $0x58] sm:$0xff] %vm881, %v2505
        %3251 = vst.msk [vmem:[%s1427 + $0x60] sm:$0xff] %vm881, %v2506
        %3252 = vst.msk [vmem:[%s1427 + $0x68] sm:$0xff] %vm881, %v2507
        %3253 = vst.msk [vmem:[%s1427 + $0x70] sm:$0xff] %vm881, %v2508
        %3254 = vst.msk [vmem:[%s1427 + $0x78] sm:$0xff] %vm881, %v2509
        %3255 = vrot.lane.b32.xlu0 %v2534, 4
        %v3256 = vpop.permute.xlu0 %3255
        %3257 = vrot.lane.b32.xlu0 %v2535, 4
        %v3258 = vpop.permute.xlu0 %3257
        %3259 = vrot.lane.b32.xlu0 %v2536, 4
        %v3260 = vpop.permute.xlu0 %3259
        %3261 = vrot.lane.b32.xlu0 %v2537, 4
        %v3262 = vpop.permute.xlu0 %3261
        %3263 = vrot.lane.b32.xlu0 %v2538, 4
        %v3264 = vpop.permute.xlu0 %3263
        %3265 = vrot.lane.b32.xlu0 %v2539, 4
        %v3266 = vpop.permute.xlu0 %3265
        %3267 = vrot.lane.b32.xlu0 %v2540, 4
        %v3268 = vpop.permute.xlu0 %3267
        %3269 = vrot.lane.b32.xlu0 %v2541, 4
        %v3270 = vpop.permute.xlu0 %3269
        %3271 = vrot.lane.b32.xlu0 %v2542, 4
        %v3272 = vpop.permute.xlu0 %3271
        %3273 = vrot.lane.b32.xlu0 %v2543, 4
        %v3274 = vpop.permute.xlu0 %3273
        %3275 = vrot.lane.b32.xlu0 %v2544, 4
        %v3276 = vpop.permute.xlu0 %3275
        %3277 = vrot.lane.b32.xlu0 %v2545, 4
        %v3278 = vpop.permute.xlu0 %3277
        %3279 = vrot.lane.b32.xlu0 %v2546, 4
        %v3280 = vpop.permute.xlu0 %3279
        %3281 = vrot.lane.b32.xlu0 %v2547, 4
        %v3282 = vpop.permute.xlu0 %3281
        %3283 = vrot.lane.b32.xlu0 %v2548, 4
        %v3284 = vpop.permute.xlu0 %3283
        %3285 = vrot.lane.b32.xlu0 %v2549, 4
        %v3286 = vpop.permute.xlu0 %3285
        %3303 = vst.msk [vmem:[%s1427] sm:$0xff] %vm946, %v3256
        %3304 = vst.msk [vmem:[%s1427 + $0x8] sm:$0xff] %vm946, %v3258
        %3305 = vst.msk [vmem:[%s1427 + $0x10] sm:$0xff] %vm946, %v3260
        %3306 = vst.msk [vmem:[%s1427 + $0x18] sm:$0xff] %vm946, %v3262
        %3307 = vst.msk [vmem:[%s1427 + $0x20] sm:$0xff] %vm946, %v3264
        %3308 = vst.msk [vmem:[%s1427 + $0x28] sm:$0xff] %vm946, %v3266
        %3309 = vst.msk [vmem:[%s1427 + $0x30] sm:$0xff] %vm946, %v3268
        %3310 = vst.msk [vmem:[%s1427 + $0x38] sm:$0xff] %vm946, %v3270
        %3311 = vst.msk [vmem:[%s1427 + $0x40] sm:$0xff] %vm946, %v3272
        %3312 = vst.msk [vmem:[%s1427 + $0x48] sm:$0xff] %vm946, %v3274
        %3313 = vst.msk [vmem:[%s1427 + $0x50] sm:$0xff] %vm946, %v3276
        %3314 = vst.msk [vmem:[%s1427 + $0x58] sm:$0xff] %vm946, %v3278
        %3315 = vst.msk [vmem:[%s1427 + $0x60] sm:$0xff] %vm946, %v3280
        %3316 = vst.msk [vmem:[%s1427 + $0x68] sm:$0xff] %vm946, %v3282
        %3317 = vst.msk [vmem:[%s1427 + $0x70] sm:$0xff] %vm946, %v3284
        %3318 = vst.msk [vmem:[%s1427 + $0x78] sm:$0xff] %vm946, %v3286
        %3327 = vrot.lane.b32.xlu0 %v2654, 8
        %v3328 = vpop.permute.xlu0 %3327
        %3329 = vrot.lane.b32.xlu0 %v2692, 8
        %v3330 = vpop.permute.xlu0 %3329
        %3331 = vrot.lane.b32.xlu0 %v2657, 8
        %v3332 = vpop.permute.xlu0 %3331
        %3333 = vrot.lane.b32.xlu0 %v2693, 8
        %v3334 = vpop.permute.xlu0 %3333
        %3335 = vrot.lane.b32.xlu0 %v2660, 8
        %v3336 = vpop.permute.xlu0 %3335
        %3337 = vrot.lane.b32.xlu0 %v2694, 8
        %v3338 = vpop.permute.xlu0 %3337
        %3339 = vrot.lane.b32.xlu0 %v2663, 8
        %v3340 = vpop.permute.xlu0 %3339
        %3341 = vrot.lane.b32.xlu0 %v2695, 8
        %v3342 = vpop.permute.xlu0 %3341
        %3343 = vrot.lane.b32.xlu0 %v2666, 8
        %v3344 = vpop.permute.xlu0 %3343
        %3345 = vrot.lane.b32.xlu0 %v2696, 8
        %v3346 = vpop.permute.xlu0 %3345
        %3347 = vrot.lane.b32.xlu0 %v2669, 8
        %v3348 = vpop.permute.xlu0 %3347
        %3349 = vrot.lane.b32.xlu0 %v2697, 8
        %v3350 = vpop.permute.xlu0 %3349
        %3351 = vrot.lane.b32.xlu0 %v2672, 8
        %v3352 = vpop.permute.xlu0 %3351
        %3353 = vrot.lane.b32.xlu0 %v2698, 8
        %v3354 = vpop.permute.xlu0 %3353
        %3355 = vrot.lane.b32.xlu0 %v2675, 8
        %v3356 = vpop.permute.xlu0 %3355
        %3357 = vrot.lane.b32.xlu0 %v2699, 8
        %v3358 = vpop.permute.xlu0 %3357
        %3375 = vst.msk [vmem:[%s1427] sm:$0xff] %vm1011, %v3328
        %3376 = vst.msk [vmem:[%s1427 + $0x8] sm:$0xff] %vm1011, %v3330
        %3377 = vst.msk [vmem:[%s1427 + $0x10] sm:$0xff] %vm1011, %v3332
        %3378 = vst.msk [vmem:[%s1427 + $0x18] sm:$0xff] %vm1011, %v3334
        %3379 = vst.msk [vmem:[%s1427 + $0x20] sm:$0xff] %vm1011, %v3336
        %3380 = vst.msk [vmem:[%s1427 + $0x28] sm:$0xff] %vm1011, %v3338
        %3381 = vst.msk [vmem:[%s1427 + $0x30] sm:$0xff] %vm1011, %v3340
        %3382 = vst.msk [vmem:[%s1427 + $0x38] sm:$0xff] %vm1011, %v3342
        %3383 = vst.msk [vmem:[%s1427 + $0x40] sm:$0xff] %vm1011, %v3344
        %3384 = vst.msk [vmem:[%s1427 + $0x48] sm:$0xff] %vm1011, %v3346
        %3385 = vst.msk [vmem:[%s1427 + $0x50] sm:$0xff] %vm1011, %v3348
        %3386 = vst.msk [vmem:[%s1427 + $0x58] sm:$0xff] %vm1011, %v3350
        %3387 = vst.msk [vmem:[%s1427 + $0x60] sm:$0xff] %vm1011, %v3352
        %3388 = vst.msk [vmem:[%s1427 + $0x68] sm:$0xff] %vm1011, %v3354
        %3389 = vst.msk [vmem:[%s1427 + $0x70] sm:$0xff] %vm1011, %v3356
        %3390 = vst.msk [vmem:[%s1427 + $0x78] sm:$0xff] %vm1011, %v3358
        %3391 = vrot.lane.b32.xlu0 %v2496, 12
        %v3392 = vpop.permute.xlu0 %3391
        %3393 = vrot.lane.b32.xlu0 %v2497, 12
        %v3394 = vpop.permute.xlu0 %3393
        %3395 = vrot.lane.b32.xlu0 %v2498, 12
        %v3396 = vpop.permute.xlu0 %3395
        %3397 = vrot.lane.b32.xlu0 %v2499, 12
        %v3398 = vpop.permute.xlu0 %3397
        %3399 = vrot.lane.b32.xlu0 %v2500, 12
        %v3400 = vpop.permute.xlu0 %3399
        %3401 = vrot.lane.b32.xlu0 %v2501, 12
        %v3402 = vpop.permute.xlu0 %3401
        %3403 = vrot.lane.b32.xlu0 %v2502, 12
        %v3404 = vpop.permute.xlu0 %3403
        %3405 = vrot.lane.b32.xlu0 %v2503, 12
        %v3406 = vpop.permute.xlu0 %3405
        %3407 = vrot.lane.b32.xlu0 %v2504, 12
        %v3408 = vpop.permute.xlu0 %3407
        %3409 = vrot.lane.b32.xlu0 %v2505, 12
        %v3410 = vpop.permute.xlu0 %3409
        %3411 = vrot.lane.b32.xlu0 %v2506, 12
        %v3412 = vpop.permute.xlu0 %3411
        %3413 = vrot.lane.b32.xlu0 %v2507, 12
        %v3414 = vpop.permute.xlu0 %3413
        %3415 = vrot.lane.b32.xlu0 %v2508, 12
        %v3416 = vpop.permute.xlu0 %3415
        %3417 = vrot.lane.b32.xlu0 %v2509, 12
        %v3418 = vpop.permute.xlu0 %3417
        %3419 = vrot.lane.b32.xlu0 %v2510, 12
        %v3420 = vpop.permute.xlu0 %3419
        %3421 = vrot.lane.b32.xlu0 %v2511, 12
        %v3422 = vpop.permute.xlu0 %3421
        %3439 = vst.msk [vmem:[%s1427] sm:$0xff] %vm1084, %v3392
        %3440 = vst.msk [vmem:[%s1427 + $0x8] sm:$0xff] %vm1084, %v3394
        %3441 = vst.msk [vmem:[%s1427 + $0x10] sm:$0xff] %vm1084, %v3396
        %3442 = vst.msk [vmem:[%s1427 + $0x18] sm:$0xff] %vm1084, %v3398
        %3443 = vst.msk [vmem:[%s1427 + $0x20] sm:$0xff] %vm1084, %v3400
        %3444 = vst.msk [vmem:[%s1427 + $0x28] sm:$0xff] %vm1084, %v3402
        %3445 = vst.msk [vmem:[%s1427 + $0x30] sm:$0xff] %vm1084, %v3404
        %3446 = vst.msk [vmem:[%s1427 + $0x38] sm:$0xff] %vm1084, %v3406
        %3447 = vst.msk [vmem:[%s1427 + $0x40] sm:$0xff] %vm1084, %v3408
        %3448 = vst.msk [vmem:[%s1427 + $0x48] sm:$0xff] %vm1084, %v3410
        %3449 = vst.msk [vmem:[%s1427 + $0x50] sm:$0xff] %vm1084, %v3412
        %3450 = vst.msk [vmem:[%s1427 + $0x58] sm:$0xff] %vm1084, %v3414
        %3451 = vst.msk [vmem:[%s1427 + $0x60] sm:$0xff] %vm1084, %v3416
        %3452 = vst.msk [vmem:[%s1427 + $0x68] sm:$0xff] %vm1084, %v3418
        %3453 = vst.msk [vmem:[%s1427 + $0x70] sm:$0xff] %vm1084, %v3420
        %3454 = vst.msk [vmem:[%s1427 + $0x78] sm:$0xff] %vm1084, %v3422
        %3455 = vrot.lane.b32.xlu0 %v2536, 16
        %v3456 = vpop.permute.xlu0 %3455
        %3457 = vrot.lane.b32.xlu0 %v2537, 16
        %v3458 = vpop.permute.xlu0 %3457
        %3459 = vrot.lane.b32.xlu0 %v2538, 16
        %v3460 = vpop.permute.xlu0 %3459
        %3461 = vrot.lane.b32.xlu0 %v2539, 16
        %v3462 = vpop.permute.xlu0 %3461
        %3463 = vrot.lane.b32.xlu0 %v2540, 16
        %v3464 = vpop.permute.xlu0 %3463
        %3465 = vrot.lane.b32.xlu0 %v2541, 16
        %v3466 = vpop.permute.xlu0 %3465
        %3467 = vrot.lane.b32.xlu0 %v2542, 16
        %v3468 = vpop.permute.xlu0 %3467
        %3469 = vrot.lane.b32.xlu0 %v2543, 16
        %v3470 = vpop.permute.xlu0 %3469
        %3471 = vrot.lane.b32.xlu0 %v2544, 16
        %v3472 = vpop.permute.xlu0 %3471
        %3473 = vrot.lane.b32.xlu0 %v2545, 16
        %v3474 = vpop.permute.xlu0 %3473
        %3475 = vrot.lane.b32.xlu0 %v2546, 16
        %v3476 = vpop.permute.xlu0 %3475
        %3477 = vrot.lane.b32.xlu0 %v2547, 16
        %v3478 = vpop.permute.xlu0 %3477
        %3479 = vrot.lane.b32.xlu0 %v2548, 16
        %v3480 = vpop.permute.xlu0 %3479
        %3481 = vrot.lane.b32.xlu0 %v2549, 16
        %v3482 = vpop.permute.xlu0 %3481
        %3483 = vrot.lane.b32.xlu0 %v2550, 16
        %v3484 = vpop.permute.xlu0 %3483
        %3485 = vrot.lane.b32.xlu0 %v2551, 16
        %v3486 = vpop.permute.xlu0 %3485
        %3503 = vst.msk [vmem:[%s1427] sm:$0xff] %vm1149, %v3456
        %3504 = vst.msk [vmem:[%s1427 + $0x8] sm:$0xff] %vm1149, %v3458
        %3505 = vst.msk [vmem:[%s1427 + $0x10] sm:$0xff] %vm1149, %v3460
        %3506 = vst.msk [vmem:[%s1427 + $0x18] sm:$0xff] %vm1149, %v3462
        %3507 = vst.msk [vmem:[%s1427 + $0x20] sm:$0xff] %vm1149, %v3464
        %3508 = vst.msk [vmem:[%s1427 + $0x28] sm:$0xff] %vm1149, %v3466
        %3509 = vst.msk [vmem:[%s1427 + $0x30] sm:$0xff] %vm1149, %v3468
        %3510 = vst.msk [vmem:[%s1427 + $0x38] sm:$0xff] %vm1149, %v3470
        %3511 = vst.msk [vmem:[%s1427 + $0x40] sm:$0xff] %vm1149, %v3472
        %3512 = vst.msk [vmem:[%s1427 + $0x48] sm:$0xff] %vm1149, %v3474
        %3513 = vst.msk [vmem:[%s1427 + $0x50] sm:$0xff] %vm1149, %v3476
        %3514 = vst.msk [vmem:[%s1427 + $0x58] sm:$0xff] %vm1149, %v3478
        %3515 = vst.msk [vmem:[%s1427 + $0x60] sm:$0xff] %vm1149, %v3480
        %3516 = vst.msk [vmem:[%s1427 + $0x68] sm:$0xff] %vm1149, %v3482
        %3517 = vst.msk [vmem:[%s1427 + $0x70] sm:$0xff] %vm1149, %v3484
        %3518 = vst.msk [vmem:[%s1427 + $0x78] sm:$0xff] %vm1149, %v3486
        %3520 = vrot.lane.b32.xlu0 %v2657, 20
        %v3521 = vpop.permute.xlu0 %3520
        %3522 = vrot.lane.b32.xlu0 %v2693, 20
        %v3523 = vpop.permute.xlu0 %3522
        %3524 = vrot.lane.b32.xlu0 %v2660, 20
        %v3525 = vpop.permute.xlu0 %3524
        %3526 = vrot.lane.b32.xlu0 %v2694, 20
        %v3527 = vpop.permute.xlu0 %3526
        %3528 = vrot.lane.b32.xlu0 %v2663, 20
        %v3529 = vpop.permute.xlu0 %3528
        %3530 = vrot.lane.b32.xlu0 %v2695, 20
        %v3531 = vpop.permute.xlu0 %3530
        %3532 = vrot.lane.b32.xlu0 %v2666, 20
        %v3533 = vpop.permute.xlu0 %3532
        %3534 = vrot.lane.b32.xlu0 %v2696, 20
        %v3535 = vpop.permute.xlu0 %3534
        %3536 = vrot.lane.b32.xlu0 %v2669, 20
        %v3537 = vpop.permute.xlu0 %3536
        %3538 = vrot.lane.b32.xlu0 %v2697, 20
        %v3539 = vpop.permute.xlu0 %3538
        %3540 = vrot.lane.b32.xlu0 %v2672, 20
        %v3541 = vpop.permute.xlu0 %3540
        %3542 = vrot.lane.b32.xlu0 %v2698, 20
        %v3543 = vpop.permute.xlu0 %3542
        %3544 = vrot.lane.b32.xlu0 %v2675, 20
        %v3545 = vpop.permute.xlu0 %3544
        %3546 = vrot.lane.b32.xlu0 %v2699, 20
        %v3547 = vpop.permute.xlu0 %3546
        %3548 = vrot.lane.b32.xlu0 %v2678, 20
        %v3549 = vpop.permute.xlu0 %3548
        %3550 = vrot.lane.b32.xlu0 %v2700, 20
        %v3551 = vpop.permute.xlu0 %3550
        %3568 = vst.msk [vmem:[%s1427] sm:$0xff] %vm1214, %v3521
        %3569 = vst.msk [vmem:[%s1427 + $0x8] sm:$0xff] %vm1214, %v3523
        %3570 = vst.msk [vmem:[%s1427 + $0x10] sm:$0xff] %vm1214, %v3525
        %3571 = vst.msk [vmem:[%s1427 + $0x18] sm:$0xff] %vm1214, %v3527
        %3572 = vst.msk [vmem:[%s1427 + $0x20] sm:$0xff] %vm1214, %v3529
        %3573 = vst.msk [vmem:[%s1427 + $0x28] sm:$0xff] %vm1214, %v3531
        %3574 = vst.msk [vmem:[%s1427 + $0x30] sm:$0xff] %vm1214, %v3533
        %3575 = vst.msk [vmem:[%s1427 + $0x38] sm:$0xff] %vm1214, %v3535
        %3576 = vst.msk [vmem:[%s1427 + $0x40] sm:$0xff] %vm1214, %v3537
        %3577 = vst.msk [vmem:[%s1427 + $0x48] sm:$0xff] %vm1214, %v3539
        %3578 = vst.msk [vmem:[%s1427 + $0x50] sm:$0xff] %vm1214, %v3541
        %3579 = vst.msk [vmem:[%s1427 + $0x58] sm:$0xff] %vm1214, %v3543
        %3580 = vst.msk [vmem:[%s1427 + $0x60] sm:$0xff] %vm1214, %v3545
        %3581 = vst.msk [vmem:[%s1427 + $0x68] sm:$0xff] %vm1214, %v3547
        %3582 = vst.msk [vmem:[%s1427 + $0x70] sm:$0xff] %vm1214, %v3549
        %3583 = vst.msk [vmem:[%s1427 + $0x78] sm:$0xff] %vm1214, %v3551
        %3584 = vrot.lane.b32.xlu0 %v2498, 24
        %v3585 = vpop.permute.xlu0 %3584
        %3586 = vrot.lane.b32.xlu0 %v2499, 24
        %v3587 = vpop.permute.xlu0 %3586
        %3588 = vrot.lane.b32.xlu0 %v2500, 24
        %v3589 = vpop.permute.xlu0 %3588
        %3590 = vrot.lane.b32.xlu0 %v2501, 24
        %v3591 = vpop.permute.xlu0 %3590
        %3592 = vrot.lane.b32.xlu0 %v2502, 24
        %v3593 = vpop.permute.xlu0 %3592
        %3594 = vrot.lane.b32.xlu0 %v2503, 24
        %v3595 = vpop.permute.xlu0 %3594
        %3596 = vrot.lane.b32.xlu0 %v2504, 24
        %v3597 = vpop.permute.xlu0 %3596
        %3598 = vrot.lane.b32.xlu0 %v2505, 24
        %v3599 = vpop.permute.xlu0 %3598
        %3600 = vrot.lane.b32.xlu0 %v2506, 24
        %v3601 = vpop.permute.xlu0 %3600
        %3602 = vrot.lane.b32.xlu0 %v2507, 24
        %v3603 = vpop.permute.xlu0 %3602
        %3604 = vrot.lane.b32.xlu0 %v2508, 24
        %v3605 = vpop.permute.xlu0 %3604
        %3606 = vrot.lane.b32.xlu0 %v2509, 24
        %v3607 = vpop.permute.xlu0 %3606
        %3608 = vrot.lane.b32.xlu0 %v2510, 24
        %v3609 = vpop.permute.xlu0 %3608
        %3610 = vrot.lane.b32.xlu0 %v2511, 24
        %v3611 = vpop.permute.xlu0 %3610
        %3612 = vrot.lane.b32.xlu0 %v2512, 24
        %v3613 = vpop.permute.xlu0 %3612
        %3614 = vrot.lane.b32.xlu0 %v2513, 24
        %v3615 = vpop.permute.xlu0 %3614
        %3632 = vst.msk [vmem:[%s1427] sm:$0xff] %vm1280, %v3585
        %3633 = vst.msk [vmem:[%s1427 + $0x8] sm:$0xff] %vm1280, %v3587
        %3634 = vst.msk [vmem:[%s1427 + $0x10] sm:$0xff] %vm1280, %v3589
        %3635 = vst.msk [vmem:[%s1427 + $0x18] sm:$0xff] %vm1280, %v3591
        %3636 = vst.msk [vmem:[%s1427 + $0x20] sm:$0xff] %vm1280, %v3593
        %3637 = vst.msk [vmem:[%s1427 + $0x28] sm:$0xff] %vm1280, %v3595
        %3638 = vst.msk [vmem:[%s1427 + $0x30] sm:$0xff] %vm1280, %v3597
        %3639 = vst.msk [vmem:[%s1427 + $0x38] sm:$0xff] %vm1280, %v3599
        %3640 = vst.msk [vmem:[%s1427 + $0x40] sm:$0xff] %vm1280, %v3601
        %3641 = vst.msk [vmem:[%s1427 + $0x48] sm:$0xff] %vm1280, %v3603
        %3642 = vst.msk [vmem:[%s1427 + $0x50] sm:$0xff] %vm1280, %v3605
        %3643 = vst.msk [vmem:[%s1427 + $0x58] sm:$0xff] %vm1280, %v3607
        %3644 = vst.msk [vmem:[%s1427 + $0x60] sm:$0xff] %vm1280, %v3609
        %3645 = vst.msk [vmem:[%s1427 + $0x68] sm:$0xff] %vm1280, %v3611
        %3646 = vst.msk [vmem:[%s1427 + $0x70] sm:$0xff] %vm1280, %v3613
        %3647 = vst.msk [vmem:[%s1427 + $0x78] sm:$0xff] %vm1280, %v3615
        %3648 = vrot.lane.b32.xlu0 %v2538, 28
        %v3649 = vpop.permute.xlu0 %3648
        %3650 = vrot.lane.b32.xlu0 %v2539, 28
        %v3651 = vpop.permute.xlu0 %3650
        %3652 = vrot.lane.b32.xlu0 %v2540, 28
        %v3653 = vpop.permute.xlu0 %3652
        %3654 = vrot.lane.b32.xlu0 %v2541, 28
        %v3655 = vpop.permute.xlu0 %3654
        %3656 = vrot.lane.b32.xlu0 %v2542, 28
        %v3657 = vpop.permute.xlu0 %3656
        %3658 = vrot.lane.b32.xlu0 %v2543, 28
        %v3659 = vpop.permute.xlu0 %3658
        %3660 = vrot.lane.b32.xlu0 %v2544, 28
        %v3661 = vpop.permute.xlu0 %3660
        %3662 = vrot.lane.b32.xlu0 %v2545, 28
        %v3663 = vpop.permute.xlu0 %3662
        %3664 = vrot.lane.b32.xlu0 %v2546, 28
        %v3665 = vpop.permute.xlu0 %3664
        %3666 = vrot.lane.b32.xlu0 %v2547, 28
        %v3667 = vpop.permute.xlu0 %3666
        %3668 = vrot.lane.b32.xlu0 %v2548, 28
        %v3669 = vpop.permute.xlu0 %3668
        %3670 = vrot.lane.b32.xlu0 %v2549, 28
        %v3671 = vpop.permute.xlu0 %3670
        %3672 = vrot.lane.b32.xlu0 %v2550, 28
        %v3673 = vpop.permute.xlu0 %3672
        %3674 = vrot.lane.b32.xlu0 %v2551, 28
        %v3675 = vpop.permute.xlu0 %3674
        %3676 = vrot.lane.b32.xlu0 %v2552, 28
        %v3677 = vpop.permute.xlu0 %3676
        %3678 = vrot.lane.b32.xlu0 %v2553, 28
        %v3679 = vpop.permute.xlu0 %3678
        %3696 = vst.msk [vmem:[%s1427] sm:$0xff] %vm1345, %v3649
        %3697 = vst.msk [vmem:[%s1427 + $0x8] sm:$0xff] %vm1345, %v3651
        %3698 = vst.msk [vmem:[%s1427 + $0x10] sm:$0xff] %vm1345, %v3653
        %3699 = vst.msk [vmem:[%s1427 + $0x18] sm:$0xff] %vm1345, %v3655
        %3700 = vst.msk [vmem:[%s1427 + $0x20] sm:$0xff] %vm1345, %v3657
        %3701 = vst.msk [vmem:[%s1427 + $0x28] sm:$0xff] %vm1345, %v3659
        %3702 = vst.msk [vmem:[%s1427 + $0x30] sm:$0xff] %vm1345, %v3661
        %3703 = vst.msk [vmem:[%s1427 + $0x38] sm:$0xff] %vm1345, %v3663
        %3704 = vst.msk [vmem:[%s1427 + $0x40] sm:$0xff] %vm1345, %v3665
        %3705 = vst.msk [vmem:[%s1427 + $0x48] sm:$0xff] %vm1345, %v3667
        %3706 = vst.msk [vmem:[%s1427 + $0x50] sm:$0xff] %vm1345, %v3669
        %3707 = vst.msk [vmem:[%s1427 + $0x58] sm:$0xff] %vm1345, %v3671
        %3708 = vst.msk [vmem:[%s1427 + $0x60] sm:$0xff] %vm1345, %v3673
        %3709 = vst.msk [vmem:[%s1427 + $0x68] sm:$0xff] %vm1345, %v3675
        %3710 = vst.msk [vmem:[%s1427 + $0x70] sm:$0xff] %vm1345, %v3677
        %3711 = vst.msk [vmem:[%s1427 + $0x78] sm:$0xff] %vm1345, %v3679
        %3713 = vrot.lane.b32.xlu0 %v2660, 32
        %v3714 = vpop.permute.xlu0 %3713
        %3715 = vrot.lane.b32.xlu0 %v2694, 32
        %v3716 = vpop.permute.xlu0 %3715
        %3717 = vrot.lane.b32.xlu0 %v2663, 32
        %v3718 = vpop.permute.xlu0 %3717
        %3719 = vrot.lane.b32.xlu0 %v2695, 32
        %v3720 = vpop.permute.xlu0 %3719
        %3721 = vrot.lane.b32.xlu0 %v2666, 32
        %v3722 = vpop.permute.xlu0 %3721
        %3723 = vrot.lane.b32.xlu0 %v2696, 32
        %v3724 = vpop.permute.xlu0 %3723
        %3725 = vrot.lane.b32.xlu0 %v2669, 32
        %v3726 = vpop.permute.xlu0 %3725
        %3727 = vrot.lane.b32.xlu0 %v2697, 32
        %v3728 = vpop.permute.xlu0 %3727
        %3729 = vrot.lane.b32.xlu0 %v2672, 32
        %v3730 = vpop.permute.xlu0 %3729
        %3731 = vrot.lane.b32.xlu0 %v2698, 32
        %v3732 = vpop.permute.xlu0 %3731
        %3733 = vrot.lane.b32.xlu0 %v2675, 32
        %v3734 = vpop.permute.xlu0 %3733
        %3735 = vrot.lane.b32.xlu0 %v2699, 32
        %v3736 = vpop.permute.xlu0 %3735
        %3737 = vrot.lane.b32.xlu0 %v2678, 32
        %v3738 = vpop.permute.xlu0 %3737
        %3739 = vrot.lane.b32.xlu0 %v2700, 32
        %v3740 = vpop.permute.xlu0 %3739
        %3741 = vrot.lane.b32.xlu0 %v2681, 32
        %v3742 = vpop.permute.xlu0 %3741
        %3743 = vrot.lane.b32.xlu0 %v2701, 32
        %v3744 = vpop.permute.xlu0 %3743
        %3761 = vst.msk [vmem:[%s1427] sm:$0xff] %vm1410, %v3714
        %3762 = vst.msk [vmem:[%s1427 + $0x8] sm:$0xff] %vm1410, %v3716
        %3763 = vst.msk [vmem:[%s1427 + $0x10] sm:$0xff] %vm1410, %v3718
        %3764 = vst.msk [vmem:[%s1427 + $0x18] sm:$0xff] %vm1410, %v3720
        %3765 = vst.msk [vmem:[%s1427 + $0x20] sm:$0xff] %vm1410, %v3722
        %3766 = vst.msk [vmem:[%s1427 + $0x28] sm:$0xff] %vm1410, %v3724
        %3767 = vst.msk [vmem:[%s1427 + $0x30] sm:$0xff] %vm1410, %v3726
        %3768 = vst.msk [vmem:[%s1427 + $0x38] sm:$0xff] %vm1410, %v3728
        %3769 = vst.msk [vmem:[%s1427 + $0x40] sm:$0xff] %vm1410, %v3730
        %3770 = vst.msk [vmem:[%s1427 + $0x48] sm:$0xff] %vm1410, %v3732
        %3771 = vst.msk [vmem:[%s1427 + $0x50] sm:$0xff] %vm1410, %v3734
        %3772 = vst.msk [vmem:[%s1427 + $0x58] sm:$0xff] %vm1410, %v3736
        %3773 = vst.msk [vmem:[%s1427 + $0x60] sm:$0xff] %vm1410, %v3738
        %3774 = vst.msk [vmem:[%s1427 + $0x68] sm:$0xff] %vm1410, %v3740
        %3775 = vst.msk [vmem:[%s1427 + $0x70] sm:$0xff] %vm1410, %v3742
        %3776 = vst.msk [vmem:[%s1427 + $0x78] sm:$0xff] %vm1410, %v3744
        %v3777 = vld [vmem:[#allocation2] sm:$0xff]
        %v3778 = vld [vmem:[#allocation2 + $0x8] sm:$0xff]
        %v3779 = vld [vmem:[#allocation2 + $0x10] sm:$0xff]
        %v3780 = vld [vmem:[#allocation2 + $0x18] sm:$0xff]
        %v3781 = vld [vmem:[#allocation2 + $0x20] sm:$0xff]
        %v3782 = vld [vmem:[#allocation2 + $0x28] sm:$0xff]
        %v3783 = vld [vmem:[#allocation2 + $0x30] sm:$0xff]
        %v3784 = vld [vmem:[#allocation2 + $0x38] sm:$0xff]
        %v3785 = vld [vmem:[#allocation2 + $0x40] sm:$0xff]
        %v3786 = vld [vmem:[#allocation2 + $0x48] sm:$0xff]
        %v3787 = vld [vmem:[#allocation2 + $0x50] sm:$0xff]
        %v3788 = vld [vmem:[#allocation2 + $0x58] sm:$0xff]
        %v3789 = vld [vmem:[#allocation2 + $0x60] sm:$0xff]
        %v3790 = vld [vmem:[#allocation2 + $0x68] sm:$0xff]
        %v3791 = vld [vmem:[#allocation2 + $0x70] sm:$0xff]
        %v3792 = vld [vmem:[#allocation2 + $0x78] sm:$0xff]
        %v3793 = vld [vmem:[#allocation2 + $0x80] sm:$0xff]
        %v3794 = vld [vmem:[#allocation2 + $0x88] sm:$0xff]
        %v3795 = vld [vmem:[#allocation2 + $0x90] sm:$0xff]
        %v3796 = vld [vmem:[#allocation2 + $0x98] sm:$0xff]
        %v3797 = vld [vmem:[#allocation2 + $0xa0] sm:$0xff]
        %v3798 = vld [vmem:[#allocation2 + $0xa8] sm:$0xff]
        %v3799 = vld [vmem:[#allocation2 + $0xb0] sm:$0xff]
        %v3800 = vld [vmem:[#allocation2 + $0xb8] sm:$0xff]
        %v3801 = vld [vmem:[#allocation2 + $0xc0] sm:$0xff]
        %v3802 = vld [vmem:[#allocation2 + $0xc8] sm:$0xff]
        %v3803 = vld [vmem:[#allocation2 + $0xd0] sm:$0xff]
        %v3804 = vld [vmem:[#allocation2 + $0xd8] sm:$0xff]
        %v3805 = vld [vmem:[#allocation2 + $0xe0] sm:$0xff]
        %v3806 = vld [vmem:[#allocation2 + $0xe8] sm:$0xff]
        %v3807 = vld [vmem:[#allocation2 + $0xf0] sm:$0xff]
        %v3808 = vld [vmem:[#allocation2 + $0xf8] sm:$0xff]
        %s3809 = scalar_lea.vmem %s3, 40
        %v3810 = vld [vmem:[%s3809] sm:$0xff]
        %v3811 = vld [vmem:[%s3809 + $0x8] sm:$0xff]
        %v3812 = vld [vmem:[%s3809 + $0x10] sm:$0xff]
        %v3813 = vld [vmem:[%s3809 + $0x18] sm:$0xff]
        %v3814 = vld [vmem:[%s3809 + $0x20] sm:$0xf]
        %v3816 = vsel %vm2007, %v3777, 0
        %v3819 = vsel %vm2007, %v3778, 0
        %v3822 = vsel %vm2007, %v3779, 0
        %v3825 = vsel %vm2007, %v3780, 0
        %v3828 = vsel %vm2007, %v3781, 0
        %v3831 = vsel %vm2007, %v3782, 0
        %v3834 = vsel %vm2007, %v3783, 0
        %v3837 = vsel %vm2007, %v3784, 0
        %v3840 = vsel %vm2007, %v3785, 0
        %v3843 = vsel %vm2007, %v3786, 0
        %v3846 = vsel %vm2007, %v3787, 0
        %v3849 = vsel %vm2007, %v3788, 0
        %v3852 = vsel %vm2007, %v3789, 0
        %v3855 = vsel %vm2007, %v3790, 0
        %v3858 = vsel %vm2007, %v3791, 0
        %v3861 = vsel %vm2007, %v3792, 0
        %v3864 = vsel %vm2007, %v3793, 0
        %v3867 = vsel %vm2007, %v3794, 0
        %v3870 = vsel %vm2007, %v3795, 0
        %v3873 = vsel %vm2007, %v3796, 0
        %v3876 = vsel %vm2007, %v3797, 0
        %v3879 = vsel %vm2007, %v3798, 0
        %v3882 = vsel %vm2007, %v3799, 0
        %v3885 = vsel %vm2007, %v3800, 0
        %v3888 = vsel %vm2007, %v3801, 0
        %v3891 = vsel %vm2007, %v3802, 0
        %v3894 = vsel %vm2007, %v3803, 0
        %v3897 = vsel %vm2007, %v3804, 0
        %v3900 = vsel %vm2007, %v3805, 0
        %v3903 = vsel %vm2007, %v3806, 0
        %v3906 = vsel %vm2007, %v3807, 0
        %v3909 = vsel %vm2007, %v3808, 0
        %v3912 = vsel %vm2104, %v3814, 0
        %3914 = vmatpush.msra.mxu0 0.0
        %3915 = vmatpush.msra.mxu0 0.0
        %3916 = vmatpush.msra.mxu0 0.0
        %3917 = vmatpush.msra.mxu0 0.0
        %3918 = vmatpush.msra.mxu0 0.0
        %3919 = vmatpush.msra.mxu0 0.0
        %3920 = vmatpush.msra.mxu0 0.0
        %3921 = vmatpush.msra.mxu0 0.0
        %3922 = vmatpush.msra.mxu0 0.0
        %3923 = vmatpush.msra.mxu0 0.0
        %3924 = vmatpush.msra.mxu0 0.0
        %3925 = vmatpush.msra.mxu0 %v3912
        %3926 = vmatpush.msra.mxu0 %v3813
        %3927 = vmatpush.msra.mxu0 %v3812
        %3928 = vmatpush.msra.mxu0 %v3811
        %3929 = vmatpush.msra.mxu0 %v3810
        %3930 = vmatmul.f32.gmra.mxu0 %v3816
        %v3931 = vpop.f32.mrf.mxu0
        %v3932 = vadd.f32 0.0, %v3931
        %3933 = vmatmul.f32.gmra.mxu0 %v3819
        %v3934 = vpop.f32.mrf.mxu0
        %v3935 = vadd.f32 0.0, %v3934
        %3936 = vmatmul.f32.gmra.mxu0 %v3822
        %v3937 = vpop.f32.mrf.mxu0
        %v3938 = vadd.f32 0.0, %v3937
        %3939 = vmatmul.f32.gmra.mxu0 %v3825
        %v3940 = vpop.f32.mrf.mxu0
        %v3941 = vadd.f32 0.0, %v3940
        %3942 = vmatmul.f32.gmra.mxu0 %v3828
        %v3943 = vpop.f32.mrf.mxu0
        %v3944 = vadd.f32 0.0, %v3943
        %3945 = vmatmul.f32.gmra.mxu0 %v3831
        %v3946 = vpop.f32.mrf.mxu0
        %v3947 = vadd.f32 0.0, %v3946
        %3948 = vmatmul.f32.gmra.mxu0 %v3834
        %v3949 = vpop.f32.mrf.mxu0
        %v3950 = vadd.f32 0.0, %v3949
        %3951 = vmatmul.f32.gmra.mxu0 %v3837
        %v3952 = vpop.f32.mrf.mxu0
        %v3953 = vadd.f32 0.0, %v3952
        %3954 = vmatmul.f32.gmra.mxu0 %v3840
        %v3955 = vpop.f32.mrf.mxu0
        %v3956 = vadd.f32 0.0, %v3955
        %3957 = vmatmul.f32.gmra.mxu0 %v3843
        %v3958 = vpop.f32.mrf.mxu0
        %v3959 = vadd.f32 0.0, %v3958
        %3960 = vmatmul.f32.gmra.mxu0 %v3846
        %v3961 = vpop.f32.mrf.mxu0
        %v3962 = vadd.f32 0.0, %v3961
        %3963 = vmatmul.f32.gmra.mxu0 %v3849
        %v3964 = vpop.f32.mrf.mxu0
        %v3965 = vadd.f32 0.0, %v3964
        %3966 = vmatmul.f32.gmra.mxu0 %v3852
        %v3967 = vpop.f32.mrf.mxu0
        %v3968 = vadd.f32 0.0, %v3967
        %3969 = vmatmul.f32.gmra.mxu0 %v3855
        %v3970 = vpop.f32.mrf.mxu0
        %v3971 = vadd.f32 0.0, %v3970
        %3972 = vmatmul.f32.gmra.mxu0 %v3858
        %v3973 = vpop.f32.mrf.mxu0
        %v3974 = vadd.f32 0.0, %v3973
        %3975 = vmatmul.f32.gmra.mxu0 %v3861
        %v3976 = vpop.f32.mrf.mxu0
        %v3977 = vadd.f32 0.0, %v3976
        %3978 = vmatmul.f32.gmra.mxu0 %v3864
        %v3979 = vpop.f32.mrf.mxu0
        %v3980 = vadd.f32 0.0, %v3979
        %3981 = vmatmul.f32.gmra.mxu0 %v3867
        %v3982 = vpop.f32.mrf.mxu0
        %v3983 = vadd.f32 0.0, %v3982
        %3984 = vmatmul.f32.gmra.mxu0 %v3870
        %v3985 = vpop.f32.mrf.mxu0
        %v3986 = vadd.f32 0.0, %v3985
        %3987 = vmatmul.f32.gmra.mxu0 %v3873
        %v3988 = vpop.f32.mrf.mxu0
        %v3989 = vadd.f32 0.0, %v3988
        %3990 = vmatmul.f32.gmra.mxu0 %v3876
        %v3991 = vpop.f32.mrf.mxu0
        %v3992 = vadd.f32 0.0, %v3991
        %3993 = vmatmul.f32.gmra.mxu0 %v3879
        %v3994 = vpop.f32.mrf.mxu0
        %v3995 = vadd.f32 0.0, %v3994
        %3996 = vmatmul.f32.gmra.mxu0 %v3882
        %v3997 = vpop.f32.mrf.mxu0
        %v3998 = vadd.f32 0.0, %v3997
        %3999 = vmatmul.f32.gmra.mxu0 %v3885
        %v4000 = vpop.f32.mrf.mxu0
        %v4001 = vadd.f32 0.0, %v4000
        %4002 = vmatmul.f32.gmra.mxu0 %v3888
        %v4003 = vpop.f32.mrf.mxu0
        %v4004 = vadd.f32 0.0, %v4003
        %4005 = vmatmul.f32.gmra.mxu0 %v3891
        %v4006 = vpop.f32.mrf.mxu0
        %v4007 = vadd.f32 0.0, %v4006
        %4008 = vmatmul.f32.gmra.mxu0 %v3894
        %v4009 = vpop.f32.mrf.mxu0
        %v4010 = vadd.f32 0.0, %v4009
        %4011 = vmatmul.f32.gmra.mxu0 %v3897
        %v4012 = vpop.f32.mrf.mxu0
        %v4013 = vadd.f32 0.0, %v4012
        %4014 = vmatmul.f32.gmra.mxu0 %v3900
        %v4015 = vpop.f32.mrf.mxu0
        %v4016 = vadd.f32 0.0, %v4015
        %4017 = vmatmul.f32.gmra.mxu0 %v3903
        %v4018 = vpop.f32.mrf.mxu0
        %v4019 = vadd.f32 0.0, %v4018
        %4020 = vmatmul.f32.gmra.mxu0 %v3906
        %v4021 = vpop.f32.mrf.mxu0
        %v4022 = vadd.f32 0.0, %v4021
        %4023 = vmatmul.f32.gmra.mxu0 %v3909
        %v4024 = vpop.f32.mrf.mxu0
        %v4025 = vadd.f32 0.0, %v4024
        %4026 = vdwg.mxu0
        %v4027 = vld [vmem:[#allocation3] sm:$0xff]
        %v4028 = vld [vmem:[#allocation3 + $0x8] sm:$0xff]
        %v4029 = vld [vmem:[#allocation3 + $0x10] sm:$0xff]
        %v4030 = vld [vmem:[#allocation3 + $0x18] sm:$0xff]
        %v4031 = vld [vmem:[#allocation3 + $0x20] sm:$0xff]
        %v4032 = vld [vmem:[#allocation3 + $0x28] sm:$0xff]
        %v4033 = vld [vmem:[#allocation3 + $0x30] sm:$0xff]
        %v4034 = vld [vmem:[#allocation3 + $0x38] sm:$0xff]
        %v4035 = vld [vmem:[#allocation3 + $0x40] sm:$0xff]
        %v4036 = vld [vmem:[#allocation3 + $0x48] sm:$0xff]
        %v4037 = vld [vmem:[#allocation3 + $0x50] sm:$0xff]
        %v4038 = vld [vmem:[#allocation3 + $0x58] sm:$0xff]
        %v4039 = vld [vmem:[#allocation3 + $0x60] sm:$0xff]
        %v4040 = vld [vmem:[#allocation3 + $0x68] sm:$0xff]
        %v4041 = vld [vmem:[#allocation3 + $0x70] sm:$0xff]
        %v4042 = vld [vmem:[#allocation3 + $0x78] sm:$0xff]
        %v4043 = vld [vmem:[#allocation3 + $0x80] sm:$0xff]
        %v4044 = vld [vmem:[#allocation3 + $0x88] sm:$0xff]
        %v4045 = vld [vmem:[#allocation3 + $0x90] sm:$0xff]
        %v4046 = vld [vmem:[#allocation3 + $0x98] sm:$0xff]
        %v4047 = vld [vmem:[#allocation3 + $0xa0] sm:$0xff]
        %v4048 = vld [vmem:[#allocation3 + $0xa8] sm:$0xff]
        %v4049 = vld [vmem:[#allocation3 + $0xb0] sm:$0xff]
        %v4050 = vld [vmem:[#allocation3 + $0xb8] sm:$0xff]
        %v4051 = vld [vmem:[#allocation3 + $0xc0] sm:$0xff]
        %v4052 = vld [vmem:[#allocation3 + $0xc8] sm:$0xff]
        %v4053 = vld [vmem:[#allocation3 + $0xd0] sm:$0xff]
        %v4054 = vld [vmem:[#allocation3 + $0xd8] sm:$0xff]
        %v4055 = vld [vmem:[#allocation3 + $0xe0] sm:$0xff]
        %v4056 = vld [vmem:[#allocation3 + $0xe8] sm:$0xff]
        %v4057 = vld [vmem:[#allocation3 + $0xf0] sm:$0xff]
        %v4058 = vld [vmem:[#allocation3 + $0xf8] sm:$0xff]
        %v4059 = vadd.f32 %v4027, %v3932
        %v4060 = vadd.f32 %v4028, %v3935
        %v4061 = vadd.f32 %v4029, %v3938
        %v4062 = vadd.f32 %v4030, %v3941
        %v4063 = vadd.f32 %v4031, %v3944
        %v4064 = vadd.f32 %v4032, %v3947
        %v4065 = vadd.f32 %v4033, %v3950
        %v4066 = vadd.f32 %v4034, %v3953
        %v4067 = vadd.f32 %v4035, %v3956
        %v4068 = vadd.f32 %v4036, %v3959
        %v4069 = vadd.f32 %v4037, %v3962
        %v4070 = vadd.f32 %v4038, %v3965
        %v4071 = vadd.f32 %v4039, %v3968
        %v4072 = vadd.f32 %v4040, %v3971
        %v4073 = vadd.f32 %v4041, %v3974
        %v4074 = vadd.f32 %v4042, %v3977
        %v4075 = vadd.f32 %v4043, %v3980
        %v4076 = vadd.f32 %v4044, %v3983
        %v4077 = vadd.f32 %v4045, %v3986
        %v4078 = vadd.f32 %v4046, %v3989
        %v4079 = vadd.f32 %v4047, %v3992
        %v4080 = vadd.f32 %v4048, %v3995
        %v4081 = vadd.f32 %v4049, %v3998
        %v4082 = vadd.f32 %v4050, %v4001
        %v4083 = vadd.f32 %v4051, %v4004
        %v4084 = vadd.f32 %v4052, %v4007
        %v4085 = vadd.f32 %v4053, %v4010
        %v4086 = vadd.f32 %v4054, %v4013
        %v4087 = vadd.f32 %v4055, %v4016
        %v4088 = vadd.f32 %v4056, %v4019
        %v4089 = vadd.f32 %v4057, %v4022
        %v4090 = vadd.f32 %v4058, %v4025
        %4091 = vst.msk [vmem:[#allocation3] sm:$0xff] %vm2221, %v4059
        %4092 = vst.msk [vmem:[#allocation3 + $0x8] sm:$0xff] %vm2221, %v4060
        %4093 = vst.msk [vmem:[#allocation3 + $0x10] sm:$0xff] %vm2221, %v4061
        %4094 = vst.msk [vmem:[#allocation3 + $0x18] sm:$0xff] %vm2221, %v4062
        %4095 = vst.msk [vmem:[#allocation3 + $0x20] sm:$0xff] %vm2221, %v4063
        %4096 = vst.msk [vmem:[#allocation3 + $0x28] sm:$0xff] %vm2221, %v4064
        %4097 = vst.msk [vmem:[#allocation3 + $0x30] sm:$0xff] %vm2221, %v4065
        %4098 = vst.msk [vmem:[#allocation3 + $0x38] sm:$0xff] %vm2221, %v4066
        %4099 = vst.msk [vmem:[#allocation3 + $0x40] sm:$0xff] %vm2221, %v4067
        %4100 = vst.msk [vmem:[#allocation3 + $0x48] sm:$0xff] %vm2221, %v4068
        %4101 = vst.msk [vmem:[#allocation3 + $0x50] sm:$0xff] %vm2221, %v4069
        %4102 = vst.msk [vmem:[#allocation3 + $0x58] sm:$0xff] %vm2221, %v4070
        %4103 = vst.msk [vmem:[#allocation3 + $0x60] sm:$0xff] %vm2221, %v4071
        %4104 = vst.msk [vmem:[#allocation3 + $0x68] sm:$0xff] %vm2221, %v4072
        %4105 = vst.msk [vmem:[#allocation3 + $0x70] sm:$0xff] %vm2221, %v4073
        %4106 = vst.msk [vmem:[#allocation3 + $0x78] sm:$0xff] %vm2221, %v4074
        %4107 = vst.msk [vmem:[#allocation3 + $0x80] sm:$0xff] %vm2221, %v4075
        %4108 = vst.msk [vmem:[#allocation3 + $0x88] sm:$0xff] %vm2221, %v4076
        %4109 = vst.msk [vmem:[#allocation3 + $0x90] sm:$0xff] %vm2221, %v4077
        %4110 = vst.msk [vmem:[#allocation3 + $0x98] sm:$0xff] %vm2221, %v4078
        %4111 = vst.msk [vmem:[#allocation3 + $0xa0] sm:$0xff] %vm2221, %v4079
        %4112 = vst.msk [vmem:[#allocation3 + $0xa8] sm:$0xff] %vm2221, %v4080
        %4113 = vst.msk [vmem:[#allocation3 + $0xb0] sm:$0xff] %vm2221, %v4081
        %4114 = vst.msk [vmem:[#allocation3 + $0xb8] sm:$0xff] %vm2221, %v4082
        %4115 = vst.msk [vmem:[#allocation3 + $0xc0] sm:$0xff] %vm2221, %v4083
        %4116 = vst.msk [vmem:[#allocation3 + $0xc8] sm:$0xff] %vm2221, %v4084
        %4117 = vst.msk [vmem:[#allocation3 + $0xd0] sm:$0xff] %vm2221, %v4085
        %4118 = vst.msk [vmem:[#allocation3 + $0xd8] sm:$0xff] %vm2221, %v4086
        %4119 = vst.msk [vmem:[#allocation3 + $0xe0] sm:$0xff] %vm2221, %v4087
        %4120 = vst.msk [vmem:[#allocation3 + $0xe8] sm:$0xff] %vm2221, %v4088
        %4121 = vst.msk [vmem:[#allocation3 + $0xf0] sm:$0xff] %vm2221, %v4089
        %4122 = vst.msk [vmem:[#allocation3 + $0xf8] sm:$0xff] %vm2221, %v4090
        %v4123 = vld [vmem:[%s419] sm:$0xff]
        %v4124 = vld [vmem:[%s419 + $0x8] sm:$0xff]
        %v4125 = vld [vmem:[%s419 + $0x10] sm:$0xff]
        %v4126 = vld [vmem:[%s419 + $0x18] sm:$0xff]
        %v4127 = vld [vmem:[%s419 + $0x20] sm:$0xff]
        %v4128 = vld [vmem:[%s419 + $0x28] sm:$0xff]
        %v4129 = vld [vmem:[%s419 + $0x30] sm:$0xff]
        %v4130 = vld [vmem:[%s419 + $0x38] sm:$0xff]
        %v4131 = vld [vmem:[%s419 + $0x40] sm:$0xff]
        %v4132 = vld [vmem:[%s419 + $0x48] sm:$0xff]
        %v4133 = vld [vmem:[%s419 + $0x50] sm:$0xff]
        %v4134 = vld [vmem:[%s419 + $0x58] sm:$0xff]
        %v4135 = vmul.f32 %v4123, 0.25
        %v4136 = vmul.f32 %v4124, 0.25
        %v4137 = vmul.f32 %v4125, 0.25
        %v4138 = vmul.f32 %v4126, 0.25
        %v4139 = vmul.f32 %v4127, 0.25
        %v4140 = vmul.f32 %v4128, 0.25
        %v4141 = vmul.f32 %v4129, 0.25
        %v4142 = vmul.f32 %v4130, 0.25
        %v4143 = vmul.f32 %v4125, 0.75
        %v4144 = vmul.f32 %v4126, 0.75
        %v4145 = vmul.f32 %v4127, 0.75
        %v4146 = vmul.f32 %v4128, 0.75
        %v4147 = vmul.f32 %v4129, 0.75
        %v4148 = vmul.f32 %v4130, 0.75
        %v4149 = vmul.f32 %v4131, 0.75
        %v4150 = vmul.f32 %v4132, 0.75
        %v4151 = vadd.f32 %v4135, %v4143
        %v4152 = vadd.f32 %v4136, %v4144
        %v4153 = vadd.f32 %v4137, %v4145
        %v4154 = vadd.f32 %v4138, %v4146
        %v4155 = vadd.f32 %v4139, %v4147
        %v4156 = vadd.f32 %v4140, %v4148
        %v4157 = vadd.f32 %v4141, %v4149
        %v4158 = vadd.f32 %v4142, %v4150
        %v4159 = vmul.f32 %v4131, 0.25
        %v4160 = vmul.f32 %v4132, 0.25
        %v4161 = vmul.f32 %v4133, 0.25
        %v4162 = vmul.f32 %v4134, 0.25
        %v4163 = vadd.f32 %v4143, %v4139
        %v4164 = vadd.f32 %v4144, %v4140
        %v4165 = vadd.f32 %v4145, %v4141
        %v4166 = vadd.f32 %v4146, %v4142
        %v4167 = vadd.f32 %v4147, %v4159
        %v4168 = vadd.f32 %v4148, %v4160
        %v4169 = vadd.f32 %v4149, %v4161
        %v4170 = vadd.f32 %v4150, %v4162
        %v4171 = vmul.f32 %v4123, 0.75
        %v4172 = vmul.f32 %v4124, 0.75
        %v4173 = vadd.f32 %v4171, %v4137
        %v4174 = vadd.f32 %v4172, %v4138
        %v4175 = vmul.f32 %v4173, %v479
        %v4176 = vmul.f32 %v4174, %v479
        %v4177 = vmul.f32 %v4133, 0.75
        %v4178 = vmul.f32 %v4134, 0.75
        %v4179 = vadd.f32 %v4159, %v4177
        %v4180 = vadd.f32 %v4160, %v4178
        %v4181 = vmul.f32 %v4179, %v488
        %v4182 = vmul.f32 %v4180, %v488
        %v4203 = vrot.slane %v4175, 7
        %v4204 = vrot.slane %v4176, 7
        %v4205 = vsel %vm511, %v4203, %v4204
        %v4206 = vrot.slane %v4151, 7
        %v4207 = vrot.slane %v4152, 7
        %v4208 = vsel %vm511, %v4206, %v4207
        %v4209 = vrot.slane %v4163, 7
        %v4210 = vrot.slane %v4164, 7
        %v4211 = vsel %vm511, %v4209, %v4210
        %v4212 = vrot.slane %v4153, 7
        %v4213 = vrot.slane %v4154, 7
        %v4214 = vsel %vm511, %v4212, %v4213
        %v4215 = vrot.slane %v4165, 7
        %v4216 = vrot.slane %v4166, 7
        %v4217 = vsel %vm511, %v4215, %v4216
        %v4218 = vrot.slane %v4155, 7
        %v4219 = vrot.slane %v4156, 7
        %v4220 = vsel %vm511, %v4218, %v4219
        %v4221 = vrot.slane %v4167, 7
        %v4222 = vrot.slane %v4168, 7
        %v4223 = vsel %vm511, %v4221, %v4222
        %v4224 = vrot.slane %v4157, 7
        %v4225 = vrot.slane %v4158, 7
        %v4226 = vsel %vm511, %v4224, %v4225
        %v4227 = vrot.slane %v4169, 7
        %v4228 = vrot.slane %v4170, 7
        %v4229 = vsel %vm511, %v4227, %v4228
        %v4230 = vrot.slane %v4181, 7
        %v4231 = vrot.slane %v4182, 7
        %v4232 = vsel %vm511, %v4230, %v4231
        %v4253 = vsel %vm511, %v4175, %v4203
        %v4254 = vsel %vm511, %v4151, %v4206
        %v4255 = vsel %vm511, %v4163, %v4209
        %v4256 = vsel %vm511, %v4153, %v4212
        %v4257 = vsel %vm511, %v4165, %v4215
        %v4258 = vsel %vm511, %v4155, %v4218
        %v4259 = vsel %vm511, %v4167, %v4221
        %v4260 = vsel %vm511, %v4157, %v4224
        %v4261 = vsel %vm511, %v4169, %v4227
        %v4262 = vsel %vm511, %v4181, %v4230
        %v4263 = vrot.slane %v4175, 1
        %v4264 = vrot.slane %v4176, 1
        %v4265 = vsel %vm572, %v4263, %v4264
        %v4266 = vrot.slane %v4151, 1
        %v4267 = vrot.slane %v4152, 1
        %v4268 = vsel %vm572, %v4266, %v4267
        %v4269 = vrot.slane %v4163, 1
        %v4270 = vrot.slane %v4164, 1
        %v4271 = vsel %vm572, %v4269, %v4270
        %v4272 = vrot.slane %v4153, 1
        %v4273 = vrot.slane %v4154, 1
        %v4274 = vsel %vm572, %v4272, %v4273
        %v4275 = vrot.slane %v4165, 1
        %v4276 = vrot.slane %v4166, 1
        %v4277 = vsel %vm572, %v4275, %v4276
        %v4278 = vrot.slane %v4155, 1
        %v4279 = vrot.slane %v4156, 1
        %v4280 = vsel %vm572, %v4278, %v4279
        %v4281 = vrot.slane %v4167, 1
        %v4282 = vrot.slane %v4168, 1
        %v4283 = vsel %vm572, %v4281, %v4282
        %v4284 = vrot.slane %v4157, 1
        %v4285 = vrot.slane %v4158, 1
        %v4286 = vsel %vm572, %v4284, %v4285
        %v4287 = vrot.slane %v4169, 1
        %v4288 = vrot.slane %v4170, 1
        %v4289 = vsel %vm572, %v4287, %v4288
        %v4290 = vrot.slane %v4181, 1
        %v4291 = vrot.slane %v4182, 1
        %v4292 = vsel %vm572, %v4290, %v4291
        %v4313 = vsel %vm572, %v4264, %v4176
        %v4314 = vsel %vm572, %v4267, %v4152
        %v4315 = vsel %vm572, %v4270, %v4164
        %v4316 = vsel %vm572, %v4273, %v4154
        %v4317 = vsel %vm572, %v4276, %v4166
        %v4318 = vsel %vm572, %v4279, %v4156
        %v4319 = vsel %vm572, %v4282, %v4168
        %v4320 = vsel %vm572, %v4285, %v4158
        %v4321 = vsel %vm572, %v4288, %v4170
        %v4322 = vsel %vm572, %v4291, %v4182
        %v4323 = vmul.f32 %v4253, 0.25
        %v4324 = vmul.f32 %v4205, 0.25
        %v4325 = vmul.f32 %v4254, 0.25
        %v4326 = vmul.f32 %v4208, 0.25
        %v4327 = vmul.f32 %v4255, 0.25
        %v4328 = vmul.f32 %v4211, 0.25
        %v4329 = vmul.f32 %v4256, 0.25
        %v4330 = vmul.f32 %v4214, 0.25
        %v4331 = vmul.f32 %v4257, 0.25
        %v4332 = vmul.f32 %v4217, 0.25
        %v4333 = vmul.f32 %v4258, 0.25
        %v4334 = vmul.f32 %v4220, 0.25
        %v4335 = vmul.f32 %v4259, 0.25
        %v4336 = vmul.f32 %v4223, 0.25
        %v4337 = vmul.f32 %v4260, 0.25
        %v4338 = vmul.f32 %v4226, 0.25
        %v4339 = vmul.f32 %v4261, 0.25
        %v4340 = vmul.f32 %v4229, 0.25
        %v4341 = vmul.f32 %v4262, 0.25
        %v4342 = vmul.f32 %v4232, 0.25
        %v4343 = vmul.f32 %v4175, 0.75
        %v4344 = vmul.f32 %v4176, 0.75
        %v4345 = vmul.f32 %v4151, 0.75
        %v4346 = vmul.f32 %v4152, 0.75
        %v4347 = vmul.f32 %v4163, 0.75
        %v4348 = vmul.f32 %v4164, 0.75
        %v4349 = vmul.f32 %v4153, 0.75
        %v4350 = vmul.f32 %v4154, 0.75
        %v4351 = vmul.f32 %v4165, 0.75
        %v4352 = vmul.f32 %v4166, 0.75
        %v4353 = vmul.f32 %v4155, 0.75
        %v4354 = vmul.f32 %v4156, 0.75
        %v4355 = vmul.f32 %v4167, 0.75
        %v4356 = vmul.f32 %v4168, 0.75
        %v4357 = vmul.f32 %v4157, 0.75
        %v4358 = vmul.f32 %v4158, 0.75
        %v4359 = vmul.f32 %v4169, 0.75
        %v4360 = vmul.f32 %v4170, 0.75
        %v4361 = vmul.f32 %v4181, 0.75
        %v4362 = vmul.f32 %v4182, 0.75
        %v4363 = vadd.f32 %v4323, %v4343
        %v4364 = vadd.f32 %v4324, %v4344
        %v4365 = vadd.f32 %v4325, %v4345
        %v4366 = vadd.f32 %v4326, %v4346
        %v4367 = vadd.f32 %v4327, %v4347
        %v4368 = vadd.f32 %v4328, %v4348
        %v4369 = vadd.f32 %v4329, %v4349
        %v4370 = vadd.f32 %v4330, %v4350
        %v4371 = vadd.f32 %v4331, %v4351
        %v4372 = vadd.f32 %v4332, %v4352
        %v4373 = vadd.f32 %v4333, %v4353
        %v4374 = vadd.f32 %v4334, %v4354
        %v4375 = vadd.f32 %v4335, %v4355
        %v4376 = vadd.f32 %v4336, %v4356
        %v4377 = vadd.f32 %v4337, %v4357
        %v4378 = vadd.f32 %v4338, %v4358
        %v4379 = vadd.f32 %v4339, %v4359
        %v4380 = vadd.f32 %v4340, %v4360
        %v4381 = vadd.f32 %v4341, %v4361
        %v4382 = vadd.f32 %v4342, %v4362
        %v4383 = vmul.f32 %v4265, 0.25
        %v4384 = vmul.f32 %v4313, 0.25
        %v4385 = vmul.f32 %v4268, 0.25
        %v4386 = vmul.f32 %v4314, 0.25
        %v4387 = vmul.f32 %v4271, 0.25
        %v4388 = vmul.f32 %v4315, 0.25
        %v4389 = vmul.f32 %v4274, 0.25
        %v4390 = vmul.f32 %v4316, 0.25
        %v4391 = vmul.f32 %v4277, 0.25
        %v4392 = vmul.f32 %v4317, 0.25
        %v4393 = vmul.f32 %v4280, 0.25
        %v4394 = vmul.f32 %v4318, 0.25
        %v4395 = vmul.f32 %v4283, 0.25
        %v4396 = vmul.f32 %v4319, 0.25
        %v4397 = vmul.f32 %v4286, 0.25
        %v4398 = vmul.f32 %v4320, 0.25
        %v4399 = vmul.f32 %v4289, 0.25
        %v4400 = vmul.f32 %v4321, 0.25
        %v4401 = vmul.f32 %v4292, 0.25
        %v4402 = vmul.f32 %v4322, 0.25
        %v4403 = vadd.f32 %v4343, %v4383
        %v4404 = vadd.f32 %v4344, %v4384
        %v4405 = vadd.f32 %v4345, %v4385
        %v4406 = vadd.f32 %v4346, %v4386
        %v4407 = vadd.f32 %v4347, %v4387
        %v4408 = vadd.f32 %v4348, %v4388
        %v4409 = vadd.f32 %v4349, %v4389
        %v4410 = vadd.f32 %v4350, %v4390
        %v4411 = vadd.f32 %v4351, %v4391
        %v4412 = vadd.f32 %v4352, %v4392
        %v4413 = vadd.f32 %v4353, %v4393
        %v4414 = vadd.f32 %v4354, %v4394
        %v4415 = vadd.f32 %v4355, %v4395
        %v4416 = vadd.f32 %v4356, %v4396
        %v4417 = vadd.f32 %v4357, %v4397
        %v4418 = vadd.f32 %v4358, %v4398
        %v4419 = vadd.f32 %v4359, %v4399
        %v4420 = vadd.f32 %v4360, %v4400
        %v4421 = vadd.f32 %v4361, %v4401
        %v4422 = vadd.f32 %v4362, %v4402
        %v4443 = vrot.slane %v4403, 7
        %v4444 = vrot.slane %v4404, 7
        %v4445 = vsel %vm511, %v4443, %v4444
        %v4446 = vrot.slane %v4405, 7
        %v4447 = vrot.slane %v4406, 7
        %v4448 = vsel %vm511, %v4446, %v4447
        %v4449 = vrot.slane %v4407, 7
        %v4450 = vrot.slane %v4408, 7
        %v4451 = vsel %vm511, %v4449, %v4450
        %v4452 = vrot.slane %v4409, 7
        %v4453 = vrot.slane %v4410, 7
        %v4454 = vsel %vm511, %v4452, %v4453
        %v4455 = vrot.slane %v4411, 7
        %v4456 = vrot.slane %v4412, 7
        %v4457 = vsel %vm511, %v4455, %v4456
        %v4458 = vrot.slane %v4413, 7
        %v4459 = vrot.slane %v4414, 7
        %v4460 = vsel %vm511, %v4458, %v4459
        %v4461 = vrot.slane %v4415, 7
        %v4462 = vrot.slane %v4416, 7
        %v4463 = vsel %vm511, %v4461, %v4462
        %v4464 = vrot.slane %v4417, 7
        %v4465 = vrot.slane %v4418, 7
        %v4466 = vsel %vm511, %v4464, %v4465
        %v4467 = vrot.slane %v4419, 7
        %v4468 = vrot.slane %v4420, 7
        %v4469 = vsel %vm511, %v4467, %v4468
        %v4470 = vrot.slane %v4421, 7
        %v4471 = vrot.slane %v4422, 7
        %v4472 = vsel %vm511, %v4470, %v4471
        %v4491 = vsel %vm511, 0.0, %v4443
        %v4492 = vsel %vm511, 0.0, %v4446
        %v4493 = vsel %vm511, 0.0, %v4449
        %v4494 = vsel %vm511, 0.0, %v4452
        %v4495 = vsel %vm511, 0.0, %v4455
        %v4496 = vsel %vm511, 0.0, %v4458
        %v4497 = vsel %vm511, 0.0, %v4461
        %v4498 = vsel %vm511, 0.0, %v4464
        %v4499 = vsel %vm511, 0.0, %v4467
        %v4500 = vsel %vm511, 0.0, %v4470
        %v4521 = vrot.slane %v4363, 1
        %v4522 = vrot.slane %v4364, 1
        %v4523 = vsel %vm572, %v4521, %v4522
        %v4524 = vrot.slane %v4365, 1
        %v4525 = vrot.slane %v4366, 1
        %v4526 = vsel %vm572, %v4524, %v4525
        %v4527 = vrot.slane %v4367, 1
        %v4528 = vrot.slane %v4368, 1
        %v4529 = vsel %vm572, %v4527, %v4528
        %v4530 = vrot.slane %v4369, 1
        %v4531 = vrot.slane %v4370, 1
        %v4532 = vsel %vm572, %v4530, %v4531
        %v4533 = vrot.slane %v4371, 1
        %v4534 = vrot.slane %v4372, 1
        %v4535 = vsel %vm572, %v4533, %v4534
        %v4536 = vrot.slane %v4373, 1
        %v4537 = vrot.slane %v4374, 1
        %v4538 = vsel %vm572, %v4536, %v4537
        %v4539 = vrot.slane %v4375, 1
        %v4540 = vrot.slane %v4376, 1
        %v4541 = vsel %vm572, %v4539, %v4540
        %v4542 = vrot.slane %v4377, 1
        %v4543 = vrot.slane %v4378, 1
        %v4544 = vsel %vm572, %v4542, %v4543
        %v4545 = vrot.slane %v4379, 1
        %v4546 = vrot.slane %v4380, 1
        %v4547 = vsel %vm572, %v4545, %v4546
        %v4548 = vrot.slane %v4381, 1
        %v4549 = vrot.slane %v4382, 1
        %v4550 = vsel %vm572, %v4548, %v4549
        %v4561 = vsel %vm572, %v4522, 0.0
        %v4562 = vsel %vm572, %v4525, 0.0
        %v4563 = vsel %vm572, %v4528, 0.0
        %v4564 = vsel %vm572, %v4531, 0.0
        %v4565 = vsel %vm572, %v4534, 0.0
        %v4566 = vsel %vm572, %v4537, 0.0
        %v4567 = vsel %vm572, %v4540, 0.0
        %v4568 = vsel %vm572, %v4543, 0.0
        %v4569 = vsel %vm572, %v4546, 0.0
        %v4570 = vsel %vm572, %v4549, 0.0
        %4571 = vst.msk [vmem:[#allocation2] sm:$0xff] %vm881, %v4491
        %4572 = vst.msk [vmem:[#allocation2 + $0x8] sm:$0xff] %vm881, %v4445
        %4573 = vst.msk [vmem:[#allocation2 + $0x10] sm:$0xff] %vm881, %v4492
        %4574 = vst.msk [vmem:[#allocation2 + $0x18] sm:$0xff] %vm881, %v4448
        %4575 = vst.msk [vmem:[#allocation2 + $0x20] sm:$0xff] %vm881, %v4493
        %4576 = vst.msk [vmem:[#allocation2 + $0x28] sm:$0xff] %vm881, %v4451
        %4577 = vst.msk [vmem:[#allocation2 + $0x30] sm:$0xff] %vm881, %v4494
        %4578 = vst.msk [vmem:[#allocation2 + $0x38] sm:$0xff] %vm881, %v4454
        %4579 = vst.msk [vmem:[#allocation2 + $0x40] sm:$0xff] %vm881, %v4495
        %4580 = vst.msk [vmem:[#allocation2 + $0x48] sm:$0xff] %vm881, %v4457
        %4581 = vst.msk [vmem:[#allocation2 + $0x50] sm:$0xff] %vm881, %v4496
        %4582 = vst.msk [vmem:[#allocation2 + $0x58] sm:$0xff] %vm881, %v4460
        %4583 = vst.msk [vmem:[#allocation2 + $0x60] sm:$0xff] %vm881, %v4497
        %4584 = vst.msk [vmem:[#allocation2 + $0x68] sm:$0xff] %vm881, %v4463
        %4585 = vst.msk [vmem:[#allocation2 + $0x70] sm:$0xff] %vm881, %v4498
        %4586 = vst.msk [vmem:[#allocation2 + $0x78] sm:$0xff] %vm881, %v4466
        %4587 = vrot.lane.b32.xlu0 %v4363, 4
        %v4588 = vpop.permute.xlu0 %4587
        %4589 = vrot.lane.b32.xlu0 %v4364, 4
        %v4590 = vpop.permute.xlu0 %4589
        %4591 = vrot.lane.b32.xlu0 %v4365, 4
        %v4592 = vpop.permute.xlu0 %4591
        %4593 = vrot.lane.b32.xlu0 %v4366, 4
        %v4594 = vpop.permute.xlu0 %4593
        %4595 = vrot.lane.b32.xlu0 %v4367, 4
        %v4596 = vpop.permute.xlu0 %4595
        %4597 = vrot.lane.b32.xlu0 %v4368, 4
        %v4598 = vpop.permute.xlu0 %4597
        %4599 = vrot.lane.b32.xlu0 %v4369, 4
        %v4600 = vpop.permute.xlu0 %4599
        %4601 = vrot.lane.b32.xlu0 %v4370, 4
        %v4602 = vpop.permute.xlu0 %4601
        %4603 = vrot.lane.b32.xlu0 %v4371, 4
        %v4604 = vpop.permute.xlu0 %4603
        %4605 = vrot.lane.b32.xlu0 %v4372, 4
        %v4606 = vpop.permute.xlu0 %4605
        %4607 = vrot.lane.b32.xlu0 %v4373, 4
        %v4608 = vpop.permute.xlu0 %4607
        %4609 = vrot.lane.b32.xlu0 %v4374, 4
        %v4610 = vpop.permute.xlu0 %4609
        %4611 = vrot.lane.b32.xlu0 %v4375, 4
        %v4612 = vpop.permute.xlu0 %4611
        %4613 = vrot.lane.b32.xlu0 %v4376, 4
        %v4614 = vpop.permute.xlu0 %4613
        %4615 = vrot.lane.b32.xlu0 %v4377, 4
        %v4616 = vpop.permute.xlu0 %4615
        %4617 = vrot.lane.b32.xlu0 %v4378, 4
        %v4618 = vpop.permute.xlu0 %4617
        %4635 = vst.msk [vmem:[#allocation2] sm:$0xff] %vm946, %v4588
        %4636 = vst.msk [vmem:[#allocation2 + $0x8] sm:$0xff] %vm946, %v4590
        %4637 = vst.msk [vmem:[#allocation2 + $0x10] sm:$0xff] %vm946, %v4592
        %4638 = vst.msk [vmem:[#allocation2 + $0x18] sm:$0xff] %vm946, %v4594
        %4639 = vst.msk [vmem:[#allocation2 + $0x20] sm:$0xff] %vm946, %v4596
        %4640 = vst.msk [vmem:[#allocation2 + $0x28] sm:$0xff] %vm946, %v4598
        %4641 = vst.msk [vmem:[#allocation2 + $0x30] sm:$0xff] %vm946, %v4600
        %4642 = vst.msk [vmem:[#allocation2 + $0x38] sm:$0xff] %vm946, %v4602
        %4643 = vst.msk [vmem:[#allocation2 + $0x40] sm:$0xff] %vm946, %v4604
        %4644 = vst.msk [vmem:[#allocation2 + $0x48] sm:$0xff] %vm946, %v4606
        %4645 = vst.msk [vmem:[#allocation2 + $0x50] sm:$0xff] %vm946, %v4608
        %4646 = vst.msk [vmem:[#allocation2 + $0x58] sm:$0xff] %vm946, %v4610
        %4647 = vst.msk [vmem:[#allocation2 + $0x60] sm:$0xff] %vm946, %v4612
        %4648 = vst.msk [vmem:[#allocation2 + $0x68] sm:$0xff] %vm946, %v4614
        %4649 = vst.msk [vmem:[#allocation2 + $0x70] sm:$0xff] %vm946, %v4616
        %4650 = vst.msk [vmem:[#allocation2 + $0x78] sm:$0xff] %vm946, %v4618
        %4651 = vrot.lane.b32.xlu0 %v4403, 8
        %v4652 = vpop.permute.xlu0 %4651
        %4653 = vrot.lane.b32.xlu0 %v4404, 8
        %v4654 = vpop.permute.xlu0 %4653
        %4655 = vrot.lane.b32.xlu0 %v4405, 8
        %v4656 = vpop.permute.xlu0 %4655
        %4657 = vrot.lane.b32.xlu0 %v4406, 8
        %v4658 = vpop.permute.xlu0 %4657
        %4659 = vrot.lane.b32.xlu0 %v4407, 8
        %v4660 = vpop.permute.xlu0 %4659
        %4661 = vrot.lane.b32.xlu0 %v4408, 8
        %v4662 = vpop.permute.xlu0 %4661
        %4663 = vrot.lane.b32.xlu0 %v4409, 8
        %v4664 = vpop.permute.xlu0 %4663
        %4665 = vrot.lane.b32.xlu0 %v4410, 8
        %v4666 = vpop.permute.xlu0 %4665
        %4667 = vrot.lane.b32.xlu0 %v4411, 8
        %v4668 = vpop.permute.xlu0 %4667
        %4669 = vrot.lane.b32.xlu0 %v4412, 8
        %v4670 = vpop.permute.xlu0 %4669
        %4671 = vrot.lane.b32.xlu0 %v4413, 8
        %v4672 = vpop.permute.xlu0 %4671
        %4673 = vrot.lane.b32.xlu0 %v4414, 8
        %v4674 = vpop.permute.xlu0 %4673
        %4675 = vrot.lane.b32.xlu0 %v4415, 8
        %v4676 = vpop.permute.xlu0 %4675
        %4677 = vrot.lane.b32.xlu0 %v4416, 8
        %v4678 = vpop.permute.xlu0 %4677
        %4679 = vrot.lane.b32.xlu0 %v4417, 8
        %v4680 = vpop.permute.xlu0 %4679
        %4681 = vrot.lane.b32.xlu0 %v4418, 8
        %v4682 = vpop.permute.xlu0 %4681
        %4699 = vst.msk [vmem:[#allocation2] sm:$0xff] %vm1011, %v4652
        %4700 = vst.msk [vmem:[#allocation2 + $0x8] sm:$0xff] %vm1011, %v4654
        %4701 = vst.msk [vmem:[#allocation2 + $0x10] sm:$0xff] %vm1011, %v4656
        %4702 = vst.msk [vmem:[#allocation2 + $0x18] sm:$0xff] %vm1011, %v4658
        %4703 = vst.msk [vmem:[#allocation2 + $0x20] sm:$0xff] %vm1011, %v4660
        %4704 = vst.msk [vmem:[#allocation2 + $0x28] sm:$0xff] %vm1011, %v4662
        %4705 = vst.msk [vmem:[#allocation2 + $0x30] sm:$0xff] %vm1011, %v4664
        %4706 = vst.msk [vmem:[#allocation2 + $0x38] sm:$0xff] %vm1011, %v4666
        %4707 = vst.msk [vmem:[#allocation2 + $0x40] sm:$0xff] %vm1011, %v4668
        %4708 = vst.msk [vmem:[#allocation2 + $0x48] sm:$0xff] %vm1011, %v4670
        %4709 = vst.msk [vmem:[#allocation2 + $0x50] sm:$0xff] %vm1011, %v4672
        %4710 = vst.msk [vmem:[#allocation2 + $0x58] sm:$0xff] %vm1011, %v4674
        %4711 = vst.msk [vmem:[#allocation2 + $0x60] sm:$0xff] %vm1011, %v4676
        %4712 = vst.msk [vmem:[#allocation2 + $0x68] sm:$0xff] %vm1011, %v4678
        %4713 = vst.msk [vmem:[#allocation2 + $0x70] sm:$0xff] %vm1011, %v4680
        %4714 = vst.msk [vmem:[#allocation2 + $0x78] sm:$0xff] %vm1011, %v4682
        %4723 = vrot.lane.b32.xlu0 %v4492, 12
        %v4724 = vpop.permute.xlu0 %4723
        %4725 = vrot.lane.b32.xlu0 %v4448, 12
        %v4726 = vpop.permute.xlu0 %4725
        %4727 = vrot.lane.b32.xlu0 %v4493, 12
        %v4728 = vpop.permute.xlu0 %4727
        %4729 = vrot.lane.b32.xlu0 %v4451, 12
        %v4730 = vpop.permute.xlu0 %4729
        %4731 = vrot.lane.b32.xlu0 %v4494, 12
        %v4732 = vpop.permute.xlu0 %4731
        %4733 = vrot.lane.b32.xlu0 %v4454, 12
        %v4734 = vpop.permute.xlu0 %4733
        %4735 = vrot.lane.b32.xlu0 %v4495, 12
        %v4736 = vpop.permute.xlu0 %4735
        %4737 = vrot.lane.b32.xlu0 %v4457, 12
        %v4738 = vpop.permute.xlu0 %4737
        %4739 = vrot.lane.b32.xlu0 %v4496, 12
        %v4740 = vpop.permute.xlu0 %4739
        %4741 = vrot.lane.b32.xlu0 %v4460, 12
        %v4742 = vpop.permute.xlu0 %4741
        %4743 = vrot.lane.b32.xlu0 %v4497, 12
        %v4744 = vpop.permute.xlu0 %4743
        %4745 = vrot.lane.b32.xlu0 %v4463, 12
        %v4746 = vpop.permute.xlu0 %4745
        %4747 = vrot.lane.b32.xlu0 %v4498, 12
        %v4748 = vpop.permute.xlu0 %4747
        %4749 = vrot.lane.b32.xlu0 %v4466, 12
        %v4750 = vpop.permute.xlu0 %4749
        %4751 = vrot.lane.b32.xlu0 %v4499, 12
        %v4752 = vpop.permute.xlu0 %4751
        %4753 = vrot.lane.b32.xlu0 %v4469, 12
        %v4754 = vpop.permute.xlu0 %4753
        %4771 = vst.msk [vmem:[#allocation2] sm:$0xff] %vm1084, %v4724
        %4772 = vst.msk [vmem:[#allocation2 + $0x8] sm:$0xff] %vm1084, %v4726
        %4773 = vst.msk [vmem:[#allocation2 + $0x10] sm:$0xff] %vm1084, %v4728
        %4774 = vst.msk [vmem:[#allocation2 + $0x18] sm:$0xff] %vm1084, %v4730
        %4775 = vst.msk [vmem:[#allocation2 + $0x20] sm:$0xff] %vm1084, %v4732
        %4776 = vst.msk [vmem:[#allocation2 + $0x28] sm:$0xff] %vm1084, %v4734
        %4777 = vst.msk [vmem:[#allocation2 + $0x30] sm:$0xff] %vm1084, %v4736
        %4778 = vst.msk [vmem:[#allocation2 + $0x38] sm:$0xff] %vm1084, %v4738
        %4779 = vst.msk [vmem:[#allocation2 + $0x40] sm:$0xff] %vm1084, %v4740
        %4780 = vst.msk [vmem:[#allocation2 + $0x48] sm:$0xff] %vm1084, %v4742
        %4781 = vst.msk [vmem:[#allocation2 + $0x50] sm:$0xff] %vm1084, %v4744
        %4782 = vst.msk [vmem:[#allocation2 + $0x58] sm:$0xff] %vm1084, %v4746
        %4783 = vst.msk [vmem:[#allocation2 + $0x60] sm:$0xff] %vm1084, %v4748
        %4784 = vst.msk [vmem:[#allocation2 + $0x68] sm:$0xff] %vm1084, %v4750
        %4785 = vst.msk [vmem:[#allocation2 + $0x70] sm:$0xff] %vm1084, %v4752
        %4786 = vst.msk [vmem:[#allocation2 + $0x78] sm:$0xff] %vm1084, %v4754
        %4787 = vrot.lane.b32.xlu0 %v4365, 16
        %v4788 = vpop.permute.xlu0 %4787
        %4789 = vrot.lane.b32.xlu0 %v4366, 16
        %v4790 = vpop.permute.xlu0 %4789
        %4791 = vrot.lane.b32.xlu0 %v4367, 16
        %v4792 = vpop.permute.xlu0 %4791
        %4793 = vrot.lane.b32.xlu0 %v4368, 16
        %v4794 = vpop.permute.xlu0 %4793
        %4795 = vrot.lane.b32.xlu0 %v4369, 16
        %v4796 = vpop.permute.xlu0 %4795
        %4797 = vrot.lane.b32.xlu0 %v4370, 16
        %v4798 = vpop.permute.xlu0 %4797
        %4799 = vrot.lane.b32.xlu0 %v4371, 16
        %v4800 = vpop.permute.xlu0 %4799
        %4801 = vrot.lane.b32.xlu0 %v4372, 16
        %v4802 = vpop.permute.xlu0 %4801
        %4803 = vrot.lane.b32.xlu0 %v4373, 16
        %v4804 = vpop.permute.xlu0 %4803
        %4805 = vrot.lane.b32.xlu0 %v4374, 16
        %v4806 = vpop.permute.xlu0 %4805
        %4807 = vrot.lane.b32.xlu0 %v4375, 16
        %v4808 = vpop.permute.xlu0 %4807
        %4809 = vrot.lane.b32.xlu0 %v4376, 16
        %v4810 = vpop.permute.xlu0 %4809
        %4811 = vrot.lane.b32.xlu0 %v4377, 16
        %v4812 = vpop.permute.xlu0 %4811
        %4813 = vrot.lane.b32.xlu0 %v4378, 16
        %v4814 = vpop.permute.xlu0 %4813
        %4815 = vrot.lane.b32.xlu0 %v4379, 16
        %v4816 = vpop.permute.xlu0 %4815
        %4817 = vrot.lane.b32.xlu0 %v4380, 16
        %v4818 = vpop.permute.xlu0 %4817
        %4835 = vst.msk [vmem:[#allocation2] sm:$0xff] %vm1149, %v4788
        %4836 = vst.msk [vmem:[#allocation2 + $0x8] sm:$0xff] %vm1149, %v4790
        %4837 = vst.msk [vmem:[#allocation2 + $0x10] sm:$0xff] %vm1149, %v4792
        %4838 = vst.msk [vmem:[#allocation2 + $0x18] sm:$0xff] %vm1149, %v4794
        %4839 = vst.msk [vmem:[#allocation2 + $0x20] sm:$0xff] %vm1149, %v4796
        %4840 = vst.msk [vmem:[#allocation2 + $0x28] sm:$0xff] %vm1149, %v4798
        %4841 = vst.msk [vmem:[#allocation2 + $0x30] sm:$0xff] %vm1149, %v4800
        %4842 = vst.msk [vmem:[#allocation2 + $0x38] sm:$0xff] %vm1149, %v4802
        %4843 = vst.msk [vmem:[#allocation2 + $0x40] sm:$0xff] %vm1149, %v4804
        %4844 = vst.msk [vmem:[#allocation2 + $0x48] sm:$0xff] %vm1149, %v4806
        %4845 = vst.msk [vmem:[#allocation2 + $0x50] sm:$0xff] %vm1149, %v4808
        %4846 = vst.msk [vmem:[#allocation2 + $0x58] sm:$0xff] %vm1149, %v4810
        %4847 = vst.msk [vmem:[#allocation2 + $0x60] sm:$0xff] %vm1149, %v4812
        %4848 = vst.msk [vmem:[#allocation2 + $0x68] sm:$0xff] %vm1149, %v4814
        %4849 = vst.msk [vmem:[#allocation2 + $0x70] sm:$0xff] %vm1149, %v4816
        %4850 = vst.msk [vmem:[#allocation2 + $0x78] sm:$0xff] %vm1149, %v4818
        %4851 = vrot.lane.b32.xlu0 %v4405, 20
        %v4852 = vpop.permute.xlu0 %4851
        %4853 = vrot.lane.b32.xlu0 %v4406, 20
        %v4854 = vpop.permute.xlu0 %4853
        %4855 = vrot.lane.b32.xlu0 %v4407, 20
        %v4856 = vpop.permute.xlu0 %4855
        %4857 = vrot.lane.b32.xlu0 %v4408, 20
        %v4858 = vpop.permute.xlu0 %4857
        %4859 = vrot.lane.b32.xlu0 %v4409, 20
        %v4860 = vpop.permute.xlu0 %4859
        %4861 = vrot.lane.b32.xlu0 %v4410, 20
        %v4862 = vpop.permute.xlu0 %4861
        %4863 = vrot.lane.b32.xlu0 %v4411, 20
        %v4864 = vpop.permute.xlu0 %4863
        %4865 = vrot.lane.b32.xlu0 %v4412, 20
        %v4866 = vpop.permute.xlu0 %4865
        %4867 = vrot.lane.b32.xlu0 %v4413, 20
        %v4868 = vpop.permute.xlu0 %4867
        %4869 = vrot.lane.b32.xlu0 %v4414, 20
        %v4870 = vpop.permute.xlu0 %4869
        %4871 = vrot.lane.b32.xlu0 %v4415, 20
        %v4872 = vpop.permute.xlu0 %4871
        %4873 = vrot.lane.b32.xlu0 %v4416, 20
        %v4874 = vpop.permute.xlu0 %4873
        %4875 = vrot.lane.b32.xlu0 %v4417, 20
        %v4876 = vpop.permute.xlu0 %4875
        %4877 = vrot.lane.b32.xlu0 %v4418, 20
        %v4878 = vpop.permute.xlu0 %4877
        %4879 = vrot.lane.b32.xlu0 %v4419, 20
        %v4880 = vpop.permute.xlu0 %4879
        %4881 = vrot.lane.b32.xlu0 %v4420, 20
        %v4882 = vpop.permute.xlu0 %4881
        %4899 = vst.msk [vmem:[#allocation2] sm:$0xff] %vm1214, %v4852
        %4900 = vst.msk [vmem:[#allocation2 + $0x8] sm:$0xff] %vm1214, %v4854
        %4901 = vst.msk [vmem:[#allocation2 + $0x10] sm:$0xff] %vm1214, %v4856
        %4902 = vst.msk [vmem:[#allocation2 + $0x18] sm:$0xff] %vm1214, %v4858
        %4903 = vst.msk [vmem:[#allocation2 + $0x20] sm:$0xff] %vm1214, %v4860
        %4904 = vst.msk [vmem:[#allocation2 + $0x28] sm:$0xff] %vm1214, %v4862
        %4905 = vst.msk [vmem:[#allocation2 + $0x30] sm:$0xff] %vm1214, %v4864
        %4906 = vst.msk [vmem:[#allocation2 + $0x38] sm:$0xff] %vm1214, %v4866
        %4907 = vst.msk [vmem:[#allocation2 + $0x40] sm:$0xff] %vm1214, %v4868
        %4908 = vst.msk [vmem:[#allocation2 + $0x48] sm:$0xff] %vm1214, %v4870
        %4909 = vst.msk [vmem:[#allocation2 + $0x50] sm:$0xff] %vm1214, %v4872
        %4910 = vst.msk [vmem:[#allocation2 + $0x58] sm:$0xff] %vm1214, %v4874
        %4911 = vst.msk [vmem:[#allocation2 + $0x60] sm:$0xff] %vm1214, %v4876
        %4912 = vst.msk [vmem:[#allocation2 + $0x68] sm:$0xff] %vm1214, %v4878
        %4913 = vst.msk [vmem:[#allocation2 + $0x70] sm:$0xff] %vm1214, %v4880
        %4914 = vst.msk [vmem:[#allocation2 + $0x78] sm:$0xff] %vm1214, %v4882
        %4916 = vrot.lane.b32.xlu0 %v4493, 24
        %v4917 = vpop.permute.xlu0 %4916
        %4918 = vrot.lane.b32.xlu0 %v4451, 24
        %v4919 = vpop.permute.xlu0 %4918
        %4920 = vrot.lane.b32.xlu0 %v4494, 24
        %v4921 = vpop.permute.xlu0 %4920
        %4922 = vrot.lane.b32.xlu0 %v4454, 24
        %v4923 = vpop.permute.xlu0 %4922
        %4924 = vrot.lane.b32.xlu0 %v4495, 24
        %v4925 = vpop.permute.xlu0 %4924
        %4926 = vrot.lane.b32.xlu0 %v4457, 24
        %v4927 = vpop.permute.xlu0 %4926
        %4928 = vrot.lane.b32.xlu0 %v4496, 24
        %v4929 = vpop.permute.xlu0 %4928
        %4930 = vrot.lane.b32.xlu0 %v4460, 24
        %v4931 = vpop.permute.xlu0 %4930
        %4932 = vrot.lane.b32.xlu0 %v4497, 24
        %v4933 = vpop.permute.xlu0 %4932
        %4934 = vrot.lane.b32.xlu0 %v4463, 24
        %v4935 = vpop.permute.xlu0 %4934
        %4936 = vrot.lane.b32.xlu0 %v4498, 24
        %v4937 = vpop.permute.xlu0 %4936
        %4938 = vrot.lane.b32.xlu0 %v4466, 24
        %v4939 = vpop.permute.xlu0 %4938
        %4940 = vrot.lane.b32.xlu0 %v4499, 24
        %v4941 = vpop.permute.xlu0 %4940
        %4942 = vrot.lane.b32.xlu0 %v4469, 24
        %v4943 = vpop.permute.xlu0 %4942
        %4944 = vrot.lane.b32.xlu0 %v4500, 24
        %v4945 = vpop.permute.xlu0 %4944
        %4946 = vrot.lane.b32.xlu0 %v4472, 24
        %v4947 = vpop.permute.xlu0 %4946
        %4964 = vst.msk [vmem:[#allocation2] sm:$0xff] %vm1280, %v4917
        %4965 = vst.msk [vmem:[#allocation2 + $0x8] sm:$0xff] %vm1280, %v4919
        %4966 = vst.msk [vmem:[#allocation2 + $0x10] sm:$0xff] %vm1280, %v4921
        %4967 = vst.msk [vmem:[#allocation2 + $0x18] sm:$0xff] %vm1280, %v4923
        %4968 = vst.msk [vmem:[#allocation2 + $0x20] sm:$0xff] %vm1280, %v4925
        %4969 = vst.msk [vmem:[#allocation2 + $0x28] sm:$0xff] %vm1280, %v4927
        %4970 = vst.msk [vmem:[#allocation2 + $0x30] sm:$0xff] %vm1280, %v4929
        %4971 = vst.msk [vmem:[#allocation2 + $0x38] sm:$0xff] %vm1280, %v4931
        %4972 = vst.msk [vmem:[#allocation2 + $0x40] sm:$0xff] %vm1280, %v4933
        %4973 = vst.msk [vmem:[#allocation2 + $0x48] sm:$0xff] %vm1280, %v4935
        %4974 = vst.msk [vmem:[#allocation2 + $0x50] sm:$0xff] %vm1280, %v4937
        %4975 = vst.msk [vmem:[#allocation2 + $0x58] sm:$0xff] %vm1280, %v4939
        %4976 = vst.msk [vmem:[#allocation2 + $0x60] sm:$0xff] %vm1280, %v4941
        %4977 = vst.msk [vmem:[#allocation2 + $0x68] sm:$0xff] %vm1280, %v4943
        %4978 = vst.msk [vmem:[#allocation2 + $0x70] sm:$0xff] %vm1280, %v4945
        %4979 = vst.msk [vmem:[#allocation2 + $0x78] sm:$0xff] %vm1280, %v4947
        %4980 = vrot.lane.b32.xlu0 %v4367, 28
        %v4981 = vpop.permute.xlu0 %4980
        %4982 = vrot.lane.b32.xlu0 %v4368, 28
        %v4983 = vpop.permute.xlu0 %4982
        %4984 = vrot.lane.b32.xlu0 %v4369, 28
        %v4985 = vpop.permute.xlu0 %4984
        %4986 = vrot.lane.b32.xlu0 %v4370, 28
        %v4987 = vpop.permute.xlu0 %4986
        %4988 = vrot.lane.b32.xlu0 %v4371, 28
        %v4989 = vpop.permute.xlu0 %4988
        %4990 = vrot.lane.b32.xlu0 %v4372, 28
        %v4991 = vpop.permute.xlu0 %4990
        %4992 = vrot.lane.b32.xlu0 %v4373, 28
        %v4993 = vpop.permute.xlu0 %4992
        %4994 = vrot.lane.b32.xlu0 %v4374, 28
        %v4995 = vpop.permute.xlu0 %4994
        %4996 = vrot.lane.b32.xlu0 %v4375, 28
        %v4997 = vpop.permute.xlu0 %4996
        %4998 = vrot.lane.b32.xlu0 %v4376, 28
        %v4999 = vpop.permute.xlu0 %4998
        %5000 = vrot.lane.b32.xlu0 %v4377, 28
        %v5001 = vpop.permute.xlu0 %5000
        %5002 = vrot.lane.b32.xlu0 %v4378, 28
        %v5003 = vpop.permute.xlu0 %5002
        %5004 = vrot.lane.b32.xlu0 %v4379, 28
        %v5005 = vpop.permute.xlu0 %5004
        %5006 = vrot.lane.b32.xlu0 %v4380, 28
        %v5007 = vpop.permute.xlu0 %5006
        %5008 = vrot.lane.b32.xlu0 %v4381, 28
        %v5009 = vpop.permute.xlu0 %5008
        %5010 = vrot.lane.b32.xlu0 %v4382, 28
        %v5011 = vpop.permute.xlu0 %5010
        %5028 = vst.msk [vmem:[#allocation2] sm:$0xff] %vm1345, %v4981
        %5029 = vst.msk [vmem:[#allocation2 + $0x8] sm:$0xff] %vm1345, %v4983
        %5030 = vst.msk [vmem:[#allocation2 + $0x10] sm:$0xff] %vm1345, %v4985
        %5031 = vst.msk [vmem:[#allocation2 + $0x18] sm:$0xff] %vm1345, %v4987
        %5032 = vst.msk [vmem:[#allocation2 + $0x20] sm:$0xff] %vm1345, %v4989
        %5033 = vst.msk [vmem:[#allocation2 + $0x28] sm:$0xff] %vm1345, %v4991
        %5034 = vst.msk [vmem:[#allocation2 + $0x30] sm:$0xff] %vm1345, %v4993
        %5035 = vst.msk [vmem:[#allocation2 + $0x38] sm:$0xff] %vm1345, %v4995
        %5036 = vst.msk [vmem:[#allocation2 + $0x40] sm:$0xff] %vm1345, %v4997
        %5037 = vst.msk [vmem:[#allocation2 + $0x48] sm:$0xff] %vm1345, %v4999
        %5038 = vst.msk [vmem:[#allocation2 + $0x50] sm:$0xff] %vm1345, %v5001
        %5039 = vst.msk [vmem:[#allocation2 + $0x58] sm:$0xff] %vm1345, %v5003
        %5040 = vst.msk [vmem:[#allocation2 + $0x60] sm:$0xff] %vm1345, %v5005
        %5041 = vst.msk [vmem:[#allocation2 + $0x68] sm:$0xff] %vm1345, %v5007
        %5042 = vst.msk [vmem:[#allocation2 + $0x70] sm:$0xff] %vm1345, %v5009
        %5043 = vst.msk [vmem:[#allocation2 + $0x78] sm:$0xff] %vm1345, %v5011
        %5044 = vrot.lane.b32.xlu0 %v4407, 32
        %v5045 = vpop.permute.xlu0 %5044
        %5046 = vrot.lane.b32.xlu0 %v4408, 32
        %v5047 = vpop.permute.xlu0 %5046
        %5048 = vrot.lane.b32.xlu0 %v4409, 32
        %v5049 = vpop.permute.xlu0 %5048
        %5050 = vrot.lane.b32.xlu0 %v4410, 32
        %v5051 = vpop.permute.xlu0 %5050
        %5052 = vrot.lane.b32.xlu0 %v4411, 32
        %v5053 = vpop.permute.xlu0 %5052
        %5054 = vrot.lane.b32.xlu0 %v4412, 32
        %v5055 = vpop.permute.xlu0 %5054
        %5056 = vrot.lane.b32.xlu0 %v4413, 32
        %v5057 = vpop.permute.xlu0 %5056
        %5058 = vrot.lane.b32.xlu0 %v4414, 32
        %v5059 = vpop.permute.xlu0 %5058
        %5060 = vrot.lane.b32.xlu0 %v4415, 32
        %v5061 = vpop.permute.xlu0 %5060
        %5062 = vrot.lane.b32.xlu0 %v4416, 32
        %v5063 = vpop.permute.xlu0 %5062
        %5064 = vrot.lane.b32.xlu0 %v4417, 32
        %v5065 = vpop.permute.xlu0 %5064
        %5066 = vrot.lane.b32.xlu0 %v4418, 32
        %v5067 = vpop.permute.xlu0 %5066
        %5068 = vrot.lane.b32.xlu0 %v4419, 32
        %v5069 = vpop.permute.xlu0 %5068
        %5070 = vrot.lane.b32.xlu0 %v4420, 32
        %v5071 = vpop.permute.xlu0 %5070
        %5072 = vrot.lane.b32.xlu0 %v4421, 32
        %v5073 = vpop.permute.xlu0 %5072
        %5074 = vrot.lane.b32.xlu0 %v4422, 32
        %v5075 = vpop.permute.xlu0 %5074
        %5092 = vst.msk [vmem:[#allocation2] sm:$0xff] %vm1410, %v5045
        %5093 = vst.msk [vmem:[#allocation2 + $0x8] sm:$0xff] %vm1410, %v5047
        %5094 = vst.msk [vmem:[#allocation2 + $0x10] sm:$0xff] %vm1410, %v5049
        %5095 = vst.msk [vmem:[#allocation2 + $0x18] sm:$0xff] %vm1410, %v5051
        %5096 = vst.msk [vmem:[#allocation2 + $0x20] sm:$0xff] %vm1410, %v5053
        %5097 = vst.msk [vmem:[#allocation2 + $0x28] sm:$0xff] %vm1410, %v5055
        %5098 = vst.msk [vmem:[#allocation2 + $0x30] sm:$0xff] %vm1410, %v5057
        %5099 = vst.msk [vmem:[#allocation2 + $0x38] sm:$0xff] %vm1410, %v5059
        %5100 = vst.msk [vmem:[#allocation2 + $0x40] sm:$0xff] %vm1410, %v5061
        %5101 = vst.msk [vmem:[#allocation2 + $0x48] sm:$0xff] %vm1410, %v5063
        %5102 = vst.msk [vmem:[#allocation2 + $0x50] sm:$0xff] %vm1410, %v5065
        %5103 = vst.msk [vmem:[#allocation2 + $0x58] sm:$0xff] %vm1410, %v5067
        %5104 = vst.msk [vmem:[#allocation2 + $0x60] sm:$0xff] %vm1410, %v5069
        %5105 = vst.msk [vmem:[#allocation2 + $0x68] sm:$0xff] %vm1410, %v5071
        %5106 = vst.msk [vmem:[#allocation2 + $0x70] sm:$0xff] %vm1410, %v5073
        %5107 = vst.msk [vmem:[#allocation2 + $0x78] sm:$0xff] %vm1410, %v5075
        %5108 = vst.msk [vmem:[%s1427] sm:$0xff] %vm881, %v4363
        %5109 = vst.msk [vmem:[%s1427 + $0x8] sm:$0xff] %vm881, %v4364
        %5110 = vst.msk [vmem:[%s1427 + $0x10] sm:$0xff] %vm881, %v4365
        %5111 = vst.msk [vmem:[%s1427 + $0x18] sm:$0xff] %vm881, %v4366
        %5112 = vst.msk [vmem:[%s1427 + $0x20] sm:$0xff] %vm881, %v4367
        %5113 = vst.msk [vmem:[%s1427 + $0x28] sm:$0xff] %vm881, %v4368
        %5114 = vst.msk [vmem:[%s1427 + $0x30] sm:$0xff] %vm881, %v4369
        %5115 = vst.msk [vmem:[%s1427 + $0x38] sm:$0xff] %vm881, %v4370
        %5116 = vst.msk [vmem:[%s1427 + $0x40] sm:$0xff] %vm881, %v4371
        %5117 = vst.msk [vmem:[%s1427 + $0x48] sm:$0xff] %vm881, %v4372
        %5118 = vst.msk [vmem:[%s1427 + $0x50] sm:$0xff] %vm881, %v4373
        %5119 = vst.msk [vmem:[%s1427 + $0x58] sm:$0xff] %vm881, %v4374
        %5120 = vst.msk [vmem:[%s1427 + $0x60] sm:$0xff] %vm881, %v4375
        %5121 = vst.msk [vmem:[%s1427 + $0x68] sm:$0xff] %vm881, %v4376
        %5122 = vst.msk [vmem:[%s1427 + $0x70] sm:$0xff] %vm881, %v4377
        %5123 = vst.msk [vmem:[%s1427 + $0x78] sm:$0xff] %vm881, %v4378
        %5124 = vrot.lane.b32.xlu0 %v4403, 4
        %v5125 = vpop.permute.xlu0 %5124
        %5126 = vrot.lane.b32.xlu0 %v4404, 4
        %v5127 = vpop.permute.xlu0 %5126
        %5128 = vrot.lane.b32.xlu0 %v4405, 4
        %v5129 = vpop.permute.xlu0 %5128
        %5130 = vrot.lane.b32.xlu0 %v4406, 4
        %v5131 = vpop.permute.xlu0 %5130
        %5132 = vrot.lane.b32.xlu0 %v4407, 4
        %v5133 = vpop.permute.xlu0 %5132
        %5134 = vrot.lane.b32.xlu0 %v4408, 4
        %v5135 = vpop.permute.xlu0 %5134
        %5136 = vrot.lane.b32.xlu0 %v4409, 4
        %v5137 = vpop.permute.xlu0 %5136
        %5138 = vrot.lane.b32.xlu0 %v4410, 4
        %v5139 = vpop.permute.xlu0 %5138
        %5140 = vrot.lane.b32.xlu0 %v4411, 4
        %v5141 = vpop.permute.xlu0 %5140
        %5142 = vrot.lane.b32.xlu0 %v4412, 4
        %v5143 = vpop.permute.xlu0 %5142
        %5144 = vrot.lane.b32.xlu0 %v4413, 4
        %v5145 = vpop.permute.xlu0 %5144
        %5146 = vrot.lane.b32.xlu0 %v4414, 4
        %v5147 = vpop.permute.xlu0 %5146
        %5148 = vrot.lane.b32.xlu0 %v4415, 4
        %v5149 = vpop.permute.xlu0 %5148
        %5150 = vrot.lane.b32.xlu0 %v4416, 4
        %v5151 = vpop.permute.xlu0 %5150
        %5152 = vrot.lane.b32.xlu0 %v4417, 4
        %v5153 = vpop.permute.xlu0 %5152
        %5154 = vrot.lane.b32.xlu0 %v4418, 4
        %v5155 = vpop.permute.xlu0 %5154
        %5172 = vst.msk [vmem:[%s1427] sm:$0xff] %vm946, %v5125
        %5173 = vst.msk [vmem:[%s1427 + $0x8] sm:$0xff] %vm946, %v5127
        %5174 = vst.msk [vmem:[%s1427 + $0x10] sm:$0xff] %vm946, %v5129
        %5175 = vst.msk [vmem:[%s1427 + $0x18] sm:$0xff] %vm946, %v5131
        %5176 = vst.msk [vmem:[%s1427 + $0x20] sm:$0xff] %vm946, %v5133
        %5177 = vst.msk [vmem:[%s1427 + $0x28] sm:$0xff] %vm946, %v5135
        %5178 = vst.msk [vmem:[%s1427 + $0x30] sm:$0xff] %vm946, %v5137
        %5179 = vst.msk [vmem:[%s1427 + $0x38] sm:$0xff] %vm946, %v5139
        %5180 = vst.msk [vmem:[%s1427 + $0x40] sm:$0xff] %vm946, %v5141
        %5181 = vst.msk [vmem:[%s1427 + $0x48] sm:$0xff] %vm946, %v5143
        %5182 = vst.msk [vmem:[%s1427 + $0x50] sm:$0xff] %vm946, %v5145
        %5183 = vst.msk [vmem:[%s1427 + $0x58] sm:$0xff] %vm946, %v5147
        %5184 = vst.msk [vmem:[%s1427 + $0x60] sm:$0xff] %vm946, %v5149
        %5185 = vst.msk [vmem:[%s1427 + $0x68] sm:$0xff] %vm946, %v5151
        %5186 = vst.msk [vmem:[%s1427 + $0x70] sm:$0xff] %vm946, %v5153
        %5187 = vst.msk [vmem:[%s1427 + $0x78] sm:$0xff] %vm946, %v5155
        %5196 = vrot.lane.b32.xlu0 %v4523, 8
        %v5197 = vpop.permute.xlu0 %5196
        %5198 = vrot.lane.b32.xlu0 %v4561, 8
        %v5199 = vpop.permute.xlu0 %5198
        %5200 = vrot.lane.b32.xlu0 %v4526, 8
        %v5201 = vpop.permute.xlu0 %5200
        %5202 = vrot.lane.b32.xlu0 %v4562, 8
        %v5203 = vpop.permute.xlu0 %5202
        %5204 = vrot.lane.b32.xlu0 %v4529, 8
        %v5205 = vpop.permute.xlu0 %5204
        %5206 = vrot.lane.b32.xlu0 %v4563, 8
        %v5207 = vpop.permute.xlu0 %5206
        %5208 = vrot.lane.b32.xlu0 %v4532, 8
        %v5209 = vpop.permute.xlu0 %5208
        %5210 = vrot.lane.b32.xlu0 %v4564, 8
        %v5211 = vpop.permute.xlu0 %5210
        %5212 = vrot.lane.b32.xlu0 %v4535, 8
        %v5213 = vpop.permute.xlu0 %5212
        %5214 = vrot.lane.b32.xlu0 %v4565, 8
        %v5215 = vpop.permute.xlu0 %5214
        %5216 = vrot.lane.b32.xlu0 %v4538, 8
        %v5217 = vpop.permute.xlu0 %5216
        %5218 = vrot.lane.b32.xlu0 %v4566, 8
        %v5219 = vpop.permute.xlu0 %5218
        %5220 = vrot.lane.b32.xlu0 %v4541, 8
        %v5221 = vpop.permute.xlu0 %5220
        %5222 = vrot.lane.b32.xlu0 %v4567, 8
        %v5223 = vpop.permute.xlu0 %5222
        %5224 = vrot.lane.b32.xlu0 %v4544, 8
        %v5225 = vpop.permute.xlu0 %5224
        %5226 = vrot.lane.b32.xlu0 %v4568, 8
        %v5227 = vpop.permute.xlu0 %5226
        %5244 = vst.msk [vmem:[%s1427] sm:$0xff] %vm1011, %v5197
        %5245 = vst.msk [vmem:[%s1427 + $0x8] sm:$0xff] %vm1011, %v5199
        %5246 = vst.msk [vmem:[%s1427 + $0x10] sm:$0xff] %vm1011, %v5201
        %5247 = vst.msk [vmem:[%s1427 + $0x18] sm:$0xff] %vm1011, %v5203
        %5248 = vst.msk [vmem:[%s1427 + $0x20] sm:$0xff] %vm1011, %v5205
        %5249 = vst.msk [vmem:[%s1427 + $0x28] sm:$0xff] %vm1011, %v5207
        %5250 = vst.msk [vmem:[%s1427 + $0x30] sm:$0xff] %vm1011, %v5209
        %5251 = vst.msk [vmem:[%s1427 + $0x38] sm:$0xff] %vm1011, %v5211
        %5252 = vst.msk [vmem:[%s1427 + $0x40] sm:$0xff] %vm1011, %v5213
        %5253 = vst.msk [vmem:[%s1427 + $0x48] sm:$0xff] %vm1011, %v5215
        %5254 = vst.msk [vmem:[%s1427 + $0x50] sm:$0xff] %vm1011, %v5217
        %5255 = vst.msk [vmem:[%s1427 + $0x58] sm:$0xff] %vm1011, %v5219
        %5256 = vst.msk [vmem:[%s1427 + $0x60] sm:$0xff] %vm1011, %v5221
        %5257 = vst.msk [vmem:[%s1427 + $0x68] sm:$0xff] %vm1011, %v5223
        %5258 = vst.msk [vmem:[%s1427 + $0x70] sm:$0xff] %vm1011, %v5225
        %5259 = vst.msk [vmem:[%s1427 + $0x78] sm:$0xff] %vm1011, %v5227
        %5260 = vrot.lane.b32.xlu0 %v4365, 12
        %v5261 = vpop.permute.xlu0 %5260
        %5262 = vrot.lane.b32.xlu0 %v4366, 12
        %v5263 = vpop.permute.xlu0 %5262
        %5264 = vrot.lane.b32.xlu0 %v4367, 12
        %v5265 = vpop.permute.xlu0 %5264
        %5266 = vrot.lane.b32.xlu0 %v4368, 12
        %v5267 = vpop.permute.xlu0 %5266
        %5268 = vrot.lane.b32.xlu0 %v4369, 12
        %v5269 = vpop.permute.xlu0 %5268
        %5270 = vrot.lane.b32.xlu0 %v4370, 12
        %v5271 = vpop.permute.xlu0 %5270
        %5272 = vrot.lane.b32.xlu0 %v4371, 12
        %v5273 = vpop.permute.xlu0 %5272
        %5274 = vrot.lane.b32.xlu0 %v4372, 12
        %v5275 = vpop.permute.xlu0 %5274
        %5276 = vrot.lane.b32.xlu0 %v4373, 12
        %v5277 = vpop.permute.xlu0 %5276
        %5278 = vrot.lane.b32.xlu0 %v4374, 12
        %v5279 = vpop.permute.xlu0 %5278
        %5280 = vrot.lane.b32.xlu0 %v4375, 12
        %v5281 = vpop.permute.xlu0 %5280
        %5282 = vrot.lane.b32.xlu0 %v4376, 12
        %v5283 = vpop.permute.xlu0 %5282
        %5284 = vrot.lane.b32.xlu0 %v4377, 12
        %v5285 = vpop.permute.xlu0 %5284
        %5286 = vrot.lane.b32.xlu0 %v4378, 12
        %v5287 = vpop.permute.xlu0 %5286
        %5288 = vrot.lane.b32.xlu0 %v4379, 12
        %v5289 = vpop.permute.xlu0 %5288
        %5290 = vrot.lane.b32.xlu0 %v4380, 12
        %v5291 = vpop.permute.xlu0 %5290
        %5308 = vst.msk [vmem:[%s1427] sm:$0xff] %vm1084, %v5261
        %5309 = vst.msk [vmem:[%s1427 + $0x8] sm:$0xff] %vm1084, %v5263
        %5310 = vst.msk [vmem:[%s1427 + $0x10] sm:$0xff] %vm1084, %v5265
        %5311 = vst.msk [vmem:[%s1427 + $0x18] sm:$0xff] %vm1084, %v5267
        %5312 = vst.msk [vmem:[%s1427 + $0x20] sm:$0xff] %vm1084, %v5269
        %5313 = vst.msk [vmem:[%s1427 + $0x28] sm:$0xff] %vm1084, %v5271
        %5314 = vst.msk [vmem:[%s1427 + $0x30] sm:$0xff] %vm1084, %v5273
        %5315 = vst.msk [vmem:[%s1427 + $0x38] sm:$0xff] %vm1084, %v5275
        %5316 = vst.msk [vmem:[%s1427 + $0x40] sm:$0xff] %vm1084, %v5277
        %5317 = vst.msk [vmem:[%s1427 + $0x48] sm:$0xff] %vm1084, %v5279
        %5318 = vst.msk [vmem:[%s1427 + $0x50] sm:$0xff] %vm1084, %v5281
        %5319 = vst.msk [vmem:[%s1427 + $0x58] sm:$0xff] %vm1084, %v5283
        %5320 = vst.msk [vmem:[%s1427 + $0x60] sm:$0xff] %vm1084, %v5285
        %5321 = vst.msk [vmem:[%s1427 + $0x68] sm:$0xff] %vm1084, %v5287
        %5322 = vst.msk [vmem:[%s1427 + $0x70] sm:$0xff] %vm1084, %v5289
        %5323 = vst.msk [vmem:[%s1427 + $0x78] sm:$0xff] %vm1084, %v5291
        %5324 = vrot.lane.b32.xlu0 %v4405, 16
        %v5325 = vpop.permute.xlu0 %5324
        %5326 = vrot.lane.b32.xlu0 %v4406, 16
        %v5327 = vpop.permute.xlu0 %5326
        %5328 = vrot.lane.b32.xlu0 %v4407, 16
        %v5329 = vpop.permute.xlu0 %5328
        %5330 = vrot.lane.b32.xlu0 %v4408, 16
        %v5331 = vpop.permute.xlu0 %5330
        %5332 = vrot.lane.b32.xlu0 %v4409, 16
        %v5333 = vpop.permute.xlu0 %5332
        %5334 = vrot.lane.b32.xlu0 %v4410, 16
        %v5335 = vpop.permute.xlu0 %5334
        %5336 = vrot.lane.b32.xlu0 %v4411, 16
        %v5337 = vpop.permute.xlu0 %5336
        %5338 = vrot.lane.b32.xlu0 %v4412, 16
        %v5339 = vpop.permute.xlu0 %5338
        %5340 = vrot.lane.b32.xlu0 %v4413, 16
        %v5341 = vpop.permute.xlu0 %5340
        %5342 = vrot.lane.b32.xlu0 %v4414, 16
        %v5343 = vpop.permute.xlu0 %5342
        %5344 = vrot.lane.b32.xlu0 %v4415, 16
        %v5345 = vpop.permute.xlu0 %5344
        %5346 = vrot.lane.b32.xlu0 %v4416, 16
        %v5347 = vpop.permute.xlu0 %5346
        %5348 = vrot.lane.b32.xlu0 %v4417, 16
        %v5349 = vpop.permute.xlu0 %5348
        %5350 = vrot.lane.b32.xlu0 %v4418, 16
        %v5351 = vpop.permute.xlu0 %5350
        %5352 = vrot.lane.b32.xlu0 %v4419, 16
        %v5353 = vpop.permute.xlu0 %5352
        %5354 = vrot.lane.b32.xlu0 %v4420, 16
        %v5355 = vpop.permute.xlu0 %5354
        %5372 = vst.msk [vmem:[%s1427] sm:$0xff] %vm1149, %v5325
        %5373 = vst.msk [vmem:[%s1427 + $0x8] sm:$0xff] %vm1149, %v5327
        %5374 = vst.msk [vmem:[%s1427 + $0x10] sm:$0xff] %vm1149, %v5329
        %5375 = vst.msk [vmem:[%s1427 + $0x18] sm:$0xff] %vm1149, %v5331
        %5376 = vst.msk [vmem:[%s1427 + $0x20] sm:$0xff] %vm1149, %v5333
        %5377 = vst.msk [vmem:[%s1427 + $0x28] sm:$0xff] %vm1149, %v5335
        %5378 = vst.msk [vmem:[%s1427 + $0x30] sm:$0xff] %vm1149, %v5337
        %5379 = vst.msk [vmem:[%s1427 + $0x38] sm:$0xff] %vm1149, %v5339
        %5380 = vst.msk [vmem:[%s1427 + $0x40] sm:$0xff] %vm1149, %v5341
        %5381 = vst.msk [vmem:[%s1427 + $0x48] sm:$0xff] %vm1149, %v5343
        %5382 = vst.msk [vmem:[%s1427 + $0x50] sm:$0xff] %vm1149, %v5345
        %5383 = vst.msk [vmem:[%s1427 + $0x58] sm:$0xff] %vm1149, %v5347
        %5384 = vst.msk [vmem:[%s1427 + $0x60] sm:$0xff] %vm1149, %v5349
        %5385 = vst.msk [vmem:[%s1427 + $0x68] sm:$0xff] %vm1149, %v5351
        %5386 = vst.msk [vmem:[%s1427 + $0x70] sm:$0xff] %vm1149, %v5353
        %5387 = vst.msk [vmem:[%s1427 + $0x78] sm:$0xff] %vm1149, %v5355
        %5389 = vrot.lane.b32.xlu0 %v4526, 20
        %v5390 = vpop.permute.xlu0 %5389
        %5391 = vrot.lane.b32.xlu0 %v4562, 20
        %v5392 = vpop.permute.xlu0 %5391
        %5393 = vrot.lane.b32.xlu0 %v4529, 20
        %v5394 = vpop.permute.xlu0 %5393
        %5395 = vrot.lane.b32.xlu0 %v4563, 20
        %v5396 = vpop.permute.xlu0 %5395
        %5397 = vrot.lane.b32.xlu0 %v4532, 20
        %v5398 = vpop.permute.xlu0 %5397
        %5399 = vrot.lane.b32.xlu0 %v4564, 20
        %v5400 = vpop.permute.xlu0 %5399
        %5401 = vrot.lane.b32.xlu0 %v4535, 20
        %v5402 = vpop.permute.xlu0 %5401
        %5403 = vrot.lane.b32.xlu0 %v4565, 20
        %v5404 = vpop.permute.xlu0 %5403
        %5405 = vrot.lane.b32.xlu0 %v4538, 20
        %v5406 = vpop.permute.xlu0 %5405
        %5407 = vrot.lane.b32.xlu0 %v4566, 20
        %v5408 = vpop.permute.xlu0 %5407
        %5409 = vrot.lane.b32.xlu0 %v4541, 20
        %v5410 = vpop.permute.xlu0 %5409
        %5411 = vrot.lane.b32.xlu0 %v4567, 20
        %v5412 = vpop.permute.xlu0 %5411
        %5413 = vrot.lane.b32.xlu0 %v4544, 20
        %v5414 = vpop.permute.xlu0 %5413
        %5415 = vrot.lane.b32.xlu0 %v4568, 20
        %v5416 = vpop.permute.xlu0 %5415
        %5417 = vrot.lane.b32.xlu0 %v4547, 20
        %v5418 = vpop.permute.xlu0 %5417
        %5419 = vrot.lane.b32.xlu0 %v4569, 20
        %v5420 = vpop.permute.xlu0 %5419
        %5437 = vst.msk [vmem:[%s1427] sm:$0xff] %vm1214, %v5390
        %5438 = vst.msk [vmem:[%s1427 + $0x8] sm:$0xff] %vm1214, %v5392
        %5439 = vst.msk [vmem:[%s1427 + $0x10] sm:$0xff] %vm1214, %v5394
        %5440 = vst.msk [vmem:[%s1427 + $0x18] sm:$0xff] %vm1214, %v5396
        %5441 = vst.msk [vmem:[%s1427 + $0x20] sm:$0xff] %vm1214, %v5398
        %5442 = vst.msk [vmem:[%s1427 + $0x28] sm:$0xff] %vm1214, %v5400
        %5443 = vst.msk [vmem:[%s1427 + $0x30] sm:$0xff] %vm1214, %v5402
        %5444 = vst.msk [vmem:[%s1427 + $0x38] sm:$0xff] %vm1214, %v5404
        %5445 = vst.msk [vmem:[%s1427 + $0x40] sm:$0xff] %vm1214, %v5406
        %5446 = vst.msk [vmem:[%s1427 + $0x48] sm:$0xff] %vm1214, %v5408
        %5447 = vst.msk [vmem:[%s1427 + $0x50] sm:$0xff] %vm1214, %v5410
        %5448 = vst.msk [vmem:[%s1427 + $0x58] sm:$0xff] %vm1214, %v5412
        %5449 = vst.msk [vmem:[%s1427 + $0x60] sm:$0xff] %vm1214, %v5414
        %5450 = vst.msk [vmem:[%s1427 + $0x68] sm:$0xff] %vm1214, %v5416
        %5451 = vst.msk [vmem:[%s1427 + $0x70] sm:$0xff] %vm1214, %v5418
        %5452 = vst.msk [vmem:[%s1427 + $0x78] sm:$0xff] %vm1214, %v5420
        %5453 = vrot.lane.b32.xlu0 %v4367, 24
        %v5454 = vpop.permute.xlu0 %5453
        %5455 = vrot.lane.b32.xlu0 %v4368, 24
        %v5456 = vpop.permute.xlu0 %5455
        %5457 = vrot.lane.b32.xlu0 %v4369, 24
        %v5458 = vpop.permute.xlu0 %5457
        %5459 = vrot.lane.b32.xlu0 %v4370, 24
        %v5460 = vpop.permute.xlu0 %5459
        %5461 = vrot.lane.b32.xlu0 %v4371, 24
        %v5462 = vpop.permute.xlu0 %5461
        %5463 = vrot.lane.b32.xlu0 %v4372, 24
        %v5464 = vpop.permute.xlu0 %5463
        %5465 = vrot.lane.b32.xlu0 %v4373, 24
        %v5466 = vpop.permute.xlu0 %5465
        %5467 = vrot.lane.b32.xlu0 %v4374, 24
        %v5468 = vpop.permute.xlu0 %5467
        %5469 = vrot.lane.b32.xlu0 %v4375, 24
        %v5470 = vpop.permute.xlu0 %5469
        %5471 = vrot.lane.b32.xlu0 %v4376, 24
        %v5472 = vpop.permute.xlu0 %5471
        %5473 = vrot.lane.b32.xlu0 %v4377, 24
        %v5474 = vpop.permute.xlu0 %5473
        %5475 = vrot.lane.b32.xlu0 %v4378, 24
        %v5476 = vpop.permute.xlu0 %5475
        %5477 = vrot.lane.b32.xlu0 %v4379, 24
        %v5478 = vpop.permute.xlu0 %5477
        %5479 = vrot.lane.b32.xlu0 %v4380, 24
        %v5480 = vpop.permute.xlu0 %5479
        %5481 = vrot.lane.b32.xlu0 %v4381, 24
        %v5482 = vpop.permute.xlu0 %5481
        %5483 = vrot.lane.b32.xlu0 %v4382, 24
        %v5484 = vpop.permute.xlu0 %5483
        %5501 = vst.msk [vmem:[%s1427] sm:$0xff] %vm1280, %v5454
        %5502 = vst.msk [vmem:[%s1427 + $0x8] sm:$0xff] %vm1280, %v5456
        %5503 = vst.msk [vmem:[%s1427 + $0x10] sm:$0xff] %vm1280, %v5458
        %5504 = vst.msk [vmem:[%s1427 + $0x18] sm:$0xff] %vm1280, %v5460
        %5505 = vst.msk [vmem:[%s1427 + $0x20] sm:$0xff] %vm1280, %v5462
        %5506 = vst.msk [vmem:[%s1427 + $0x28] sm:$0xff] %vm1280, %v5464
        %5507 = vst.msk [vmem:[%s1427 + $0x30] sm:$0xff] %vm1280, %v5466
        %5508 = vst.msk [vmem:[%s1427 + $0x38] sm:$0xff] %vm1280, %v5468
        %5509 = vst.msk [vmem:[%s1427 + $0x40] sm:$0xff] %vm1280, %v5470
        %5510 = vst.msk [vmem:[%s1427 + $0x48] sm:$0xff] %vm1280, %v5472
        %5511 = vst.msk [vmem:[%s1427 + $0x50] sm:$0xff] %vm1280, %v5474
        %5512 = vst.msk [vmem:[%s1427 + $0x58] sm:$0xff] %vm1280, %v5476
        %5513 = vst.msk [vmem:[%s1427 + $0x60] sm:$0xff] %vm1280, %v5478
        %5514 = vst.msk [vmem:[%s1427 + $0x68] sm:$0xff] %vm1280, %v5480
        %5515 = vst.msk [vmem:[%s1427 + $0x70] sm:$0xff] %vm1280, %v5482
        %5516 = vst.msk [vmem:[%s1427 + $0x78] sm:$0xff] %vm1280, %v5484
        %5517 = vrot.lane.b32.xlu0 %v4407, 28
        %v5518 = vpop.permute.xlu0 %5517
        %5519 = vrot.lane.b32.xlu0 %v4408, 28
        %v5520 = vpop.permute.xlu0 %5519
        %5521 = vrot.lane.b32.xlu0 %v4409, 28
        %v5522 = vpop.permute.xlu0 %5521
        %5523 = vrot.lane.b32.xlu0 %v4410, 28
        %v5524 = vpop.permute.xlu0 %5523
        %5525 = vrot.lane.b32.xlu0 %v4411, 28
        %v5526 = vpop.permute.xlu0 %5525
        %5527 = vrot.lane.b32.xlu0 %v4412, 28
        %v5528 = vpop.permute.xlu0 %5527
        %5529 = vrot.lane.b32.xlu0 %v4413, 28
        %v5530 = vpop.permute.xlu0 %5529
        %5531 = vrot.lane.b32.xlu0 %v4414, 28
        %v5532 = vpop.permute.xlu0 %5531
        %5533 = vrot.lane.b32.xlu0 %v4415, 28
        %v5534 = vpop.permute.xlu0 %5533
        %5535 = vrot.lane.b32.xlu0 %v4416, 28
        %v5536 = vpop.permute.xlu0 %5535
        %5537 = vrot.lane.b32.xlu0 %v4417, 28
        %v5538 = vpop.permute.xlu0 %5537
        %5539 = vrot.lane.b32.xlu0 %v4418, 28
        %v5540 = vpop.permute.xlu0 %5539
        %5541 = vrot.lane.b32.xlu0 %v4419, 28
        %v5542 = vpop.permute.xlu0 %5541
        %5543 = vrot.lane.b32.xlu0 %v4420, 28
        %v5544 = vpop.permute.xlu0 %5543
        %5545 = vrot.lane.b32.xlu0 %v4421, 28
        %v5546 = vpop.permute.xlu0 %5545
        %5547 = vrot.lane.b32.xlu0 %v4422, 28
        %v5548 = vpop.permute.xlu0 %5547
        %5565 = vst.msk [vmem:[%s1427] sm:$0xff] %vm1345, %v5518
        %5566 = vst.msk [vmem:[%s1427 + $0x8] sm:$0xff] %vm1345, %v5520
        %5567 = vst.msk [vmem:[%s1427 + $0x10] sm:$0xff] %vm1345, %v5522
        %5568 = vst.msk [vmem:[%s1427 + $0x18] sm:$0xff] %vm1345, %v5524
        %5569 = vst.msk [vmem:[%s1427 + $0x20] sm:$0xff] %vm1345, %v5526
        %5570 = vst.msk [vmem:[%s1427 + $0x28] sm:$0xff] %vm1345, %v5528
        %5571 = vst.msk [vmem:[%s1427 + $0x30] sm:$0xff] %vm1345, %v5530
        %5572 = vst.msk [vmem:[%s1427 + $0x38] sm:$0xff] %vm1345, %v5532
        %5573 = vst.msk [vmem:[%s1427 + $0x40] sm:$0xff] %vm1345, %v5534
        %5574 = vst.msk [vmem:[%s1427 + $0x48] sm:$0xff] %vm1345, %v5536
        %5575 = vst.msk [vmem:[%s1427 + $0x50] sm:$0xff] %vm1345, %v5538
        %5576 = vst.msk [vmem:[%s1427 + $0x58] sm:$0xff] %vm1345, %v5540
        %5577 = vst.msk [vmem:[%s1427 + $0x60] sm:$0xff] %vm1345, %v5542
        %5578 = vst.msk [vmem:[%s1427 + $0x68] sm:$0xff] %vm1345, %v5544
        %5579 = vst.msk [vmem:[%s1427 + $0x70] sm:$0xff] %vm1345, %v5546
        %5580 = vst.msk [vmem:[%s1427 + $0x78] sm:$0xff] %vm1345, %v5548
        %5582 = vrot.lane.b32.xlu0 %v4529, 32
        %v5583 = vpop.permute.xlu0 %5582
        %5584 = vrot.lane.b32.xlu0 %v4563, 32
        %v5585 = vpop.permute.xlu0 %5584
        %5586 = vrot.lane.b32.xlu0 %v4532, 32
        %v5587 = vpop.permute.xlu0 %5586
        %5588 = vrot.lane.b32.xlu0 %v4564, 32
        %v5589 = vpop.permute.xlu0 %5588
        %5590 = vrot.lane.b32.xlu0 %v4535, 32
        %v5591 = vpop.permute.xlu0 %5590
        %5592 = vrot.lane.b32.xlu0 %v4565, 32
        %v5593 = vpop.permute.xlu0 %5592
        %5594 = vrot.lane.b32.xlu0 %v4538, 32
        %v5595 = vpop.permute.xlu0 %5594
        %5596 = vrot.lane.b32.xlu0 %v4566, 32
        %v5597 = vpop.permute.xlu0 %5596
        %5598 = vrot.lane.b32.xlu0 %v4541, 32
        %v5599 = vpop.permute.xlu0 %5598
        %5600 = vrot.lane.b32.xlu0 %v4567, 32
        %v5601 = vpop.permute.xlu0 %5600
        %5602 = vrot.lane.b32.xlu0 %v4544, 32
        %v5603 = vpop.permute.xlu0 %5602
        %5604 = vrot.lane.b32.xlu0 %v4568, 32
        %v5605 = vpop.permute.xlu0 %5604
        %5606 = vrot.lane.b32.xlu0 %v4547, 32
        %v5607 = vpop.permute.xlu0 %5606
        %5608 = vrot.lane.b32.xlu0 %v4569, 32
        %v5609 = vpop.permute.xlu0 %5608
        %5610 = vrot.lane.b32.xlu0 %v4550, 32
        %v5611 = vpop.permute.xlu0 %5610
        %5612 = vrot.lane.b32.xlu0 %v4570, 32
        %v5613 = vpop.permute.xlu0 %5612
        %5630 = vst.msk [vmem:[%s1427] sm:$0xff] %vm1410, %v5583
        %5631 = vst.msk [vmem:[%s1427 + $0x8] sm:$0xff] %vm1410, %v5585
        %5632 = vst.msk [vmem:[%s1427 + $0x10] sm:$0xff] %vm1410, %v5587
        %5633 = vst.msk [vmem:[%s1427 + $0x18] sm:$0xff] %vm1410, %v5589
        %5634 = vst.msk [vmem:[%s1427 + $0x20] sm:$0xff] %vm1410, %v5591
        %5635 = vst.msk [vmem:[%s1427 + $0x28] sm:$0xff] %vm1410, %v5593
        %5636 = vst.msk [vmem:[%s1427 + $0x30] sm:$0xff] %vm1410, %v5595
        %5637 = vst.msk [vmem:[%s1427 + $0x38] sm:$0xff] %vm1410, %v5597
        %5638 = vst.msk [vmem:[%s1427 + $0x40] sm:$0xff] %vm1410, %v5599
        %5639 = vst.msk [vmem:[%s1427 + $0x48] sm:$0xff] %vm1410, %v5601
        %5640 = vst.msk [vmem:[%s1427 + $0x50] sm:$0xff] %vm1410, %v5603
        %5641 = vst.msk [vmem:[%s1427 + $0x58] sm:$0xff] %vm1410, %v5605
        %5642 = vst.msk [vmem:[%s1427 + $0x60] sm:$0xff] %vm1410, %v5607
        %5643 = vst.msk [vmem:[%s1427 + $0x68] sm:$0xff] %vm1410, %v5609
        %5644 = vst.msk [vmem:[%s1427 + $0x70] sm:$0xff] %vm1410, %v5611
        %5645 = vst.msk [vmem:[%s1427 + $0x78] sm:$0xff] %vm1410, %v5613
        %v5646 = vld [vmem:[#allocation2] sm:$0xff]
        %v5647 = vld [vmem:[#allocation2 + $0x8] sm:$0xff]
        %v5648 = vld [vmem:[#allocation2 + $0x10] sm:$0xff]
        %v5649 = vld [vmem:[#allocation2 + $0x18] sm:$0xff]
        %v5650 = vld [vmem:[#allocation2 + $0x20] sm:$0xff]
        %v5651 = vld [vmem:[#allocation2 + $0x28] sm:$0xff]
        %v5652 = vld [vmem:[#allocation2 + $0x30] sm:$0xff]
        %v5653 = vld [vmem:[#allocation2 + $0x38] sm:$0xff]
        %v5654 = vld [vmem:[#allocation2 + $0x40] sm:$0xff]
        %v5655 = vld [vmem:[#allocation2 + $0x48] sm:$0xff]
        %v5656 = vld [vmem:[#allocation2 + $0x50] sm:$0xff]
        %v5657 = vld [vmem:[#allocation2 + $0x58] sm:$0xff]
        %v5658 = vld [vmem:[#allocation2 + $0x60] sm:$0xff]
        %v5659 = vld [vmem:[#allocation2 + $0x68] sm:$0xff]
        %v5660 = vld [vmem:[#allocation2 + $0x70] sm:$0xff]
        %v5661 = vld [vmem:[#allocation2 + $0x78] sm:$0xff]
        %v5662 = vld [vmem:[#allocation2 + $0x80] sm:$0xff]
        %v5663 = vld [vmem:[#allocation2 + $0x88] sm:$0xff]
        %v5664 = vld [vmem:[#allocation2 + $0x90] sm:$0xff]
        %v5665 = vld [vmem:[#allocation2 + $0x98] sm:$0xff]
        %v5666 = vld [vmem:[#allocation2 + $0xa0] sm:$0xff]
        %v5667 = vld [vmem:[#allocation2 + $0xa8] sm:$0xff]
        %v5668 = vld [vmem:[#allocation2 + $0xb0] sm:$0xff]
        %v5669 = vld [vmem:[#allocation2 + $0xb8] sm:$0xff]
        %v5670 = vld [vmem:[#allocation2 + $0xc0] sm:$0xff]
        %v5671 = vld [vmem:[#allocation2 + $0xc8] sm:$0xff]
        %v5672 = vld [vmem:[#allocation2 + $0xd0] sm:$0xff]
        %v5673 = vld [vmem:[#allocation2 + $0xd8] sm:$0xff]
        %v5674 = vld [vmem:[#allocation2 + $0xe0] sm:$0xff]
        %v5675 = vld [vmem:[#allocation2 + $0xe8] sm:$0xff]
        %v5676 = vld [vmem:[#allocation2 + $0xf0] sm:$0xff]
        %v5677 = vld [vmem:[#allocation2 + $0xf8] sm:$0xff]
        %s5678 = scalar_lea.vmem %s3, 80
        %v5679 = vld [vmem:[%s5678] sm:$0xff]
        %v5680 = vld [vmem:[%s5678 + $0x8] sm:$0xff]
        %v5681 = vld [vmem:[%s5678 + $0x10] sm:$0xff]
        %v5682 = vld [vmem:[%s5678 + $0x18] sm:$0xff]
        %v5683 = vld [vmem:[%s5678 + $0x20] sm:$0xf]
        %v5685 = vsel %vm2007, %v5646, 0
        %v5688 = vsel %vm2007, %v5647, 0
        %v5691 = vsel %vm2007, %v5648, 0
        %v5694 = vsel %vm2007, %v5649, 0
        %v5697 = vsel %vm2007, %v5650, 0
        %v5700 = vsel %vm2007, %v5651, 0
        %v5703 = vsel %vm2007, %v5652, 0
        %v5706 = vsel %vm2007, %v5653, 0
        %v5709 = vsel %vm2007, %v5654, 0
        %v5712 = vsel %vm2007, %v5655, 0
        %v5715 = vsel %vm2007, %v5656, 0
        %v5718 = vsel %vm2007, %v5657, 0
        %v5721 = vsel %vm2007, %v5658, 0
        %v5724 = vsel %vm2007, %v5659, 0
        %v5727 = vsel %vm2007, %v5660, 0
        %v5730 = vsel %vm2007, %v5661, 0
        %v5733 = vsel %vm2007, %v5662, 0
        %v5736 = vsel %vm2007, %v5663, 0
        %v5739 = vsel %vm2007, %v5664, 0
        %v5742 = vsel %vm2007, %v5665, 0
        %v5745 = vsel %vm2007, %v5666, 0
        %v5748 = vsel %vm2007, %v5667, 0
        %v5751 = vsel %vm2007, %v5668, 0
        %v5754 = vsel %vm2007, %v5669, 0
        %v5757 = vsel %vm2007, %v5670, 0
        %v5760 = vsel %vm2007, %v5671, 0
        %v5763 = vsel %vm2007, %v5672, 0
        %v5766 = vsel %vm2007, %v5673, 0
        %v5769 = vsel %vm2007, %v5674, 0
        %v5772 = vsel %vm2007, %v5675, 0
        %v5775 = vsel %vm2007, %v5676, 0
        %v5778 = vsel %vm2007, %v5677, 0
        %v5781 = vsel %vm2104, %v5683, 0
        %5783 = vmatpush.msra.mxu0 0.0
        %5784 = vmatpush.msra.mxu0 0.0
        %5785 = vmatpush.msra.mxu0 0.0
        %5786 = vmatpush.msra.mxu0 0.0
        %5787 = vmatpush.msra.mxu0 0.0
        %5788 = vmatpush.msra.mxu0 0.0
        %5789 = vmatpush.msra.mxu0 0.0
        %5790 = vmatpush.msra.mxu0 0.0
        %5791 = vmatpush.msra.mxu0 0.0
        %5792 = vmatpush.msra.mxu0 0.0
        %5793 = vmatpush.msra.mxu0 0.0
        %5794 = vmatpush.msra.mxu0 %v5781
        %5795 = vmatpush.msra.mxu0 %v5682
        %5796 = vmatpush.msra.mxu0 %v5681
        %5797 = vmatpush.msra.mxu0 %v5680
        %5798 = vmatpush.msra.mxu0 %v5679
        %5799 = vmatmul.f32.gmra.mxu0 %v5685
        %v5800 = vpop.f32.mrf.mxu0
        %v5801 = vadd.f32 0.0, %v5800
        %5802 = vmatmul.f32.gmra.mxu0 %v5688
        %v5803 = vpop.f32.mrf.mxu0
        %v5804 = vadd.f32 0.0, %v5803
        %5805 = vmatmul.f32.gmra.mxu0 %v5691
        %v5806 = vpop.f32.mrf.mxu0
        %v5807 = vadd.f32 0.0, %v5806
        %5808 = vmatmul.f32.gmra.mxu0 %v5694
        %v5809 = vpop.f32.mrf.mxu0
        %v5810 = vadd.f32 0.0, %v5809
        %5811 = vmatmul.f32.gmra.mxu0 %v5697
        %v5812 = vpop.f32.mrf.mxu0
        %v5813 = vadd.f32 0.0, %v5812
        %5814 = vmatmul.f32.gmra.mxu0 %v5700
        %v5815 = vpop.f32.mrf.mxu0
        %v5816 = vadd.f32 0.0, %v5815
        %5817 = vmatmul.f32.gmra.mxu0 %v5703
        %v5818 = vpop.f32.mrf.mxu0
        %v5819 = vadd.f32 0.0, %v5818
        %5820 = vmatmul.f32.gmra.mxu0 %v5706
        %v5821 = vpop.f32.mrf.mxu0
        %v5822 = vadd.f32 0.0, %v5821
        %5823 = vmatmul.f32.gmra.mxu0 %v5709
        %v5824 = vpop.f32.mrf.mxu0
        %v5825 = vadd.f32 0.0, %v5824
        %5826 = vmatmul.f32.gmra.mxu0 %v5712
        %v5827 = vpop.f32.mrf.mxu0
        %v5828 = vadd.f32 0.0, %v5827
        %5829 = vmatmul.f32.gmra.mxu0 %v5715
        %v5830 = vpop.f32.mrf.mxu0
        %v5831 = vadd.f32 0.0, %v5830
        %5832 = vmatmul.f32.gmra.mxu0 %v5718
        %v5833 = vpop.f32.mrf.mxu0
        %v5834 = vadd.f32 0.0, %v5833
        %5835 = vmatmul.f32.gmra.mxu0 %v5721
        %v5836 = vpop.f32.mrf.mxu0
        %v5837 = vadd.f32 0.0, %v5836
        %5838 = vmatmul.f32.gmra.mxu0 %v5724
        %v5839 = vpop.f32.mrf.mxu0
        %v5840 = vadd.f32 0.0, %v5839
        %5841 = vmatmul.f32.gmra.mxu0 %v5727
        %v5842 = vpop.f32.mrf.mxu0
        %v5843 = vadd.f32 0.0, %v5842
        %5844 = vmatmul.f32.gmra.mxu0 %v5730
        %v5845 = vpop.f32.mrf.mxu0
        %v5846 = vadd.f32 0.0, %v5845
        %5847 = vmatmul.f32.gmra.mxu0 %v5733
        %v5848 = vpop.f32.mrf.mxu0
        %v5849 = vadd.f32 0.0, %v5848
        %5850 = vmatmul.f32.gmra.mxu0 %v5736
        %v5851 = vpop.f32.mrf.mxu0
        %v5852 = vadd.f32 0.0, %v5851
        %5853 = vmatmul.f32.gmra.mxu0 %v5739
        %v5854 = vpop.f32.mrf.mxu0
        %v5855 = vadd.f32 0.0, %v5854
        %5856 = vmatmul.f32.gmra.mxu0 %v5742
        %v5857 = vpop.f32.mrf.mxu0
        %v5858 = vadd.f32 0.0, %v5857
        %5859 = vmatmul.f32.gmra.mxu0 %v5745
        %v5860 = vpop.f32.mrf.mxu0
        %v5861 = vadd.f32 0.0, %v5860
        %5862 = vmatmul.f32.gmra.mxu0 %v5748
        %v5863 = vpop.f32.mrf.mxu0
        %v5864 = vadd.f32 0.0, %v5863
        %5865 = vmatmul.f32.gmra.mxu0 %v5751
        %v5866 = vpop.f32.mrf.mxu0
        %v5867 = vadd.f32 0.0, %v5866
        %5868 = vmatmul.f32.gmra.mxu0 %v5754
        %v5869 = vpop.f32.mrf.mxu0
        %v5870 = vadd.f32 0.0, %v5869
        %5871 = vmatmul.f32.gmra.mxu0 %v5757
        %v5872 = vpop.f32.mrf.mxu0
        %v5873 = vadd.f32 0.0, %v5872
        %5874 = vmatmul.f32.gmra.mxu0 %v5760
        %v5875 = vpop.f32.mrf.mxu0
        %v5876 = vadd.f32 0.0, %v5875
        %5877 = vmatmul.f32.gmra.mxu0 %v5763
        %v5878 = vpop.f32.mrf.mxu0
        %v5879 = vadd.f32 0.0, %v5878
        %5880 = vmatmul.f32.gmra.mxu0 %v5766
        %v5881 = vpop.f32.mrf.mxu0
        %v5882 = vadd.f32 0.0, %v5881
        %5883 = vmatmul.f32.gmra.mxu0 %v5769
        %v5884 = vpop.f32.mrf.mxu0
        %v5885 = vadd.f32 0.0, %v5884
        %5886 = vmatmul.f32.gmra.mxu0 %v5772
        %v5887 = vpop.f32.mrf.mxu0
        %v5888 = vadd.f32 0.0, %v5887
        %5889 = vmatmul.f32.gmra.mxu0 %v5775
        %v5890 = vpop.f32.mrf.mxu0
        %v5891 = vadd.f32 0.0, %v5890
        %5892 = vmatmul.f32.gmra.mxu0 %v5778
        %v5893 = vpop.f32.mrf.mxu0
        %v5894 = vadd.f32 0.0, %v5893
        %5895 = vdwg.mxu0
        %v5896 = vld [vmem:[#allocation3] sm:$0xff]
        %v5897 = vld [vmem:[#allocation3 + $0x8] sm:$0xff]
        %v5898 = vld [vmem:[#allocation3 + $0x10] sm:$0xff]
        %v5899 = vld [vmem:[#allocation3 + $0x18] sm:$0xff]
        %v5900 = vld [vmem:[#allocation3 + $0x20] sm:$0xff]
        %v5901 = vld [vmem:[#allocation3 + $0x28] sm:$0xff]
        %v5902 = vld [vmem:[#allocation3 + $0x30] sm:$0xff]
        %v5903 = vld [vmem:[#allocation3 + $0x38] sm:$0xff]
        %v5904 = vld [vmem:[#allocation3 + $0x40] sm:$0xff]
        %v5905 = vld [vmem:[#allocation3 + $0x48] sm:$0xff]
        %v5906 = vld [vmem:[#allocation3 + $0x50] sm:$0xff]
        %v5907 = vld [vmem:[#allocation3 + $0x58] sm:$0xff]
        %v5908 = vld [vmem:[#allocation3 + $0x60] sm:$0xff]
        %v5909 = vld [vmem:[#allocation3 + $0x68] sm:$0xff]
        %v5910 = vld [vmem:[#allocation3 + $0x70] sm:$0xff]
        %v5911 = vld [vmem:[#allocation3 + $0x78] sm:$0xff]
        %v5912 = vld [vmem:[#allocation3 + $0x80] sm:$0xff]
        %v5913 = vld [vmem:[#allocation3 + $0x88] sm:$0xff]
        %v5914 = vld [vmem:[#allocation3 + $0x90] sm:$0xff]
        %v5915 = vld [vmem:[#allocation3 + $0x98] sm:$0xff]
        %v5916 = vld [vmem:[#allocation3 + $0xa0] sm:$0xff]
        %v5917 = vld [vmem:[#allocation3 + $0xa8] sm:$0xff]
        %v5918 = vld [vmem:[#allocation3 + $0xb0] sm:$0xff]
        %v5919 = vld [vmem:[#allocation3 + $0xb8] sm:$0xff]
        %v5920 = vld [vmem:[#allocation3 + $0xc0] sm:$0xff]
        %v5921 = vld [vmem:[#allocation3 + $0xc8] sm:$0xff]
        %v5922 = vld [vmem:[#allocation3 + $0xd0] sm:$0xff]
        %v5923 = vld [vmem:[#allocation3 + $0xd8] sm:$0xff]
        %v5924 = vld [vmem:[#allocation3 + $0xe0] sm:$0xff]
        %v5925 = vld [vmem:[#allocation3 + $0xe8] sm:$0xff]
        %v5926 = vld [vmem:[#allocation3 + $0xf0] sm:$0xff]
        %v5927 = vld [vmem:[#allocation3 + $0xf8] sm:$0xff]
        %v5928 = vadd.f32 %v5896, %v5801
        %v5929 = vadd.f32 %v5897, %v5804
        %v5930 = vadd.f32 %v5898, %v5807
        %v5931 = vadd.f32 %v5899, %v5810
        %v5932 = vadd.f32 %v5900, %v5813
        %v5933 = vadd.f32 %v5901, %v5816
        %v5934 = vadd.f32 %v5902, %v5819
        %v5935 = vadd.f32 %v5903, %v5822
        %v5936 = vadd.f32 %v5904, %v5825
        %v5937 = vadd.f32 %v5905, %v5828
        %v5938 = vadd.f32 %v5906, %v5831
        %v5939 = vadd.f32 %v5907, %v5834
        %v5940 = vadd.f32 %v5908, %v5837
        %v5941 = vadd.f32 %v5909, %v5840
        %v5942 = vadd.f32 %v5910, %v5843
        %v5943 = vadd.f32 %v5911, %v5846
        %v5944 = vadd.f32 %v5912, %v5849
        %v5945 = vadd.f32 %v5913, %v5852
        %v5946 = vadd.f32 %v5914, %v5855
        %v5947 = vadd.f32 %v5915, %v5858
        %v5948 = vadd.f32 %v5916, %v5861
        %v5949 = vadd.f32 %v5917, %v5864
        %v5950 = vadd.f32 %v5918, %v5867
        %v5951 = vadd.f32 %v5919, %v5870
        %v5952 = vadd.f32 %v5920, %v5873
        %v5953 = vadd.f32 %v5921, %v5876
        %v5954 = vadd.f32 %v5922, %v5879
        %v5955 = vadd.f32 %v5923, %v5882
        %v5956 = vadd.f32 %v5924, %v5885
        %v5957 = vadd.f32 %v5925, %v5888
        %v5958 = vadd.f32 %v5926, %v5891
        %v5959 = vadd.f32 %v5927, %v5894
        %5960 = vst.msk [vmem:[#allocation3] sm:$0xff] %vm2221, %v5928
        %5961 = vst.msk [vmem:[#allocation3 + $0x8] sm:$0xff] %vm2221, %v5929
        %5962 = vst.msk [vmem:[#allocation3 + $0x10] sm:$0xff] %vm2221, %v5930
        %5963 = vst.msk [vmem:[#allocation3 + $0x18] sm:$0xff] %vm2221, %v5931
        %5964 = vst.msk [vmem:[#allocation3 + $0x20] sm:$0xff] %vm2221, %v5932
        %5965 = vst.msk [vmem:[#allocation3 + $0x28] sm:$0xff] %vm2221, %v5933
        %5966 = vst.msk [vmem:[#allocation3 + $0x30] sm:$0xff] %vm2221, %v5934
        %5967 = vst.msk [vmem:[#allocation3 + $0x38] sm:$0xff] %vm2221, %v5935
        %5968 = vst.msk [vmem:[#allocation3 + $0x40] sm:$0xff] %vm2221, %v5936
        %5969 = vst.msk [vmem:[#allocation3 + $0x48] sm:$0xff] %vm2221, %v5937
        %5970 = vst.msk [vmem:[#allocation3 + $0x50] sm:$0xff] %vm2221, %v5938
        %5971 = vst.msk [vmem:[#allocation3 + $0x58] sm:$0xff] %vm2221, %v5939
        %5972 = vst.msk [vmem:[#allocation3 + $0x60] sm:$0xff] %vm2221, %v5940
        %5973 = vst.msk [vmem:[#allocation3 + $0x68] sm:$0xff] %vm2221, %v5941
        %5974 = vst.msk [vmem:[#allocation3 + $0x70] sm:$0xff] %vm2221, %v5942
        %5975 = vst.msk [vmem:[#allocation3 + $0x78] sm:$0xff] %vm2221, %v5943
        %5976 = vst.msk [vmem:[#allocation3 + $0x80] sm:$0xff] %vm2221, %v5944
        %5977 = vst.msk [vmem:[#allocation3 + $0x88] sm:$0xff] %vm2221, %v5945
        %5978 = vst.msk [vmem:[#allocation3 + $0x90] sm:$0xff] %vm2221, %v5946
        %5979 = vst.msk [vmem:[#allocation3 + $0x98] sm:$0xff] %vm2221, %v5947
        %5980 = vst.msk [vmem:[#allocation3 + $0xa0] sm:$0xff] %vm2221, %v5948
        %5981 = vst.msk [vmem:[#allocation3 + $0xa8] sm:$0xff] %vm2221, %v5949
        %5982 = vst.msk [vmem:[#allocation3 + $0xb0] sm:$0xff] %vm2221, %v5950
        %5983 = vst.msk [vmem:[#allocation3 + $0xb8] sm:$0xff] %vm2221, %v5951
        %5984 = vst.msk [vmem:[#allocation3 + $0xc0] sm:$0xff] %vm2221, %v5952
        %5985 = vst.msk [vmem:[#allocation3 + $0xc8] sm:$0xff] %vm2221, %v5953
        %5986 = vst.msk [vmem:[#allocation3 + $0xd0] sm:$0xff] %vm2221, %v5954
        %5987 = vst.msk [vmem:[#allocation3 + $0xd8] sm:$0xff] %vm2221, %v5955
        %5988 = vst.msk [vmem:[#allocation3 + $0xe0] sm:$0xff] %vm2221, %v5956
        %5989 = vst.msk [vmem:[#allocation3 + $0xe8] sm:$0xff] %vm2221, %v5957
        %5990 = vst.msk [vmem:[#allocation3 + $0xf0] sm:$0xff] %vm2221, %v5958
        %5991 = vst.msk [vmem:[#allocation3 + $0xf8] sm:$0xff] %vm2221, %v5959
        %v5992 = vld [vmem:[#allocation3] sm:$0xff]
        %v5993 = vld [vmem:[#allocation3 + $0x8] sm:$0xff]
        %v5994 = vld [vmem:[#allocation3 + $0x10] sm:$0xff]
        %v5995 = vld [vmem:[#allocation3 + $0x18] sm:$0xff]
        %v5996 = vld [vmem:[#allocation3 + $0x20] sm:$0xff]
        %v5997 = vld [vmem:[#allocation3 + $0x28] sm:$0xff]
        %v5998 = vld [vmem:[#allocation3 + $0x30] sm:$0xff]
        %v5999 = vld [vmem:[#allocation3 + $0x38] sm:$0xff]
        %v6000 = vld [vmem:[#allocation3 + $0x40] sm:$0xff]
        %v6001 = vld [vmem:[#allocation3 + $0x48] sm:$0xff]
        %v6002 = vld [vmem:[#allocation3 + $0x50] sm:$0xff]
        %v6003 = vld [vmem:[#allocation3 + $0x58] sm:$0xff]
        %v6004 = vld [vmem:[#allocation3 + $0x60] sm:$0xff]
        %v6005 = vld [vmem:[#allocation3 + $0x68] sm:$0xff]
        %v6006 = vld [vmem:[#allocation3 + $0x70] sm:$0xff]
        %v6007 = vld [vmem:[#allocation3 + $0x78] sm:$0xff]
        %v6008 = vld [vmem:[#allocation3 + $0x80] sm:$0xff]
        %v6009 = vld [vmem:[#allocation3 + $0x88] sm:$0xff]
        %v6010 = vld [vmem:[#allocation3 + $0x90] sm:$0xff]
        %v6011 = vld [vmem:[#allocation3 + $0x98] sm:$0xff]
        %v6012 = vld [vmem:[#allocation3 + $0xa0] sm:$0xff]
        %v6013 = vld [vmem:[#allocation3 + $0xa8] sm:$0xff]
        %v6014 = vld [vmem:[#allocation3 + $0xb0] sm:$0xff]
        %v6015 = vld [vmem:[#allocation3 + $0xb8] sm:$0xff]
        %v6016 = vld [vmem:[#allocation3 + $0xc0] sm:$0xff]
        %v6017 = vld [vmem:[#allocation3 + $0xc8] sm:$0xff]
        %v6018 = vld [vmem:[#allocation3 + $0xd0] sm:$0xff]
        %v6019 = vld [vmem:[#allocation3 + $0xd8] sm:$0xff]
        %v6020 = vld [vmem:[#allocation3 + $0xe0] sm:$0xff]
        %v6021 = vld [vmem:[#allocation3 + $0xe8] sm:$0xff]
        %v6022 = vld [vmem:[#allocation3 + $0xf0] sm:$0xff]
        %v6023 = vld [vmem:[#allocation3 + $0xf8] sm:$0xff]
        %6024 = vst.msk [vmem:[%s366] sm:$0xff] %vm2221, %v5992
        %6025 = vst.msk [vmem:[%s366 + $0x8] sm:$0xff] %vm2221, %v5993
        %6026 = vst.msk [vmem:[%s366 + $0x10] sm:$0xff] %vm2221, %v5994
        %6027 = vst.msk [vmem:[%s366 + $0x18] sm:$0xff] %vm2221, %v5995
        %6028 = vst.msk [vmem:[%s366 + $0x20] sm:$0xff] %vm2221, %v5996
        %6029 = vst.msk [vmem:[%s366 + $0x28] sm:$0xff] %vm2221, %v5997
        %6030 = vst.msk [vmem:[%s366 + $0x30] sm:$0xff] %vm2221, %v5998
        %6031 = vst.msk [vmem:[%s366 + $0x38] sm:$0xff] %vm2221, %v5999
        %6032 = vst.msk [vmem:[%s366 + $0x40] sm:$0xff] %vm2221, %v6000
        %6033 = vst.msk [vmem:[%s366 + $0x48] sm:$0xff] %vm2221, %v6001
        %6034 = vst.msk [vmem:[%s366 + $0x50] sm:$0xff] %vm2221, %v6002
        %6035 = vst.msk [vmem:[%s366 + $0x58] sm:$0xff] %vm2221, %v6003
        %6036 = vst.msk [vmem:[%s366 + $0x60] sm:$0xff] %vm2221, %v6004
        %6037 = vst.msk [vmem:[%s366 + $0x68] sm:$0xff] %vm2221, %v6005
        %6038 = vst.msk [vmem:[%s366 + $0x70] sm:$0xff] %vm2221, %v6006
        %6039 = vst.msk [vmem:[%s366 + $0x78] sm:$0xff] %vm2221, %v6007
        %6040 = vst.msk [vmem:[%s366 + $0x80] sm:$0xff] %vm2221, %v6008
        %6041 = vst.msk [vmem:[%s366 + $0x88] sm:$0xff] %vm2221, %v6009
        %6042 = vst.msk [vmem:[%s366 + $0x90] sm:$0xff] %vm2221, %v6010
        %6043 = vst.msk [vmem:[%s366 + $0x98] sm:$0xff] %vm2221, %v6011
        %6044 = vst.msk [vmem:[%s366 + $0xa0] sm:$0xff] %vm2221, %v6012
        %6045 = vst.msk [vmem:[%s366 + $0xa8] sm:$0xff] %vm2221, %v6013
        %6046 = vst.msk [vmem:[%s366 + $0xb0] sm:$0xff] %vm2221, %v6014
        %6047 = vst.msk [vmem:[%s366 + $0xb8] sm:$0xff] %vm2221, %v6015
        %6048 = vst.msk [vmem:[%s366 + $0xc0] sm:$0xff] %vm2221, %v6016
        %6049 = vst.msk [vmem:[%s366 + $0xc8] sm:$0xff] %vm2221, %v6017
        %6050 = vst.msk [vmem:[%s366 + $0xd0] sm:$0xff] %vm2221, %v6018
        %6051 = vst.msk [vmem:[%s366 + $0xd8] sm:$0xff] %vm2221, %v6019
        %6052 = vst.msk [vmem:[%s366 + $0xe0] sm:$0xff] %vm2221, %v6020
        %6053 = vst.msk [vmem:[%s366 + $0xe8] sm:$0xff] %vm2221, %v6021
        %6054 = vst.msk [vmem:[%s366 + $0xf0] sm:$0xff] %vm2221, %v6022
        %6055 = vst.msk [vmem:[%s366 + $0xf8] sm:$0xff] %vm2221, %v6023
        %s6056 = sand.u32 %s195, 1
        %s6057 = sand.u32 %s195, 1
        %s6058 = smul.addr %s6057, 256
        %s6059 = scalar_lea.vmem [#allocation4], %s6058
        // Predicated region
        $region41: #{spatial_2x_3d_upsample.1} parent=39 // pred_check
          %p6060 = pneg %p205
        $region42: #{spatial_2x_3d_upsample.1} parent=39 // pred_check_branch
          %6062 = sbr.rel (%p6060) target = $region44
        $region43: #{spatial_2x_3d_upsample.1} parent=39 // pred_region
          %s6063 = smul.u32 8, %s23
          %s6064 = smul.addr %s6063, 2
          %s6065 = smul.addr %s22, 32
          %s6066 = sadd.s32 %s6064, %s6065
          %s6067 = smul.addr %s21, 128
          %s6068 = sadd.s32 %s6066, %s6067
          %s6069 = smul.addr %s6068, 8
          %s6070 = scalar_lea.vmem %s5, %s6069
          // Predicated region
          $region45: #{spatial_2x_3d_upsample.1} parent=43 // pred_check
            _
          $region46: #{spatial_2x_3d_upsample.1} parent=43 // pred_check_branch
            %6072 = sbr.rel (0) target = $region48
          $region47: #{spatial_2x_3d_upsample.1} parent=43 // pred_region
            // Predicated region
            $region49: #{spatial_2x_3d_upsample.1} parent=47 // pred_check
              _
            $region50: #{spatial_2x_3d_upsample.1} parent=47 // pred_check_branch
              %6074 = sbr.rel (0) target = $region52
            $region51: #{spatial_2x_3d_upsample.1} parent=47 // pred_region
              // Predicated region
              $region64: #{spatial_2x_3d_upsample.1} parent=51 // pred_check
                _
              $region65: #{spatial_2x_3d_upsample.1} parent=51 // pred_check_branch
                %6152 = sbr.rel (0) target = $region67
              $region66: #{spatial_2x_3d_upsample.1} parent=51 // pred_region
                loop: start=0, step=1, limit=1
                $region68: #{spatial_2x_3d_upsample.1} parent=66 // loop_pre_header
                  _
                $region69: #{spatial_2x_3d_upsample.1} parent=66 // loop_header
                  %s6154 = sphi 0, %s6158
                  %p6155 = scmp.ge.s32.totalorder %s6154, 1
                  %s6159 = sphi %s6059, %s6059
                  %s6160 = sphi %s6070, %s6070
                $region70: #{spatial_2x_3d_upsample.1} parent=66 // loop_header_branch
                  %6157 = sbr.rel (%p6155) target = $region74
                $region71: #{spatial_2x_3d_upsample.1} parent=66 // loop_body
                  %v6161 = vld [vmem:[%s6159] sm:$0xff]
                  %6162 = vst [vmem:[%s6160] sm:$0xff] %v6161
                  %v6163 = vld [vmem:[%s6159 + $0x8] sm:$0xff]
                  %6164 = vst [vmem:[%s6160 + $0x8] sm:$0xff] %v6163
                  %v6165 = vld [vmem:[%s6159 + $0x10] sm:$0xff]
                  %6166 = vst [vmem:[%s6160 + $0x10] sm:$0xff] %v6165
                  %v6167 = vld [vmem:[%s6159 + $0x18] sm:$0xff]
                  %6168 = vst [vmem:[%s6160 + $0x18] sm:$0xff] %v6167
                  %v6169 = vld [vmem:[%s6159 + $0x20] sm:$0xff]
                  %6170 = vst [vmem:[%s6160 + $0x20] sm:$0xff] %v6169
                  %v6171 = vld [vmem:[%s6159 + $0x28] sm:$0xff]
                  %6172 = vst [vmem:[%s6160 + $0x28] sm:$0xff] %v6171
                  %v6173 = vld [vmem:[%s6159 + $0x30] sm:$0xff]
                  %6174 = vst [vmem:[%s6160 + $0x30] sm:$0xff] %v6173
                  %v6175 = vld [vmem:[%s6159 + $0x38] sm:$0xff]
                  %6176 = vst [vmem:[%s6160 + $0x38] sm:$0xff] %v6175
                  %v6177 = vld [vmem:[%s6159 + $0x40] sm:$0xff]
                  %6178 = vst [vmem:[%s6160 + $0x40] sm:$0xff] %v6177
                  %v6179 = vld [vmem:[%s6159 + $0x48] sm:$0xff]
                  %6180 = vst [vmem:[%s6160 + $0x48] sm:$0xff] %v6179
                  %v6181 = vld [vmem:[%s6159 + $0x50] sm:$0xff]
                  %6182 = vst [vmem:[%s6160 + $0x50] sm:$0xff] %v6181
                  %v6183 = vld [vmem:[%s6159 + $0x58] sm:$0xff]
                  %6184 = vst [vmem:[%s6160 + $0x58] sm:$0xff] %v6183
                  %v6185 = vld [vmem:[%s6159 + $0x60] sm:$0xff]
                  %6186 = vst [vmem:[%s6160 + $0x60] sm:$0xff] %v6185
                  %v6187 = vld [vmem:[%s6159 + $0x68] sm:$0xff]
                  %6188 = vst [vmem:[%s6160 + $0x68] sm:$0xff] %v6187
                  %v6189 = vld [vmem:[%s6159 + $0x70] sm:$0xff]
                  %6190 = vst [vmem:[%s6160 + $0x70] sm:$0xff] %v6189
                  %v6191 = vld [vmem:[%s6159 + $0x78] sm:$0xff]
                  %6192 = vst [vmem:[%s6160 + $0x78] sm:$0xff] %v6191
                  %v6193 = vld [vmem:[%s6159 + $0x80] sm:$0xff]
                  %6194 = vst [vmem:[%s6160 + $0x800] sm:$0xff] %v6193
                  %v6195 = vld [vmem:[%s6159 + $0x88] sm:$0xff]
                  %6196 = vst [vmem:[%s6160 + $0x808] sm:$0xff] %v6195
                  %v6197 = vld [vmem:[%s6159 + $0x90] sm:$0xff]
                  %6198 = vst [vmem:[%s6160 + $0x810] sm:$0xff] %v6197
                  %v6199 = vld [vmem:[%s6159 + $0x98] sm:$0xff]
                  %6200 = vst [vmem:[%s6160 + $0x818] sm:$0xff] %v6199
                  %v6201 = vld [vmem:[%s6159 + $0xa0] sm:$0xff]
                  %6202 = vst [vmem:[%s6160 + $0x820] sm:$0xff] %v6201
                  %v6203 = vld [vmem:[%s6159 + $0xa8] sm:$0xff]
                  %6204 = vst [vmem:[%s6160 + $0x828] sm:$0xff] %v6203
                  %v6205 = vld [vmem:[%s6159 + $0xb0] sm:$0xff]
                  %6206 = vst [vmem:[%s6160 + $0x830] sm:$0xff] %v6205
                  %v6207 = vld [vmem:[%s6159 + $0xb8] sm:$0xff]
                  %6208 = vst [vmem:[%s6160 + $0x838] sm:$0xff] %v6207
                  %v6209 = vld [vmem:[%s6159 + $0xc0] sm:$0xff]
                  %6210 = vst [vmem:[%s6160 + $0x840] sm:$0xff] %v6209
                  %v6211 = vld [vmem:[%s6159 + $0xc8] sm:$0xff]
                  %6212 = vst [vmem:[%s6160 + $0x848] sm:$0xff] %v6211
                  %v6213 = vld [vmem:[%s6159 + $0xd0] sm:$0xff]
                  %6214 = vst [vmem:[%s6160 + $0x850] sm:$0xff] %v6213
                  %v6215 = vld [vmem:[%s6159 + $0xd8] sm:$0xff]
                  %6216 = vst [vmem:[%s6160 + $0x858] sm:$0xff] %v6215
                  %v6217 = vld [vmem:[%s6159 + $0xe0] sm:$0xff]
                  %6218 = vst [vmem:[%s6160 + $0x860] sm:$0xff] %v6217
                  %v6219 = vld [vmem:[%s6159 + $0xe8] sm:$0xff]
                  %6220 = vst [vmem:[%s6160 + $0x868] sm:$0xff] %v6219
                  %v6221 = vld [vmem:[%s6159 + $0xf0] sm:$0xff]
                  %6222 = vst [vmem:[%s6160 + $0x870] sm:$0xff] %v6221
                  %v6223 = vld [vmem:[%s6159 + $0xf8] sm:$0xff]
                  %6224 = vst [vmem:[%s6160 + $0x878] sm:$0xff] %v6223
                $region72: #{spatial_2x_3d_upsample.1} parent=66 // loop_footer
                  %s6158 = sadd.s32 1, %s6154
                $region73: #{spatial_2x_3d_upsample.1} parent=66 // loop_footer_branch
                  %6153 = sbr.rel target = $region69
                $region74: #{spatial_2x_3d_upsample.1} parent=66 // loop_exit
                  _
              $region67: #{spatial_2x_3d_upsample.1} parent=51 // pred_fallthru
                _
              // Predicated region
              $region75: #{spatial_2x_3d_upsample.1} parent=51 // pred_check
                _
              $region76: #{spatial_2x_3d_upsample.1} parent=51 // pred_check_branch
                %6226 = sbr.rel target = $region78
              $region77: #{spatial_2x_3d_upsample.1} parent=51 // pred_region
                _
              $region78: #{spatial_2x_3d_upsample.1} parent=51 // pred_fallthru
                _
            $region52: #{spatial_2x_3d_upsample.1} parent=47 // pred_fallthru
              _
            // Predicated region
            $region53: #{spatial_2x_3d_upsample.1} parent=47 // pred_check
              _
            $region54: #{spatial_2x_3d_upsample.1} parent=47 // pred_check_branch
              %6076 = sbr.rel target = $region56
            $region55: #{spatial_2x_3d_upsample.1} parent=47 // pred_region
              %s6078 = ssub.s32 256, 1
              loop: start=0, step=1, limit=1
              $region57: #{spatial_2x_3d_upsample.1} parent=55 // loop_pre_header
                _
              $region58: #{spatial_2x_3d_upsample.1} parent=55 // loop_header
                %s6080 = sphi 0, %s6084
                %p6081 = scmp.ge.s32.totalorder %s6080, 1
                %s6085 = sphi %s6059, %s6059
                %s6086 = sphi %s6070, %s6070
              $region59: #{spatial_2x_3d_upsample.1} parent=55 // loop_header_branch
                %6083 = sbr.rel (%p6081) target = $region63
              $region60: #{spatial_2x_3d_upsample.1} parent=55 // loop_body
                %v6087 = vld [vmem:[%s6085] sm:%s6078]
                %6088 = vst [vmem:[%s6086] sm:%s6078] %v6087
                %v6089 = vld [vmem:[%s6085 + $0x8] sm:%s6078]
                %6090 = vst [vmem:[%s6086 + $0x8] sm:%s6078] %v6089
                %v6091 = vld [vmem:[%s6085 + $0x10] sm:%s6078]
                %6092 = vst [vmem:[%s6086 + $0x10] sm:%s6078] %v6091
                %v6093 = vld [vmem:[%s6085 + $0x18] sm:%s6078]
                %6094 = vst [vmem:[%s6086 + $0x18] sm:%s6078] %v6093
                %v6095 = vld [vmem:[%s6085 + $0x20] sm:%s6078]
                %6096 = vst [vmem:[%s6086 + $0x20] sm:%s6078] %v6095
                %v6097 = vld [vmem:[%s6085 + $0x28] sm:%s6078]
                %6098 = vst [vmem:[%s6086 + $0x28] sm:%s6078] %v6097
                %v6099 = vld [vmem:[%s6085 + $0x30] sm:%s6078]
                %6100 = vst [vmem:[%s6086 + $0x30] sm:%s6078] %v6099
                %v6101 = vld [vmem:[%s6085 + $0x38] sm:%s6078]
                %6102 = vst [vmem:[%s6086 + $0x38] sm:%s6078] %v6101
                %v6103 = vld [vmem:[%s6085 + $0x40] sm:%s6078]
                %6104 = vst [vmem:[%s6086 + $0x40] sm:%s6078] %v6103
                %v6105 = vld [vmem:[%s6085 + $0x48] sm:%s6078]
                %6106 = vst [vmem:[%s6086 + $0x48] sm:%s6078] %v6105
                %v6107 = vld [vmem:[%s6085 + $0x50] sm:%s6078]
                %6108 = vst [vmem:[%s6086 + $0x50] sm:%s6078] %v6107
                %v6109 = vld [vmem:[%s6085 + $0x58] sm:%s6078]
                %6110 = vst [vmem:[%s6086 + $0x58] sm:%s6078] %v6109
                %v6111 = vld [vmem:[%s6085 + $0x60] sm:%s6078]
                %6112 = vst [vmem:[%s6086 + $0x60] sm:%s6078] %v6111
                %v6113 = vld [vmem:[%s6085 + $0x68] sm:%s6078]
                %6114 = vst [vmem:[%s6086 + $0x68] sm:%s6078] %v6113
                %v6115 = vld [vmem:[%s6085 + $0x70] sm:%s6078]
                %6116 = vst [vmem:[%s6086 + $0x70] sm:%s6078] %v6115
                %v6117 = vld [vmem:[%s6085 + $0x78] sm:%s6078]
                %6118 = vst [vmem:[%s6086 + $0x78] sm:%s6078] %v6117
                %v6119 = vld [vmem:[%s6085 + $0x80] sm:%s6078]
                %6120 = vst [vmem:[%s6086 + $0x800] sm:%s6078] %v6119
                %v6121 = vld [vmem:[%s6085 + $0x88] sm:%s6078]
                %6122 = vst [vmem:[%s6086 + $0x808] sm:%s6078] %v6121
                %v6123 = vld [vmem:[%s6085 + $0x90] sm:%s6078]
                %6124 = vst [vmem:[%s6086 + $0x810] sm:%s6078] %v6123
                %v6125 = vld [vmem:[%s6085 + $0x98] sm:%s6078]
                %6126 = vst [vmem:[%s6086 + $0x818] sm:%s6078] %v6125
                %v6127 = vld [vmem:[%s6085 + $0xa0] sm:%s6078]
                %6128 = vst [vmem:[%s6086 + $0x820] sm:%s6078] %v6127
                %v6129 = vld [vmem:[%s6085 + $0xa8] sm:%s6078]
                %6130 = vst [vmem:[%s6086 + $0x828] sm:%s6078] %v6129
                %v6131 = vld [vmem:[%s6085 + $0xb0] sm:%s6078]
                %6132 = vst [vmem:[%s6086 + $0x830] sm:%s6078] %v6131
                %v6133 = vld [vmem:[%s6085 + $0xb8] sm:%s6078]
                %6134 = vst [vmem:[%s6086 + $0x838] sm:%s6078] %v6133
                %v6135 = vld [vmem:[%s6085 + $0xc0] sm:%s6078]
                %6136 = vst [vmem:[%s6086 + $0x840] sm:%s6078] %v6135
                %v6137 = vld [vmem:[%s6085 + $0xc8] sm:%s6078]
                %6138 = vst [vmem:[%s6086 + $0x848] sm:%s6078] %v6137
                %v6139 = vld [vmem:[%s6085 + $0xd0] sm:%s6078]
                %6140 = vst [vmem:[%s6086 + $0x850] sm:%s6078] %v6139
                %v6141 = vld [vmem:[%s6085 + $0xd8] sm:%s6078]
                %6142 = vst [vmem:[%s6086 + $0x858] sm:%s6078] %v6141
                %v6143 = vld [vmem:[%s6085 + $0xe0] sm:%s6078]
                %6144 = vst [vmem:[%s6086 + $0x860] sm:%s6078] %v6143
                %v6145 = vld [vmem:[%s6085 + $0xe8] sm:%s6078]
                %6146 = vst [vmem:[%s6086 + $0x868] sm:%s6078] %v6145
                %v6147 = vld [vmem:[%s6085 + $0xf0] sm:%s6078]
                %6148 = vst [vmem:[%s6086 + $0x870] sm:%s6078] %v6147
                %v6149 = vld [vmem:[%s6085 + $0xf8] sm:%s6078]
                %6150 = vst [vmem:[%s6086 + $0x878] sm:%s6078] %v6149
              $region61: #{spatial_2x_3d_upsample.1} parent=55 // loop_footer
                %s6084 = sadd.s32 1, %s6080
              $region62: #{spatial_2x_3d_upsample.1} parent=55 // loop_footer_branch
                %6079 = sbr.rel target = $region58
              $region63: #{spatial_2x_3d_upsample.1} parent=55 // loop_exit
                _
            $region56: #{spatial_2x_3d_upsample.1} parent=47 // pred_fallthru
              _
          $region48: #{spatial_2x_3d_upsample.1} parent=43 // pred_fallthru
            _
          %6227 = vnop
        $region44: #{spatial_2x_3d_upsample.1} parent=39 // pred_fallthru
          _
      $region40: #{spatial_2x_3d_upsample.1} parent=5 // pred_fallthru
        _
      %p6228 = scmp.le.s32.totalorder 2, %s11
      // Predicated region
      $region79: #{spatial_2x_3d_upsample.1} parent=5 // pred_check
        %p6229 = pneg %p6228
      $region80: #{spatial_2x_3d_upsample.1} parent=5 // pred_check_branch
        %6231 = sbr.rel (%p6229) target = $region82
      $region81: #{spatial_2x_3d_upsample.1} parent=5 // pred_region
        %s6232 = ssub.s32 %s11, 2
        // Predicated region
        $region83: #{spatial_2x_3d_upsample.1} parent=81 // pred_check
          %p6233 = pneg %p211
        $region84: #{spatial_2x_3d_upsample.1} parent=81 // pred_check_branch
          %6235 = sbr.rel (%p6233) target = $region86
        $region85: #{spatial_2x_3d_upsample.1} parent=81 // pred_region
          %s6236 = sand.u32 %s196, 1
          %s6237 = sand.u32 %s196, 1
          %s6238 = smul.addr %s6237, 256
          %s6239 = scalar_lea.vmem [#allocation4], %s6238
        $region86: #{spatial_2x_3d_upsample.1} parent=81 // pred_fallthru
          _
      $region82: #{spatial_2x_3d_upsample.1} parent=5 // pred_fallthru
        _
    $region6: #{spatial_2x_3d_upsample.1} parent=1 // loop_footer
      %s15 = sadd.s32 1, %s11
    $region7: #{spatial_2x_3d_upsample.1} parent=1 // loop_footer_branch
      %10 = sbr.rel target = $region3
    $region8: #{spatial_2x_3d_upsample.1} parent=1 // loop_exit
      _

</llo_original>
